<compile_context>
chip_gen: v7x
topology: tpu7x:2x2x1
jax: 0.10.0
libtpu: 0.0.40
codegen_flags: <defaults>
</compile_context>

<pallas_src>
import jax
import jax.numpy as jnp
from jax.experimental import pallas as pl
from jax.experimental.pallas import tpu as pltpu

C1_PAD = 128   # conv1 out channels 90  -> 128 lanes
C2_PAD = 128   # conv2 out channels 100 -> 128 lanes
F_PAD = 256    # fc1/fc2 out features 200 -> 256
F3_PAD = 128   # fc3 out features 10 -> 128

# Geometry for 32x32 input: conv1 -> 28x28, pool -> 14x14, conv2 -> 10x10, pool -> 5x5
CONV1_TILE_M = 392        # 14 conv1 output rows x 28 cols  (exactly 2 tiles / image)
CONV1_OUT_TILE = 98       # 7 pooled rows x 14 cols
CONV2_IN_W = 14           # conv2 input spatial width (pooled conv1 grid)
CONV2_EXT = 196           # 14*14 "extended" conv2 output positions per image
CONV2_PAD_ROWS = 256      # 196 + max tap offset (4*14+4 = 60) flat rows per image


# ----------------------------------------------------------------------------
# Pallas kernels
# ----------------------------------------------------------------------------
def _conv1_relu_pool_kernel(p_ref, w_ref, b_ref, o_ref, act_ref, m1_ref):
    """conv1 tile: (392,75)@(75,128) + bias -> relu -> fused 2x2 maxpool -> (98,128).

    The 392 patch rows of a tile are (r, w) row-major with r in [0,14) conv
    output rows and w in [0,28), i.e. always 7 complete 2x2 pool row-pairs.
    """
    acc = jnp.dot(p_ref[...], w_ref[...], preferred_element_type=jnp.float32)
    act_ref[...] = jnp.maximum(acc + b_ref[...], 0.0)
    # W-pair max: 28 is even, so flat-row parity == w parity.
    m1_ref[...] = jnp.maximum(act_ref[pl.ds(0, 196, stride=2), :],
                              act_ref[pl.ds(1, 196, stride=2), :])
    # m1 rows are (r, pw) with pw in [0,14).  H-pair max: r = 2*pr, 2*pr+1.
    for pr in range(7):
        o_ref[0, pl.ds(pr * 14, 14), :] = jnp.maximum(
            m1_ref[pl.ds((2 * pr) * 14, 14), :],
            m1_ref[pl.ds((2 * pr + 1) * 14, 14), :]).astype(o_ref.dtype)


def _conv2_relu_pool_kernel(x_ref, w_ref, b_ref, o_ref, act_ref, m1_ref):
    """conv2 for one image as an in-VMEM shifted matmul + fused relu / 2x2 pool.

    x_ref holds the image's pooled conv1 activation (14,14,128) flattened
    row-major to 196 rows and zero-padded to 256 rows.  For tap (kh,kw) the
    slice x[p + kh*14 + kw] aligns input position (h+kh, w+kw) with "extended"
    output position p = h*14 + w, so 25 static (196,128)@(128,128) matmuls
    accumulate the convolution.  Only positions with h<10 and w<10 are valid,
    and only those are read by the fused pool.
    """
    acc = jnp.zeros((CONV2_EXT, C2_PAD), jnp.float32)
    for kh in range(5):
        for kw in range(5):
            acc = acc + jnp.dot(
                x_ref[pl.ds(kh * CONV2_IN_W + kw, CONV2_EXT), :],
                w_ref[kh * 5 + kw],
                preferred_element_type=jnp.float32)
    act_ref[...] = jnp.maximum(acc + b_ref[...], 0.0)
    # W-pair max over the valid 10x10 region (14 is even: row parity == w parity).
    m1_ref[...] = jnp.maximum(act_ref[pl.ds(0, 98, stride=2), :],
                              act_ref[pl.ds(1, 98, stride=2), :])
    # m1 rows are (h, pw) with pw in [0,7); keep pw<5 and reduce H pairs.
    for ph in range(5):
        o_ref[0, pl.ds(ph * 5, 5), :] = jnp.maximum(
            m1_ref[pl.ds((2 * ph) * 7, 5), :],
            m1_ref[pl.ds((2 * ph + 1) * 7, 5), :]).astype(o_ref.dtype)


def _mlp_kernel(x_ref, w1_ref, b1_ref, w2_ref, b2_ref, w3_ref, b3_ref, o_ref):
    h = jnp.dot(x_ref[...], w1_ref[...], preferred_element_type=jnp.float32) + b1_ref[...]
    h = jnp.maximum(h, 0.0).astype(jnp.bfloat16)
    h = jnp.dot(h, w2_ref[...], preferred_element_type=jnp.float32) + b2_ref[...]
    h = jnp.maximum(h, 0.0).astype(jnp.bfloat16)
    o_ref[...] = jnp.dot(h, w3_ref[...], preferred_element_type=jnp.float32) + b3_ref[...]


# ----------------------------------------------------------------------------
# pallas_call wrappers
# ----------------------------------------------------------------------------
def conv1_relu_pool(patches, w, b):
    """patches (B*784, 75) -> pooled conv1 activation (2B, 98, 128) bf16."""
    M, K = patches.shape
    assert M % CONV1_TILE_M == 0
    n_tiles = M // CONV1_TILE_M           # = 2 * batch (>= 2 grid steps)
    N = w.shape[1]
    cost = pl.CostEstimate(
        flops=2 * M * K * N + 3 * M * N,
        transcendentals=0,
        bytes_accessed=M * K * 2 + K * N * 2 + n_tiles * CONV1_OUT_TILE * N * 2)
    return pl.pallas_call(
        _conv1_relu_pool_kernel,
        out_shape=jax.ShapeDtypeStruct((n_tiles, CONV1_OUT_TILE, N), jnp.bfloat16),
        grid=(n_tiles,),
        in_specs=[
            pl.BlockSpec((CONV1_TILE_M, K), lambda i: (i, 0)),   # patches: streamed
            pl.BlockSpec((K, N), lambda i: (0, 0)),              # weights: resident
            pl.BlockSpec((1, N), lambda i: (0, 0)),              # bias: resident
        ],
        out_specs=pl.BlockSpec((1, CONV1_OUT_TILE, N), lambda i: (i, 0, 0)),
        scratch_shapes=[pltpu.VMEM((CONV1_TILE_M, N), jnp.float32),
                        pltpu.VMEM((CONV1_TILE_M // 2, N), jnp.float32)],
        compiler_params=pltpu.CompilerParams(dimension_semantics=("parallel",)),
        cost_estimate=cost,
    )(patches, w, b)


def conv2_relu_pool(x_flat, w, b, batch):
    """x_flat (B*256, 128) padded flat rows -> pooled conv2 activation (B, 25, 128)."""
    N = w.shape[2]
    cost = pl.CostEstimate(
        flops=2 * batch * 25 * CONV2_EXT * C1_PAD * N,
        transcendentals=0,
        bytes_accessed=(batch * CONV2_PAD_ROWS * C1_PAD * 2
                        + 25 * C1_PAD * N * 2 + batch * 25 * N * 2))
    return pl.pallas_call(
        _conv2_relu_pool_kernel,
        out_shape=jax.ShapeDtypeStruct((batch, 25, N), jnp.bfloat16),
        grid=(batch,),
        in_specs=[
            pl.BlockSpec((CONV2_PAD_ROWS, C1_PAD), lambda i: (i, 0)),   # one image
            pl.BlockSpec((25, C1_PAD, N), lambda i: (0, 0, 0)),         # weights resident
            pl.BlockSpec((1, N), lambda i: (0, 0)),                     # bias resident
        ],
        out_specs=pl.BlockSpec((1, 25, N), lambda i: (i, 0, 0)),
        scratch_shapes=[pltpu.VMEM((CONV2_EXT, N), jnp.float32),
                        pltpu.VMEM((CONV2_EXT // 2, N), jnp.float32)],
        compiler_params=pltpu.CompilerParams(dimension_semantics=("parallel",)),
        cost_estimate=cost,
    )(x_flat, w, b)


def mlp_fused(x, w1, b1, w2, b2, w3, b3, *, block_m=128):
    """fc1 -> relu -> fc2 -> relu -> fc3 fused in one pallas_call (weights resident)."""
    M, K1 = x.shape
    N1, N2, N3 = w1.shape[1], w2.shape[1], w3.shape[1]
    bm = min(block_m, M)          # <=128 keeps the f32 intermediate under the vreg file
    grid = (pl.cdiv(M, bm),)
    cost = pl.CostEstimate(
        flops=2 * M * (K1 * N1 + N1 * N2 + N2 * N3),
        transcendentals=0,
        bytes_accessed=(M * K1 + K1 * N1 + N1 * N2 + N2 * N3) * 2 + M * N3 * 4)
    const = lambda i: (0, 0)
    return pl.pallas_call(
        _mlp_kernel,
        out_shape=jax.ShapeDtypeStruct((M, N3), jnp.float32),
        grid=grid,
        in_specs=[
            pl.BlockSpec((bm, K1), lambda i: (i, 0)),
            pl.BlockSpec((K1, N1), const), pl.BlockSpec((1, N1), const),
            pl.BlockSpec((N1, N2), const), pl.BlockSpec((1, N2), const),
            pl.BlockSpec((N2, N3), const), pl.BlockSpec((1, N3), const),
        ],
        out_specs=pl.BlockSpec((bm, N3), lambda i: (i, 0)),
        compiler_params=pltpu.CompilerParams(dimension_semantics=("parallel",)),
        cost_estimate=cost,
    )(x, w1, b1, w2, b2, w3, b3)


# ----------------------------------------------------------------------------
# Glue: conv1 im2col (tiny, 75-wide) stays at the JAX level
# ----------------------------------------------------------------------------
def _im2col(x_nhwc, k):
    B, H, W, C = x_nhwc.shape
    Ho, Wo = H - k + 1, W - k + 1
    cols = [x_nhwc[:, kh:kh + Ho, kw:kw + Wo, :] for kh in range(k) for kw in range(k)]
    # column index = c*k*k + (kh*k + kw)  -- matches _prep_conv1's row order.
    patches = jnp.stack(cols, axis=-1).reshape(B * Ho * Wo, C * k * k)
    return patches, (B, Ho, Wo)


# ----------------------------------------------------------------------------
# One-time parameter prep (pad to 128 lanes, pre-transpose, permute fc1, bf16)
# Padded channels/features stay exactly zero: zero weight rows/cols + ZERO bias
# (relu and maxpool preserve zero) -- never pad biases with non-zeros.
# ----------------------------------------------------------------------------
def _prep_conv1(w_oihw, b, cout_pad):
    Cout, Cin, KH, KW = w_oihw.shape                            # (90, 3, 5, 5)
    w = jnp.pad(w_oihw, ((0, cout_pad - Cout), (0, 0), (0, 0), (0, 0)))
    w2d = w.reshape(cout_pad, Cin * KH * KW).T.astype(jnp.bfloat16)   # (75, 128)
    b2d = jnp.pad(b, (0, cout_pad - Cout)).reshape(1, cout_pad).astype(jnp.float32)
    return w2d, b2d


def _prep_conv2(w_oihw, b, cin_pad, cout_pad):
    Cout, Cin, KH, KW = w_oihw.shape                            # (100, 90, 5, 5)
    w = jnp.pad(w_oihw, ((0, cout_pad - Cout), (0, cin_pad - Cin), (0, 0), (0, 0)))
    w = jnp.transpose(w, (2, 3, 1, 0))                          # (kh, kw, cin, cout)
    w = w.reshape(KH * KW, cin_pad, cout_pad).astype(jnp.bfloat16)    # (25, 128, 128)
    b2d = jnp.pad(b, (0, cout_pad - Cout)).reshape(1, cout_pad).astype(jnp.float32)
    return w, b2d


def _prep_fc(w, b, in_pad, out_pad):
    out_f, in_f = w.shape
    wp = jnp.pad(w.T, ((0, in_pad - in_f), (0, out_pad - out_f))).astype(jnp.bfloat16)
    bp = jnp.pad(b, (0, out_pad - out_f)).reshape(1, out_pad).astype(jnp.float32)
    return wp, bp


def prepare_params(params):
    c1w, c1b = _prep_conv1(params["conv1_w"], params["conv1_b"], C1_PAD)
    c2w, c2b = _prep_conv2(params["conv2_w"], params["conv2_b"], C1_PAD, C2_PAD)
    # fc1: torch flatten order is NCHW (c,h,w); our features are (h,w,c) with a
    # padded C, so permute the weight columns once here (zero runtime cost).
    w = params["fc1_w"].reshape(200, 100, 5, 5)                 # (n, c, h, w)
    w = jnp.transpose(w, (2, 3, 1, 0))                          # (h, w, c, n)
    w = jnp.pad(w, ((0, 0), (0, 0), (0, C2_PAD - 100), (0, F_PAD - 200)))
    f1w = w.reshape(5 * 5 * C2_PAD, F_PAD).astype(jnp.bfloat16)
    f1b = jnp.pad(params["fc1_b"], (0, F_PAD - 200)).reshape(1, F_PAD).astype(jnp.float32)
    f2w, f2b = _prep_fc(params["fc2_w"], params["fc2_b"], F_PAD, F_PAD)
    f3w, f3b = _prep_fc(params["fc3_w"], params["fc3_b"], F_PAD, F3_PAD)
    return dict(conv1_w=c1w, conv1_b=c1b, conv2_w=c2w, conv2_b=c2b,
                fc1_w=f1w, fc1_b=f1b, fc2_w=f2w, fc2_b=f2b, fc3_w=f3w, fc3_b=f3b)


# ----------------------------------------------------------------------------
# Full forward pass (matches the PyTorch Net semantics for 3x32x32 inputs)
# ----------------------------------------------------------------------------
def net_forward(pp, x_nchw):
    B = x_nchw.shape[0]
    assert x_nchw.shape[1:] == (3, 32, 32)
    x = jnp.transpose(x_nchw, (0, 2, 3, 1)).astype(jnp.bfloat16)       # NHWC bf16
    # conv1 + relu + pool (fused): patches are small (75 cols), built by XLA.
    patches, _ = _im2col(x, 5)                                         # (B*784, 75)
    p1 = conv1_relu_pool(patches, pp["conv1_w"], pp["conv1_b"])        # (2B, 98, 128)
    p1 = p1.reshape(B, 196, C1_PAD)                                    # (B, 14*14, 128)
    # Zero-pad each image's flat rows 196 -> 256 so the in-kernel shifted matmul
    # can read row p + tap for every extended position p (tiny HBM copy).
    xp = jnp.pad(p1, ((0, 0), (0, CONV2_PAD_ROWS - 196), (0, 0)))
    xp = xp.reshape(B * CONV2_PAD_ROWS, C1_PAD)
    # conv2 + relu + pool (fused, no HBM im2col).
    p2 = conv2_relu_pool(xp, pp["conv2_w"], pp["conv2_b"], B)          # (B, 25, 128)
    feats = p2.reshape(B, 25 * C2_PAD)                                 # (B, 3200)
    logits = mlp_fused(feats, pp["fc1_w"], pp["fc1_b"], pp["fc2_w"], pp["fc2_b"],
                       pp["fc3_w"], pp["fc3_b"])                       # (B, 128) f32
    return logits[:, :10]


def init_params(key):
    """Deterministic synthetic init (PyTorch-style uniform bounds)."""
    ks = jax.random.split(key, 10)

    def u(k, shape, fan_in):
        bound = 1.0 / (fan_in ** 0.5)
        return jax.random.uniform(k, shape, jnp.float32, -bound, bound)

    return {
        "conv1_w": u(ks[0], (90, 3, 5, 5), 3 * 5 * 5),
        "conv1_b": u(ks[1], (90,), 3 * 5 * 5),
        "conv2_w": u(ks[2], (100, 90, 5, 5), 90 * 5 * 5),
        "conv2_b": u(ks[3], (100,), 90 * 5 * 5),
        "fc1_w": u(ks[4], (200, 100 * 5 * 5), 100 * 5 * 5),
        "fc1_b": u(ks[5], (200,), 100 * 5 * 5),
        "fc2_w": u(ks[6], (200, 200), 200),
        "fc2_b": u(ks[7], (200,), 200),
        "fc3_w": u(ks[8], (10, 200), 200),
        "fc3_b": u(ks[9], (10,), 200),
    }


if __name__ == "__main__":
    key = jax.random.PRNGKey(0)
    pkey, xkey = jax.random.split(key)
    params = init_params(pkey)
    prepped = prepare_params(params)   # one-time layout plumbing, outside the hot path

    # Input must be 32x32 so that flatten yields 100*5*5 features (small batch).
    x = jax.random.normal(xkey, (4, 3, 32, 32), jnp.float32)

    fwd = jax.jit(net_forward)
    out = jax.block_until_ready(fwd(prepped, x))
    assert out.shape == (4, 10), out.shape

    # Reference: same math in plain JAX with the ORIGINAL (unpadded, torch-layout)
    # weights, bf16 matmul operands + f32 accumulate.  Validates channel padding,
    # the shifted-matmul conv2, the fused pooling and the fc1 column permutation.
    def ref_forward(params, x_nchw):
        xr = jnp.transpose(x_nchw, (0, 2, 3, 1)).astype(jnp.bfloat16)
        for wname, bname in (("conv1_w", "conv1_b"), ("conv2_w", "conv2_b")):
            w, b = params[wname], params[bname]
            Cout = w.shape[0]
            p, (B, Ho, Wo) = _im2col(xr, 5)
            y = jnp.dot(p, w.reshape(Cout, -1).T.astype(jnp.bfloat16),
                        preferred_element_type=jnp.float32) + b
            y = jnp.maximum(y, 0.0).reshape(B, Ho, Wo, Cout)
            y = y.reshape(B, Ho // 2, 2, Wo // 2, 2, Cout).max(axis=(2, 4))
            xr = y.astype(jnp.bfloat16)
        B = xr.shape[0]
        h = jnp.transpose(xr, (0, 3, 1, 2)).reshape(B, -1)   # torch NCHW flatten order
        h = jnp.dot(h, params["fc1_w"].T.astype(jnp.bfloat16),
                    preferred_element_type=jnp.float32) + params["fc1_b"]
        h = jnp.maximum(h, 0.0).astype(jnp.bfloat16)
        h = jnp.dot(h, params["fc2_w"].T.astype(jnp.bfloat16),
                    preferred_element_type=jnp.float32) + params["fc2_b"]
        h = jnp.maximum(h, 0.0).astype(jnp.bfloat16)
        return jnp.dot(h, params["fc3_w"].T.astype(jnp.bfloat16),
                       preferred_element_type=jnp.float32) + params["fc3_b"]

    ref = jax.block_until_ready(ref_forward(params, x))
    assert jnp.allclose(out, ref, rtol=2e-2, atol=2e-2), \
        float(jnp.max(jnp.abs(out - ref)))

    print("KERNEL_OK")
</pallas_src>

<mosaic_0001>
module attributes {stable_mosaic.version = 11 : i64} {
  func.func @_conv1_relu_pool_kernel(%arg0: i32, %arg1: memref<392x75xbf16, #tpu.memory_space<vmem>>, %arg2: memref<75x128xbf16, #tpu.memory_space<vmem>>, %arg3: memref<1x128xf32, #tpu.memory_space<vmem>>, %arg4: memref<1x98x128xbf16, #tpu.memory_space<vmem>>, %arg5: memref<392x128xf32, #tpu.memory_space<vmem>>, %arg6: memref<196x128xf32, #tpu.memory_space<vmem>>) attributes {dimension_semantics = [#tpu.dimension_semantics<parallel>], iteration_bounds = array<i64: 8>, scalar_prefetch = 0 : i64, scratch_operands = 2 : i64, tpu.core_type = #tpu.core_type<tc>, window_params = [{transform_indices = @transform_0, window_bounds = array<i64: 392, 75>}, {pipeline_mode = #tpu.pipeline_mode<synchronous>, transform_indices = @transform_1, window_bounds = array<i64: 75, 128>}, {pipeline_mode = #tpu.pipeline_mode<synchronous>, transform_indices = @transform_2, window_bounds = array<i64: 1, 128>}, {transform_indices = @transform_3, window_bounds = array<i64: 1, 98, 128>}]} {
    %c0 = arith.constant 0 : index
    %c0_0 = arith.constant 0 : index
    %0 = vector.load %arg1[%c0, %c0_0] : memref<392x75xbf16, #tpu.memory_space<vmem>>, vector<392x75xbf16>
    %c0_1 = arith.constant 0 : index
    %c0_2 = arith.constant 0 : index
    %1 = vector.load %arg2[%c0_1, %c0_2] : memref<75x128xbf16, #tpu.memory_space<vmem>>, vector<75x128xbf16>
    %cst = arith.constant dense<0.000000e+00> : vector<392x128xf32>
    %2 = tpu.matmul %0, %1, %cst {dimension_numbers = #tpu.dot_dimension_numbers<[1], [0], [0], [1], [0, 0, 1, 1], [], []>} : vector<392x75xbf16>, vector<75x128xbf16>, vector<392x128xf32> -> vector<392x128xf32>
    %c0_3 = arith.constant 0 : index
    %c0_4 = arith.constant 0 : index
    %3 = vector.load %arg3[%c0_3, %c0_4] : memref<1x128xf32, #tpu.memory_space<vmem>>, vector<1x128xf32>
    %4 = vector.broadcast %3 : vector<1x128xf32> to vector<392x128xf32>
    %5 = arith.addf %2, %4 : vector<392x128xf32>
    %cst_5 = arith.constant 0.000000e+00 : f32
    %6 = vector.broadcast %cst_5 : f32 to vector<392x128xf32>
    %7 = arith.maximumf %5, %6 : vector<392x128xf32>
    %c0_6 = arith.constant 0 : index
    %c0_7 = arith.constant 0 : index
    %8 = vector.load %arg5[%c0_6, %c0_7] : memref<392x128xf32, #tpu.memory_space<vmem>>, vector<392x128xf32>
    tpu.vector_store %arg5[%c0_6, %c0_7], %7 {strides = array<i32>} : memref<392x128xf32, #tpu.memory_space<vmem>>, vector<392x128xf32>,
    %c0_8 = arith.constant 0 : index
    %c0_9 = arith.constant 0 : index
    %9 = tpu.strided_load %arg5[%c0_8, %c0_9] {strides = array<i32: 2, 1>} : memref<392x128xf32, #tpu.memory_space<vmem>>, vector<196x128xf32>
    %c1 = arith.constant 1 : index
    %c0_10 = arith.constant 0 : index
    %10 = tpu.strided_load %arg5[%c1, %c0_10] {strides = array<i32: 2, 1>} : memref<392x128xf32, #tpu.memory_space<vmem>>, vector<196x128xf32>
    %11 = arith.maximumf %9, %10 : vector<196x128xf32>
    %c0_11 = arith.constant 0 : index
    %c0_12 = arith.constant 0 : index
    %12 = vector.load %arg6[%c0_11, %c0_12] : memref<196x128xf32, #tpu.memory_space<vmem>>, vector<196x128xf32>
    tpu.vector_store %arg6[%c0_11, %c0_12], %11 {strides = array<i32>} : memref<196x128xf32, #tpu.memory_space<vmem>>, vector<196x128xf32>,
    %c0_13 = arith.constant 0 : index
    %c0_14 = arith.constant 0 : index
    %13 = vector.load %arg6[%c0_13, %c0_14] : memref<196x128xf32, #tpu.memory_space<vmem>>, vector<14x128xf32>
    %c14 = arith.constant 14 : index
    %c0_15 = arith.constant 0 : index
    %14 = vector.load %arg6[%c14, %c0_15] : memref<196x128xf32, #tpu.memory_space<vmem>>, vector<14x128xf32>
    %15 = arith.maximumf %13, %14 : vector<14x128xf32>
    %16 = arith.truncf %15 : vector<14x128xf32> to vector<14x128xbf16>
    %c0_16 = arith.constant 0 : index
    %c0_17 = arith.constant 0 : index
    %c0_18 = arith.constant 0 : index
    %17 = vector.load %arg4[%c0_16, %c0_17, %c0_18] : memref<1x98x128xbf16, #tpu.memory_space<vmem>>, vector<1x14x128xbf16>
    %18 = vector.shape_cast %17 : vector<1x14x128xbf16> to vector<14x128xbf16>
    %19 = vector.shape_cast %16 : vector<14x128xbf16> to vector<1x14x128xbf16>
    tpu.vector_store %arg4[%c0_16, %c0_17, %c0_18], %19 {strides = array<i32>} : memref<1x98x128xbf16, #tpu.memory_space<vmem>>, vector<1x14x128xbf16>,
    %c28 = arith.constant 28 : index
    %c0_19 = arith.constant 0 : index
    %20 = vector.load %arg6[%c28, %c0_19] : memref<196x128xf32, #tpu.memory_space<vmem>>, vector<14x128xf32>
    %c42 = arith.constant 42 : index
    %c0_20 = arith.constant 0 : index
    %21 = vector.load %arg6[%c42, %c0_20] : memref<196x128xf32, #tpu.memory_space<vmem>>, vector<14x128xf32>
    %22 = arith.maximumf %20, %21 : vector<14x128xf32>
    %23 = arith.truncf %22 : vector<14x128xf32> to vector<14x128xbf16>
    %c0_21 = arith.constant 0 : index
    %c14_22 = arith.constant 14 : index
    %c0_23 = arith.constant 0 : index
    %24 = vector.load %arg4[%c0_21, %c14_22, %c0_23] : memref<1x98x128xbf16, #tpu.memory_space<vmem>>, vector<1x14x128xbf16>
    %25 = vector.shape_cast %24 : vector<1x14x128xbf16> to vector<14x128xbf16>
    %26 = vector.shape_cast %23 : vector<14x128xbf16> to vector<1x14x128xbf16>
    tpu.vector_store %arg4[%c0_21, %c14_22, %c0_23], %26 {strides = array<i32>} : memref<1x98x128xbf16, #tpu.memory_space<vmem>>, vector<1x14x128xbf16>,
    %c56 = arith.constant 56 : index
    %c0_24 = arith.constant 0 : index
    %27 = vector.load %arg6[%c56, %c0_24] : memref<196x128xf32, #tpu.memory_space<vmem>>, vector<14x128xf32>
    %c70 = arith.constant 70 : index
    %c0_25 = arith.constant 0 : index
    %28 = vector.load %arg6[%c70, %c0_25] : memref<196x128xf32, #tpu.memory_space<vmem>>, vector<14x128xf32>
    %29 = arith.maximumf %27, %28 : vector<14x128xf32>
    %30 = arith.truncf %29 : vector<14x128xf32> to vector<14x128xbf16>
    %c0_26 = arith.constant 0 : index
    %c28_27 = arith.constant 28 : index
    %c0_28 = arith.constant 0 : index
    %31 = vector.load %arg4[%c0_26, %c28_27, %c0_28] : memref<1x98x128xbf16, #tpu.memory_space<vmem>>, vector<1x14x128xbf16>
    %32 = vector.shape_cast %31 : vector<1x14x128xbf16> to vector<14x128xbf16>
    %33 = vector.shape_cast %30 : vector<14x128xbf16> to vector<1x14x128xbf16>
    tpu.vector_store %arg4[%c0_26, %c28_27, %c0_28], %33 {strides = array<i32>} : memref<1x98x128xbf16, #tpu.memory_space<vmem>>, vector<1x14x128xbf16>,
    %c84 = arith.constant 84 : index
    %c0_29 = arith.constant 0 : index
    %34 = vector.load %arg6[%c84, %c0_29] : memref<196x128xf32, #tpu.memory_space<vmem>>, vector<14x128xf32>
    %c98 = arith.constant 98 : index
    %c0_30 = arith.constant 0 : index
    %35 = vector.load %arg6[%c98, %c0_30] : memref<196x128xf32, #tpu.memory_space<vmem>>, vector<14x128xf32>
    %36 = arith.maximumf %34, %35 : vector<14x128xf32>
    %37 = arith.truncf %36 : vector<14x128xf32> to vector<14x128xbf16>
    %c0_31 = arith.constant 0 : index
    %c42_32 = arith.constant 42 : index
    %c0_33 = arith.constant 0 : index
    %38 = vector.load %arg4[%c0_31, %c42_32, %c0_33] : memref<1x98x128xbf16, #tpu.memory_space<vmem>>, vector<1x14x128xbf16>
    %39 = vector.shape_cast %38 : vector<1x14x128xbf16> to vector<14x128xbf16>
    %40 = vector.shape_cast %37 : vector<14x128xbf16> to vector<1x14x128xbf16>
    tpu.vector_store %arg4[%c0_31, %c42_32, %c0_33], %40 {strides = array<i32>} : memref<1x98x128xbf16, #tpu.memory_space<vmem>>, vector<1x14x128xbf16>,
    %c112 = arith.constant 112 : index
    %c0_34 = arith.constant 0 : index
    %41 = vector.load %arg6[%c112, %c0_34] : memref<196x128xf32, #tpu.memory_space<vmem>>, vector<14x128xf32>
    %c126 = arith.constant 126 : index
    %c0_35 = arith.constant 0 : index
    %42 = vector.load %arg6[%c126, %c0_35] : memref<196x128xf32, #tpu.memory_space<vmem>>, vector<14x128xf32>
    %43 = arith.maximumf %41, %42 : vector<14x128xf32>
    %44 = arith.truncf %43 : vector<14x128xf32> to vector<14x128xbf16>
    %c0_36 = arith.constant 0 : index
    %c56_37 = arith.constant 56 : index
    %c0_38 = arith.constant 0 : index
    %45 = vector.load %arg4[%c0_36, %c56_37, %c0_38] : memref<1x98x128xbf16, #tpu.memory_space<vmem>>, vector<1x14x128xbf16>
    %46 = vector.shape_cast %45 : vector<1x14x128xbf16> to vector<14x128xbf16>
    %47 = vector.shape_cast %44 : vector<14x128xbf16> to vector<1x14x128xbf16>
    tpu.vector_store %arg4[%c0_36, %c56_37, %c0_38], %47 {strides = array<i32>} : memref<1x98x128xbf16, #tpu.memory_space<vmem>>, vector<1x14x128xbf16>,
    %c140 = arith.constant 140 : index
    %c0_39 = arith.constant 0 : index
    %48 = vector.load %arg6[%c140, %c0_39] : memref<196x128xf32, #tpu.memory_space<vmem>>, vector<14x128xf32>
    %c154 = arith.constant 154 : index
    %c0_40 = arith.constant 0 : index
    %49 = vector.load %arg6[%c154, %c0_40] : memref<196x128xf32, #tpu.memory_space<vmem>>, vector<14x128xf32>
    %50 = arith.maximumf %48, %49 : vector<14x128xf32>
    %51 = arith.truncf %50 : vector<14x128xf32> to vector<14x128xbf16>
    %c0_41 = arith.constant 0 : index
    %c70_42 = arith.constant 70 : index
    %c0_43 = arith.constant 0 : index
    %52 = vector.load %arg4[%c0_41, %c70_42, %c0_43] : memref<1x98x128xbf16, #tpu.memory_space<vmem>>, vector<1x14x128xbf16>
    %53 = vector.shape_cast %52 : vector<1x14x128xbf16> to vector<14x128xbf16>
    %54 = vector.shape_cast %51 : vector<14x128xbf16> to vector<1x14x128xbf16>
    tpu.vector_store %arg4[%c0_41, %c70_42, %c0_43], %54 {strides = array<i32>} : memref<1x98x128xbf16, #tpu.memory_space<vmem>>, vector<1x14x128xbf16>,
    %c168 = arith.constant 168 : index
    %c0_44 = arith.constant 0 : index
    %55 = vector.load %arg6[%c168, %c0_44] : memref<196x128xf32, #tpu.memory_space<vmem>>, vector<14x128xf32>
    %c182 = arith.constant 182 : index
    %c0_45 = arith.constant 0 : index
    %56 = vector.load %arg6[%c182, %c0_45] : memref<196x128xf32, #tpu.memory_space<vmem>>, vector<14x128xf32>
    %57 = arith.maximumf %55, %56 : vector<14x128xf32>
    %58 = arith.truncf %57 : vector<14x128xf32> to vector<14x128xbf16>
    %c0_46 = arith.constant 0 : index
    %c84_47 = arith.constant 84 : index
    %c0_48 = arith.constant 0 : index
    %59 = vector.load %arg4[%c0_46, %c84_47, %c0_48] : memref<1x98x128xbf16, #tpu.memory_space<vmem>>, vector<1x14x128xbf16>
    %60 = vector.shape_cast %59 : vector<1x14x128xbf16> to vector<14x128xbf16>
    %61 = vector.shape_cast %58 : vector<14x128xbf16> to vector<1x14x128xbf16>
    tpu.vector_store %arg4[%c0_46, %c84_47, %c0_48], %61 {strides = array<i32>} : memref<1x98x128xbf16, #tpu.memory_space<vmem>>, vector<1x14x128xbf16>,
    return
  }
  func.func @transform_0(%arg0: i32) -> (i32, i32) {
    %c0_i32 = arith.constant 0 : i32
    %c0_i32_0 = arith.constant 0 : i32
    return %arg0, %c0_i32 : i32, i32
  }
  func.func @transform_1(%arg0: i32) -> (i32, i32) {
    %c0_i32 = arith.constant 0 : i32
    %c0_i32_0 = arith.constant 0 : i32
    %c0_i32_1 = arith.constant 0 : i32
    return %c0_i32, %c0_i32_0 : i32, i32
  }
  func.func @transform_2(%arg0: i32) -> (i32, i32) {
    %c0_i32 = arith.constant 0 : i32
    %c0_i32_0 = arith.constant 0 : i32
    %c0_i32_1 = arith.constant 0 : i32
    return %c0_i32, %c0_i32_0 : i32, i32
  }
  func.func @transform_3(%arg0: i32) -> (i32, i32, i32) {
    %c0_i32 = arith.constant 0 : i32
    %c0_i32_0 = arith.constant 0 : i32
    %c0_i32_1 = arith.constant 0 : i32
    return %arg0, %c0_i32, %c0_i32_0 : i32, i32, i32
  }
}

module attributes {stable_mosaic.version = 11 : i64} {
  func.func @_conv2_relu_pool_kernel(%arg0: i32, %arg1: memref<256x128xbf16, #tpu.memory_space<vmem>>, %arg2: memref<25x128x128xbf16, #tpu.memory_space<vmem>>, %arg3: memref<1x128xf32, #tpu.memory_space<vmem>>, %arg4: memref<1x25x128xbf16, #tpu.memory_space<vmem>>, %arg5: memref<196x128xf32, #tpu.memory_space<vmem>>, %arg6: memref<98x128xf32, #tpu.memory_space<vmem>>) attributes {dimension_semantics = [#tpu.dimension_semantics<parallel>], iteration_bounds = array<i64: 4>, scalar_prefetch = 0 : i64, scratch_operands = 2 : i64, tpu.core_type = #tpu.core_type<tc>, window_params = [{transform_indices = @transform_0, window_bounds = array<i64: 256, 128>}, {pipeline_mode = #tpu.pipeline_mode<synchronous>, transform_indices = @transform_1, window_bounds = array<i64: 25, 128, 128>}, {pipeline_mode = #tpu.pipeline_mode<synchronous>, transform_indices = @transform_2, window_bounds = array<i64: 1, 128>}, {transform_indices = @transform_3, window_bounds = array<i64: 1, 25, 128>}]} {
    %cst = arith.constant 0.000000e+00 : f32
    %0 = vector.broadcast %cst : f32 to vector<196x128xf32>
    %c0 = arith.constant 0 : index
    %c0_0 = arith.constant 0 : index
    %1 = vector.load %arg1[%c0, %c0_0] : memref<256x128xbf16, #tpu.memory_space<vmem>>, vector<196x128xbf16>
    %c0_1 = arith.constant 0 : index
    %c0_2 = arith.constant 0 : index
    %c0_3 = arith.constant 0 : index
    %2 = vector.load %arg2[%c0_1, %c0_2, %c0_3] : memref<25x128x128xbf16, #tpu.memory_space<vmem>>, vector<1x128x128xbf16>
    %3 = vector.shape_cast %2 : vector<1x128x128xbf16> to vector<128x128xbf16>
    %cst_4 = arith.constant dense<0.000000e+00> : vector<196x128xf32>
    %4 = tpu.matmul %1, %3, %cst_4 {dimension_numbers = #tpu.dot_dimension_numbers<[1], [0], [0], [1], [0, 0, 1, 1], [], []>} : vector<196x128xbf16>, vector<128x128xbf16>, vector<196x128xf32> -> vector<196x128xf32>
    %5 = arith.addf %0, %4 : vector<196x128xf32>
    %c1 = arith.constant 1 : index
    %c0_5 = arith.constant 0 : index
    %6 = vector.load %arg1[%c1, %c0_5] : memref<256x128xbf16, #tpu.memory_space<vmem>>, vector<196x128xbf16>
    %c1_6 = arith.constant 1 : index
    %c0_7 = arith.constant 0 : index
    %c0_8 = arith.constant 0 : index
    %7 = vector.load %arg2[%c1_6, %c0_7, %c0_8] : memref<25x128x128xbf16, #tpu.memory_space<vmem>>, vector<1x128x128xbf16>
    %8 = vector.shape_cast %7 : vector<1x128x128xbf16> to vector<128x128xbf16>
    %cst_9 = arith.constant dense<0.000000e+00> : vector<196x128xf32>
    %9 = tpu.matmul %6, %8, %cst_9 {dimension_numbers = #tpu.dot_dimension_numbers<[1], [0], [0], [1], [0, 0, 1, 1], [], []>} : vector<196x128xbf16>, vector<128x128xbf16>, vector<196x128xf32> -> vector<196x128xf32>
    %10 = arith.addf %5, %9 : vector<196x128xf32>
    %c2 = arith.constant 2 : index
    %c0_10 = arith.constant 0 : index
    %11 = vector.load %arg1[%c2, %c0_10] : memref<256x128xbf16, #tpu.memory_space<vmem>>, vector<196x128xbf16>
    %c2_11 = arith.constant 2 : index
    %c0_12 = arith.constant 0 : index
    %c0_13 = arith.constant 0 : index
    %12 = vector.load %arg2[%c2_11, %c0_12, %c0_13] : memref<25x128x128xbf16, #tpu.memory_space<vmem>>, vector<1x128x128xbf16>
    %13 = vector.shape_cast %12 : vector<1x128x128xbf16> to vector<128x128xbf16>
    %cst_14 = arith.constant dense<0.000000e+00> : vector<196x128xf32>
    %14 = tpu.matmul %11, %13, %cst_14 {dimension_numbers = #tpu.dot_dimension_numbers<[1], [0], [0], [1], [0, 0, 1, 1], [], []>} : vector<196x128xbf16>, vector<128x128xbf16>, vector<196x128xf32> -> vector<196x128xf32>
    %15 = arith.addf %10, %14 : vector<196x128xf32>
    %c3 = arith.constant 3 : index
    %c0_15 = arith.constant 0 : index
    %16 = vector.load %arg1[%c3, %c0_15] : memref<256x128xbf16, #tpu.memory_space<vmem>>, vector<196x128xbf16>
    %c3_16 = arith.constant 3 : index
    %c0_17 = arith.constant 0 : index
    %c0_18 = arith.constant 0 : index
    %17 = vector.load %arg2[%c3_16, %c0_17, %c0_18] : memref<25x128x128xbf16, #tpu.memory_space<vmem>>, vector<1x128x128xbf16>
    %18 = vector.shape_cast %17 : vector<1x128x128xbf16> to vector<128x128xbf16>
    %cst_19 = arith.constant dense<0.000000e+00> : vector<196x128xf32>
    %19 = tpu.matmul %16, %18, %cst_19 {dimension_numbers = #tpu.dot_dimension_numbers<[1], [0], [0], [1], [0, 0, 1, 1], [], []>} : vector<196x128xbf16>, vector<128x128xbf16>, vector<196x128xf32> -> vector<196x128xf32>
    %20 = arith.addf %15, %19 : vector<196x128xf32>
    %c4 = arith.constant 4 : index
    %c0_20 = arith.constant 0 : index
    %21 = vector.load %arg1[%c4, %c0_20] : memref<256x128xbf16, #tpu.memory_space<vmem>>, vector<196x128xbf16>
    %c4_21 = arith.constant 4 : index
    %c0_22 = arith.constant 0 : index
    %c0_23 = arith.constant 0 : index
    %22 = vector.load %arg2[%c4_21, %c0_22, %c0_23] : memref<25x128x128xbf16, #tpu.memory_space<vmem>>, vector<1x128x128xbf16>
    %23 = vector.shape_cast %22 : vector<1x128x128xbf16> to vector<128x128xbf16>
    %cst_24 = arith.constant dense<0.000000e+00> : vector<196x128xf32>
    %24 = tpu.matmul %21, %23, %cst_24 {dimension_numbers = #tpu.dot_dimension_numbers<[1], [0], [0], [1], [0, 0, 1, 1], [], []>} : vector<196x128xbf16>, vector<128x128xbf16>, vector<196x128xf32> -> vector<196x128xf32>
    %25 = arith.addf %20, %24 : vector<196x128xf32>
    %c14 = arith.constant 14 : index
    %c0_25 = arith.constant 0 : index
    %26 = vector.load %arg1[%c14, %c0_25] : memref<256x128xbf16, #tpu.memory_space<vmem>>, vector<196x128xbf16>
    %c5 = arith.constant 5 : index
    %c0_26 = arith.constant 0 : index
    %c0_27 = arith.constant 0 : index
    %27 = vector.load %arg2[%c5, %c0_26, %c0_27] : memref<25x128x128xbf16, #tpu.memory_space<vmem>>, vector<1x128x128xbf16>
    %28 = vector.shape_cast %27 : vector<1x128x128xbf16> to vector<128x128xbf16>
    %cst_28 = arith.constant dense<0.000000e+00> : vector<196x128xf32>
    %29 = tpu.matmul %26, %28, %cst_28 {dimension_numbers = #tpu.dot_dimension_numbers<[1], [0], [0], [1], [0, 0, 1, 1], [], []>} : vector<196x128xbf16>, vector<128x128xbf16>, vector<196x128xf32> -> vector<196x128xf32>
    %30 = arith.addf %25, %29 : vector<196x128xf32>
    %c15 = arith.constant 15 : index
    %c0_29 = arith.constant 0 : index
    %31 = vector.load %arg1[%c15, %c0_29] : memref<256x128xbf16, #tpu.memory_space<vmem>>, vector<196x128xbf16>
    %c6 = arith.constant 6 : index
    %c0_30 = arith.constant 0 : index
    %c0_31 = arith.constant 0 : index
    %32 = vector.load %arg2[%c6, %c0_30, %c0_31] : memref<25x128x128xbf16, #tpu.memory_space<vmem>>, vector<1x128x128xbf16>
    %33 = vector.shape_cast %32 : vector<1x128x128xbf16> to vector<128x128xbf16>
    %cst_32 = arith.constant dense<0.000000e+00> : vector<196x128xf32>
    %34 = tpu.matmul %31, %33, %cst_32 {dimension_numbers = #tpu.dot_dimension_numbers<[1], [0], [0], [1], [0, 0, 1, 1], [], []>} : vector<196x128xbf16>, vector<128x128xbf16>, vector<196x128xf32> -> vector<196x128xf32>
    %35 = arith.addf %30, %34 : vector<196x128xf32>
    %c16 = arith.constant 16 : index
    %c0_33 = arith.constant 0 : index
    %36 = vector.load %arg1[%c16, %c0_33] : memref<256x128xbf16, #tpu.memory_space<vmem>>, vector<196x128xbf16>
    %c7 = arith.constant 7 : index
    %c0_34 = arith.constant 0 : index
    %c0_35 = arith.constant 0 : index
    %37 = vector.load %arg2[%c7, %c0_34, %c0_35] : memref<25x128x128xbf16, #tpu.memory_space<vmem>>, vector<1x128x128xbf16>
    %38 = vector.shape_cast %37 : vector<1x128x128xbf16> to vector<128x128xbf16>
    %cst_36 = arith.constant dense<0.000000e+00> : vector<196x128xf32>
    %39 = tpu.matmul %36, %38, %cst_36 {dimension_numbers = #tpu.dot_dimension_numbers<[1], [0], [0], [1], [0, 0, 1, 1], [], []>} : vector<196x128xbf16>, vector<128x128xbf16>, vector<196x128xf32> -> vector<196x128xf32>
    %40 = arith.addf %35, %39 : vector<196x128xf32>
    %c17 = arith.constant 17 : index
    %c0_37 = arith.constant 0 : index
    %41 = vector.load %arg1[%c17, %c0_37] : memref<256x128xbf16, #tpu.memory_space<vmem>>, vector<196x128xbf16>
    %c8 = arith.constant 8 : index
    %c0_38 = arith.constant 0 : index
    %c0_39 = arith.constant 0 : index
    %42 = vector.load %arg2[%c8, %c0_38, %c0_39] : memref<25x128x128xbf16, #tpu.memory_space<vmem>>, vector<1x128x128xbf16>
    %43 = vector.shape_cast %42 : vector<1x128x128xbf16> to vector<128x128xbf16>
    %cst_40 = arith.constant dense<0.000000e+00> : vector<196x128xf32>
    %44 = tpu.matmul %41, %43, %cst_40 {dimension_numbers = #tpu.dot_dimension_numbers<[1], [0], [0], [1], [0, 0, 1, 1], [], []>} : vector<196x128xbf16>, vector<128x128xbf16>, vector<196x128xf32> -> vector<196x128xf32>
    %45 = arith.addf %40, %44 : vector<196x128xf32>
    %c18 = arith.constant 18 : index
    %c0_41 = arith.constant 0 : index
    %46 = vector.load %arg1[%c18, %c0_41] : memref<256x128xbf16, #tpu.memory_space<vmem>>, vector<196x128xbf16>
    %c9 = arith.constant 9 : index
    %c0_42 = arith.constant 0 : index
    %c0_43 = arith.constant 0 : index
    %47 = vector.load %arg2[%c9, %c0_42, %c0_43] : memref<25x128x128xbf16, #tpu.memory_space<vmem>>, vector<1x128x128xbf16>
    %48 = vector.shape_cast %47 : vector<1x128x128xbf16> to vector<128x128xbf16>
    %cst_44 = arith.constant dense<0.000000e+00> : vector<196x128xf32>
    %49 = tpu.matmul %46, %48, %cst_44 {dimension_numbers = #tpu.dot_dimension_numbers<[1], [0], [0], [1], [0, 0, 1, 1], [], []>} : vector<196x128xbf16>, vector<128x128xbf16>, vector<196x128xf32> -> vector<196x128xf32>
    %50 = arith.addf %45, %49 : vector<196x128xf32>
    %c28 = arith.constant 28 : index
    %c0_45 = arith.constant 0 : index
    %51 = vector.load %arg1[%c28, %c0_45] : memref<256x128xbf16, #tpu.memory_space<vmem>>, vector<196x128xbf16>
    %c10 = arith.constant 10 : index
    %c0_46 = arith.constant 0 : index
    %c0_47 = arith.constant 0 : index
    %52 = vector.load %arg2[%c10, %c0_46, %c0_47] : memref<25x128x128xbf16, #tpu.memory_space<vmem>>, vector<1x128x128xbf16>
    %53 = vector.shape_cast %52 : vector<1x128x128xbf16> to vector<128x128xbf16>
    %cst_48 = arith.constant dense<0.000000e+00> : vector<196x128xf32>
    %54 = tpu.matmul %51, %53, %cst_48 {dimension_numbers = #tpu.dot_dimension_numbers<[1], [0], [0], [1], [0, 0, 1, 1], [], []>} : vector<196x128xbf16>, vector<128x128xbf16>, vector<196x128xf32> -> vector<196x128xf32>
    %55 = arith.addf %50, %54 : vector<196x128xf32>
    %c29 = arith.constant 29 : index
    %c0_49 = arith.constant 0 : index
    %56 = vector.load %arg1[%c29, %c0_49] : memref<256x128xbf16, #tpu.memory_space<vmem>>, vector<196x128xbf16>
    %c11 = arith.constant 11 : index
    %c0_50 = arith.constant 0 : index
    %c0_51 = arith.constant 0 : index
    %57 = vector.load %arg2[%c11, %c0_50, %c0_51] : memref<25x128x128xbf16, #tpu.memory_space<vmem>>, vector<1x128x128xbf16>
    %58 = vector.shape_cast %57 : vector<1x128x128xbf16> to vector<128x128xbf16>
    %cst_52 = arith.constant dense<0.000000e+00> : vector<196x128xf32>
    %59 = tpu.matmul %56, %58, %cst_52 {dimension_numbers = #tpu.dot_dimension_numbers<[1], [0], [0], [1], [0, 0, 1, 1], [], []>} : vector<196x128xbf16>, vector<128x128xbf16>, vector<196x128xf32> -> vector<196x128xf32>
    %60 = arith.addf %55, %59 : vector<196x128xf32>
    %c30 = arith.constant 30 : index
    %c0_53 = arith.constant 0 : index
    %61 = vector.load %arg1[%c30, %c0_53] : memref<256x128xbf16, #tpu.memory_space<vmem>>, vector<196x128xbf16>
    %c12 = arith.constant 12 : index
    %c0_54 = arith.constant 0 : index
    %c0_55 = arith.constant 0 : index
    %62 = vector.load %arg2[%c12, %c0_54, %c0_55] : memref<25x128x128xbf16, #tpu.memory_space<vmem>>, vector<1x128x128xbf16>
    %63 = vector.shape_cast %62 : vector<1x128x128xbf16> to vector<128x128xbf16>
    %cst_56 = arith.constant dense<0.000000e+00> : vector<196x128xf32>
    %64 = tpu.matmul %61, %63, %cst_56 {dimension_numbers = #tpu.dot_dimension_numbers<[1], [0], [0], [1], [0, 0, 1, 1], [], []>} : vector<196x128xbf16>, vector<128x128xbf16>, vector<196x128xf32> -> vector<196x128xf32>
    %65 = arith.addf %60, %64 : vector<196x128xf32>
    %c31 = arith.constant 31 : index
    %c0_57 = arith.constant 0 : index
    %66 = vector.load %arg1[%c31, %c0_57] : memref<256x128xbf16, #tpu.memory_space<vmem>>, vector<196x128xbf16>
    %c13 = arith.constant 13 : index
    %c0_58 = arith.constant 0 : index
    %c0_59 = arith.constant 0 : index
    %67 = vector.load %arg2[%c13, %c0_58, %c0_59] : memref<25x128x128xbf16, #tpu.memory_space<vmem>>, vector<1x128x128xbf16>
    %68 = vector.shape_cast %67 : vector<1x128x128xbf16> to vector<128x128xbf16>
    %cst_60 = arith.constant dense<0.000000e+00> : vector<196x128xf32>
    %69 = tpu.matmul %66, %68, %cst_60 {dimension_numbers = #tpu.dot_dimension_numbers<[1], [0], [0], [1], [0, 0, 1, 1], [], []>} : vector<196x128xbf16>, vector<128x128xbf16>, vector<196x128xf32> -> vector<196x128xf32>
    %70 = arith.addf %65, %69 : vector<196x128xf32>
    %c32 = arith.constant 32 : index
    %c0_61 = arith.constant 0 : index
    %71 = vector.load %arg1[%c32, %c0_61] : memref<256x128xbf16, #tpu.memory_space<vmem>>, vector<196x128xbf16>
    %c14_62 = arith.constant 14 : index
    %c0_63 = arith.constant 0 : index
    %c0_64 = arith.constant 0 : index
    %72 = vector.load %arg2[%c14_62, %c0_63, %c0_64] : memref<25x128x128xbf16, #tpu.memory_space<vmem>>, vector<1x128x128xbf16>
    %73 = vector.shape_cast %72 : vector<1x128x128xbf16> to vector<128x128xbf16>
    %cst_65 = arith.constant dense<0.000000e+00> : vector<196x128xf32>
    %74 = tpu.matmul %71, %73, %cst_65 {dimension_numbers = #tpu.dot_dimension_numbers<[1], [0], [0], [1], [0, 0, 1, 1], [], []>} : vector<196x128xbf16>, vector<128x128xbf16>, vector<196x128xf32> -> vector<196x128xf32>
    %75 = arith.addf %70, %74 : vector<196x128xf32>
    %c42 = arith.constant 42 : index
    %c0_66 = arith.constant 0 : index
    %76 = vector.load %arg1[%c42, %c0_66] : memref<256x128xbf16, #tpu.memory_space<vmem>>, vector<196x128xbf16>
    %c15_67 = arith.constant 15 : index
    %c0_68 = arith.constant 0 : index
    %c0_69 = arith.constant 0 : index
    %77 = vector.load %arg2[%c15_67, %c0_68, %c0_69] : memref<25x128x128xbf16, #tpu.memory_space<vmem>>, vector<1x128x128xbf16>
    %78 = vector.shape_cast %77 : vector<1x128x128xbf16> to vector<128x128xbf16>
    %cst_70 = arith.constant dense<0.000000e+00> : vector<196x128xf32>
    %79 = tpu.matmul %76, %78, %cst_70 {dimension_numbers = #tpu.dot_dimension_numbers<[1], [0], [0], [1], [0, 0, 1, 1], [], []>} : vector<196x128xbf16>, vector<128x128xbf16>, vector<196x128xf32> -> vector<196x128xf32>
    %80 = arith.addf %75, %79 : vector<196x128xf32>
    %c43 = arith.constant 43 : index
    %c0_71 = arith.constant 0 : index
    %81 = vector.load %arg1[%c43, %c0_71] : memref<256x128xbf16, #tpu.memory_space<vmem>>, vector<196x128xbf16>
    %c16_72 = arith.constant 16 : index
    %c0_73 = arith.constant 0 : index
    %c0_74 = arith.constant 0 : index
    %82 = vector.load %arg2[%c16_72, %c0_73, %c0_74] : memref<25x128x128xbf16, #tpu.memory_space<vmem>>, vector<1x128x128xbf16>
    %83 = vector.shape_cast %82 : vector<1x128x128xbf16> to vector<128x128xbf16>
    %cst_75 = arith.constant dense<0.000000e+00> : vector<196x128xf32>
    %84 = tpu.matmul %81, %83, %cst_75 {dimension_numbers = #tpu.dot_dimension_numbers<[1], [0], [0], [1], [0, 0, 1, 1], [], []>} : vector<196x128xbf16>, vector<128x128xbf16>, vector<196x128xf32> -> vector<196x128xf32>
    %85 = arith.addf %80, %84 : vector<196x128xf32>
    %c44 = arith.constant 44 : index
    %c0_76 = arith.constant 0 : index
    %86 = vector.load %arg1[%c44, %c0_76] : memref<256x128xbf16, #tpu.memory_space<vmem>>, vector<196x128xbf16>
    %c17_77 = arith.constant 17 : index
    %c0_78 = arith.constant 0 : index
    %c0_79 = arith.constant 0 : index
    %87 = vector.load %arg2[%c17_77, %c0_78, %c0_79] : memref<25x128x128xbf16, #tpu.memory_space<vmem>>, vector<1x128x128xbf16>
    %88 = vector.shape_cast %87 : vector<1x128x128xbf16> to vector<128x128xbf16>
    %cst_80 = arith.constant dense<0.000000e+00> : vector<196x128xf32>
    %89 = tpu.matmul %86, %88, %cst_80 {dimension_numbers = #tpu.dot_dimension_numbers<[1], [0], [0], [1], [0, 0, 1, 1], [], []>} : vector<196x128xbf16>, vector<128x128xbf16>, vector<196x128xf32> -> vector<196x128xf32>
    %90 = arith.addf %85, %89 : vector<196x128xf32>
    %c45 = arith.constant 45 : index
    %c0_81 = arith.constant 0 : index
    %91 = vector.load %arg1[%c45, %c0_81] : memref<256x128xbf16, #tpu.memory_space<vmem>>, vector<196x128xbf16>
    %c18_82 = arith.constant 18 : index
    %c0_83 = arith.constant 0 : index
    %c0_84 = arith.constant 0 : index
    %92 = vector.load %arg2[%c18_82, %c0_83, %c0_84] : memref<25x128x128xbf16, #tpu.memory_space<vmem>>, vector<1x128x128xbf16>
    %93 = vector.shape_cast %92 : vector<1x128x128xbf16> to vector<128x128xbf16>
    %cst_85 = arith.constant dense<0.000000e+00> : vector<196x128xf32>
    %94 = tpu.matmul %91, %93, %cst_85 {dimension_numbers = #tpu.dot_dimension_numbers<[1], [0], [0], [1], [0, 0, 1, 1], [], []>} : vector<196x128xbf16>, vector<128x128xbf16>, vector<196x128xf32> -> vector<196x128xf32>
    %95 = arith.addf %90, %94 : vector<196x128xf32>
    %c46 = arith.constant 46 : index
    %c0_86 = arith.constant 0 : index
    %96 = vector.load %arg1[%c46, %c0_86] : memref<256x128xbf16, #tpu.memory_space<vmem>>, vector<196x128xbf16>
    %c19 = arith.constant 19 : index
    %c0_87 = arith.constant 0 : index
    %c0_88 = arith.constant 0 : index
    %97 = vector.load %arg2[%c19, %c0_87, %c0_88] : memref<25x128x128xbf16, #tpu.memory_space<vmem>>, vector<1x128x128xbf16>
    %98 = vector.shape_cast %97 : vector<1x128x128xbf16> to vector<128x128xbf16>
    %cst_89 = arith.constant dense<0.000000e+00> : vector<196x128xf32>
    %99 = tpu.matmul %96, %98, %cst_89 {dimension_numbers = #tpu.dot_dimension_numbers<[1], [0], [0], [1], [0, 0, 1, 1], [], []>} : vector<196x128xbf16>, vector<128x128xbf16>, vector<196x128xf32> -> vector<196x128xf32>
    %100 = arith.addf %95, %99 : vector<196x128xf32>
    %c56 = arith.constant 56 : index
    %c0_90 = arith.constant 0 : index
    %101 = vector.load %arg1[%c56, %c0_90] : memref<256x128xbf16, #tpu.memory_space<vmem>>, vector<196x128xbf16>
    %c20 = arith.constant 20 : index
    %c0_91 = arith.constant 0 : index
    %c0_92 = arith.constant 0 : index
    %102 = vector.load %arg2[%c20, %c0_91, %c0_92] : memref<25x128x128xbf16, #tpu.memory_space<vmem>>, vector<1x128x128xbf16>
    %103 = vector.shape_cast %102 : vector<1x128x128xbf16> to vector<128x128xbf16>
    %cst_93 = arith.constant dense<0.000000e+00> : vector<196x128xf32>
    %104 = tpu.matmul %101, %103, %cst_93 {dimension_numbers = #tpu.dot_dimension_numbers<[1], [0], [0], [1], [0, 0, 1, 1], [], []>} : vector<196x128xbf16>, vector<128x128xbf16>, vector<196x128xf32> -> vector<196x128xf32>
    %105 = arith.addf %100, %104 : vector<196x128xf32>
    %c57 = arith.constant 57 : index
    %c0_94 = arith.constant 0 : index
    %106 = vector.load %arg1[%c57, %c0_94] : memref<256x128xbf16, #tpu.memory_space<vmem>>, vector<196x128xbf16>
    %c21 = arith.constant 21 : index
    %c0_95 = arith.constant 0 : index
    %c0_96 = arith.constant 0 : index
    %107 = vector.load %arg2[%c21, %c0_95, %c0_96] : memref<25x128x128xbf16, #tpu.memory_space<vmem>>, vector<1x128x128xbf16>
    %108 = vector.shape_cast %107 : vector<1x128x128xbf16> to vector<128x128xbf16>
    %cst_97 = arith.constant dense<0.000000e+00> : vector<196x128xf32>
    %109 = tpu.matmul %106, %108, %cst_97 {dimension_numbers = #tpu.dot_dimension_numbers<[1], [0], [0], [1], [0, 0, 1, 1], [], []>} : vector<196x128xbf16>, vector<128x128xbf16>, vector<196x128xf32> -> vector<196x128xf32>
    %110 = arith.addf %105, %109 : vector<196x128xf32>
    %c58 = arith.constant 58 : index
    %c0_98 = arith.constant 0 : index
    %111 = vector.load %arg1[%c58, %c0_98] : memref<256x128xbf16, #tpu.memory_space<vmem>>, vector<196x128xbf16>
    %c22 = arith.constant 22 : index
    %c0_99 = arith.constant 0 : index
    %c0_100 = arith.constant 0 : index
    %112 = vector.load %arg2[%c22, %c0_99, %c0_100] : memref<25x128x128xbf16, #tpu.memory_space<vmem>>, vector<1x128x128xbf16>
    %113 = vector.shape_cast %112 : vector<1x128x128xbf16> to vector<128x128xbf16>
    %cst_101 = arith.constant dense<0.000000e+00> : vector<196x128xf32>
    %114 = tpu.matmul %111, %113, %cst_101 {dimension_numbers = #tpu.dot_dimension_numbers<[1], [0], [0], [1], [0, 0, 1, 1], [], []>} : vector<196x128xbf16>, vector<128x128xbf16>, vector<196x128xf32> -> vector<196x128xf32>
    %115 = arith.addf %110, %114 : vector<196x128xf32>
    %c59 = arith.constant 59 : index
    %c0_102 = arith.constant 0 : index
    %116 = vector.load %arg1[%c59, %c0_102] : memref<256x128xbf16, #tpu.memory_space<vmem>>, vector<196x128xbf16>
    %c23 = arith.constant 23 : index
    %c0_103 = arith.constant 0 : index
    %c0_104 = arith.constant 0 : index
    %117 = vector.load %arg2[%c23, %c0_103, %c0_104] : memref<25x128x128xbf16, #tpu.memory_space<vmem>>, vector<1x128x128xbf16>
    %118 = vector.shape_cast %117 : vector<1x128x128xbf16> to vector<128x128xbf16>
    %cst_105 = arith.constant dense<0.000000e+00> : vector<196x128xf32>
    %119 = tpu.matmul %116, %118, %cst_105 {dimension_numbers = #tpu.dot_dimension_numbers<[1], [0], [0], [1], [0, 0, 1, 1], [], []>} : vector<196x128xbf16>, vector<128x128xbf16>, vector<196x128xf32> -> vector<196x128xf32>
    %120 = arith.addf %115, %119 : vector<196x128xf32>
    %c60 = arith.constant 60 : index
    %c0_106 = arith.constant 0 : index
    %121 = vector.load %arg1[%c60, %c0_106] : memref<256x128xbf16, #tpu.memory_space<vmem>>, vector<196x128xbf16>
    %c24 = arith.constant 24 : index
    %c0_107 = arith.constant 0 : index
    %c0_108 = arith.constant 0 : index
    %122 = vector.load %arg2[%c24, %c0_107, %c0_108] : memref<25x128x128xbf16, #tpu.memory_space<vmem>>, vector<1x128x128xbf16>
    %123 = vector.shape_cast %122 : vector<1x128x128xbf16> to vector<128x128xbf16>
    %cst_109 = arith.constant dense<0.000000e+00> : vector<196x128xf32>
    %124 = tpu.matmul %121, %123, %cst_109 {dimension_numbers = #tpu.dot_dimension_numbers<[1], [0], [0], [1], [0, 0, 1, 1], [], []>} : vector<196x128xbf16>, vector<128x128xbf16>, vector<196x128xf32> -> vector<196x128xf32>
    %125 = arith.addf %120, %124 : vector<196x128xf32>
    %c0_110 = arith.constant 0 : index
    %c0_111 = arith.constant 0 : index
    %126 = vector.load %arg3[%c0_110, %c0_111] : memref<1x128xf32, #tpu.memory_space<vmem>>, vector<1x128xf32>
    %127 = vector.broadcast %126 : vector<1x128xf32> to vector<196x128xf32>
    %128 = arith.addf %125, %127 : vector<196x128xf32>
    %cst_112 = arith.constant 0.000000e+00 : f32
    %129 = vector.broadcast %cst_112 : f32 to vector<196x128xf32>
    %130 = arith.maximumf %128, %129 : vector<196x128xf32>
    %c0_113 = arith.constant 0 : index
    %c0_114 = arith.constant 0 : index
    %131 = vector.load %arg5[%c0_113, %c0_114] : memref<196x128xf32, #tpu.memory_space<vmem>>, vector<196x128xf32>
    tpu.vector_store %arg5[%c0_113, %c0_114], %130 {strides = array<i32>} : memref<196x128xf32, #tpu.memory_space<vmem>>, vector<196x128xf32>,
    %c0_115 = arith.constant 0 : index
    %c0_116 = arith.constant 0 : index
    %132 = tpu.strided_load %arg5[%c0_115, %c0_116] {strides = array<i32: 2, 1>} : memref<196x128xf32, #tpu.memory_space<vmem>>, vector<98x128xf32>
    %c1_117 = arith.constant 1 : index
    %c0_118 = arith.constant 0 : index
    %133 = tpu.strided_load %arg5[%c1_117, %c0_118] {strides = array<i32: 2, 1>} : memref<196x128xf32, #tpu.memory_space<vmem>>, vector<98x128xf32>
    %134 = arith.maximumf %132, %133 : vector<98x128xf32>
    %c0_119 = arith.constant 0 : index
    %c0_120 = arith.constant 0 : index
    %135 = vector.load %arg6[%c0_119, %c0_120] : memref<98x128xf32, #tpu.memory_space<vmem>>, vector<98x128xf32>
    tpu.vector_store %arg6[%c0_119, %c0_120], %134 {strides = array<i32>} : memref<98x128xf32, #tpu.memory_space<vmem>>, vector<98x128xf32>,
    %c0_121 = arith.constant 0 : index
    %c0_122 = arith.constant 0 : index
    %136 = vector.load %arg6[%c0_121, %c0_122] : memref<98x128xf32, #tpu.memory_space<vmem>>, vector<5x128xf32>
    %c7_123 = arith.constant 7 : index
    %c0_124 = arith.constant 0 : index
    %137 = vector.load %arg6[%c7_123, %c0_124] : memref<98x128xf32, #tpu.memory_space<vmem>>, vector<5x128xf32>
    %138 = arith.maximumf %136, %137 : vector<5x128xf32>
    %139 = arith.truncf %138 : vector<5x128xf32> to vector<5x128xbf16>
    %c0_125 = arith.constant 0 : index
    %c0_126 = arith.constant 0 : index
    %c0_127 = arith.constant 0 : index
    %140 = vector.load %arg4[%c0_125, %c0_126, %c0_127] : memref<1x25x128xbf16, #tpu.memory_space<vmem>>, vector<1x5x128xbf16>
    %141 = vector.shape_cast %140 : vector<1x5x128xbf16> to vector<5x128xbf16>
    %142 = vector.shape_cast %139 : vector<5x128xbf16> to vector<1x5x128xbf16>
    tpu.vector_store %arg4[%c0_125, %c0_126, %c0_127], %142 {strides = array<i32>} : memref<1x25x128xbf16, #tpu.memory_space<vmem>>, vector<1x5x128xbf16>,
    %c14_128 = arith.constant 14 : index
    %c0_129 = arith.constant 0 : index
    %143 = vector.load %arg6[%c14_128, %c0_129] : memref<98x128xf32, #tpu.memory_space<vmem>>, vector<5x128xf32>
    %c21_130 = arith.constant 21 : index
    %c0_131 = arith.constant 0 : index
    %144 = vector.load %arg6[%c21_130, %c0_131] : memref<98x128xf32, #tpu.memory_space<vmem>>, vector<5x128xf32>
    %145 = arith.maximumf %143, %144 : vector<5x128xf32>
    %146 = arith.truncf %145 : vector<5x128xf32> to vector<5x128xbf16>
    %c0_132 = arith.constant 0 : index
    %c5_133 = arith.constant 5 : index
    %c0_134 = arith.constant 0 : index
    %147 = vector.load %arg4[%c0_132, %c5_133, %c0_134] : memref<1x25x128xbf16, #tpu.memory_space<vmem>>, vector<1x5x128xbf16>
    %148 = vector.shape_cast %147 : vector<1x5x128xbf16> to vector<5x128xbf16>
    %149 = vector.shape_cast %146 : vector<5x128xbf16> to vector<1x5x128xbf16>
    tpu.vector_store %arg4[%c0_132, %c5_133, %c0_134], %149 {strides = array<i32>} : memref<1x25x128xbf16, #tpu.memory_space<vmem>>, vector<1x5x128xbf16>,
    %c28_135 = arith.constant 28 : index
    %c0_136 = arith.constant 0 : index
    %150 = vector.load %arg6[%c28_135, %c0_136] : memref<98x128xf32, #tpu.memory_space<vmem>>, vector<5x128xf32>
    %c35 = arith.constant 35 : index
    %c0_137 = arith.constant 0 : index
    %151 = vector.load %arg6[%c35, %c0_137] : memref<98x128xf32, #tpu.memory_space<vmem>>, vector<5x128xf32>
    %152 = arith.maximumf %150, %151 : vector<5x128xf32>
    %153 = arith.truncf %152 : vector<5x128xf32> to vector<5x128xbf16>
    %c0_138 = arith.constant 0 : index
    %c10_139 = arith.constant 10 : index
    %c0_140 = arith.constant 0 : index
    %154 = vector.load %arg4[%c0_138, %c10_139, %c0_140] : memref<1x25x128xbf16, #tpu.memory_space<vmem>>, vector<1x5x128xbf16>
    %155 = vector.shape_cast %154 : vector<1x5x128xbf16> to vector<5x128xbf16>
    %156 = vector.shape_cast %153 : vector<5x128xbf16> to vector<1x5x128xbf16>
    tpu.vector_store %arg4[%c0_138, %c10_139, %c0_140], %156 {strides = array<i32>} : memref<1x25x128xbf16, #tpu.memory_space<vmem>>, vector<1x5x128xbf16>,
    %c42_141 = arith.constant 42 : index
    %c0_142 = arith.constant 0 : index
    %157 = vector.load %arg6[%c42_141, %c0_142] : memref<98x128xf32, #tpu.memory_space<vmem>>, vector<5x128xf32>
    %c49 = arith.constant 49 : index
    %c0_143 = arith.constant 0 : index
    %158 = vector.load %arg6[%c49, %c0_143] : memref<98x128xf32, #tpu.memory_space<vmem>>, vector<5x128xf32>
    %159 = arith.maximumf %157, %158 : vector<5x128xf32>
    %160 = arith.truncf %159 : vector<5x128xf32> to vector<5x128xbf16>
    %c0_144 = arith.constant 0 : index
    %c15_145 = arith.constant 15 : index
    %c0_146 = arith.constant 0 : index
    %161 = vector.load %arg4[%c0_144, %c15_145, %c0_146] : memref<1x25x128xbf16, #tpu.memory_space<vmem>>, vector<1x5x128xbf16>
    %162 = vector.shape_cast %161 : vector<1x5x128xbf16> to vector<5x128xbf16>
    %163 = vector.shape_cast %160 : vector<5x128xbf16> to vector<1x5x128xbf16>
    tpu.vector_store %arg4[%c0_144, %c15_145, %c0_146], %163 {strides = array<i32>} : memref<1x25x128xbf16, #tpu.memory_space<vmem>>, vector<1x5x128xbf16>,
    %c56_147 = arith.constant 56 : index
    %c0_148 = arith.constant 0 : index
    %164 = vector.load %arg6[%c56_147, %c0_148] : memref<98x128xf32, #tpu.memory_space<vmem>>, vector<5x128xf32>
    %c63 = arith.constant 63 : index
    %c0_149 = arith.constant 0 : index
    %165 = vector.load %arg6[%c63, %c0_149] : memref<98x128xf32, #tpu.memory_space<vmem>>, vector<5x128xf32>
    %166 = arith.maximumf %164, %165 : vector<5x128xf32>
    %167 = arith.truncf %166 : vector<5x128xf32> to vector<5x128xbf16>
    %c0_150 = arith.constant 0 : index
    %c20_151 = arith.constant 20 : index
    %c0_152 = arith.constant 0 : index
    %168 = vector.load %arg4[%c0_150, %c20_151, %c0_152] : memref<1x25x128xbf16, #tpu.memory_space<vmem>>, vector<1x5x128xbf16>
    %169 = vector.shape_cast %168 : vector<1x5x128xbf16> to vector<5x128xbf16>
    %170 = vector.shape_cast %167 : vector<5x128xbf16> to vector<1x5x128xbf16>
    tpu.vector_store %arg4[%c0_150, %c20_151, %c0_152], %170 {strides = array<i32>} : memref<1x25x128xbf16, #tpu.memory_space<vmem>>, vector<1x5x128xbf16>,
    return
  }
  func.func @transform_0(%arg0: i32) -> (i32, i32) {
    %c0_i32 = arith.constant 0 : i32
    %c0_i32_0 = arith.constant 0 : i32
    return %arg0, %c0_i32 : i32, i32
  }
  func.func @transform_1(%arg0: i32) -> (i32, i32, i32) {
    %c0_i32 = arith.constant 0 : i32
    %c0_i32_0 = arith.constant 0 : i32
    %c0_i32_1 = arith.constant 0 : i32
    %c0_i32_2 = arith.constant 0 : i32
    return %c0_i32, %c0_i32_0, %c0_i32_1 : i32, i32, i32
  }
  func.func @transform_2(%arg0: i32) -> (i32, i32) {
    %c0_i32 = arith.constant 0 : i32
    %c0_i32_0 = arith.constant 0 : i32
    %c0_i32_1 = arith.constant 0 : i32
    return %c0_i32, %c0_i32_0 : i32, i32
  }
  func.func @transform_3(%arg0: i32) -> (i32, i32, i32) {
    %c0_i32 = arith.constant 0 : i32
    %c0_i32_0 = arith.constant 0 : i32
    %c0_i32_1 = arith.constant 0 : i32
    return %arg0, %c0_i32, %c0_i32_0 : i32, i32, i32
  }
}

module attributes {stable_mosaic.version = 11 : i64} {
  func.func @_mlp_kernel(%arg0: i32, %arg1: memref<4x3200xbf16, #tpu.memory_space<vmem>>, %arg2: memref<3200x256xbf16, #tpu.memory_space<vmem>>, %arg3: memref<1x256xf32, #tpu.memory_space<vmem>>, %arg4: memref<256x256xbf16, #tpu.memory_space<vmem>>, %arg5: memref<1x256xf32, #tpu.memory_space<vmem>>, %arg6: memref<256x128xbf16, #tpu.memory_space<vmem>>, %arg7: memref<1x128xf32, #tpu.memory_space<vmem>>, %arg8: memref<4x128xf32, #tpu.memory_space<vmem>>) attributes {dimension_semantics = [#tpu.dimension_semantics<parallel>], iteration_bounds = array<i64: 1>, scalar_prefetch = 0 : i64, scratch_operands = 0 : i64, tpu.core_type = #tpu.core_type<tc>, window_params = [{transform_indices = @transform_0, window_bounds = array<i64: 4, 3200>}, {pipeline_mode = #tpu.pipeline_mode<synchronous>, transform_indices = @transform_1, window_bounds = array<i64: 3200, 256>}, {pipeline_mode = #tpu.pipeline_mode<synchronous>, transform_indices = @transform_2, window_bounds = array<i64: 1, 256>}, {pipeline_mode = #tpu.pipeline_mode<synchronous>, transform_indices = @transform_3, window_bounds = array<i64: 256, 256>}, {pipeline_mode = #tpu.pipeline_mode<synchronous>, transform_indices = @transform_4, window_bounds = array<i64: 1, 256>}, {pipeline_mode = #tpu.pipeline_mode<synchronous>, transform_indices = @transform_5, window_bounds = array<i64: 256, 128>}, {pipeline_mode = #tpu.pipeline_mode<synchronous>, transform_indices = @transform_6, window_bounds = array<i64: 1, 128>}, {transform_indices = @transform_7, window_bounds = array<i64: 4, 128>}]} {
    %c0 = arith.constant 0 : index
    %c0_0 = arith.constant 0 : index
    %0 = vector.load %arg1[%c0, %c0_0] : memref<4x3200xbf16, #tpu.memory_space<vmem>>, vector<4x3200xbf16>
    %c0_1 = arith.constant 0 : index
    %c0_2 = arith.constant 0 : index
    %1 = vector.load %arg2[%c0_1, %c0_2] : memref<3200x256xbf16, #tpu.memory_space<vmem>>, vector<3200x256xbf16>
    %cst = arith.constant dense<0.000000e+00> : vector<4x256xf32>
    %2 = tpu.matmul %0, %1, %cst {dimension_numbers = #tpu.dot_dimension_numbers<[1], [0], [0], [1], [0, 0, 1, 1], [], []>} : vector<4x3200xbf16>, vector<3200x256xbf16>, vector<4x256xf32> -> vector<4x256xf32>
    %c0_3 = arith.constant 0 : index
    %c0_4 = arith.constant 0 : index
    %3 = vector.load %arg3[%c0_3, %c0_4] : memref<1x256xf32, #tpu.memory_space<vmem>>, vector<1x256xf32>
    %4 = vector.broadcast %3 : vector<1x256xf32> to vector<4x256xf32>
    %5 = arith.addf %2, %4 : vector<4x256xf32>
    %cst_5 = arith.constant 0.000000e+00 : f32
    %6 = vector.broadcast %cst_5 : f32 to vector<4x256xf32>
    %7 = arith.maximumf %5, %6 : vector<4x256xf32>
    %8 = arith.truncf %7 : vector<4x256xf32> to vector<4x256xbf16>
    %c0_6 = arith.constant 0 : index
    %c0_7 = arith.constant 0 : index
    %9 = vector.load %arg4[%c0_6, %c0_7] : memref<256x256xbf16, #tpu.memory_space<vmem>>, vector<256x256xbf16>
    %cst_8 = arith.constant dense<0.000000e+00> : vector<4x256xf32>
    %10 = tpu.matmul %8, %9, %cst_8 {dimension_numbers = #tpu.dot_dimension_numbers<[1], [0], [0], [1], [0, 0, 1, 1], [], []>} : vector<4x256xbf16>, vector<256x256xbf16>, vector<4x256xf32> -> vector<4x256xf32>
    %c0_9 = arith.constant 0 : index
    %c0_10 = arith.constant 0 : index
    %11 = vector.load %arg5[%c0_9, %c0_10] : memref<1x256xf32, #tpu.memory_space<vmem>>, vector<1x256xf32>
    %12 = vector.broadcast %11 : vector<1x256xf32> to vector<4x256xf32>
    %13 = arith.addf %10, %12 : vector<4x256xf32>
    %cst_11 = arith.constant 0.000000e+00 : f32
    %14 = vector.broadcast %cst_11 : f32 to vector<4x256xf32>
    %15 = arith.maximumf %13, %14 : vector<4x256xf32>
    %16 = arith.truncf %15 : vector<4x256xf32> to vector<4x256xbf16>
    %c0_12 = arith.constant 0 : index
    %c0_13 = arith.constant 0 : index
    %17 = vector.load %arg6[%c0_12, %c0_13] : memref<256x128xbf16, #tpu.memory_space<vmem>>, vector<256x128xbf16>
    %cst_14 = arith.constant dense<0.000000e+00> : vector<4x128xf32>
    %18 = tpu.matmul %16, %17, %cst_14 {dimension_numbers = #tpu.dot_dimension_numbers<[1], [0], [0], [1], [0, 0, 1, 1], [], []>} : vector<4x256xbf16>, vector<256x128xbf16>, vector<4x128xf32> -> vector<4x128xf32>
    %c0_15 = arith.constant 0 : index
    %c0_16 = arith.constant 0 : index
    %19 = vector.load %arg7[%c0_15, %c0_16] : memref<1x128xf32, #tpu.memory_space<vmem>>, vector<1x128xf32>
    %20 = vector.broadcast %19 : vector<1x128xf32> to vector<4x128xf32>
    %21 = arith.addf %18, %20 : vector<4x128xf32>
    %c0_17 = arith.constant 0 : index
    %c0_18 = arith.constant 0 : index
    %22 = vector.load %arg8[%c0_17, %c0_18] : memref<4x128xf32, #tpu.memory_space<vmem>>, vector<4x128xf32>
    tpu.vector_store %arg8[%c0_17, %c0_18], %21 {strides = array<i32>} : memref<4x128xf32, #tpu.memory_space<vmem>>, vector<4x128xf32>,
    return
  }
  func.func @transform_0(%arg0: i32) -> (i32, i32) {
    %c0_i32 = arith.constant 0 : i32
    %c0_i32_0 = arith.constant 0 : i32
    return %arg0, %c0_i32 : i32, i32
  }
  func.func @transform_1(%arg0: i32) -> (i32, i32) {
    %c0_i32 = arith.constant 0 : i32
    %c0_i32_0 = arith.constant 0 : i32
    %c0_i32_1 = arith.constant 0 : i32
    return %c0_i32, %c0_i32_0 : i32, i32
  }
  func.func @transform_2(%arg0: i32) -> (i32, i32) {
    %c0_i32 = arith.constant 0 : i32
    %c0_i32_0 = arith.constant 0 : i32
    %c0_i32_1 = arith.constant 0 : i32
    return %c0_i32, %c0_i32_0 : i32, i32
  }
  func.func @transform_3(%arg0: i32) -> (i32, i32) {
    %c0_i32 = arith.constant 0 : i32
    %c0_i32_0 = arith.constant 0 : i32
    %c0_i32_1 = arith.constant 0 : i32
    return %c0_i32, %c0_i32_0 : i32, i32
  }
  func.func @transform_4(%arg0: i32) -> (i32, i32) {
    %c0_i32 = arith.constant 0 : i32
    %c0_i32_0 = arith.constant 0 : i32
    %c0_i32_1 = arith.constant 0 : i32
    return %c0_i32, %c0_i32_0 : i32, i32
  }
  func.func @transform_5(%arg0: i32) -> (i32, i32) {
    %c0_i32 = arith.constant 0 : i32
    %c0_i32_0 = arith.constant 0 : i32
    %c0_i32_1 = arith.constant 0 : i32
    return %c0_i32, %c0_i32_0 : i32, i32
  }
  func.func @transform_6(%arg0: i32) -> (i32, i32) {
    %c0_i32 = arith.constant 0 : i32
    %c0_i32_0 = arith.constant 0 : i32
    %c0_i32_1 = arith.constant 0 : i32
    return %c0_i32, %c0_i32_0 : i32, i32
  }
  func.func @transform_7(%arg0: i32) -> (i32, i32) {
    %c0_i32 = arith.constant 0 : i32
    %c0_i32_0 = arith.constant 0 : i32
    return %arg0, %c0_i32 : i32, i32
  }
}

</mosaic_0001>

<llo_original>
// kernel: net_forward.3
$region0: #{net_forward.3}
  #allocation0 [shape = 'u32[]', space=smem, size = 0x4, offset = 0x4, fixed_abs, tag = 'smem constant byte address 0x4 - core index']
  #allocation1 [shape = 'u32[144,128]{1,0:T(1,128)}', space=vmem, size = 0x12000, scoped, tag = 'internal scratch']
  #allocation2 [shape = 'f32[392,128]{1,0:T(8,128)}', space=vmem, size = 0x31000, scoped, tag = 'scratch operand']
  #allocation3 [shape = 'f32[196,128]{1,0:T(8,128)}', space=vmem, size = 0x19000, scoped, tag = 'scratch operand']
  %s0 = inlined_call_operand.vmem [shape: bf16[3136,75], index: 0, kind: input, shape index: {}]
  %s1 = inlined_call_operand.vmem [shape: bf16[75,128], index: 1, kind: input, shape index: {}]
  %s2 = inlined_call_operand.vmem [shape: f32[1,128], index: 2, kind: input, shape index: {}]
  %s3 = inlined_call_operand.vmem [shape: bf16[8,98,128], index: 3, kind: output, shape index: {}]
  %s4 = sld [smem:[#allocation0]]
  $region45: #{net_forward.3} parent=0
    _
  %s6 = ssub.s32 1, %s4
  %s7 = scalar_select 0, %s6, %s4
  loop: start=0, step=1, limit=10
  $region2: #{net_forward.3} parent=0 // loop_pre_header
    _
  $region3: #{net_forward.3} parent=0 // loop_header
    %s9 = sphi 0, %s13
    %p10 = scmp.ge.s32.totalorder %s9, 10
    %s19 = sphi 0, %s21
    %s22 = sphi 0, %s19
    %s23 = sphi 0, %s22
    %s39 = sphi 0, %s23
    %s43 = sphi 0, %s43
    %s45 = sphi 0, %s43
    %s46 = sphi 0, %s45
    %s60 = sphi 0, %s46
    %s64 = sphi 0, %s64
    %s66 = sphi 0, %s64
    %s67 = sphi 0, %s66
    %s81 = sphi 0, %s67
    %s87 = sphi 0, %s89
    %s90 = sphi 0, %s87
    %s91 = sphi 0, %s90
    %s107 = sphi 0, %s91
  $region4: #{net_forward.3} parent=0 // loop_header_branch
    %12 = sbr.rel (%p10) target = $region8
  $region5: #{net_forward.3} parent=0 // loop_body
    %s14 = ssub.s32 %s9, 1
    %s15 = ssub.s32 %s9, 2
    %s16 = sadd.s32 %s9, 1
    %s17 = ssub.s32 %s9, %s16
    %p18 = scmp.eq.s32.totalorder %s17, 0
    %s20 = sadd.s32 %s19, 1
    %s21 = scalar_select %p18, %s19, %s20
    %p24 = pneg %p18
    %p25 = scmp.eq.s32.totalorder %s9, 7
    %p26 = por %p24, %p25
    %p27 = scmp.ne.s32.totalorder %s19, %s22
    %p28 = scmp.eq.s32.totalorder %s9, 0
    %p29 = por %p27, %p28
    %p30 = scmp.ne.s32.totalorder %s19, %s22
    %p31 = scmp.eq.s32.totalorder %s14, 7
    %p32 = por %p30, %p31
    %p33 = scmp.ne.s32.totalorder %s22, %s23
    %p34 = scmp.eq.s32.totalorder %s14, 0
    %p35 = por %p33, %p34
    %p36 = scmp.ne.s32.totalorder %s22, %s23
    %p37 = scmp.eq.s32.totalorder %s15, 7
    %p38 = por %p36, %p37
    %p40 = scmp.ne.s32.totalorder %s23, %s39
    %p41 = scmp.eq.s32.totalorder %s15, 0
    %p42 = por %p40, %p41
    %s44 = sadd.s32 %s43, 1
    %p47 = scmp.eq.s32.totalorder %s9, 7
    %p48 = scmp.ne.s32.totalorder %s43, %s45
    %p49 = scmp.eq.s32.totalorder %s9, 0
    %p50 = por %p48, %p49
    %p51 = scmp.ne.s32.totalorder %s43, %s45
    %p52 = scmp.eq.s32.totalorder %s14, 7
    %p53 = por %p51, %p52
    %p54 = scmp.ne.s32.totalorder %s45, %s46
    %p55 = scmp.eq.s32.totalorder %s14, 0
    %p56 = por %p54, %p55
    %p57 = scmp.ne.s32.totalorder %s45, %s46
    %p58 = scmp.eq.s32.totalorder %s15, 7
    %p59 = por %p57, %p58
    %p61 = scmp.ne.s32.totalorder %s46, %s60
    %p62 = scmp.eq.s32.totalorder %s15, 0
    %p63 = por %p61, %p62
    %s65 = sadd.s32 %s64, 1
    %p68 = scmp.eq.s32.totalorder %s9, 7
    %p69 = scmp.ne.s32.totalorder %s64, %s66
    %p70 = scmp.eq.s32.totalorder %s9, 0
    %p71 = por %p69, %p70
    %p72 = scmp.ne.s32.totalorder %s64, %s66
    %p73 = scmp.eq.s32.totalorder %s14, 7
    %p74 = por %p72, %p73
    %p75 = scmp.ne.s32.totalorder %s66, %s67
    %p76 = scmp.eq.s32.totalorder %s14, 0
    %p77 = por %p75, %p76
    %p78 = scmp.ne.s32.totalorder %s66, %s67
    %p79 = scmp.eq.s32.totalorder %s15, 7
    %p80 = por %p78, %p79
    %p82 = scmp.ne.s32.totalorder %s67, %s81
    %p83 = scmp.eq.s32.totalorder %s15, 0
    %p84 = por %p82, %p83
    %s85 = ssub.s32 %s9, %s16
    %p86 = scmp.eq.s32.totalorder %s85, 0
    %s88 = sadd.s32 %s87, 1
    %s89 = scalar_select %p86, %s87, %s88
    %p92 = pneg %p86
    %p93 = scmp.eq.s32.totalorder %s9, 7
    %p94 = por %p92, %p93
    %p95 = scmp.ne.s32.totalorder %s87, %s90
    %p96 = scmp.eq.s32.totalorder %s9, 0
    %p97 = por %p95, %p96
    %p98 = scmp.ne.s32.totalorder %s87, %s90
    %p99 = scmp.eq.s32.totalorder %s14, 7
    %p100 = por %p98, %p99
    %p101 = scmp.ne.s32.totalorder %s90, %s91
    %p102 = scmp.eq.s32.totalorder %s14, 0
    %p103 = por %p101, %p102
    %p104 = scmp.ne.s32.totalorder %s90, %s91
    %p105 = scmp.eq.s32.totalorder %s15, 7
    %p106 = por %p104, %p105
    %p108 = scmp.ne.s32.totalorder %s91, %s107
    %p109 = scmp.eq.s32.totalorder %s15, 0
    %p110 = por %p108, %p109
    %p111 = scmp.le.s32.totalorder 1, %s9
    %p112 = scmp.lt.s32.totalorder %s9, 9
    %p113 = pnand %p111, %p112
    %p114 = pneg %p113
    // Predicated region
    $region9: #{net_forward.3} parent=5 // pred_check
      _
    $region10: #{net_forward.3} parent=5 // pred_check_branch
      %116 = sbr.rel (%p113) target = $region12
    $region11: #{net_forward.3} parent=5 // pred_region
      %s117 = ssub.s32 %s9, 1
      // Predicated region
      $region13: #{net_forward.3} parent=11 // pred_check
        %p118 = pneg %p56
      $region14: #{net_forward.3} parent=11 // pred_check_branch
        %120 = sbr.rel (%p118) target = $region16
      $region15: #{net_forward.3} parent=11 // pred_region
        _
      $region16: #{net_forward.3} parent=11 // pred_fallthru
        _
      // Predicated region
      $region17: #{net_forward.3} parent=11 // pred_check
        %p121 = pneg %p77
      $region18: #{net_forward.3} parent=11 // pred_check_branch
        %123 = sbr.rel (%p121) target = $region20
      $region19: #{net_forward.3} parent=11 // pred_region
        _
      $region20: #{net_forward.3} parent=11 // pred_fallthru
        _
    $region12: #{net_forward.3} parent=5 // pred_fallthru
      _
    %p124 = scmp.lt.s32.totalorder %s9, 8
    // Predicated region
    $region21: #{net_forward.3} parent=5 // pred_check
      %p125 = pneg %p124
    $region22: #{net_forward.3} parent=5 // pred_check_branch
      %127 = sbr.rel (%p125) target = $region24
    $region23: #{net_forward.3} parent=5 // pred_region
      // Predicated region
      $region25: #{net_forward.3} parent=23 // pred_check
        %p128 = pneg %p29
      $region26: #{net_forward.3} parent=23 // pred_check_branch
        %130 = sbr.rel (%p128) target = $region28
      $region27: #{net_forward.3} parent=23 // pred_region
        %s131 = smul.u32 49, %s9
        %p132 = scmp.lt.s32.totalorder %s131, 391
        %s133 = scalar_select %p132, %s131, 391
        %s134 = smul.addr %s133, 4
        %s135 = scalar_lea.vmem %s0, %s134
        %s136 = smul.u32 49, %s9
      $region28: #{net_forward.3} parent=23 // pred_fallthru
        _
    $region24: #{net_forward.3} parent=5 // pred_fallthru
      _
    %p137 = scmp.le.s32.totalorder 1, %s9
    %p138 = scmp.lt.s32.totalorder %s9, 9
    %p139 = pnand %p137, %p138
    %p140 = pneg %p139
    // Predicated region
    $region29: #{net_forward.3} parent=5 // pred_check
      _
    $region30: #{net_forward.3} parent=5 // pred_check_branch
      %142 = sbr.rel (%p139) target = $region32
    $region31: #{net_forward.3} parent=5 // pred_region
      %s143 = ssub.s32 %s9, 1
      %s144 = smul.u32 49, %s14
      %p145 = scmp.lt.s32.totalorder %s144, 391
      %s146 = scalar_select %p145, %s144, 391
      %s147 = smul.addr %s146, 4
      %s148 = scalar_lea.vmem %s0, %s147
      %p149 = pneg %p35
      %p150 = pneg %p32
      %p151 = pneg %p56
      %p152 = pneg %p53
      %p153 = pneg %p77
      %p154 = pneg %p74
      %p155 = pneg %p103
      %p156 = pneg %p100
      %p157 = scmp.lt.s32.totalorder %s14, 7
      %s158 = scalar_select %p157, %s14, 7
      %s159 = smul.addr %s158, 13
      %s160 = smul.addr %s159, 4
      %s161 = scalar_lea.vmem %s3, %s160
      %s162 = smul.u32 49, %s14
      %p163 = scmp.lt.s32.totalorder %s162, 391
      %s164 = scalar_select %p163, %s162, 391
      %s165 = smul.addr %s164, 4
      %s166 = scalar_lea.vmem %s0, %s165
      %s167 = smul.u32 49, %s14
      %p168 = scmp.lt.s32.totalorder %s14, 7
      %s169 = scalar_select %p168, %s14, 7
      %s170 = smul.addr %s169, 13
      %s171 = smul.addr %s170, 4
      %s172 = scalar_lea.vmem %s3, %s171
      %v174 = vld [vmem:[%s166] sm:$0xf]
      %v175 = vld [vmem:[%s166 + $0x4] sm:$0xf]
      %v176 = vld [vmem:[%s166 + $0x8] sm:$0xf]
      %v177 = vld [vmem:[%s166 + $0xc] sm:$0xf]
      %v178 = vld [vmem:[%s166 + $0x10] sm:$0xf]
      %v179 = vld [vmem:[%s166 + $0x14] sm:$0xf]
      %v180 = vld [vmem:[%s166 + $0x18] sm:$0xf]
      %v181 = vld [vmem:[%s166 + $0x1c] sm:$0xf]
      %v182 = vld [vmem:[%s166 + $0x20] sm:$0xf]
      %v183 = vld [vmem:[%s166 + $0x24] sm:$0xf]
      %v184 = vld [vmem:[%s166 + $0x28] sm:$0xf]
      %v185 = vld [vmem:[%s166 + $0x2c] sm:$0xf]
      %v186 = vld [vmem:[%s166 + $0x30] sm:$0xf]
      %v187 = vld [vmem:[%s166 + $0x34] sm:$0xf]
      %v188 = vld [vmem:[%s166 + $0x38] sm:$0xf]
      %v189 = vld [vmem:[%s166 + $0x3c] sm:$0xf]
      %v190 = vld [vmem:[%s166 + $0x40] sm:$0xf]
      %v191 = vld [vmem:[%s166 + $0x44] sm:$0xf]
      %v192 = vld [vmem:[%s166 + $0x48] sm:$0xf]
      %v193 = vld [vmem:[%s166 + $0x4c] sm:$0xf]
      %v194 = vld [vmem:[%s166 + $0x50] sm:$0xf]
      %v195 = vld [vmem:[%s166 + $0x54] sm:$0xf]
      %v196 = vld [vmem:[%s166 + $0x58] sm:$0xf]
      %v197 = vld [vmem:[%s166 + $0x5c] sm:$0xf]
      %v198 = vld [vmem:[%s166 + $0x60] sm:$0xf]
      %v199 = vld [vmem:[%s166 + $0x64] sm:$0xf]
      %v200 = vld [vmem:[%s166 + $0x68] sm:$0xf]
      %v201 = vld [vmem:[%s166 + $0x6c] sm:$0xf]
      %v202 = vld [vmem:[%s166 + $0x70] sm:$0xf]
      %v203 = vld [vmem:[%s166 + $0x74] sm:$0xf]
      %v204 = vld [vmem:[%s166 + $0x78] sm:$0xf]
      %v205 = vld [vmem:[%s166 + $0x7c] sm:$0xf]
      %v206 = vld [vmem:[%s166 + $0x80] sm:$0xf]
      %v207 = vld [vmem:[%s166 + $0x84] sm:$0xf]
      %v208 = vld [vmem:[%s166 + $0x88] sm:$0xf]
      %v209 = vld [vmem:[%s166 + $0x8c] sm:$0xf]
      %v210 = vld [vmem:[%s166 + $0x90] sm:$0xf]
      %v211 = vld [vmem:[%s166 + $0x94] sm:$0xf]
      %v212 = vld [vmem:[%s166 + $0x98] sm:$0xf]
      %v213 = vld [vmem:[%s166 + $0x9c] sm:$0xf]
      %v214 = vld [vmem:[%s166 + $0xa0] sm:$0xf]
      %v215 = vld [vmem:[%s166 + $0xa4] sm:$0xf]
      %v216 = vld [vmem:[%s166 + $0xa8] sm:$0xf]
      %v217 = vld [vmem:[%s166 + $0xac] sm:$0xf]
      %v218 = vld [vmem:[%s166 + $0xb0] sm:$0xf]
      %v219 = vld [vmem:[%s166 + $0xb4] sm:$0xf]
      %v220 = vld [vmem:[%s166 + $0xb8] sm:$0xf]
      %v221 = vld [vmem:[%s166 + $0xbc] sm:$0xf]
      %v222 = vld [vmem:[%s166 + $0xc0] sm:$0xf]
      %v223 = vld [vmem:[%s1] sm:$0xf]
      %v224 = vld [vmem:[%s1 + $0x4] sm:$0xf]
      %v225 = vld [vmem:[%s1 + $0x8] sm:$0xf]
      %v226 = vld [vmem:[%s1 + $0xc] sm:$0xf]
      %v227 = vld [vmem:[%s1 + $0x10] sm:$0xf]
      %v228 = vld [vmem:[%s1 + $0x14] sm:$0xf]
      %v229 = vld [vmem:[%s1 + $0x18] sm:$0xf]
      %v230 = vld [vmem:[%s1 + $0x1c] sm:$0xf]
      %v231 = vld [vmem:[%s1 + $0x20] sm:$0xf]
      %v232 = vld [vmem:[%s1 + $0x24] sm:$0x3]
      %v233 = vld [vmem:[%s2] sm:$0x1]
      %v235 = vlaneseq
      %v236 = vshrl.u32 %v235, 7
      %v237 = vsub.s32 0, %v236
      %v238 = vrot.slane %v233, %v237
      %v289 = vunpack.c.l.b16 %v174
      %v290 = vunpack.c.l.b16 %v175
      %v291 = vunpack.c.l.b16 %v176
      %v292 = vunpack.c.l.b16 %v177
      %v293 = vunpack.c.l.b16 %v178
      %v294 = vunpack.c.l.b16 %v179
      %v295 = vunpack.c.l.b16 %v180
      %v296 = vunpack.c.l.b16 %v181
      %v297 = vunpack.c.l.b16 %v182
      %v298 = vunpack.c.l.b16 %v183
      %v299 = vunpack.c.l.b16 %v184
      %v300 = vunpack.c.l.b16 %v185
      %v301 = vunpack.c.l.b16 %v186
      %v302 = vunpack.c.l.b16 %v187
      %v303 = vunpack.c.l.b16 %v188
      %v304 = vunpack.c.l.b16 %v189
      %v305 = vunpack.c.l.b16 %v190
      %v306 = vunpack.c.l.b16 %v191
      %v307 = vunpack.c.l.b16 %v192
      %v308 = vunpack.c.l.b16 %v193
      %v309 = vunpack.c.l.b16 %v194
      %v310 = vunpack.c.l.b16 %v195
      %v311 = vunpack.c.l.b16 %v196
      %v312 = vunpack.c.l.b16 %v197
      %v313 = vunpack.c.l.b16 %v198
      %v314 = vunpack.c.l.b16 %v199
      %v315 = vunpack.c.l.b16 %v200
      %v316 = vunpack.c.l.b16 %v201
      %v317 = vunpack.c.l.b16 %v202
      %v318 = vunpack.c.l.b16 %v203
      %v319 = vunpack.c.l.b16 %v204
      %v320 = vunpack.c.l.b16 %v205
      %v321 = vunpack.c.l.b16 %v206
      %v322 = vunpack.c.l.b16 %v207
      %v323 = vunpack.c.l.b16 %v208
      %v324 = vunpack.c.l.b16 %v209
      %v325 = vunpack.c.l.b16 %v210
      %v326 = vunpack.c.l.b16 %v211
      %v327 = vunpack.c.l.b16 %v212
      %v328 = vunpack.c.l.b16 %v213
      %v329 = vunpack.c.l.b16 %v214
      %v330 = vunpack.c.l.b16 %v215
      %v331 = vunpack.c.l.b16 %v216
      %v332 = vunpack.c.l.b16 %v217
      %v333 = vunpack.c.l.b16 %v218
      %v334 = vunpack.c.l.b16 %v219
      %v335 = vunpack.c.l.b16 %v220
      %v336 = vunpack.c.l.b16 %v221
      %v337 = vunpack.c.l.b16 %v222
      %v338 = vpack.c.b16 %v290, %v289
      %v339 = vpack.c.b16 %v292, %v291
      %v340 = vpack.c.b16 %v294, %v293
      %v341 = vpack.c.b16 %v296, %v295
      %v342 = vpack.c.b16 %v298, %v297
      %v343 = vpack.c.b16 %v300, %v299
      %v344 = vpack.c.b16 %v302, %v301
      %v345 = vpack.c.b16 %v304, %v303
      %v346 = vpack.c.b16 %v306, %v305
      %v347 = vpack.c.b16 %v308, %v307
      %v348 = vpack.c.b16 %v310, %v309
      %v349 = vpack.c.b16 %v312, %v311
      %v350 = vpack.c.b16 %v314, %v313
      %v351 = vpack.c.b16 %v316, %v315
      %v352 = vpack.c.b16 %v318, %v317
      %v353 = vpack.c.b16 %v320, %v319
      %v354 = vpack.c.b16 %v322, %v321
      %v355 = vpack.c.b16 %v324, %v323
      %v356 = vpack.c.b16 %v326, %v325
      %v357 = vpack.c.b16 %v328, %v327
      %v358 = vpack.c.b16 %v330, %v329
      %v359 = vpack.c.b16 %v332, %v331
      %v360 = vpack.c.b16 %v334, %v333
      %v361 = vpack.c.b16 %v336, %v335
      %v362 = vpack.c.b16 %v337, %v337
      %v373 = vunpack.c.l.b16 %v223
      %v374 = vunpack.c.l.b16 %v224
      %v375 = vunpack.c.l.b16 %v225
      %v376 = vunpack.c.l.b16 %v226
      %v377 = vunpack.c.l.b16 %v227
      %v378 = vunpack.c.l.b16 %v228
      %v379 = vunpack.c.l.b16 %v229
      %v380 = vunpack.c.l.b16 %v230
      %v381 = vunpack.c.l.b16 %v231
      %v382 = vunpack.c.l.b16 %v232
      %v383 = vpack.c.b16 %v374, %v373
      %v384 = vpack.c.b16 %v376, %v375
      %v385 = vpack.c.b16 %v378, %v377
      %v386 = vpack.c.b16 %v380, %v379
      %v387 = vpack.c.b16 %v382, %v381
      %vm392 = vcmask 613376
      %v394 = vsel %vm392, %v338, 0
      %v397 = vsel %vm392, %v339, 0
      %v400 = vsel %vm392, %v340, 0
      %v403 = vsel %vm392, %v341, 0
      %v406 = vsel %vm392, %v342, 0
      %v409 = vsel %vm392, %v343, 0
      %v412 = vsel %vm392, %v344, 0
      %v415 = vsel %vm392, %v345, 0
      %v418 = vsel %vm392, %v346, 0
      %v421 = vsel %vm392, %v347, 0
      %v424 = vsel %vm392, %v348, 0
      %v427 = vsel %vm392, %v349, 0
      %v430 = vsel %vm392, %v350, 0
      %v433 = vsel %vm392, %v351, 0
      %v436 = vsel %vm392, %v352, 0
      %v439 = vsel %vm392, %v353, 0
      %v442 = vsel %vm392, %v354, 0
      %v445 = vsel %vm392, %v355, 0
      %v448 = vsel %vm392, %v356, 0
      %v451 = vsel %vm392, %v357, 0
      %v454 = vsel %vm392, %v358, 0
      %v457 = vsel %vm392, %v359, 0
      %v460 = vsel %vm392, %v360, 0
      %v463 = vsel %vm392, %v361, 0
      %v466 = vsel %vm392, %v362, 0
      %vm468 = vcmask 1044480
      %vm469 = vcmask 1045504
      %v470 = vsel %vm468, 4294967295, 65535
      %v471 = vsel %vm469, %v470, 0
      %v473 = vand.u32 %v387, %v471
      %475 = vmatprep.subr.bf16.mxu0 0
      %476 = vmatpush1.bf16.msra.mxu0 %v383
      %477 = vmatprep.subr.bf16.mxu0 0
      %478 = vmatpush1.bf16.msra.mxu0 %v384
      %479 = vmatprep.subr.bf16.mxu0 0
      %480 = vmatpush1.bf16.msra.mxu0 %v385
      %481 = vmatprep.subr.bf16.mxu0 0
      %482 = vmatpush1.bf16.msra.mxu0 %v386
      %483 = vmatprep.subr.bf16.mxu0 0
      %484 = vmatpush1.bf16.msra.mxu0 %v473
      %485 = vmatprep.subr.bf16.mxu0 0
      %486 = vmatpush1.bf16.msra.mxu0 0
      %487 = vmatprep.subr.bf16.mxu0 0
      %488 = vmatpush1.bf16.msra.mxu0 0
      %489 = vmatprep.subr.bf16.mxu0 0
      %490 = vmatpush1.bf16.msra.mxu0 0
      %491 = vmatprep.subr.bf16.mxu0 0
      %492 = vmatpush1.bf16.msra.mxu0 0
      %493 = vmatprep.subr.bf16.mxu0 0
      %494 = vmatpush1.bf16.msra.mxu0 0
      %495 = vmatprep.subr.bf16.mxu0 0
      %496 = vmatpush1.bf16.msra.mxu0 0
      %497 = vmatprep.subr.bf16.mxu0 0
      %498 = vmatpush1.bf16.msra.mxu0 0
      %499 = vmatprep.subr.bf16.mxu0 0
      %500 = vmatpush1.bf16.msra.mxu0 0
      %501 = vmatprep.subr.bf16.mxu0 0
      %502 = vmatpush1.bf16.msra.mxu0 0
      %503 = vmatprep.subr.bf16.mxu0 0
      %504 = vmatpush1.bf16.msra.mxu0 0
      %505 = vmatprep.subr.bf16.mxu0 0
      %506 = vmatpush1.bf16.msra.mxu0 0
      %507 = vmatprep.mubr.bf16.mxu0 0
      %508 = vmatmul.mubr.bf16.gmra.mrb[0].mxu0 %v394
      %v509 = vpop.f32.mrb[0].mxu0
      %v510 = vadd.f32 %v238, %v509
      %v511 = vpop.f32.mrb[0].mxu0
      %v512 = vpop.f32.mrb[0].mxu0
      %v513 = vadd.f32 %v238, %v512
      %v514 = vpop.f32.mrb[0].mxu0
      %515 = vmatprep.mubr.bf16.mxu0 0
      %516 = vmatmul.mubr.bf16.gmra.mrb[0].mxu0 %v397
      %v517 = vpop.f32.mrb[0].mxu0
      %v518 = vadd.f32 %v238, %v517
      %v519 = vpop.f32.mrb[0].mxu0
      %v520 = vpop.f32.mrb[0].mxu0
      %v521 = vadd.f32 %v238, %v520
      %v522 = vpop.f32.mrb[0].mxu0
      %523 = vmatprep.mubr.bf16.mxu0 0
      %524 = vmatmul.mubr.bf16.gmra.mrb[0].mxu0 %v400
      %v525 = vpop.f32.mrb[0].mxu0
      %v526 = vadd.f32 %v238, %v525
      %v527 = vpop.f32.mrb[0].mxu0
      %v528 = vpop.f32.mrb[0].mxu0
      %v529 = vadd.f32 %v238, %v528
      %v530 = vpop.f32.mrb[0].mxu0
      %531 = vmatprep.mubr.bf16.mxu0 0
      %532 = vmatmul.mubr.bf16.gmra.mrb[0].mxu0 %v403
      %v533 = vpop.f32.mrb[0].mxu0
      %v534 = vadd.f32 %v238, %v533
      %v535 = vpop.f32.mrb[0].mxu0
      %v536 = vpop.f32.mrb[0].mxu0
      %v537 = vadd.f32 %v238, %v536
      %v538 = vpop.f32.mrb[0].mxu0
      %539 = vmatprep.mubr.bf16.mxu0 0
      %540 = vmatmul.mubr.bf16.gmra.mrb[0].mxu0 %v406
      %v541 = vpop.f32.mrb[0].mxu0
      %v542 = vadd.f32 %v238, %v541
      %v543 = vpop.f32.mrb[0].mxu0
      %v544 = vpop.f32.mrb[0].mxu0
      %v545 = vadd.f32 %v238, %v544
      %v546 = vpop.f32.mrb[0].mxu0
      %547 = vmatprep.mubr.bf16.mxu0 0
      %548 = vmatmul.mubr.bf16.gmra.mrb[0].mxu0 %v409
      %v549 = vpop.f32.mrb[0].mxu0
      %v550 = vadd.f32 %v238, %v549
      %v551 = vpop.f32.mrb[0].mxu0
      %v552 = vpop.f32.mrb[0].mxu0
      %v553 = vadd.f32 %v238, %v552
      %v554 = vpop.f32.mrb[0].mxu0
      %555 = vmatprep.mubr.bf16.mxu0 0
      %556 = vmatmul.mubr.bf16.gmra.mrb[0].mxu0 %v412
      %v557 = vpop.f32.mrb[0].mxu0
      %v558 = vadd.f32 %v238, %v557
      %v559 = vpop.f32.mrb[0].mxu0
      %v560 = vpop.f32.mrb[0].mxu0
      %v561 = vadd.f32 %v238, %v560
      %v562 = vpop.f32.mrb[0].mxu0
      %563 = vmatprep.mubr.bf16.mxu0 0
      %564 = vmatmul.mubr.bf16.gmra.mrb[0].mxu0 %v415
      %v565 = vpop.f32.mrb[0].mxu0
      %v566 = vadd.f32 %v238, %v565
      %v567 = vpop.f32.mrb[0].mxu0
      %v568 = vpop.f32.mrb[0].mxu0
      %v569 = vadd.f32 %v238, %v568
      %v570 = vpop.f32.mrb[0].mxu0
      %571 = vmatprep.mubr.bf16.mxu0 0
      %572 = vmatmul.mubr.bf16.gmra.mrb[0].mxu0 %v418
      %v573 = vpop.f32.mrb[0].mxu0
      %v574 = vadd.f32 %v238, %v573
      %v575 = vpop.f32.mrb[0].mxu0
      %v576 = vpop.f32.mrb[0].mxu0
      %v577 = vadd.f32 %v238, %v576
      %v578 = vpop.f32.mrb[0].mxu0
      %579 = vmatprep.mubr.bf16.mxu0 0
      %580 = vmatmul.mubr.bf16.gmra.mrb[0].mxu0 %v421
      %v581 = vpop.f32.mrb[0].mxu0
      %v582 = vadd.f32 %v238, %v581
      %v583 = vpop.f32.mrb[0].mxu0
      %v584 = vpop.f32.mrb[0].mxu0
      %v585 = vadd.f32 %v238, %v584
      %v586 = vpop.f32.mrb[0].mxu0
      %587 = vmatprep.mubr.bf16.mxu0 0
      %588 = vmatmul.mubr.bf16.gmra.mrb[0].mxu0 %v424
      %v589 = vpop.f32.mrb[0].mxu0
      %v590 = vadd.f32 %v238, %v589
      %v591 = vpop.f32.mrb[0].mxu0
      %v592 = vpop.f32.mrb[0].mxu0
      %v593 = vadd.f32 %v238, %v592
      %v594 = vpop.f32.mrb[0].mxu0
      %595 = vmatprep.mubr.bf16.mxu0 0
      %596 = vmatmul.mubr.bf16.gmra.mrb[0].mxu0 %v427
      %v597 = vpop.f32.mrb[0].mxu0
      %v598 = vadd.f32 %v238, %v597
      %v599 = vpop.f32.mrb[0].mxu0
      %v600 = vpop.f32.mrb[0].mxu0
      %v601 = vadd.f32 %v238, %v600
      %v602 = vpop.f32.mrb[0].mxu0
      %603 = vmatprep.mubr.bf16.mxu0 0
      %604 = vmatmul.mubr.bf16.gmra.mrb[0].mxu0 %v430
      %v605 = vpop.f32.mrb[0].mxu0
      %v606 = vadd.f32 %v238, %v605
      %v607 = vpop.f32.mrb[0].mxu0
      %v608 = vpop.f32.mrb[0].mxu0
      %v609 = vadd.f32 %v238, %v608
      %v610 = vpop.f32.mrb[0].mxu0
      %611 = vmatprep.mubr.bf16.mxu0 0
      %612 = vmatmul.mubr.bf16.gmra.mrb[0].mxu0 %v433
      %v613 = vpop.f32.mrb[0].mxu0
      %v614 = vadd.f32 %v238, %v613
      %v615 = vpop.f32.mrb[0].mxu0
      %v616 = vpop.f32.mrb[0].mxu0
      %v617 = vadd.f32 %v238, %v616
      %v618 = vpop.f32.mrb[0].mxu0
      %619 = vmatprep.mubr.bf16.mxu0 0
      %620 = vmatmul.mubr.bf16.gmra.mrb[0].mxu0 %v436
      %v621 = vpop.f32.mrb[0].mxu0
      %v622 = vadd.f32 %v238, %v621
      %v623 = vpop.f32.mrb[0].mxu0
      %v624 = vpop.f32.mrb[0].mxu0
      %v625 = vadd.f32 %v238, %v624
      %v626 = vpop.f32.mrb[0].mxu0
      %627 = vmatprep.mubr.bf16.mxu0 0
      %628 = vmatmul.mubr.bf16.gmra.mrb[0].mxu0 %v439
      %v629 = vpop.f32.mrb[0].mxu0
      %v630 = vadd.f32 %v238, %v629
      %v631 = vpop.f32.mrb[0].mxu0
      %v632 = vpop.f32.mrb[0].mxu0
      %v633 = vadd.f32 %v238, %v632
      %v634 = vpop.f32.mrb[0].mxu0
      %635 = vmatprep.mubr.bf16.mxu0 0
      %636 = vmatmul.mubr.bf16.gmra.mrb[0].mxu0 %v442
      %v637 = vpop.f32.mrb[0].mxu0
      %v638 = vadd.f32 %v238, %v637
      %v639 = vpop.f32.mrb[0].mxu0
      %v640 = vpop.f32.mrb[0].mxu0
      %v641 = vadd.f32 %v238, %v640
      %v642 = vpop.f32.mrb[0].mxu0
      %643 = vmatprep.mubr.bf16.mxu0 0
      %644 = vmatmul.mubr.bf16.gmra.mrb[0].mxu0 %v445
      %v645 = vpop.f32.mrb[0].mxu0
      %v646 = vadd.f32 %v238, %v645
      %v647 = vpop.f32.mrb[0].mxu0
      %v648 = vpop.f32.mrb[0].mxu0
      %v649 = vadd.f32 %v238, %v648
      %v650 = vpop.f32.mrb[0].mxu0
      %651 = vmatprep.mubr.bf16.mxu0 0
      %652 = vmatmul.mubr.bf16.gmra.mrb[0].mxu0 %v448
      %v653 = vpop.f32.mrb[0].mxu0
      %v654 = vadd.f32 %v238, %v653
      %v655 = vpop.f32.mrb[0].mxu0
      %v656 = vpop.f32.mrb[0].mxu0
      %v657 = vadd.f32 %v238, %v656
      %v658 = vpop.f32.mrb[0].mxu0
      %659 = vmatprep.mubr.bf16.mxu0 0
      %660 = vmatmul.mubr.bf16.gmra.mrb[0].mxu0 %v451
      %v661 = vpop.f32.mrb[0].mxu0
      %v662 = vadd.f32 %v238, %v661
      %v663 = vpop.f32.mrb[0].mxu0
      %v664 = vpop.f32.mrb[0].mxu0
      %v665 = vadd.f32 %v238, %v664
      %v666 = vpop.f32.mrb[0].mxu0
      %667 = vmatprep.mubr.bf16.mxu0 0
      %668 = vmatmul.mubr.bf16.gmra.mrb[0].mxu0 %v454
      %v669 = vpop.f32.mrb[0].mxu0
      %v670 = vadd.f32 %v238, %v669
      %v671 = vpop.f32.mrb[0].mxu0
      %v672 = vpop.f32.mrb[0].mxu0
      %v673 = vadd.f32 %v238, %v672
      %v674 = vpop.f32.mrb[0].mxu0
      %675 = vmatprep.mubr.bf16.mxu0 0
      %676 = vmatmul.mubr.bf16.gmra.mrb[0].mxu0 %v457
      %v677 = vpop.f32.mrb[0].mxu0
      %v678 = vadd.f32 %v238, %v677
      %v679 = vpop.f32.mrb[0].mxu0
      %v680 = vpop.f32.mrb[0].mxu0
      %v681 = vadd.f32 %v238, %v680
      %v682 = vpop.f32.mrb[0].mxu0
      %683 = vmatprep.mubr.bf16.mxu0 0
      %684 = vmatmul.mubr.bf16.gmra.mrb[0].mxu0 %v460
      %v685 = vpop.f32.mrb[0].mxu0
      %v686 = vadd.f32 %v238, %v685
      %v687 = vpop.f32.mrb[0].mxu0
      %v688 = vpop.f32.mrb[0].mxu0
      %v689 = vadd.f32 %v238, %v688
      %v690 = vpop.f32.mrb[0].mxu0
      %691 = vmatprep.mubr.bf16.mxu0 0
      %692 = vmatmul.mubr.bf16.gmra.mrb[0].mxu0 %v463
      %v693 = vpop.f32.mrb[0].mxu0
      %v694 = vadd.f32 %v238, %v693
      %v695 = vpop.f32.mrb[0].mxu0
      %v696 = vpop.f32.mrb[0].mxu0
      %v697 = vadd.f32 %v238, %v696
      %v698 = vpop.f32.mrb[0].mxu0
      %699 = vmatprep.mubr.bf16.mxu0 0
      %700 = vmatmul.mubr.bf16.gmra.mrb[0].mxu0 %v466
      %v701 = vpop.f32.mrb[0].mxu0
      %v702 = vadd.f32 %v238, %v701
      %v703 = vpop.f32.mrb[0].mxu0
      %v704 = vpop.f32.mrb[0].mxu0
      %v705 = vpop.f32.mrb[0].mxu0
      %706 = vdwg.mxu0
      %v707 = vmax.f32 %v510, 0.0
      %v708 = vmax.f32 %v513, 0.0
      %v709 = vmax.f32 %v518, 0.0
      %v710 = vmax.f32 %v521, 0.0
      %v711 = vmax.f32 %v526, 0.0
      %v712 = vmax.f32 %v529, 0.0
      %v713 = vmax.f32 %v534, 0.0
      %v714 = vmax.f32 %v537, 0.0
      %v715 = vmax.f32 %v542, 0.0
      %v716 = vmax.f32 %v545, 0.0
      %v717 = vmax.f32 %v550, 0.0
      %v718 = vmax.f32 %v553, 0.0
      %v719 = vmax.f32 %v558, 0.0
      %v720 = vmax.f32 %v561, 0.0
      %v721 = vmax.f32 %v566, 0.0
      %v722 = vmax.f32 %v569, 0.0
      %v723 = vmax.f32 %v574, 0.0
      %v724 = vmax.f32 %v577, 0.0
      %v725 = vmax.f32 %v582, 0.0
      %v726 = vmax.f32 %v585, 0.0
      %v727 = vmax.f32 %v590, 0.0
      %v728 = vmax.f32 %v593, 0.0
      %v729 = vmax.f32 %v598, 0.0
      %v730 = vmax.f32 %v601, 0.0
      %v731 = vmax.f32 %v606, 0.0
      %v732 = vmax.f32 %v609, 0.0
      %v733 = vmax.f32 %v614, 0.0
      %v734 = vmax.f32 %v617, 0.0
      %v735 = vmax.f32 %v622, 0.0
      %v736 = vmax.f32 %v625, 0.0
      %v737 = vmax.f32 %v630, 0.0
      %v738 = vmax.f32 %v633, 0.0
      %v739 = vmax.f32 %v638, 0.0
      %v740 = vmax.f32 %v641, 0.0
      %v741 = vmax.f32 %v646, 0.0
      %v742 = vmax.f32 %v649, 0.0
      %v743 = vmax.f32 %v654, 0.0
      %v744 = vmax.f32 %v657, 0.0
      %v745 = vmax.f32 %v662, 0.0
      %v746 = vmax.f32 %v665, 0.0
      %v747 = vmax.f32 %v670, 0.0
      %v748 = vmax.f32 %v673, 0.0
      %v749 = vmax.f32 %v678, 0.0
      %v750 = vmax.f32 %v681, 0.0
      %v751 = vmax.f32 %v686, 0.0
      %v752 = vmax.f32 %v689, 0.0
      %v753 = vmax.f32 %v694, 0.0
      %v754 = vmax.f32 %v697, 0.0
      %v755 = vmax.f32 %v702, 0.0
      %756 = vst [vmem:[#allocation2] sm:$0xff] %v707
      %757 = vst [vmem:[#allocation2 + $0x8] sm:$0xff] %v708
      %758 = vst [vmem:[#allocation2 + $0x10] sm:$0xff] %v709
      %759 = vst [vmem:[#allocation2 + $0x18] sm:$0xff] %v710
      %760 = vst [vmem:[#allocation2 + $0x20] sm:$0xff] %v711
      %761 = vst [vmem:[#allocation2 + $0x28] sm:$0xff] %v712
      %762 = vst [vmem:[#allocation2 + $0x30] sm:$0xff] %v713
      %763 = vst [vmem:[#allocation2 + $0x38] sm:$0xff] %v714
      %764 = vst [vmem:[#allocation2 + $0x40] sm:$0xff] %v715
      %765 = vst [vmem:[#allocation2 + $0x48] sm:$0xff] %v716
      %766 = vst [vmem:[#allocation2 + $0x50] sm:$0xff] %v717
      %767 = vst [vmem:[#allocation2 + $0x58] sm:$0xff] %v718
      %768 = vst [vmem:[#allocation2 + $0x60] sm:$0xff] %v719
      %769 = vst [vmem:[#allocation2 + $0x68] sm:$0xff] %v720
      %770 = vst [vmem:[#allocation2 + $0x70] sm:$0xff] %v721
      %771 = vst [vmem:[#allocation2 + $0x78] sm:$0xff] %v722
      %772 = vst [vmem:[#allocation2 + $0x80] sm:$0xff] %v723
      %773 = vst [vmem:[#allocation2 + $0x88] sm:$0xff] %v724
      %774 = vst [vmem:[#allocation2 + $0x90] sm:$0xff] %v725
      %775 = vst [vmem:[#allocation2 + $0x98] sm:$0xff] %v726
      %776 = vst [vmem:[#allocation2 + $0xa0] sm:$0xff] %v727
      %777 = vst [vmem:[#allocation2 + $0xa8] sm:$0xff] %v728
      %778 = vst [vmem:[#allocation2 + $0xb0] sm:$0xff] %v729
      %779 = vst [vmem:[#allocation2 + $0xb8] sm:$0xff] %v730
      %780 = vst [vmem:[#allocation2 + $0xc0] sm:$0xff] %v731
      %781 = vst [vmem:[#allocation2 + $0xc8] sm:$0xff] %v732
      %782 = vst [vmem:[#allocation2 + $0xd0] sm:$0xff] %v733
      %783 = vst [vmem:[#allocation2 + $0xd8] sm:$0xff] %v734
      %784 = vst [vmem:[#allocation2 + $0xe0] sm:$0xff] %v735
      %785 = vst [vmem:[#allocation2 + $0xe8] sm:$0xff] %v736
      %786 = vst [vmem:[#allocation2 + $0xf0] sm:$0xff] %v737
      %787 = vst [vmem:[#allocation2 + $0xf8] sm:$0xff] %v738
      %788 = vst [vmem:[#allocation2 + $0x100] sm:$0xff] %v739
      %789 = vst [vmem:[#allocation2 + $0x108] sm:$0xff] %v740
      %790 = vst [vmem:[#allocation2 + $0x110] sm:$0xff] %v741
      %791 = vst [vmem:[#allocation2 + $0x118] sm:$0xff] %v742
      %792 = vst [vmem:[#allocation2 + $0x120] sm:$0xff] %v743
      %793 = vst [vmem:[#allocation2 + $0x128] sm:$0xff] %v744
      %794 = vst [vmem:[#allocation2 + $0x130] sm:$0xff] %v745
      %795 = vst [vmem:[#allocation2 + $0x138] sm:$0xff] %v746
      %796 = vst [vmem:[#allocation2 + $0x140] sm:$0xff] %v747
      %797 = vst [vmem:[#allocation2 + $0x148] sm:$0xff] %v748
      %798 = vst [vmem:[#allocation2 + $0x150] sm:$0xff] %v749
      %799 = vst [vmem:[#allocation2 + $0x158] sm:$0xff] %v750
      %800 = vst [vmem:[#allocation2 + $0x160] sm:$0xff] %v751
      %801 = vst [vmem:[#allocation2 + $0x168] sm:$0xff] %v752
      %802 = vst [vmem:[#allocation2 + $0x170] sm:$0xff] %v753
      %803 = vst [vmem:[#allocation2 + $0x178] sm:$0xff] %v754
      %804 = vst [vmem:[#allocation2 + $0x180] sm:$0xff] %v755
      %v805 = vld [vmem:[#allocation2] ss:$2 sm:$0xff]
      %s806 = scalar_lea.vmem [#allocation2], 16
      %v807 = vld [vmem:[%s806] ss:$2 sm:$0xff]
      %s808 = scalar_lea.vmem [#allocation2], 32
      %v809 = vld [vmem:[%s808] ss:$2 sm:$0xff]
      %s810 = scalar_lea.vmem [#allocation2], 48
      %v811 = vld [vmem:[%s810] ss:$2 sm:$0xff]
      %s812 = scalar_lea.vmem [#allocation2], 64
      %v813 = vld [vmem:[%s812] ss:$2 sm:$0xff]
      %s814 = scalar_lea.vmem [#allocation2], 80
      %v815 = vld [vmem:[%s814] ss:$2 sm:$0xff]
      %s816 = scalar_lea.vmem [#allocation2], 96
      %v817 = vld [vmem:[%s816] ss:$2 sm:$0xff]
      %s818 = scalar_lea.vmem [#allocation2], 112
      %v819 = vld [vmem:[%s818] ss:$2 sm:$0xff]
      %s820 = scalar_lea.vmem [#allocation2], 128
      %v821 = vld [vmem:[%s820] ss:$2 sm:$0xff]
      %s822 = scalar_lea.vmem [#allocation2], 144
      %v823 = vld [vmem:[%s822] ss:$2 sm:$0xff]
      %s824 = scalar_lea.vmem [#allocation2], 160
      %v825 = vld [vmem:[%s824] ss:$2 sm:$0xff]
      %s826 = scalar_lea.vmem [#allocation2], 176
      %v827 = vld [vmem:[%s826] ss:$2 sm:$0xff]
      %s828 = scalar_lea.vmem [#allocation2], 192
      %v829 = vld [vmem:[%s828] ss:$2 sm:$0xff]
      %s830 = scalar_lea.vmem [#allocation2], 208
      %v831 = vld [vmem:[%s830] ss:$2 sm:$0xff]
      %s832 = scalar_lea.vmem [#allocation2], 224
      %v833 = vld [vmem:[%s832] ss:$2 sm:$0xff]
      %s834 = scalar_lea.vmem [#allocation2], 240
      %v835 = vld [vmem:[%s834] ss:$2 sm:$0xff]
      %s836 = scalar_lea.vmem [#allocation2], 256
      %v837 = vld [vmem:[%s836] ss:$2 sm:$0xff]
      %s838 = scalar_lea.vmem [#allocation2], 272
      %v839 = vld [vmem:[%s838] ss:$2 sm:$0xff]
      %s840 = scalar_lea.vmem [#allocation2], 288
      %v841 = vld [vmem:[%s840] ss:$2 sm:$0xff]
      %s842 = scalar_lea.vmem [#allocation2], 304
      %v843 = vld [vmem:[%s842] ss:$2 sm:$0xff]
      %s844 = scalar_lea.vmem [#allocation2], 320
      %v845 = vld [vmem:[%s844] ss:$2 sm:$0xff]
      %s846 = scalar_lea.vmem [#allocation2], 336
      %v847 = vld [vmem:[%s846] ss:$2 sm:$0xff]
      %s848 = scalar_lea.vmem [#allocation2], 352
      %v849 = vld [vmem:[%s848] ss:$2 sm:$0xff]
      %s850 = scalar_lea.vmem [#allocation2], 368
      %v851 = vld [vmem:[%s850] ss:$2 sm:$0xff]
      %s852 = scalar_lea.vmem [#allocation2], 384
      %v853 = vld [vmem:[%s852] ss:$2 sm:$0xf]
      %s854 = scalar_lea.vmem [#allocation2], 1
      %v855 = vld [vmem:[%s854] ss:$2 sm:$0xff]
      %s856 = scalar_lea.vmem [#allocation2], 17
      %v857 = vld [vmem:[%s856] ss:$2 sm:$0xff]
      %s858 = scalar_lea.vmem [#allocation2], 33
      %v859 = vld [vmem:[%s858] ss:$2 sm:$0xff]
      %s860 = scalar_lea.vmem [#allocation2], 49
      %v861 = vld [vmem:[%s860] ss:$2 sm:$0xff]
      %s862 = scalar_lea.vmem [#allocation2], 65
      %v863 = vld [vmem:[%s862] ss:$2 sm:$0xff]
      %s864 = scalar_lea.vmem [#allocation2], 81
      %v865 = vld [vmem:[%s864] ss:$2 sm:$0xff]
      %s866 = scalar_lea.vmem [#allocation2], 97
      %v867 = vld [vmem:[%s866] ss:$2 sm:$0xff]
      %s868 = scalar_lea.vmem [#allocation2], 113
      %v869 = vld [vmem:[%s868] ss:$2 sm:$0xff]
      %s870 = scalar_lea.vmem [#allocation2], 129
      %v871 = vld [vmem:[%s870] ss:$2 sm:$0xff]
      %s872 = scalar_lea.vmem [#allocation2], 145
      %v873 = vld [vmem:[%s872] ss:$2 sm:$0xff]
      %s874 = scalar_lea.vmem [#allocation2], 161
      %v875 = vld [vmem:[%s874] ss:$2 sm:$0xff]
      %s876 = scalar_lea.vmem [#allocation2], 177
      %v877 = vld [vmem:[%s876] ss:$2 sm:$0xff]
      %s878 = scalar_lea.vmem [#allocation2], 193
      %v879 = vld [vmem:[%s878] ss:$2 sm:$0xff]
      %s880 = scalar_lea.vmem [#allocation2], 209
      %v881 = vld [vmem:[%s880] ss:$2 sm:$0xff]
      %s882 = scalar_lea.vmem [#allocation2], 225
      %v883 = vld [vmem:[%s882] ss:$2 sm:$0xff]
      %s884 = scalar_lea.vmem [#allocation2], 241
      %v885 = vld [vmem:[%s884] ss:$2 sm:$0xff]
      %s886 = scalar_lea.vmem [#allocation2], 257
      %v887 = vld [vmem:[%s886] ss:$2 sm:$0xff]
      %s888 = scalar_lea.vmem [#allocation2], 273
      %v889 = vld [vmem:[%s888] ss:$2 sm:$0xff]
      %s890 = scalar_lea.vmem [#allocation2], 289
      %v891 = vld [vmem:[%s890] ss:$2 sm:$0xff]
      %s892 = scalar_lea.vmem [#allocation2], 305
      %v893 = vld [vmem:[%s892] ss:$2 sm:$0xff]
      %s894 = scalar_lea.vmem [#allocation2], 321
      %v895 = vld [vmem:[%s894] ss:$2 sm:$0xff]
      %s896 = scalar_lea.vmem [#allocation2], 337
      %v897 = vld [vmem:[%s896] ss:$2 sm:$0xff]
      %s898 = scalar_lea.vmem [#allocation2], 353
      %v899 = vld [vmem:[%s898] ss:$2 sm:$0xff]
      %s900 = scalar_lea.vmem [#allocation2], 369
      %v901 = vld [vmem:[%s900] ss:$2 sm:$0xff]
      %s902 = scalar_lea.vmem [#allocation2], 385
      %v903 = vld [vmem:[%s902] ss:$2 sm:$0xf]
      %v904 = vmax.f32 %v805, %v855
      %v905 = vmax.f32 %v807, %v857
      %v906 = vmax.f32 %v809, %v859
      %v907 = vmax.f32 %v811, %v861
      %v908 = vmax.f32 %v813, %v863
      %v909 = vmax.f32 %v815, %v865
      %v910 = vmax.f32 %v817, %v867
      %v911 = vmax.f32 %v819, %v869
      %v912 = vmax.f32 %v821, %v871
      %v913 = vmax.f32 %v823, %v873
      %v914 = vmax.f32 %v825, %v875
      %v915 = vmax.f32 %v827, %v877
      %v916 = vmax.f32 %v829, %v879
      %v917 = vmax.f32 %v831, %v881
      %v918 = vmax.f32 %v833, %v883
      %v919 = vmax.f32 %v835, %v885
      %v920 = vmax.f32 %v837, %v887
      %v921 = vmax.f32 %v839, %v889
      %v922 = vmax.f32 %v841, %v891
      %v923 = vmax.f32 %v843, %v893
      %v924 = vmax.f32 %v845, %v895
      %v925 = vmax.f32 %v847, %v897
      %v926 = vmax.f32 %v849, %v899
      %v927 = vmax.f32 %v851, %v901
      %v928 = vmax.f32 %v853, %v903
      %929 = vst [vmem:[#allocation3] sm:$0xff] %v904
      %930 = vst [vmem:[#allocation3 + $0x8] sm:$0xff] %v905
      %931 = vst [vmem:[#allocation3 + $0x10] sm:$0xff] %v906
      %932 = vst [vmem:[#allocation3 + $0x18] sm:$0xff] %v907
      %933 = vst [vmem:[#allocation3 + $0x20] sm:$0xff] %v908
      %934 = vst [vmem:[#allocation3 + $0x28] sm:$0xff] %v909
      %935 = vst [vmem:[#allocation3 + $0x30] sm:$0xff] %v910
      %936 = vst [vmem:[#allocation3 + $0x38] sm:$0xff] %v911
      %937 = vst [vmem:[#allocation3 + $0x40] sm:$0xff] %v912
      %938 = vst [vmem:[#allocation3 + $0x48] sm:$0xff] %v913
      %939 = vst [vmem:[#allocation3 + $0x50] sm:$0xff] %v914
      %940 = vst [vmem:[#allocation3 + $0x58] sm:$0xff] %v915
      %941 = vst [vmem:[#allocation3 + $0x60] sm:$0xff] %v916
      %942 = vst [vmem:[#allocation3 + $0x68] sm:$0xff] %v917
      %943 = vst [vmem:[#allocation3 + $0x70] sm:$0xff] %v918
      %944 = vst [vmem:[#allocation3 + $0x78] sm:$0xff] %v919
      %945 = vst [vmem:[#allocation3 + $0x80] sm:$0xff] %v920
      %946 = vst [vmem:[#allocation3 + $0x88] sm:$0xff] %v921
      %947 = vst [vmem:[#allocation3 + $0x90] sm:$0xff] %v922
      %948 = vst [vmem:[#allocation3 + $0x98] sm:$0xff] %v923
      %949 = vst [vmem:[#allocation3 + $0xa0] sm:$0xff] %v924
      %950 = vst [vmem:[#allocation3 + $0xa8] sm:$0xff] %v925
      %951 = vst [vmem:[#allocation3 + $0xb0] sm:$0xff] %v926
      %952 = vst [vmem:[#allocation3 + $0xb8] sm:$0xff] %v927
      %953 = vst [vmem:[#allocation3 + $0xc0] sm:$0xf] %v928
      %v954 = vld [vmem:[#allocation3] sm:$0xff]
      %v955 = vld [vmem:[#allocation3 + $0x8] sm:$0x3f]
      %v956 = vld [vmem:[#allocation3 + $0xe] sm:$0xff]
      %v957 = vld [vmem:[#allocation3 + $0x16] sm:$0x3f]
      %v958 = vmax.f32 %v954, %v956
      %v959 = vmax.f32 %v955, %v957
      %v960 = vpack.c.bf16 %v959, %v958
      %v962 = vunpack.c.l.b16 %v960
      %v963 = vunpack.c.h.b16 %v960
      %v964 = vpack.c.b16 %v962, %v962
      %v965 = vpack.c.b16 %v963, %v963
      %968 = vst [vmem:[%s172] sm:$0xf] %v964
      %969 = vst [vmem:[%s172 + $0x4] sm:$0x7] %v965
      %v970 = vld [vmem:[#allocation3 + $0x1c] sm:$0xff]
      %v971 = vld [vmem:[#allocation3 + $0x24] sm:$0x3f]
      %v972 = vld [vmem:[#allocation3 + $0x2a] sm:$0xff]
      %v973 = vld [vmem:[#allocation3 + $0x32] sm:$0x3f]
      %v974 = vmax.f32 %v970, %v972
      %v975 = vmax.f32 %v971, %v973
      %v976 = vpack.c.bf16 %v975, %v974
      %v978 = vunpack.c.l.b16 %v976
      %v979 = vunpack.c.h.b16 %v976
      %v980 = vpack.c.b16 %v978, %v978
      %v981 = vpack.c.b16 %v979, %v979
      %vm982 = vcmask 1042432
      %vm983 = vcmask 1046532
      %vm984 = vmor %vm982, %vm983
      %v985 = vrot.slane %v980, 5
      %v986 = vrot.slane %v985, 4
      %v987 = vrot.slane %v981, 5
      %v988 = vsel %vm984, %v986, %v987
      %v989 = vrot.slane %v987, 4
      %993 = vst [vmem:[%s172 + $0x4] sm:$0x8] %v985
      %994 = vst [vmem:[%s172 + $0x8] sm:$0xf] %v988
      %995 = vst [vmem:[%s172 + $0xc] sm:$0x3] %v989
      %v996 = vld [vmem:[#allocation3 + $0x38] sm:$0xff]
      %v997 = vld [vmem:[#allocation3 + $0x40] sm:$0x3f]
      %v998 = vld [vmem:[#allocation3 + $0x46] sm:$0xff]
      %v999 = vld [vmem:[#allocation3 + $0x4e] sm:$0x3f]
      %v1000 = vmax.f32 %v996, %v998
      %v1001 = vmax.f32 %v997, %v999
      %v1002 = vpack.c.bf16 %v1001, %v1000
      %v1004 = vunpack.c.l.b16 %v1002
      %v1005 = vunpack.c.h.b16 %v1002
      %v1006 = vpack.c.b16 %v1004, %v1004
      %v1007 = vpack.c.b16 %v1005, %v1005
      %vm1008 = vcmask 1041408
      %vm1009 = vcmask 1045508
      %vm1010 = vmor %vm1008, %vm1009
      %v1011 = vrot.slane %v1006, 6
      %v1012 = vrot.slane %v1011, 4
      %v1013 = vrot.slane %v1007, 6
      %v1014 = vsel %vm1010, %v1012, %v1013
      %v1015 = vrot.slane %v1013, 4
      %1019 = vst [vmem:[%s172 + $0xc] sm:$0xc] %v1011
      %1020 = vst [vmem:[%s172 + $0x10] sm:$0xf] %v1014
      %1021 = vst [vmem:[%s172 + $0x14] sm:$0x1] %v1015
      %v1022 = vld [vmem:[#allocation3 + $0x54] sm:$0xff]
      %v1023 = vld [vmem:[#allocation3 + $0x5c] sm:$0x3f]
      %v1024 = vld [vmem:[#allocation3 + $0x62] sm:$0xff]
      %v1025 = vld [vmem:[#allocation3 + $0x6a] sm:$0x3f]
      %v1026 = vmax.f32 %v1022, %v1024
      %v1027 = vmax.f32 %v1023, %v1025
      %v1028 = vpack.c.bf16 %v1027, %v1026
      %v1030 = vunpack.c.l.b16 %v1028
      %v1031 = vunpack.c.h.b16 %v1028
      %v1032 = vpack.c.b16 %v1030, %v1030
      %v1033 = vpack.c.b16 %v1031, %v1031
      %vm1034 = vcmask 1040384
      %vm1035 = vcmask 1044484
      %vm1036 = vmor %vm1034, %vm1035
      %v1037 = vrot.slane %v1032, 7
      %v1038 = vrot.slane %v1037, 4
      %v1039 = vrot.slane %v1033, 7
      %v1040 = vsel %vm1036, %v1038, %v1039
      %1043 = vst [vmem:[%s172 + $0x14] sm:$0xe] %v1037
      %1044 = vst [vmem:[%s172 + $0x18] sm:$0xf] %v1040
      %v1045 = vld [vmem:[#allocation3 + $0x70] sm:$0xff]
      %v1046 = vld [vmem:[#allocation3 + $0x78] sm:$0x3f]
      %v1047 = vld [vmem:[#allocation3 + $0x7e] sm:$0xff]
      %v1048 = vld [vmem:[#allocation3 + $0x86] sm:$0x3f]
      %v1049 = vmax.f32 %v1045, %v1047
      %v1050 = vmax.f32 %v1046, %v1048
      %v1051 = vpack.c.bf16 %v1050, %v1049
      %v1053 = vunpack.c.l.b16 %v1051
      %v1054 = vunpack.c.h.b16 %v1051
      %v1055 = vpack.c.b16 %v1053, %v1053
      %v1056 = vpack.c.b16 %v1054, %v1054
      %1059 = vst [vmem:[%s172 + $0x1c] sm:$0xf] %v1055
      %1060 = vst [vmem:[%s172 + $0x20] sm:$0x7] %v1056
      %v1061 = vld [vmem:[#allocation3 + $0x8c] sm:$0xff]
      %v1062 = vld [vmem:[#allocation3 + $0x94] sm:$0x3f]
      %v1063 = vld [vmem:[#allocation3 + $0x9a] sm:$0xff]
      %v1064 = vld [vmem:[#allocation3 + $0xa2] sm:$0x3f]
      %v1065 = vmax.f32 %v1061, %v1063
      %v1066 = vmax.f32 %v1062, %v1064
      %v1067 = vpack.c.bf16 %v1066, %v1065
      %v1069 = vunpack.c.l.b16 %v1067
      %v1070 = vunpack.c.h.b16 %v1067
      %v1071 = vpack.c.b16 %v1069, %v1069
      %v1072 = vpack.c.b16 %v1070, %v1070
      %v1073 = vrot.slane %v1071, 5
      %v1074 = vrot.slane %v1073, 4
      %v1075 = vrot.slane %v1072, 5
      %v1076 = vsel %vm984, %v1074, %v1075
      %v1077 = vrot.slane %v1075, 4
      %1081 = vst [vmem:[%s172 + $0x20] sm:$0x8] %v1073
      %1082 = vst [vmem:[%s172 + $0x24] sm:$0xf] %v1076
      %1083 = vst [vmem:[%s172 + $0x28] sm:$0x3] %v1077
      %v1084 = vld [vmem:[#allocation3 + $0xa8] sm:$0xff]
      %v1085 = vld [vmem:[#allocation3 + $0xb0] sm:$0x3f]
      %v1086 = vld [vmem:[#allocation3 + $0xb6] sm:$0xff]
      %v1087 = vld [vmem:[#allocation3 + $0xbe] sm:$0x3f]
      %v1088 = vmax.f32 %v1084, %v1086
      %v1089 = vmax.f32 %v1085, %v1087
      %v1090 = vpack.c.bf16 %v1089, %v1088
      %v1092 = vunpack.c.l.b16 %v1090
      %v1093 = vunpack.c.h.b16 %v1090
      %v1094 = vpack.c.b16 %v1092, %v1092
      %v1095 = vpack.c.b16 %v1093, %v1093
      %v1096 = vrot.slane %v1094, 6
      %v1097 = vrot.slane %v1096, 4
      %v1098 = vrot.slane %v1095, 6
      %v1099 = vsel %vm1010, %v1097, %v1098
      %v1100 = vrot.slane %v1098, 4
      %1104 = vst [vmem:[%s172 + $0x28] sm:$0xc] %v1096
      %1105 = vst [vmem:[%s172 + $0x2c] sm:$0xf] %v1099
      %1106 = vst [vmem:[%s172 + $0x30] sm:$0x1] %v1100
      %p1107 = scmp.lt.s32.totalorder %s14, 7
      %s1108 = scalar_select %p1107, %s14, 7
      %s1109 = smul.addr %s1108, 13
      %s1110 = smul.addr %s1109, 4
      %s1111 = scalar_lea.vmem %s3, %s1110
      // Predicated region
      $region33: #{net_forward.3} parent=31 // pred_check
        %p1112 = pneg %p100
      $region34: #{net_forward.3} parent=31 // pred_check_branch
        %1114 = sbr.rel (%p1112) target = $region36
      $region35: #{net_forward.3} parent=31 // pred_region
        _
      $region36: #{net_forward.3} parent=31 // pred_fallthru
        _
    $region32: #{net_forward.3} parent=5 // pred_fallthru
      _
    %p1115 = scmp.le.s32.totalorder 2, %s9
    // Predicated region
    $region37: #{net_forward.3} parent=5 // pred_check
      %p1116 = pneg %p1115
    $region38: #{net_forward.3} parent=5 // pred_check_branch
      %1118 = sbr.rel (%p1116) target = $region40
    $region39: #{net_forward.3} parent=5 // pred_region
      %s1119 = ssub.s32 %s9, 2
      // Predicated region
      $region41: #{net_forward.3} parent=39 // pred_check
        %p1120 = pneg %p106
      $region42: #{net_forward.3} parent=39 // pred_check_branch
        %1122 = sbr.rel (%p1120) target = $region44
      $region43: #{net_forward.3} parent=39 // pred_region
        %p1123 = scmp.lt.s32.totalorder %s15, 7
        %s1124 = scalar_select %p1123, %s15, 7
        %s1125 = smul.addr %s1124, 13
        %s1126 = smul.addr %s1125, 4
        %s1127 = scalar_lea.vmem %s3, %s1126
      $region44: #{net_forward.3} parent=39 // pred_fallthru
        _
    $region40: #{net_forward.3} parent=5 // pred_fallthru
      _
  $region6: #{net_forward.3} parent=0 // loop_footer
    %s13 = sadd.s32 1, %s9
  $region7: #{net_forward.3} parent=0 // loop_footer_branch
    %8 = sbr.rel target = $region3
  $region8: #{net_forward.3} parent=0 // loop_exit
    _

// kernel: net_forward.5
$region0: #{net_forward.5}
  #allocation0 [shape = 'u32[]', space=smem, size = 0x4, offset = 0x4, fixed_abs, tag = 'smem constant byte address 0x4 - core index']
  #allocation1 [shape = 'u32[144,128]{1,0:T(1,128)}', space=vmem, size = 0x12000, scoped, tag = 'internal scratch']
  %s0 = inlined_call_operand.vmem [shape: bf16[4,3200], index: 0, kind: input, shape index: {}]
  %s1 = inlined_call_operand.vmem [shape: bf16[3200,256], index: 1, kind: input, shape index: {}]
  %s2 = inlined_call_operand.vmem [shape: f32[1,256], index: 2, kind: input, shape index: {}]
  %s3 = inlined_call_operand.vmem [shape: bf16[256,256], index: 3, kind: input, shape index: {}]
  %s4 = inlined_call_operand.vmem [shape: f32[1,256], index: 4, kind: input, shape index: {}]
  %s5 = inlined_call_operand.vmem [shape: bf16[256,128], index: 5, kind: input, shape index: {}]
  %s6 = inlined_call_operand.vmem [shape: f32[1,128], index: 6, kind: input, shape index: {}]
  %s7 = inlined_call_operand.hbm [shape: f32[4,128], index: 7, kind: output, shape index: {}]
  %s8 = sld [smem:[#allocation0]]
  $region38: #{net_forward.5} parent=0
    _
  %s10 = ssub.s32 1, %s8
  %s11 = scalar_select 0, %s10, %s8
  $region1: #{net_forward.5} parent=0
    #allocation2 [shape = 'u8[2048]{0}', space=vmem, size = 0x800, scoped, tag = 'output window, operand 0, single buffered']
    #allocation3 [shape = 's32[1]{0}', space=sflag, size = 0x4, scoped, tag = 'scoped memory for net_forward.5']
    %12 = vsyncpa [#allocation3], 0
    // Predicated region
    $region2: #{net_forward.5} parent=1 // pred_check
      _
    $region3: #{net_forward.5} parent=1 // pred_check_branch
      %14 = sbr.rel (0) target = $region5
    $region4: #{net_forward.5} parent=1 // pred_region
      _
    $region5: #{net_forward.5} parent=1 // pred_fallthru
      _
    // Predicated region
    $region6: #{net_forward.5} parent=1 // pred_check
      _
    $region7: #{net_forward.5} parent=1 // pred_check_branch
      %16 = sbr.rel (0) target = $region9
    $region8: #{net_forward.5} parent=1 // pred_region
      _
    $region9: #{net_forward.5} parent=1 // pred_fallthru
      _
    // Predicated region
    $region10: #{net_forward.5} parent=1 // pred_check
      _
    $region11: #{net_forward.5} parent=1 // pred_check_branch
      %18 = sbr.rel (0) target = $region13
    $region12: #{net_forward.5} parent=1 // pred_region
      _
    $region13: #{net_forward.5} parent=1 // pred_fallthru
      _
    // Predicated region
    $region14: #{net_forward.5} parent=1 // pred_check
      _
    $region15: #{net_forward.5} parent=1 // pred_check_branch
      %20 = sbr.rel (0) target = $region17
    $region16: #{net_forward.5} parent=1 // pred_region
      _
    $region17: #{net_forward.5} parent=1 // pred_fallthru
      _
    // Predicated region
    $region18: #{net_forward.5} parent=1 // pred_check
      _
    $region19: #{net_forward.5} parent=1 // pred_check_branch
      %22 = sbr.rel (0) target = $region21
    $region20: #{net_forward.5} parent=1 // pred_region
      _
    $region21: #{net_forward.5} parent=1 // pred_fallthru
      _
    // Predicated region
    $region22: #{net_forward.5} parent=1 // pred_check
      _
    $region23: #{net_forward.5} parent=1 // pred_check_branch
      %24 = sbr.rel (0) target = $region25
    $region24: #{net_forward.5} parent=1 // pred_region
      _
    $region25: #{net_forward.5} parent=1 // pred_fallthru
      _
    // Predicated region
    $region26: #{net_forward.5} parent=1 // pred_check
      _
    $region27: #{net_forward.5} parent=1 // pred_check_branch
      %26 = sbr.rel (0) target = $region29
    $region28: #{net_forward.5} parent=1 // pred_region
      _
    $region29: #{net_forward.5} parent=1 // pred_fallthru
      _
    %v28 = vld [vmem:[%s0] sm:$0xff]
    %v29 = vld [vmem:[%s0 + $0x8] sm:$0xff]
    %v30 = vld [vmem:[%s0 + $0x10] sm:$0xff]
    %v31 = vld [vmem:[%s0 + $0x18] sm:$0xff]
    %v32 = vld [vmem:[%s0 + $0x20] sm:$0xff]
    %v33 = vld [vmem:[%s0 + $0x28] sm:$0xff]
    %v34 = vld [vmem:[%s0 + $0x30] sm:$0x3]
    %v35 = vld [vmem:[%s1] sm:$0xff]
    %v36 = vld [vmem:[%s1 + $0x8] sm:$0xff]
    %v37 = vld [vmem:[%s1 + $0x10] sm:$0xff]
    %v38 = vld [vmem:[%s1 + $0x18] sm:$0xff]
    %v39 = vld [vmem:[%s1 + $0x20] sm:$0xff]
    %v40 = vld [vmem:[%s1 + $0x28] sm:$0xff]
    %v41 = vld [vmem:[%s1 + $0x30] sm:$0xff]
    %v42 = vld [vmem:[%s1 + $0x38] sm:$0xff]
    %v43 = vld [vmem:[%s1 + $0x40] sm:$0xff]
    %v44 = vld [vmem:[%s1 + $0x48] sm:$0xff]
    %v45 = vld [vmem:[%s1 + $0x50] sm:$0xff]
    %v46 = vld [vmem:[%s1 + $0x58] sm:$0xff]
    %v47 = vld [vmem:[%s1 + $0x60] sm:$0xff]
    %v48 = vld [vmem:[%s1 + $0x68] sm:$0xff]
    %v49 = vld [vmem:[%s1 + $0x70] sm:$0xff]
    %v50 = vld [vmem:[%s1 + $0x78] sm:$0xff]
    %v51 = vld [vmem:[%s1 + $0x80] sm:$0xff]
    %v52 = vld [vmem:[%s1 + $0x88] sm:$0xff]
    %v53 = vld [vmem:[%s1 + $0x90] sm:$0xff]
    %v54 = vld [vmem:[%s1 + $0x98] sm:$0xff]
    %v55 = vld [vmem:[%s1 + $0xa0] sm:$0xff]
    %v56 = vld [vmem:[%s1 + $0xa8] sm:$0xff]
    %v57 = vld [vmem:[%s1 + $0xb0] sm:$0xff]
    %v58 = vld [vmem:[%s1 + $0xb8] sm:$0xff]
    %v59 = vld [vmem:[%s1 + $0xc0] sm:$0xff]
    %v60 = vld [vmem:[%s1 + $0xc8] sm:$0xff]
    %v61 = vld [vmem:[%s1 + $0xd0] sm:$0xff]
    %v62 = vld [vmem:[%s1 + $0xd8] sm:$0xff]
    %v63 = vld [vmem:[%s1 + $0xe0] sm:$0xff]
    %v64 = vld [vmem:[%s1 + $0xe8] sm:$0xff]
    %v65 = vld [vmem:[%s1 + $0xf0] sm:$0xff]
    %v66 = vld [vmem:[%s1 + $0xf8] sm:$0xff]
    %v67 = vld [vmem:[%s1 + $0x100] sm:$0xff]
    %v68 = vld [vmem:[%s1 + $0x108] sm:$0xff]
    %v69 = vld [vmem:[%s1 + $0x110] sm:$0xff]
    %v70 = vld [vmem:[%s1 + $0x118] sm:$0xff]
    %v71 = vld [vmem:[%s1 + $0x120] sm:$0xff]
    %v72 = vld [vmem:[%s1 + $0x128] sm:$0xff]
    %v73 = vld [vmem:[%s1 + $0x130] sm:$0xff]
    %v74 = vld [vmem:[%s1 + $0x138] sm:$0xff]
    %v75 = vld [vmem:[%s1 + $0x140] sm:$0xff]
    %v76 = vld [vmem:[%s1 + $0x148] sm:$0xff]
    %v77 = vld [vmem:[%s1 + $0x150] sm:$0xff]
    %v78 = vld [vmem:[%s1 + $0x158] sm:$0xff]
    %v79 = vld [vmem:[%s1 + $0x160] sm:$0xff]
    %v80 = vld [vmem:[%s1 + $0x168] sm:$0xff]
    %v81 = vld [vmem:[%s1 + $0x170] sm:$0xff]
    %v82 = vld [vmem:[%s1 + $0x178] sm:$0xff]
    %v83 = vld [vmem:[%s1 + $0x180] sm:$0xff]
    %v84 = vld [vmem:[%s1 + $0x188] sm:$0xff]
    %v85 = vld [vmem:[%s1 + $0x190] sm:$0xff]
    %v86 = vld [vmem:[%s1 + $0x198] sm:$0xff]
    %v87 = vld [vmem:[%s1 + $0x1a0] sm:$0xff]
    %v88 = vld [vmem:[%s1 + $0x1a8] sm:$0xff]
    %v89 = vld [vmem:[%s1 + $0x1b0] sm:$0xff]
    %v90 = vld [vmem:[%s1 + $0x1b8] sm:$0xff]
    %v91 = vld [vmem:[%s1 + $0x1c0] sm:$0xff]
    %v92 = vld [vmem:[%s1 + $0x1c8] sm:$0xff]
    %v93 = vld [vmem:[%s1 + $0x1d0] sm:$0xff]
    %v94 = vld [vmem:[%s1 + $0x1d8] sm:$0xff]
    %v95 = vld [vmem:[%s1 + $0x1e0] sm:$0xff]
    %v96 = vld [vmem:[%s1 + $0x1e8] sm:$0xff]
    %v97 = vld [vmem:[%s1 + $0x1f0] sm:$0xff]
    %v98 = vld [vmem:[%s1 + $0x1f8] sm:$0xff]
    %v99 = vld [vmem:[%s1 + $0x200] sm:$0xff]
    %v100 = vld [vmem:[%s1 + $0x208] sm:$0xff]
    %v101 = vld [vmem:[%s1 + $0x210] sm:$0xff]
    %v102 = vld [vmem:[%s1 + $0x218] sm:$0xff]
    %v103 = vld [vmem:[%s1 + $0x220] sm:$0xff]
    %v104 = vld [vmem:[%s1 + $0x228] sm:$0xff]
    %v105 = vld [vmem:[%s1 + $0x230] sm:$0xff]
    %v106 = vld [vmem:[%s1 + $0x238] sm:$0xff]
    %v107 = vld [vmem:[%s1 + $0x240] sm:$0xff]
    %v108 = vld [vmem:[%s1 + $0x248] sm:$0xff]
    %v109 = vld [vmem:[%s1 + $0x250] sm:$0xff]
    %v110 = vld [vmem:[%s1 + $0x258] sm:$0xff]
    %v111 = vld [vmem:[%s1 + $0x260] sm:$0xff]
    %v112 = vld [vmem:[%s1 + $0x268] sm:$0xff]
    %v113 = vld [vmem:[%s1 + $0x270] sm:$0xff]
    %v114 = vld [vmem:[%s1 + $0x278] sm:$0xff]
    %v115 = vld [vmem:[%s1 + $0x280] sm:$0xff]
    %v116 = vld [vmem:[%s1 + $0x288] sm:$0xff]
    %v117 = vld [vmem:[%s1 + $0x290] sm:$0xff]
    %v118 = vld [vmem:[%s1 + $0x298] sm:$0xff]
    %v119 = vld [vmem:[%s1 + $0x2a0] sm:$0xff]
    %v120 = vld [vmem:[%s1 + $0x2a8] sm:$0xff]
    %v121 = vld [vmem:[%s1 + $0x2b0] sm:$0xff]
    %v122 = vld [vmem:[%s1 + $0x2b8] sm:$0xff]
    %v123 = vld [vmem:[%s1 + $0x2c0] sm:$0xff]
    %v124 = vld [vmem:[%s1 + $0x2c8] sm:$0xff]
    %v125 = vld [vmem:[%s1 + $0x2d0] sm:$0xff]
    %v126 = vld [vmem:[%s1 + $0x2d8] sm:$0xff]
    %v127 = vld [vmem:[%s1 + $0x2e0] sm:$0xff]
    %v128 = vld [vmem:[%s1 + $0x2e8] sm:$0xff]
    %v129 = vld [vmem:[%s1 + $0x2f0] sm:$0xff]
    %v130 = vld [vmem:[%s1 + $0x2f8] sm:$0xff]
    %v131 = vld [vmem:[%s1 + $0x300] sm:$0xff]
    %v132 = vld [vmem:[%s1 + $0x308] sm:$0xff]
    %v133 = vld [vmem:[%s1 + $0x310] sm:$0xff]
    %v134 = vld [vmem:[%s1 + $0x318] sm:$0xff]
    %v135 = vld [vmem:[%s1 + $0x320] sm:$0xff]
    %v136 = vld [vmem:[%s1 + $0x328] sm:$0xff]
    %v137 = vld [vmem:[%s1 + $0x330] sm:$0xff]
    %v138 = vld [vmem:[%s1 + $0x338] sm:$0xff]
    %v139 = vld [vmem:[%s1 + $0x340] sm:$0xff]
    %v140 = vld [vmem:[%s1 + $0x348] sm:$0xff]
    %v141 = vld [vmem:[%s1 + $0x350] sm:$0xff]
    %v142 = vld [vmem:[%s1 + $0x358] sm:$0xff]
    %v143 = vld [vmem:[%s1 + $0x360] sm:$0xff]
    %v144 = vld [vmem:[%s1 + $0x368] sm:$0xff]
    %v145 = vld [vmem:[%s1 + $0x370] sm:$0xff]
    %v146 = vld [vmem:[%s1 + $0x378] sm:$0xff]
    %v147 = vld [vmem:[%s1 + $0x380] sm:$0xff]
    %v148 = vld [vmem:[%s1 + $0x388] sm:$0xff]
    %v149 = vld [vmem:[%s1 + $0x390] sm:$0xff]
    %v150 = vld [vmem:[%s1 + $0x398] sm:$0xff]
    %v151 = vld [vmem:[%s1 + $0x3a0] sm:$0xff]
    %v152 = vld [vmem:[%s1 + $0x3a8] sm:$0xff]
    %v153 = vld [vmem:[%s1 + $0x3b0] sm:$0xff]
    %v154 = vld [vmem:[%s1 + $0x3b8] sm:$0xff]
    %v155 = vld [vmem:[%s1 + $0x3c0] sm:$0xff]
    %v156 = vld [vmem:[%s1 + $0x3c8] sm:$0xff]
    %v157 = vld [vmem:[%s1 + $0x3d0] sm:$0xff]
    %v158 = vld [vmem:[%s1 + $0x3d8] sm:$0xff]
    %v159 = vld [vmem:[%s1 + $0x3e0] sm:$0xff]
    %v160 = vld [vmem:[%s1 + $0x3e8] sm:$0xff]
    %v161 = vld [vmem:[%s1 + $0x3f0] sm:$0xff]
    %v162 = vld [vmem:[%s1 + $0x3f8] sm:$0xff]
    %v163 = vld [vmem:[%s1 + $0x400] sm:$0xff]
    %v164 = vld [vmem:[%s1 + $0x408] sm:$0xff]
    %v165 = vld [vmem:[%s1 + $0x410] sm:$0xff]
    %v166 = vld [vmem:[%s1 + $0x418] sm:$0xff]
    %v167 = vld [vmem:[%s1 + $0x420] sm:$0xff]
    %v168 = vld [vmem:[%s1 + $0x428] sm:$0xff]
    %v169 = vld [vmem:[%s1 + $0x430] sm:$0xff]
    %v170 = vld [vmem:[%s1 + $0x438] sm:$0xff]
    %v171 = vld [vmem:[%s1 + $0x440] sm:$0xff]
    %v172 = vld [vmem:[%s1 + $0x448] sm:$0xff]
    %v173 = vld [vmem:[%s1 + $0x450] sm:$0xff]
    %v174 = vld [vmem:[%s1 + $0x458] sm:$0xff]
    %v175 = vld [vmem:[%s1 + $0x460] sm:$0xff]
    %v176 = vld [vmem:[%s1 + $0x468] sm:$0xff]
    %v177 = vld [vmem:[%s1 + $0x470] sm:$0xff]
    %v178 = vld [vmem:[%s1 + $0x478] sm:$0xff]
    %v179 = vld [vmem:[%s1 + $0x480] sm:$0xff]
    %v180 = vld [vmem:[%s1 + $0x488] sm:$0xff]
    %v181 = vld [vmem:[%s1 + $0x490] sm:$0xff]
    %v182 = vld [vmem:[%s1 + $0x498] sm:$0xff]
    %v183 = vld [vmem:[%s1 + $0x4a0] sm:$0xff]
    %v184 = vld [vmem:[%s1 + $0x4a8] sm:$0xff]
    %v185 = vld [vmem:[%s1 + $0x4b0] sm:$0xff]
    %v186 = vld [vmem:[%s1 + $0x4b8] sm:$0xff]
    %v187 = vld [vmem:[%s1 + $0x4c0] sm:$0xff]
    %v188 = vld [vmem:[%s1 + $0x4c8] sm:$0xff]
    %v189 = vld [vmem:[%s1 + $0x4d0] sm:$0xff]
    %v190 = vld [vmem:[%s1 + $0x4d8] sm:$0xff]
    %v191 = vld [vmem:[%s1 + $0x4e0] sm:$0xff]
    %v192 = vld [vmem:[%s1 + $0x4e8] sm:$0xff]
    %v193 = vld [vmem:[%s1 + $0x4f0] sm:$0xff]
    %v194 = vld [vmem:[%s1 + $0x4f8] sm:$0xff]
    %v195 = vld [vmem:[%s1 + $0x500] sm:$0xff]
    %v196 = vld [vmem:[%s1 + $0x508] sm:$0xff]
    %v197 = vld [vmem:[%s1 + $0x510] sm:$0xff]
    %v198 = vld [vmem:[%s1 + $0x518] sm:$0xff]
    %v199 = vld [vmem:[%s1 + $0x520] sm:$0xff]
    %v200 = vld [vmem:[%s1 + $0x528] sm:$0xff]
    %v201 = vld [vmem:[%s1 + $0x530] sm:$0xff]
    %v202 = vld [vmem:[%s1 + $0x538] sm:$0xff]
    %v203 = vld [vmem:[%s1 + $0x540] sm:$0xff]
    %v204 = vld [vmem:[%s1 + $0x548] sm:$0xff]
    %v205 = vld [vmem:[%s1 + $0x550] sm:$0xff]
    %v206 = vld [vmem:[%s1 + $0x558] sm:$0xff]
    %v207 = vld [vmem:[%s1 + $0x560] sm:$0xff]
    %v208 = vld [vmem:[%s1 + $0x568] sm:$0xff]
    %v209 = vld [vmem:[%s1 + $0x570] sm:$0xff]
    %v210 = vld [vmem:[%s1 + $0x578] sm:$0xff]
    %v211 = vld [vmem:[%s1 + $0x580] sm:$0xff]
    %v212 = vld [vmem:[%s1 + $0x588] sm:$0xff]
    %v213 = vld [vmem:[%s1 + $0x590] sm:$0xff]
    %v214 = vld [vmem:[%s1 + $0x598] sm:$0xff]
    %v215 = vld [vmem:[%s1 + $0x5a0] sm:$0xff]
    %v216 = vld [vmem:[%s1 + $0x5a8] sm:$0xff]
    %v217 = vld [vmem:[%s1 + $0x5b0] sm:$0xff]
    %v218 = vld [vmem:[%s1 + $0x5b8] sm:$0xff]
    %v219 = vld [vmem:[%s1 + $0x5c0] sm:$0xff]
    %v220 = vld [vmem:[%s1 + $0x5c8] sm:$0xff]
    %v221 = vld [vmem:[%s1 + $0x5d0] sm:$0xff]
    %v222 = vld [vmem:[%s1 + $0x5d8] sm:$0xff]
    %v223 = vld [vmem:[%s1 + $0x5e0] sm:$0xff]
    %v224 = vld [vmem:[%s1 + $0x5e8] sm:$0xff]
    %v225 = vld [vmem:[%s1 + $0x5f0] sm:$0xff]
    %v226 = vld [vmem:[%s1 + $0x5f8] sm:$0xff]
    %v227 = vld [vmem:[%s1 + $0x600] sm:$0xff]
    %v228 = vld [vmem:[%s1 + $0x608] sm:$0xff]
    %v229 = vld [vmem:[%s1 + $0x610] sm:$0xff]
    %v230 = vld [vmem:[%s1 + $0x618] sm:$0xff]
    %v231 = vld [vmem:[%s1 + $0x620] sm:$0xff]
    %v232 = vld [vmem:[%s1 + $0x628] sm:$0xff]
    %v233 = vld [vmem:[%s1 + $0x630] sm:$0xff]
    %v234 = vld [vmem:[%s1 + $0x638] sm:$0xff]
    %v235 = vld [vmem:[%s1 + $0x640] sm:$0xff]
    %v236 = vld [vmem:[%s1 + $0x648] sm:$0xff]
    %v237 = vld [vmem:[%s1 + $0x650] sm:$0xff]
    %v238 = vld [vmem:[%s1 + $0x658] sm:$0xff]
    %v239 = vld [vmem:[%s1 + $0x660] sm:$0xff]
    %v240 = vld [vmem:[%s1 + $0x668] sm:$0xff]
    %v241 = vld [vmem:[%s1 + $0x670] sm:$0xff]
    %v242 = vld [vmem:[%s1 + $0x678] sm:$0xff]
    %v243 = vld [vmem:[%s1 + $0x680] sm:$0xff]
    %v244 = vld [vmem:[%s1 + $0x688] sm:$0xff]
    %v245 = vld [vmem:[%s1 + $0x690] sm:$0xff]
    %v246 = vld [vmem:[%s1 + $0x698] sm:$0xff]
    %v247 = vld [vmem:[%s1 + $0x6a0] sm:$0xff]
    %v248 = vld [vmem:[%s1 + $0x6a8] sm:$0xff]
    %v249 = vld [vmem:[%s1 + $0x6b0] sm:$0xff]
    %v250 = vld [vmem:[%s1 + $0x6b8] sm:$0xff]
    %v251 = vld [vmem:[%s1 + $0x6c0] sm:$0xff]
    %v252 = vld [vmem:[%s1 + $0x6c8] sm:$0xff]
    %v253 = vld [vmem:[%s1 + $0x6d0] sm:$0xff]
    %v254 = vld [vmem:[%s1 + $0x6d8] sm:$0xff]
    %v255 = vld [vmem:[%s1 + $0x6e0] sm:$0xff]
    %v256 = vld [vmem:[%s1 + $0x6e8] sm:$0xff]
    %v257 = vld [vmem:[%s1 + $0x6f0] sm:$0xff]
    %v258 = vld [vmem:[%s1 + $0x6f8] sm:$0xff]
    %v259 = vld [vmem:[%s1 + $0x700] sm:$0xff]
    %v260 = vld [vmem:[%s1 + $0x708] sm:$0xff]
    %v261 = vld [vmem:[%s1 + $0x710] sm:$0xff]
    %v262 = vld [vmem:[%s1 + $0x718] sm:$0xff]
    %v263 = vld [vmem:[%s1 + $0x720] sm:$0xff]
    %v264 = vld [vmem:[%s1 + $0x728] sm:$0xff]
    %v265 = vld [vmem:[%s1 + $0x730] sm:$0xff]
    %v266 = vld [vmem:[%s1 + $0x738] sm:$0xff]
    %v267 = vld [vmem:[%s1 + $0x740] sm:$0xff]
    %v268 = vld [vmem:[%s1 + $0x748] sm:$0xff]
    %v269 = vld [vmem:[%s1 + $0x750] sm:$0xff]
    %v270 = vld [vmem:[%s1 + $0x758] sm:$0xff]
    %v271 = vld [vmem:[%s1 + $0x760] sm:$0xff]
    %v272 = vld [vmem:[%s1 + $0x768] sm:$0xff]
    %v273 = vld [vmem:[%s1 + $0x770] sm:$0xff]
    %v274 = vld [vmem:[%s1 + $0x778] sm:$0xff]
    %v275 = vld [vmem:[%s1 + $0x780] sm:$0xff]
    %v276 = vld [vmem:[%s1 + $0x788] sm:$0xff]
    %v277 = vld [vmem:[%s1 + $0x790] sm:$0xff]
    %v278 = vld [vmem:[%s1 + $0x798] sm:$0xff]
    %v279 = vld [vmem:[%s1 + $0x7a0] sm:$0xff]
    %v280 = vld [vmem:[%s1 + $0x7a8] sm:$0xff]
    %v281 = vld [vmem:[%s1 + $0x7b0] sm:$0xff]
    %v282 = vld [vmem:[%s1 + $0x7b8] sm:$0xff]
    %v283 = vld [vmem:[%s1 + $0x7c0] sm:$0xff]
    %v284 = vld [vmem:[%s1 + $0x7c8] sm:$0xff]
    %v285 = vld [vmem:[%s1 + $0x7d0] sm:$0xff]
    %v286 = vld [vmem:[%s1 + $0x7d8] sm:$0xff]
    %v287 = vld [vmem:[%s1 + $0x7e0] sm:$0xff]
    %v288 = vld [vmem:[%s1 + $0x7e8] sm:$0xff]
    %v289 = vld [vmem:[%s1 + $0x7f0] sm:$0xff]
    %v290 = vld [vmem:[%s1 + $0x7f8] sm:$0xff]
    %v291 = vld [vmem:[%s1 + $0x800] sm:$0xff]
    %v292 = vld [vmem:[%s1 + $0x808] sm:$0xff]
    %v293 = vld [vmem:[%s1 + $0x810] sm:$0xff]
    %v294 = vld [vmem:[%s1 + $0x818] sm:$0xff]
    %v295 = vld [vmem:[%s1 + $0x820] sm:$0xff]
    %v296 = vld [vmem:[%s1 + $0x828] sm:$0xff]
    %v297 = vld [vmem:[%s1 + $0x830] sm:$0xff]
    %v298 = vld [vmem:[%s1 + $0x838] sm:$0xff]
    %v299 = vld [vmem:[%s1 + $0x840] sm:$0xff]
    %v300 = vld [vmem:[%s1 + $0x848] sm:$0xff]
    %v301 = vld [vmem:[%s1 + $0x850] sm:$0xff]
    %v302 = vld [vmem:[%s1 + $0x858] sm:$0xff]
    %v303 = vld [vmem:[%s1 + $0x860] sm:$0xff]
    %v304 = vld [vmem:[%s1 + $0x868] sm:$0xff]
    %v305 = vld [vmem:[%s1 + $0x870] sm:$0xff]
    %v306 = vld [vmem:[%s1 + $0x878] sm:$0xff]
    %v307 = vld [vmem:[%s1 + $0x880] sm:$0xff]
    %v308 = vld [vmem:[%s1 + $0x888] sm:$0xff]
    %v309 = vld [vmem:[%s1 + $0x890] sm:$0xff]
    %v310 = vld [vmem:[%s1 + $0x898] sm:$0xff]
    %v311 = vld [vmem:[%s1 + $0x8a0] sm:$0xff]
    %v312 = vld [vmem:[%s1 + $0x8a8] sm:$0xff]
    %v313 = vld [vmem:[%s1 + $0x8b0] sm:$0xff]
    %v314 = vld [vmem:[%s1 + $0x8b8] sm:$0xff]
    %v315 = vld [vmem:[%s1 + $0x8c0] sm:$0xff]
    %v316 = vld [vmem:[%s1 + $0x8c8] sm:$0xff]
    %v317 = vld [vmem:[%s1 + $0x8d0] sm:$0xff]
    %v318 = vld [vmem:[%s1 + $0x8d8] sm:$0xff]
    %v319 = vld [vmem:[%s1 + $0x8e0] sm:$0xff]
    %v320 = vld [vmem:[%s1 + $0x8e8] sm:$0xff]
    %v321 = vld [vmem:[%s1 + $0x8f0] sm:$0xff]
    %v322 = vld [vmem:[%s1 + $0x8f8] sm:$0xff]
    %v323 = vld [vmem:[%s1 + $0x900] sm:$0xff]
    %v324 = vld [vmem:[%s1 + $0x908] sm:$0xff]
    %v325 = vld [vmem:[%s1 + $0x910] sm:$0xff]
    %v326 = vld [vmem:[%s1 + $0x918] sm:$0xff]
    %v327 = vld [vmem:[%s1 + $0x920] sm:$0xff]
    %v328 = vld [vmem:[%s1 + $0x928] sm:$0xff]
    %v329 = vld [vmem:[%s1 + $0x930] sm:$0xff]
    %v330 = vld [vmem:[%s1 + $0x938] sm:$0xff]
    %v331 = vld [vmem:[%s1 + $0x940] sm:$0xff]
    %v332 = vld [vmem:[%s1 + $0x948] sm:$0xff]
    %v333 = vld [vmem:[%s1 + $0x950] sm:$0xff]
    %v334 = vld [vmem:[%s1 + $0x958] sm:$0xff]
    %v335 = vld [vmem:[%s1 + $0x960] sm:$0xff]
    %v336 = vld [vmem:[%s1 + $0x968] sm:$0xff]
    %v337 = vld [vmem:[%s1 + $0x970] sm:$0xff]
    %v338 = vld [vmem:[%s1 + $0x978] sm:$0xff]
    %v339 = vld [vmem:[%s1 + $0x980] sm:$0xff]
    %v340 = vld [vmem:[%s1 + $0x988] sm:$0xff]
    %v341 = vld [vmem:[%s1 + $0x990] sm:$0xff]
    %v342 = vld [vmem:[%s1 + $0x998] sm:$0xff]
    %v343 = vld [vmem:[%s1 + $0x9a0] sm:$0xff]
    %v344 = vld [vmem:[%s1 + $0x9a8] sm:$0xff]
    %v345 = vld [vmem:[%s1 + $0x9b0] sm:$0xff]
    %v346 = vld [vmem:[%s1 + $0x9b8] sm:$0xff]
    %v347 = vld [vmem:[%s1 + $0x9c0] sm:$0xff]
    %v348 = vld [vmem:[%s1 + $0x9c8] sm:$0xff]
    %v349 = vld [vmem:[%s1 + $0x9d0] sm:$0xff]
    %v350 = vld [vmem:[%s1 + $0x9d8] sm:$0xff]
    %v351 = vld [vmem:[%s1 + $0x9e0] sm:$0xff]
    %v352 = vld [vmem:[%s1 + $0x9e8] sm:$0xff]
    %v353 = vld [vmem:[%s1 + $0x9f0] sm:$0xff]
    %v354 = vld [vmem:[%s1 + $0x9f8] sm:$0xff]
    %v355 = vld [vmem:[%s1 + $0xa00] sm:$0xff]
    %v356 = vld [vmem:[%s1 + $0xa08] sm:$0xff]
    %v357 = vld [vmem:[%s1 + $0xa10] sm:$0xff]
    %v358 = vld [vmem:[%s1 + $0xa18] sm:$0xff]
    %v359 = vld [vmem:[%s1 + $0xa20] sm:$0xff]
    %v360 = vld [vmem:[%s1 + $0xa28] sm:$0xff]
    %v361 = vld [vmem:[%s1 + $0xa30] sm:$0xff]
    %v362 = vld [vmem:[%s1 + $0xa38] sm:$0xff]
    %v363 = vld [vmem:[%s1 + $0xa40] sm:$0xff]
    %v364 = vld [vmem:[%s1 + $0xa48] sm:$0xff]
    %v365 = vld [vmem:[%s1 + $0xa50] sm:$0xff]
    %v366 = vld [vmem:[%s1 + $0xa58] sm:$0xff]
    %v367 = vld [vmem:[%s1 + $0xa60] sm:$0xff]
    %v368 = vld [vmem:[%s1 + $0xa68] sm:$0xff]
    %v369 = vld [vmem:[%s1 + $0xa70] sm:$0xff]
    %v370 = vld [vmem:[%s1 + $0xa78] sm:$0xff]
    %v371 = vld [vmem:[%s1 + $0xa80] sm:$0xff]
    %v372 = vld [vmem:[%s1 + $0xa88] sm:$0xff]
    %v373 = vld [vmem:[%s1 + $0xa90] sm:$0xff]
    %v374 = vld [vmem:[%s1 + $0xa98] sm:$0xff]
    %v375 = vld [vmem:[%s1 + $0xaa0] sm:$0xff]
    %v376 = vld [vmem:[%s1 + $0xaa8] sm:$0xff]
    %v377 = vld [vmem:[%s1 + $0xab0] sm:$0xff]
    %v378 = vld [vmem:[%s1 + $0xab8] sm:$0xff]
    %v379 = vld [vmem:[%s1 + $0xac0] sm:$0xff]
    %v380 = vld [vmem:[%s1 + $0xac8] sm:$0xff]
    %v381 = vld [vmem:[%s1 + $0xad0] sm:$0xff]
    %v382 = vld [vmem:[%s1 + $0xad8] sm:$0xff]
    %v383 = vld [vmem:[%s1 + $0xae0] sm:$0xff]
    %v384 = vld [vmem:[%s1 + $0xae8] sm:$0xff]
    %v385 = vld [vmem:[%s1 + $0xaf0] sm:$0xff]
    %v386 = vld [vmem:[%s1 + $0xaf8] sm:$0xff]
    %v387 = vld [vmem:[%s1 + $0xb00] sm:$0xff]
    %v388 = vld [vmem:[%s1 + $0xb08] sm:$0xff]
    %v389 = vld [vmem:[%s1 + $0xb10] sm:$0xff]
    %v390 = vld [vmem:[%s1 + $0xb18] sm:$0xff]
    %v391 = vld [vmem:[%s1 + $0xb20] sm:$0xff]
    %v392 = vld [vmem:[%s1 + $0xb28] sm:$0xff]
    %v393 = vld [vmem:[%s1 + $0xb30] sm:$0xff]
    %v394 = vld [vmem:[%s1 + $0xb38] sm:$0xff]
    %v395 = vld [vmem:[%s1 + $0xb40] sm:$0xff]
    %v396 = vld [vmem:[%s1 + $0xb48] sm:$0xff]
    %v397 = vld [vmem:[%s1 + $0xb50] sm:$0xff]
    %v398 = vld [vmem:[%s1 + $0xb58] sm:$0xff]
    %v399 = vld [vmem:[%s1 + $0xb60] sm:$0xff]
    %v400 = vld [vmem:[%s1 + $0xb68] sm:$0xff]
    %v401 = vld [vmem:[%s1 + $0xb70] sm:$0xff]
    %v402 = vld [vmem:[%s1 + $0xb78] sm:$0xff]
    %v403 = vld [vmem:[%s1 + $0xb80] sm:$0xff]
    %v404 = vld [vmem:[%s1 + $0xb88] sm:$0xff]
    %v405 = vld [vmem:[%s1 + $0xb90] sm:$0xff]
    %v406 = vld [vmem:[%s1 + $0xb98] sm:$0xff]
    %v407 = vld [vmem:[%s1 + $0xba0] sm:$0xff]
    %v408 = vld [vmem:[%s1 + $0xba8] sm:$0xff]
    %v409 = vld [vmem:[%s1 + $0xbb0] sm:$0xff]
    %v410 = vld [vmem:[%s1 + $0xbb8] sm:$0xff]
    %v411 = vld [vmem:[%s1 + $0xbc0] sm:$0xff]
    %v412 = vld [vmem:[%s1 + $0xbc8] sm:$0xff]
    %v413 = vld [vmem:[%s1 + $0xbd0] sm:$0xff]
    %v414 = vld [vmem:[%s1 + $0xbd8] sm:$0xff]
    %v415 = vld [vmem:[%s1 + $0xbe0] sm:$0xff]
    %v416 = vld [vmem:[%s1 + $0xbe8] sm:$0xff]
    %v417 = vld [vmem:[%s1 + $0xbf0] sm:$0xff]
    %v418 = vld [vmem:[%s1 + $0xbf8] sm:$0xff]
    %v419 = vld [vmem:[%s1 + $0xc00] sm:$0xff]
    %v420 = vld [vmem:[%s1 + $0xc08] sm:$0xff]
    %v421 = vld [vmem:[%s1 + $0xc10] sm:$0xff]
    %v422 = vld [vmem:[%s1 + $0xc18] sm:$0xff]
    %v423 = vld [vmem:[%s1 + $0xc20] sm:$0xff]
    %v424 = vld [vmem:[%s1 + $0xc28] sm:$0xff]
    %v425 = vld [vmem:[%s1 + $0xc30] sm:$0xff]
    %v426 = vld [vmem:[%s1 + $0xc38] sm:$0xff]
    %v427 = vld [vmem:[%s1 + $0xc40] sm:$0xff]
    %v428 = vld [vmem:[%s1 + $0xc48] sm:$0xff]
    %v429 = vld [vmem:[%s1 + $0xc50] sm:$0xff]
    %v430 = vld [vmem:[%s1 + $0xc58] sm:$0xff]
    %v431 = vld [vmem:[%s1 + $0xc60] sm:$0xff]
    %v432 = vld [vmem:[%s1 + $0xc68] sm:$0xff]
    %v433 = vld [vmem:[%s1 + $0xc70] sm:$0xff]
    %v434 = vld [vmem:[%s1 + $0xc78] sm:$0xff]
    %v435 = vld [vmem:[%s2] sm:$0x3]
    %v437 = vlaneseq
    %v438 = vshrl.u32 %v437, 7
    %v439 = vsub.s32 0, %v438
    %v440 = vrot.slane %v435, %v439
    %v441 = vlaneseq
    %v442 = vshrl.u32 %v441, 7
    %v443 = vsub.s32 1, %v442
    %v444 = vrot.slane %v435, %v443
    %v454 = vcombine.high %v28, %v28
    %v456 = vunpack.c.l.s4 1983009808
    %v457 = vunpack.c.0.s8 %v456
    %v458 = vlaneseq
    %v459 = vshrl.u32 %v458, 7
    %v460 = vsub.s32 %v457, %v459
    %v461 = vrot.slane %v28, %v460
    %v463 = vunpack.c.l.s4 1983009808
    %v464 = vunpack.c.0.s8 %v463
    %v465 = vlaneseq
    %v466 = vshrl.u32 %v465, 7
    %v467 = vsub.s32 %v464, %v466
    %v468 = vrot.slane %v454, %v467
    %v469 = vcombine.high %v461, %v461
    %v470 = vcombine.high %v468, %v468
    %v471 = vcombine.high %v29, %v29
    %v473 = vunpack.c.l.s4 1983009808
    %v474 = vunpack.c.0.s8 %v473
    %v475 = vlaneseq
    %v476 = vshrl.u32 %v475, 7
    %v477 = vsub.s32 %v474, %v476
    %v478 = vrot.slane %v29, %v477
    %v480 = vunpack.c.l.s4 1983009808
    %v481 = vunpack.c.0.s8 %v480
    %v482 = vlaneseq
    %v483 = vshrl.u32 %v482, 7
    %v484 = vsub.s32 %v481, %v483
    %v485 = vrot.slane %v471, %v484
    %v486 = vcombine.high %v478, %v478
    %v487 = vcombine.high %v485, %v485
    %v488 = vcombine.high %v30, %v30
    %v490 = vunpack.c.l.s4 1983009808
    %v491 = vunpack.c.0.s8 %v490
    %v492 = vlaneseq
    %v493 = vshrl.u32 %v492, 7
    %v494 = vsub.s32 %v491, %v493
    %v495 = vrot.slane %v30, %v494
    %v497 = vunpack.c.l.s4 1983009808
    %v498 = vunpack.c.0.s8 %v497
    %v499 = vlaneseq
    %v500 = vshrl.u32 %v499, 7
    %v501 = vsub.s32 %v498, %v500
    %v502 = vrot.slane %v488, %v501
    %v503 = vcombine.high %v495, %v495
    %v504 = vcombine.high %v502, %v502
    %v505 = vcombine.high %v31, %v31
    %v507 = vunpack.c.l.s4 1983009808
    %v508 = vunpack.c.0.s8 %v507
    %v509 = vlaneseq
    %v510 = vshrl.u32 %v509, 7
    %v511 = vsub.s32 %v508, %v510
    %v512 = vrot.slane %v31, %v511
    %v514 = vunpack.c.l.s4 1983009808
    %v515 = vunpack.c.0.s8 %v514
    %v516 = vlaneseq
    %v517 = vshrl.u32 %v516, 7
    %v518 = vsub.s32 %v515, %v517
    %v519 = vrot.slane %v505, %v518
    %v520 = vcombine.high %v512, %v512
    %v521 = vcombine.high %v519, %v519
    %v522 = vcombine.high %v32, %v32
    %v524 = vunpack.c.l.s4 1983009808
    %v525 = vunpack.c.0.s8 %v524
    %v526 = vlaneseq
    %v527 = vshrl.u32 %v526, 7
    %v528 = vsub.s32 %v525, %v527
    %v529 = vrot.slane %v32, %v528
    %v531 = vunpack.c.l.s4 1983009808
    %v532 = vunpack.c.0.s8 %v531
    %v533 = vlaneseq
    %v534 = vshrl.u32 %v533, 7
    %v535 = vsub.s32 %v532, %v534
    %v536 = vrot.slane %v522, %v535
    %v537 = vcombine.high %v529, %v529
    %v538 = vcombine.high %v536, %v536
    %v539 = vcombine.high %v33, %v33
    %v541 = vunpack.c.l.s4 1983009808
    %v542 = vunpack.c.0.s8 %v541
    %v543 = vlaneseq
    %v544 = vshrl.u32 %v543, 7
    %v545 = vsub.s32 %v542, %v544
    %v546 = vrot.slane %v33, %v545
    %v548 = vunpack.c.l.s4 1983009808
    %v549 = vunpack.c.0.s8 %v548
    %v550 = vlaneseq
    %v551 = vshrl.u32 %v550, 7
    %v552 = vsub.s32 %v549, %v551
    %v553 = vrot.slane %v539, %v552
    %v554 = vcombine.high %v546, %v546
    %v555 = vcombine.high %v553, %v553
    %v557 = vunpack.c.l.s4 1983009808
    %v558 = vunpack.c.0.s8 %v557
    %v559 = vlaneseq
    %v560 = vshrl.u32 %v559, 7
    %v561 = vsub.s32 %v558, %v560
    %v562 = vrot.slane %v34, %v561
    %v988 = vunpack.c.l.b16 %v35
    %v989 = vunpack.c.h.b16 %v35
    %v990 = vunpack.c.l.b16 %v36
    %v991 = vunpack.c.h.b16 %v36
    %v992 = vunpack.c.l.b16 %v37
    %v993 = vunpack.c.h.b16 %v37
    %v994 = vunpack.c.l.b16 %v38
    %v995 = vunpack.c.h.b16 %v38
    %v996 = vunpack.c.l.b16 %v39
    %v997 = vunpack.c.h.b16 %v39
    %v998 = vunpack.c.l.b16 %v40
    %v999 = vunpack.c.h.b16 %v40
    %v1000 = vunpack.c.l.b16 %v41
    %v1001 = vunpack.c.h.b16 %v41
    %v1002 = vunpack.c.l.b16 %v42
    %v1003 = vunpack.c.h.b16 %v42
    %v1004 = vunpack.c.l.b16 %v43
    %v1005 = vunpack.c.h.b16 %v43
    %v1006 = vunpack.c.l.b16 %v44
    %v1007 = vunpack.c.h.b16 %v44
    %v1008 = vunpack.c.l.b16 %v45
    %v1009 = vunpack.c.h.b16 %v45
    %v1010 = vunpack.c.l.b16 %v46
    %v1011 = vunpack.c.h.b16 %v46
    %v1012 = vunpack.c.l.b16 %v47
    %v1013 = vunpack.c.h.b16 %v47
    %v1014 = vunpack.c.l.b16 %v48
    %v1015 = vunpack.c.h.b16 %v48
    %v1016 = vunpack.c.l.b16 %v49
    %v1017 = vunpack.c.h.b16 %v49
    %v1018 = vunpack.c.l.b16 %v50
    %v1019 = vunpack.c.h.b16 %v50
    %v1020 = vunpack.c.l.b16 %v51
    %v1021 = vunpack.c.h.b16 %v51
    %v1022 = vunpack.c.l.b16 %v52
    %v1023 = vunpack.c.h.b16 %v52
    %v1024 = vunpack.c.l.b16 %v53
    %v1025 = vunpack.c.h.b16 %v53
    %v1026 = vunpack.c.l.b16 %v54
    %v1027 = vunpack.c.h.b16 %v54
    %v1028 = vunpack.c.l.b16 %v55
    %v1029 = vunpack.c.h.b16 %v55
    %v1030 = vunpack.c.l.b16 %v56
    %v1031 = vunpack.c.h.b16 %v56
    %v1032 = vunpack.c.l.b16 %v57
    %v1033 = vunpack.c.h.b16 %v57
    %v1034 = vunpack.c.l.b16 %v58
    %v1035 = vunpack.c.h.b16 %v58
    %v1036 = vunpack.c.l.b16 %v59
    %v1037 = vunpack.c.h.b16 %v59
    %v1038 = vunpack.c.l.b16 %v60
    %v1039 = vunpack.c.h.b16 %v60
    %v1040 = vunpack.c.l.b16 %v61
    %v1041 = vunpack.c.h.b16 %v61
    %v1042 = vunpack.c.l.b16 %v62
    %v1043 = vunpack.c.h.b16 %v62
    %v1044 = vunpack.c.l.b16 %v63
    %v1045 = vunpack.c.h.b16 %v63
    %v1046 = vunpack.c.l.b16 %v64
    %v1047 = vunpack.c.h.b16 %v64
    %v1048 = vunpack.c.l.b16 %v65
    %v1049 = vunpack.c.h.b16 %v65
    %v1050 = vunpack.c.l.b16 %v66
    %v1051 = vunpack.c.h.b16 %v66
    %v1052 = vunpack.c.l.b16 %v67
    %v1053 = vunpack.c.h.b16 %v67
    %v1054 = vunpack.c.l.b16 %v68
    %v1055 = vunpack.c.h.b16 %v68
    %v1056 = vunpack.c.l.b16 %v69
    %v1057 = vunpack.c.h.b16 %v69
    %v1058 = vunpack.c.l.b16 %v70
    %v1059 = vunpack.c.h.b16 %v70
    %v1060 = vunpack.c.l.b16 %v71
    %v1061 = vunpack.c.h.b16 %v71
    %v1062 = vunpack.c.l.b16 %v72
    %v1063 = vunpack.c.h.b16 %v72
    %v1064 = vunpack.c.l.b16 %v73
    %v1065 = vunpack.c.h.b16 %v73
    %v1066 = vunpack.c.l.b16 %v74
    %v1067 = vunpack.c.h.b16 %v74
    %v1068 = vunpack.c.l.b16 %v75
    %v1069 = vunpack.c.h.b16 %v75
    %v1070 = vunpack.c.l.b16 %v76
    %v1071 = vunpack.c.h.b16 %v76
    %v1072 = vunpack.c.l.b16 %v77
    %v1073 = vunpack.c.h.b16 %v77
    %v1074 = vunpack.c.l.b16 %v78
    %v1075 = vunpack.c.h.b16 %v78
    %v1076 = vunpack.c.l.b16 %v79
    %v1077 = vunpack.c.h.b16 %v79
    %v1078 = vunpack.c.l.b16 %v80
    %v1079 = vunpack.c.h.b16 %v80
    %v1080 = vunpack.c.l.b16 %v81
    %v1081 = vunpack.c.h.b16 %v81
    %v1082 = vunpack.c.l.b16 %v82
    %v1083 = vunpack.c.h.b16 %v82
    %v1084 = vunpack.c.l.b16 %v83
    %v1085 = vunpack.c.h.b16 %v83
    %v1086 = vunpack.c.l.b16 %v84
    %v1087 = vunpack.c.h.b16 %v84
    %v1088 = vunpack.c.l.b16 %v85
    %v1089 = vunpack.c.h.b16 %v85
    %v1090 = vunpack.c.l.b16 %v86
    %v1091 = vunpack.c.h.b16 %v86
    %v1092 = vunpack.c.l.b16 %v87
    %v1093 = vunpack.c.h.b16 %v87
    %v1094 = vunpack.c.l.b16 %v88
    %v1095 = vunpack.c.h.b16 %v88
    %v1096 = vunpack.c.l.b16 %v89
    %v1097 = vunpack.c.h.b16 %v89
    %v1098 = vunpack.c.l.b16 %v90
    %v1099 = vunpack.c.h.b16 %v90
    %v1100 = vunpack.c.l.b16 %v91
    %v1101 = vunpack.c.h.b16 %v91
    %v1102 = vunpack.c.l.b16 %v92
    %v1103 = vunpack.c.h.b16 %v92
    %v1104 = vunpack.c.l.b16 %v93
    %v1105 = vunpack.c.h.b16 %v93
    %v1106 = vunpack.c.l.b16 %v94
    %v1107 = vunpack.c.h.b16 %v94
    %v1108 = vunpack.c.l.b16 %v95
    %v1109 = vunpack.c.h.b16 %v95
    %v1110 = vunpack.c.l.b16 %v96
    %v1111 = vunpack.c.h.b16 %v96
    %v1112 = vunpack.c.l.b16 %v97
    %v1113 = vunpack.c.h.b16 %v97
    %v1114 = vunpack.c.l.b16 %v98
    %v1115 = vunpack.c.h.b16 %v98
    %v1116 = vunpack.c.l.b16 %v99
    %v1117 = vunpack.c.h.b16 %v99
    %v1118 = vunpack.c.l.b16 %v100
    %v1119 = vunpack.c.h.b16 %v100
    %v1120 = vunpack.c.l.b16 %v101
    %v1121 = vunpack.c.h.b16 %v101
    %v1122 = vunpack.c.l.b16 %v102
    %v1123 = vunpack.c.h.b16 %v102
    %v1124 = vunpack.c.l.b16 %v103
    %v1125 = vunpack.c.h.b16 %v103
    %v1126 = vunpack.c.l.b16 %v104
    %v1127 = vunpack.c.h.b16 %v104
    %v1128 = vunpack.c.l.b16 %v105
    %v1129 = vunpack.c.h.b16 %v105
    %v1130 = vunpack.c.l.b16 %v106
    %v1131 = vunpack.c.h.b16 %v106
    %v1132 = vunpack.c.l.b16 %v107
    %v1133 = vunpack.c.h.b16 %v107
    %v1134 = vunpack.c.l.b16 %v108
    %v1135 = vunpack.c.h.b16 %v108
    %v1136 = vunpack.c.l.b16 %v109
    %v1137 = vunpack.c.h.b16 %v109
    %v1138 = vunpack.c.l.b16 %v110
    %v1139 = vunpack.c.h.b16 %v110
    %v1140 = vunpack.c.l.b16 %v111
    %v1141 = vunpack.c.h.b16 %v111
    %v1142 = vunpack.c.l.b16 %v112
    %v1143 = vunpack.c.h.b16 %v112
    %v1144 = vunpack.c.l.b16 %v113
    %v1145 = vunpack.c.h.b16 %v113
    %v1146 = vunpack.c.l.b16 %v114
    %v1147 = vunpack.c.h.b16 %v114
    %v1148 = vunpack.c.l.b16 %v115
    %v1149 = vunpack.c.h.b16 %v115
    %v1150 = vunpack.c.l.b16 %v116
    %v1151 = vunpack.c.h.b16 %v116
    %v1152 = vunpack.c.l.b16 %v117
    %v1153 = vunpack.c.h.b16 %v117
    %v1154 = vunpack.c.l.b16 %v118
    %v1155 = vunpack.c.h.b16 %v118
    %v1156 = vunpack.c.l.b16 %v119
    %v1157 = vunpack.c.h.b16 %v119
    %v1158 = vunpack.c.l.b16 %v120
    %v1159 = vunpack.c.h.b16 %v120
    %v1160 = vunpack.c.l.b16 %v121
    %v1161 = vunpack.c.h.b16 %v121
    %v1162 = vunpack.c.l.b16 %v122
    %v1163 = vunpack.c.h.b16 %v122
    %v1164 = vunpack.c.l.b16 %v123
    %v1165 = vunpack.c.h.b16 %v123
    %v1166 = vunpack.c.l.b16 %v124
    %v1167 = vunpack.c.h.b16 %v124
    %v1168 = vunpack.c.l.b16 %v125
    %v1169 = vunpack.c.h.b16 %v125
    %v1170 = vunpack.c.l.b16 %v126
    %v1171 = vunpack.c.h.b16 %v126
    %v1172 = vunpack.c.l.b16 %v127
    %v1173 = vunpack.c.h.b16 %v127
    %v1174 = vunpack.c.l.b16 %v128
    %v1175 = vunpack.c.h.b16 %v128
    %v1176 = vunpack.c.l.b16 %v129
    %v1177 = vunpack.c.h.b16 %v129
    %v1178 = vunpack.c.l.b16 %v130
    %v1179 = vunpack.c.h.b16 %v130
    %v1180 = vunpack.c.l.b16 %v131
    %v1181 = vunpack.c.h.b16 %v131
    %v1182 = vunpack.c.l.b16 %v132
    %v1183 = vunpack.c.h.b16 %v132
    %v1184 = vunpack.c.l.b16 %v133
    %v1185 = vunpack.c.h.b16 %v133
    %v1186 = vunpack.c.l.b16 %v134
    %v1187 = vunpack.c.h.b16 %v134
    %v1188 = vunpack.c.l.b16 %v135
    %v1189 = vunpack.c.h.b16 %v135
    %v1190 = vunpack.c.l.b16 %v136
    %v1191 = vunpack.c.h.b16 %v136
    %v1192 = vunpack.c.l.b16 %v137
    %v1193 = vunpack.c.h.b16 %v137
    %v1194 = vunpack.c.l.b16 %v138
    %v1195 = vunpack.c.h.b16 %v138
    %v1196 = vunpack.c.l.b16 %v139
    %v1197 = vunpack.c.h.b16 %v139
    %v1198 = vunpack.c.l.b16 %v140
    %v1199 = vunpack.c.h.b16 %v140
    %v1200 = vunpack.c.l.b16 %v141
    %v1201 = vunpack.c.h.b16 %v141
    %v1202 = vunpack.c.l.b16 %v142
    %v1203 = vunpack.c.h.b16 %v142
    %v1204 = vunpack.c.l.b16 %v143
    %v1205 = vunpack.c.h.b16 %v143
    %v1206 = vunpack.c.l.b16 %v144
    %v1207 = vunpack.c.h.b16 %v144
    %v1208 = vunpack.c.l.b16 %v145
    %v1209 = vunpack.c.h.b16 %v145
    %v1210 = vunpack.c.l.b16 %v146
    %v1211 = vunpack.c.h.b16 %v146
    %v1212 = vunpack.c.l.b16 %v147
    %v1213 = vunpack.c.h.b16 %v147
    %v1214 = vunpack.c.l.b16 %v148
    %v1215 = vunpack.c.h.b16 %v148
    %v1216 = vunpack.c.l.b16 %v149
    %v1217 = vunpack.c.h.b16 %v149
    %v1218 = vunpack.c.l.b16 %v150
    %v1219 = vunpack.c.h.b16 %v150
    %v1220 = vunpack.c.l.b16 %v151
    %v1221 = vunpack.c.h.b16 %v151
    %v1222 = vunpack.c.l.b16 %v152
    %v1223 = vunpack.c.h.b16 %v152
    %v1224 = vunpack.c.l.b16 %v153
    %v1225 = vunpack.c.h.b16 %v153
    %v1226 = vunpack.c.l.b16 %v154
    %v1227 = vunpack.c.h.b16 %v154
    %v1228 = vunpack.c.l.b16 %v155
    %v1229 = vunpack.c.h.b16 %v155
    %v1230 = vunpack.c.l.b16 %v156
    %v1231 = vunpack.c.h.b16 %v156
    %v1232 = vunpack.c.l.b16 %v157
    %v1233 = vunpack.c.h.b16 %v157
    %v1234 = vunpack.c.l.b16 %v158
    %v1235 = vunpack.c.h.b16 %v158
    %v1236 = vunpack.c.l.b16 %v159
    %v1237 = vunpack.c.h.b16 %v159
    %v1238 = vunpack.c.l.b16 %v160
    %v1239 = vunpack.c.h.b16 %v160
    %v1240 = vunpack.c.l.b16 %v161
    %v1241 = vunpack.c.h.b16 %v161
    %v1242 = vunpack.c.l.b16 %v162
    %v1243 = vunpack.c.h.b16 %v162
    %v1244 = vunpack.c.l.b16 %v163
    %v1245 = vunpack.c.h.b16 %v163
    %v1246 = vunpack.c.l.b16 %v164
    %v1247 = vunpack.c.h.b16 %v164
    %v1248 = vunpack.c.l.b16 %v165
    %v1249 = vunpack.c.h.b16 %v165
    %v1250 = vunpack.c.l.b16 %v166
    %v1251 = vunpack.c.h.b16 %v166
    %v1252 = vunpack.c.l.b16 %v167
    %v1253 = vunpack.c.h.b16 %v167
    %v1254 = vunpack.c.l.b16 %v168
    %v1255 = vunpack.c.h.b16 %v168
    %v1256 = vunpack.c.l.b16 %v169
    %v1257 = vunpack.c.h.b16 %v169
    %v1258 = vunpack.c.l.b16 %v170
    %v1259 = vunpack.c.h.b16 %v170
    %v1260 = vunpack.c.l.b16 %v171
    %v1261 = vunpack.c.h.b16 %v171
    %v1262 = vunpack.c.l.b16 %v172
    %v1263 = vunpack.c.h.b16 %v172
    %v1264 = vunpack.c.l.b16 %v173
    %v1265 = vunpack.c.h.b16 %v173
    %v1266 = vunpack.c.l.b16 %v174
    %v1267 = vunpack.c.h.b16 %v174
    %v1268 = vunpack.c.l.b16 %v175
    %v1269 = vunpack.c.h.b16 %v175
    %v1270 = vunpack.c.l.b16 %v176
    %v1271 = vunpack.c.h.b16 %v176
    %v1272 = vunpack.c.l.b16 %v177
    %v1273 = vunpack.c.h.b16 %v177
    %v1274 = vunpack.c.l.b16 %v178
    %v1275 = vunpack.c.h.b16 %v178
    %v1276 = vunpack.c.l.b16 %v179
    %v1277 = vunpack.c.h.b16 %v179
    %v1278 = vunpack.c.l.b16 %v180
    %v1279 = vunpack.c.h.b16 %v180
    %v1280 = vunpack.c.l.b16 %v181
    %v1281 = vunpack.c.h.b16 %v181
    %v1282 = vunpack.c.l.b16 %v182
    %v1283 = vunpack.c.h.b16 %v182
    %v1284 = vunpack.c.l.b16 %v183
    %v1285 = vunpack.c.h.b16 %v183
    %v1286 = vunpack.c.l.b16 %v184
    %v1287 = vunpack.c.h.b16 %v184
    %v1288 = vunpack.c.l.b16 %v185
    %v1289 = vunpack.c.h.b16 %v185
    %v1290 = vunpack.c.l.b16 %v186
    %v1291 = vunpack.c.h.b16 %v186
    %v1292 = vunpack.c.l.b16 %v187
    %v1293 = vunpack.c.h.b16 %v187
    %v1294 = vunpack.c.l.b16 %v188
    %v1295 = vunpack.c.h.b16 %v188
    %v1296 = vunpack.c.l.b16 %v189
    %v1297 = vunpack.c.h.b16 %v189
    %v1298 = vunpack.c.l.b16 %v190
    %v1299 = vunpack.c.h.b16 %v190
    %v1300 = vunpack.c.l.b16 %v191
    %v1301 = vunpack.c.h.b16 %v191
    %v1302 = vunpack.c.l.b16 %v192
    %v1303 = vunpack.c.h.b16 %v192
    %v1304 = vunpack.c.l.b16 %v193
    %v1305 = vunpack.c.h.b16 %v193
    %v1306 = vunpack.c.l.b16 %v194
    %v1307 = vunpack.c.h.b16 %v194
    %v1308 = vunpack.c.l.b16 %v195
    %v1309 = vunpack.c.h.b16 %v195
    %v1310 = vunpack.c.l.b16 %v196
    %v1311 = vunpack.c.h.b16 %v196
    %v1312 = vunpack.c.l.b16 %v197
    %v1313 = vunpack.c.h.b16 %v197
    %v1314 = vunpack.c.l.b16 %v198
    %v1315 = vunpack.c.h.b16 %v198
    %v1316 = vunpack.c.l.b16 %v199
    %v1317 = vunpack.c.h.b16 %v199
    %v1318 = vunpack.c.l.b16 %v200
    %v1319 = vunpack.c.h.b16 %v200
    %v1320 = vunpack.c.l.b16 %v201
    %v1321 = vunpack.c.h.b16 %v201
    %v1322 = vunpack.c.l.b16 %v202
    %v1323 = vunpack.c.h.b16 %v202
    %v1324 = vunpack.c.l.b16 %v203
    %v1325 = vunpack.c.h.b16 %v203
    %v1326 = vunpack.c.l.b16 %v204
    %v1327 = vunpack.c.h.b16 %v204
    %v1328 = vunpack.c.l.b16 %v205
    %v1329 = vunpack.c.h.b16 %v205
    %v1330 = vunpack.c.l.b16 %v206
    %v1331 = vunpack.c.h.b16 %v206
    %v1332 = vunpack.c.l.b16 %v207
    %v1333 = vunpack.c.h.b16 %v207
    %v1334 = vunpack.c.l.b16 %v208
    %v1335 = vunpack.c.h.b16 %v208
    %v1336 = vunpack.c.l.b16 %v209
    %v1337 = vunpack.c.h.b16 %v209
    %v1338 = vunpack.c.l.b16 %v210
    %v1339 = vunpack.c.h.b16 %v210
    %v1340 = vunpack.c.l.b16 %v211
    %v1341 = vunpack.c.h.b16 %v211
    %v1342 = vunpack.c.l.b16 %v212
    %v1343 = vunpack.c.h.b16 %v212
    %v1344 = vunpack.c.l.b16 %v213
    %v1345 = vunpack.c.h.b16 %v213
    %v1346 = vunpack.c.l.b16 %v214
    %v1347 = vunpack.c.h.b16 %v214
    %v1348 = vunpack.c.l.b16 %v215
    %v1349 = vunpack.c.h.b16 %v215
    %v1350 = vunpack.c.l.b16 %v216
    %v1351 = vunpack.c.h.b16 %v216
    %v1352 = vunpack.c.l.b16 %v217
    %v1353 = vunpack.c.h.b16 %v217
    %v1354 = vunpack.c.l.b16 %v218
    %v1355 = vunpack.c.h.b16 %v218
    %v1356 = vunpack.c.l.b16 %v219
    %v1357 = vunpack.c.h.b16 %v219
    %v1358 = vunpack.c.l.b16 %v220
    %v1359 = vunpack.c.h.b16 %v220
    %v1360 = vunpack.c.l.b16 %v221
    %v1361 = vunpack.c.h.b16 %v221
    %v1362 = vunpack.c.l.b16 %v222
    %v1363 = vunpack.c.h.b16 %v222
    %v1364 = vunpack.c.l.b16 %v223
    %v1365 = vunpack.c.h.b16 %v223
    %v1366 = vunpack.c.l.b16 %v224
    %v1367 = vunpack.c.h.b16 %v224
    %v1368 = vunpack.c.l.b16 %v225
    %v1369 = vunpack.c.h.b16 %v225
    %v1370 = vunpack.c.l.b16 %v226
    %v1371 = vunpack.c.h.b16 %v226
    %v1372 = vunpack.c.l.b16 %v227
    %v1373 = vunpack.c.h.b16 %v227
    %v1374 = vunpack.c.l.b16 %v228
    %v1375 = vunpack.c.h.b16 %v228
    %v1376 = vunpack.c.l.b16 %v229
    %v1377 = vunpack.c.h.b16 %v229
    %v1378 = vunpack.c.l.b16 %v230
    %v1379 = vunpack.c.h.b16 %v230
    %v1380 = vunpack.c.l.b16 %v231
    %v1381 = vunpack.c.h.b16 %v231
    %v1382 = vunpack.c.l.b16 %v232
    %v1383 = vunpack.c.h.b16 %v232
    %v1384 = vunpack.c.l.b16 %v233
    %v1385 = vunpack.c.h.b16 %v233
    %v1386 = vunpack.c.l.b16 %v234
    %v1387 = vunpack.c.h.b16 %v234
    %v1388 = vunpack.c.l.b16 %v235
    %v1389 = vunpack.c.h.b16 %v235
    %v1390 = vunpack.c.l.b16 %v236
    %v1391 = vunpack.c.h.b16 %v236
    %v1392 = vunpack.c.l.b16 %v237
    %v1393 = vunpack.c.h.b16 %v237
    %v1394 = vunpack.c.l.b16 %v238
    %v1395 = vunpack.c.h.b16 %v238
    %v1396 = vunpack.c.l.b16 %v239
    %v1397 = vunpack.c.h.b16 %v239
    %v1398 = vunpack.c.l.b16 %v240
    %v1399 = vunpack.c.h.b16 %v240
    %v1400 = vunpack.c.l.b16 %v241
    %v1401 = vunpack.c.h.b16 %v241
    %v1402 = vunpack.c.l.b16 %v242
    %v1403 = vunpack.c.h.b16 %v242
    %v1404 = vunpack.c.l.b16 %v243
    %v1405 = vunpack.c.h.b16 %v243
    %v1406 = vunpack.c.l.b16 %v244
    %v1407 = vunpack.c.h.b16 %v244
    %v1408 = vunpack.c.l.b16 %v245
    %v1409 = vunpack.c.h.b16 %v245
    %v1410 = vunpack.c.l.b16 %v246
    %v1411 = vunpack.c.h.b16 %v246
    %v1412 = vunpack.c.l.b16 %v247
    %v1413 = vunpack.c.h.b16 %v247
    %v1414 = vunpack.c.l.b16 %v248
    %v1415 = vunpack.c.h.b16 %v248
    %v1416 = vunpack.c.l.b16 %v249
    %v1417 = vunpack.c.h.b16 %v249
    %v1418 = vunpack.c.l.b16 %v250
    %v1419 = vunpack.c.h.b16 %v250
    %v1420 = vunpack.c.l.b16 %v251
    %v1421 = vunpack.c.h.b16 %v251
    %v1422 = vunpack.c.l.b16 %v252
    %v1423 = vunpack.c.h.b16 %v252
    %v1424 = vunpack.c.l.b16 %v253
    %v1425 = vunpack.c.h.b16 %v253
    %v1426 = vunpack.c.l.b16 %v254
    %v1427 = vunpack.c.h.b16 %v254
    %v1428 = vunpack.c.l.b16 %v255
    %v1429 = vunpack.c.h.b16 %v255
    %v1430 = vunpack.c.l.b16 %v256
    %v1431 = vunpack.c.h.b16 %v256
    %v1432 = vunpack.c.l.b16 %v257
    %v1433 = vunpack.c.h.b16 %v257
    %v1434 = vunpack.c.l.b16 %v258
    %v1435 = vunpack.c.h.b16 %v258
    %v1436 = vunpack.c.l.b16 %v259
    %v1437 = vunpack.c.h.b16 %v259
    %v1438 = vunpack.c.l.b16 %v260
    %v1439 = vunpack.c.h.b16 %v260
    %v1440 = vunpack.c.l.b16 %v261
    %v1441 = vunpack.c.h.b16 %v261
    %v1442 = vunpack.c.l.b16 %v262
    %v1443 = vunpack.c.h.b16 %v262
    %v1444 = vunpack.c.l.b16 %v263
    %v1445 = vunpack.c.h.b16 %v263
    %v1446 = vunpack.c.l.b16 %v264
    %v1447 = vunpack.c.h.b16 %v264
    %v1448 = vunpack.c.l.b16 %v265
    %v1449 = vunpack.c.h.b16 %v265
    %v1450 = vunpack.c.l.b16 %v266
    %v1451 = vunpack.c.h.b16 %v266
    %v1452 = vunpack.c.l.b16 %v267
    %v1453 = vunpack.c.h.b16 %v267
    %v1454 = vunpack.c.l.b16 %v268
    %v1455 = vunpack.c.h.b16 %v268
    %v1456 = vunpack.c.l.b16 %v269
    %v1457 = vunpack.c.h.b16 %v269
    %v1458 = vunpack.c.l.b16 %v270
    %v1459 = vunpack.c.h.b16 %v270
    %v1460 = vunpack.c.l.b16 %v271
    %v1461 = vunpack.c.h.b16 %v271
    %v1462 = vunpack.c.l.b16 %v272
    %v1463 = vunpack.c.h.b16 %v272
    %v1464 = vunpack.c.l.b16 %v273
    %v1465 = vunpack.c.h.b16 %v273
    %v1466 = vunpack.c.l.b16 %v274
    %v1467 = vunpack.c.h.b16 %v274
    %v1468 = vunpack.c.l.b16 %v275
    %v1469 = vunpack.c.h.b16 %v275
    %v1470 = vunpack.c.l.b16 %v276
    %v1471 = vunpack.c.h.b16 %v276
    %v1472 = vunpack.c.l.b16 %v277
    %v1473 = vunpack.c.h.b16 %v277
    %v1474 = vunpack.c.l.b16 %v278
    %v1475 = vunpack.c.h.b16 %v278
    %v1476 = vunpack.c.l.b16 %v279
    %v1477 = vunpack.c.h.b16 %v279
    %v1478 = vunpack.c.l.b16 %v280
    %v1479 = vunpack.c.h.b16 %v280
    %v1480 = vunpack.c.l.b16 %v281
    %v1481 = vunpack.c.h.b16 %v281
    %v1482 = vunpack.c.l.b16 %v282
    %v1483 = vunpack.c.h.b16 %v282
    %v1484 = vunpack.c.l.b16 %v283
    %v1485 = vunpack.c.h.b16 %v283
    %v1486 = vunpack.c.l.b16 %v284
    %v1487 = vunpack.c.h.b16 %v284
    %v1488 = vunpack.c.l.b16 %v285
    %v1489 = vunpack.c.h.b16 %v285
    %v1490 = vunpack.c.l.b16 %v286
    %v1491 = vunpack.c.h.b16 %v286
    %v1492 = vunpack.c.l.b16 %v287
    %v1493 = vunpack.c.h.b16 %v287
    %v1494 = vunpack.c.l.b16 %v288
    %v1495 = vunpack.c.h.b16 %v288
    %v1496 = vunpack.c.l.b16 %v289
    %v1497 = vunpack.c.h.b16 %v289
    %v1498 = vunpack.c.l.b16 %v290
    %v1499 = vunpack.c.h.b16 %v290
    %v1500 = vunpack.c.l.b16 %v291
    %v1501 = vunpack.c.h.b16 %v291
    %v1502 = vunpack.c.l.b16 %v292
    %v1503 = vunpack.c.h.b16 %v292
    %v1504 = vunpack.c.l.b16 %v293
    %v1505 = vunpack.c.h.b16 %v293
    %v1506 = vunpack.c.l.b16 %v294
    %v1507 = vunpack.c.h.b16 %v294
    %v1508 = vunpack.c.l.b16 %v295
    %v1509 = vunpack.c.h.b16 %v295
    %v1510 = vunpack.c.l.b16 %v296
    %v1511 = vunpack.c.h.b16 %v296
    %v1512 = vunpack.c.l.b16 %v297
    %v1513 = vunpack.c.h.b16 %v297
    %v1514 = vunpack.c.l.b16 %v298
    %v1515 = vunpack.c.h.b16 %v298
    %v1516 = vunpack.c.l.b16 %v299
    %v1517 = vunpack.c.h.b16 %v299
    %v1518 = vunpack.c.l.b16 %v300
    %v1519 = vunpack.c.h.b16 %v300
    %v1520 = vunpack.c.l.b16 %v301
    %v1521 = vunpack.c.h.b16 %v301
    %v1522 = vunpack.c.l.b16 %v302
    %v1523 = vunpack.c.h.b16 %v302
    %v1524 = vunpack.c.l.b16 %v303
    %v1525 = vunpack.c.h.b16 %v303
    %v1526 = vunpack.c.l.b16 %v304
    %v1527 = vunpack.c.h.b16 %v304
    %v1528 = vunpack.c.l.b16 %v305
    %v1529 = vunpack.c.h.b16 %v305
    %v1530 = vunpack.c.l.b16 %v306
    %v1531 = vunpack.c.h.b16 %v306
    %v1532 = vunpack.c.l.b16 %v307
    %v1533 = vunpack.c.h.b16 %v307
    %v1534 = vunpack.c.l.b16 %v308
    %v1535 = vunpack.c.h.b16 %v308
    %v1536 = vunpack.c.l.b16 %v309
    %v1537 = vunpack.c.h.b16 %v309
    %v1538 = vunpack.c.l.b16 %v310
    %v1539 = vunpack.c.h.b16 %v310
    %v1540 = vunpack.c.l.b16 %v311
    %v1541 = vunpack.c.h.b16 %v311
    %v1542 = vunpack.c.l.b16 %v312
    %v1543 = vunpack.c.h.b16 %v312
    %v1544 = vunpack.c.l.b16 %v313
    %v1545 = vunpack.c.h.b16 %v313
    %v1546 = vunpack.c.l.b16 %v314
    %v1547 = vunpack.c.h.b16 %v314
    %v1548 = vunpack.c.l.b16 %v315
    %v1549 = vunpack.c.h.b16 %v315
    %v1550 = vunpack.c.l.b16 %v316
    %v1551 = vunpack.c.h.b16 %v316
    %v1552 = vunpack.c.l.b16 %v317
    %v1553 = vunpack.c.h.b16 %v317
    %v1554 = vunpack.c.l.b16 %v318
    %v1555 = vunpack.c.h.b16 %v318
    %v1556 = vunpack.c.l.b16 %v319
    %v1557 = vunpack.c.h.b16 %v319
    %v1558 = vunpack.c.l.b16 %v320
    %v1559 = vunpack.c.h.b16 %v320
    %v1560 = vunpack.c.l.b16 %v321
    %v1561 = vunpack.c.h.b16 %v321
    %v1562 = vunpack.c.l.b16 %v322
    %v1563 = vunpack.c.h.b16 %v322
    %v1564 = vunpack.c.l.b16 %v323
    %v1565 = vunpack.c.h.b16 %v323
    %v1566 = vunpack.c.l.b16 %v324
    %v1567 = vunpack.c.h.b16 %v324
    %v1568 = vunpack.c.l.b16 %v325
    %v1569 = vunpack.c.h.b16 %v325
    %v1570 = vunpack.c.l.b16 %v326
    %v1571 = vunpack.c.h.b16 %v326
    %v1572 = vunpack.c.l.b16 %v327
    %v1573 = vunpack.c.h.b16 %v327
    %v1574 = vunpack.c.l.b16 %v328
    %v1575 = vunpack.c.h.b16 %v328
    %v1576 = vunpack.c.l.b16 %v329
    %v1577 = vunpack.c.h.b16 %v329
    %v1578 = vunpack.c.l.b16 %v330
    %v1579 = vunpack.c.h.b16 %v330
    %v1580 = vunpack.c.l.b16 %v331
    %v1581 = vunpack.c.h.b16 %v331
    %v1582 = vunpack.c.l.b16 %v332
    %v1583 = vunpack.c.h.b16 %v332
    %v1584 = vunpack.c.l.b16 %v333
    %v1585 = vunpack.c.h.b16 %v333
    %v1586 = vunpack.c.l.b16 %v334
    %v1587 = vunpack.c.h.b16 %v334
    %v1588 = vunpack.c.l.b16 %v335
    %v1589 = vunpack.c.h.b16 %v335
    %v1590 = vunpack.c.l.b16 %v336
    %v1591 = vunpack.c.h.b16 %v336
    %v1592 = vunpack.c.l.b16 %v337
    %v1593 = vunpack.c.h.b16 %v337
    %v1594 = vunpack.c.l.b16 %v338
    %v1595 = vunpack.c.h.b16 %v338
    %v1596 = vunpack.c.l.b16 %v339
    %v1597 = vunpack.c.h.b16 %v339
    %v1598 = vunpack.c.l.b16 %v340
    %v1599 = vunpack.c.h.b16 %v340
    %v1600 = vunpack.c.l.b16 %v341
    %v1601 = vunpack.c.h.b16 %v341
    %v1602 = vunpack.c.l.b16 %v342
    %v1603 = vunpack.c.h.b16 %v342
    %v1604 = vunpack.c.l.b16 %v343
    %v1605 = vunpack.c.h.b16 %v343
    %v1606 = vunpack.c.l.b16 %v344
    %v1607 = vunpack.c.h.b16 %v344
    %v1608 = vunpack.c.l.b16 %v345
    %v1609 = vunpack.c.h.b16 %v345
    %v1610 = vunpack.c.l.b16 %v346
    %v1611 = vunpack.c.h.b16 %v346
    %v1612 = vunpack.c.l.b16 %v347
    %v1613 = vunpack.c.h.b16 %v347
    %v1614 = vunpack.c.l.b16 %v348
    %v1615 = vunpack.c.h.b16 %v348
    %v1616 = vunpack.c.l.b16 %v349
    %v1617 = vunpack.c.h.b16 %v349
    %v1618 = vunpack.c.l.b16 %v350
    %v1619 = vunpack.c.h.b16 %v350
    %v1620 = vunpack.c.l.b16 %v351
    %v1621 = vunpack.c.h.b16 %v351
    %v1622 = vunpack.c.l.b16 %v352
    %v1623 = vunpack.c.h.b16 %v352
    %v1624 = vunpack.c.l.b16 %v353
    %v1625 = vunpack.c.h.b16 %v353
    %v1626 = vunpack.c.l.b16 %v354
    %v1627 = vunpack.c.h.b16 %v354
    %v1628 = vunpack.c.l.b16 %v355
    %v1629 = vunpack.c.h.b16 %v355
    %v1630 = vunpack.c.l.b16 %v356
    %v1631 = vunpack.c.h.b16 %v356
    %v1632 = vunpack.c.l.b16 %v357
    %v1633 = vunpack.c.h.b16 %v357
    %v1634 = vunpack.c.l.b16 %v358
    %v1635 = vunpack.c.h.b16 %v358
    %v1636 = vunpack.c.l.b16 %v359
    %v1637 = vunpack.c.h.b16 %v359
    %v1638 = vunpack.c.l.b16 %v360
    %v1639 = vunpack.c.h.b16 %v360
    %v1640 = vunpack.c.l.b16 %v361
    %v1641 = vunpack.c.h.b16 %v361
    %v1642 = vunpack.c.l.b16 %v362
    %v1643 = vunpack.c.h.b16 %v362
    %v1644 = vunpack.c.l.b16 %v363
    %v1645 = vunpack.c.h.b16 %v363
    %v1646 = vunpack.c.l.b16 %v364
    %v1647 = vunpack.c.h.b16 %v364
    %v1648 = vunpack.c.l.b16 %v365
    %v1649 = vunpack.c.h.b16 %v365
    %v1650 = vunpack.c.l.b16 %v366
    %v1651 = vunpack.c.h.b16 %v366
    %v1652 = vunpack.c.l.b16 %v367
    %v1653 = vunpack.c.h.b16 %v367
    %v1654 = vunpack.c.l.b16 %v368
    %v1655 = vunpack.c.h.b16 %v368
    %v1656 = vunpack.c.l.b16 %v369
    %v1657 = vunpack.c.h.b16 %v369
    %v1658 = vunpack.c.l.b16 %v370
    %v1659 = vunpack.c.h.b16 %v370
    %v1660 = vunpack.c.l.b16 %v371
    %v1661 = vunpack.c.h.b16 %v371
    %v1662 = vunpack.c.l.b16 %v372
    %v1663 = vunpack.c.h.b16 %v372
    %v1664 = vunpack.c.l.b16 %v373
    %v1665 = vunpack.c.h.b16 %v373
    %v1666 = vunpack.c.l.b16 %v374
    %v1667 = vunpack.c.h.b16 %v374
    %v1668 = vunpack.c.l.b16 %v375
    %v1669 = vunpack.c.h.b16 %v375
    %v1670 = vunpack.c.l.b16 %v376
    %v1671 = vunpack.c.h.b16 %v376
    %v1672 = vunpack.c.l.b16 %v377
    %v1673 = vunpack.c.h.b16 %v377
    %v1674 = vunpack.c.l.b16 %v378
    %v1675 = vunpack.c.h.b16 %v378
    %v1676 = vunpack.c.l.b16 %v379
    %v1677 = vunpack.c.h.b16 %v379
    %v1678 = vunpack.c.l.b16 %v380
    %v1679 = vunpack.c.h.b16 %v380
    %v1680 = vunpack.c.l.b16 %v381
    %v1681 = vunpack.c.h.b16 %v381
    %v1682 = vunpack.c.l.b16 %v382
    %v1683 = vunpack.c.h.b16 %v382
    %v1684 = vunpack.c.l.b16 %v383
    %v1685 = vunpack.c.h.b16 %v383
    %v1686 = vunpack.c.l.b16 %v384
    %v1687 = vunpack.c.h.b16 %v384
    %v1688 = vunpack.c.l.b16 %v385
    %v1689 = vunpack.c.h.b16 %v385
    %v1690 = vunpack.c.l.b16 %v386
    %v1691 = vunpack.c.h.b16 %v386
    %v1692 = vunpack.c.l.b16 %v387
    %v1693 = vunpack.c.h.b16 %v387
    %v1694 = vunpack.c.l.b16 %v388
    %v1695 = vunpack.c.h.b16 %v388
    %v1696 = vunpack.c.l.b16 %v389
    %v1697 = vunpack.c.h.b16 %v389
    %v1698 = vunpack.c.l.b16 %v390
    %v1699 = vunpack.c.h.b16 %v390
    %v1700 = vunpack.c.l.b16 %v391
    %v1701 = vunpack.c.h.b16 %v391
    %v1702 = vunpack.c.l.b16 %v392
    %v1703 = vunpack.c.h.b16 %v392
    %v1704 = vunpack.c.l.b16 %v393
    %v1705 = vunpack.c.h.b16 %v393
    %v1706 = vunpack.c.l.b16 %v394
    %v1707 = vunpack.c.h.b16 %v394
    %v1708 = vunpack.c.l.b16 %v395
    %v1709 = vunpack.c.h.b16 %v395
    %v1710 = vunpack.c.l.b16 %v396
    %v1711 = vunpack.c.h.b16 %v396
    %v1712 = vunpack.c.l.b16 %v397
    %v1713 = vunpack.c.h.b16 %v397
    %v1714 = vunpack.c.l.b16 %v398
    %v1715 = vunpack.c.h.b16 %v398
    %v1716 = vunpack.c.l.b16 %v399
    %v1717 = vunpack.c.h.b16 %v399
    %v1718 = vunpack.c.l.b16 %v400
    %v1719 = vunpack.c.h.b16 %v400
    %v1720 = vunpack.c.l.b16 %v401
    %v1721 = vunpack.c.h.b16 %v401
    %v1722 = vunpack.c.l.b16 %v402
    %v1723 = vunpack.c.h.b16 %v402
    %v1724 = vunpack.c.l.b16 %v403
    %v1725 = vunpack.c.h.b16 %v403
    %v1726 = vunpack.c.l.b16 %v404
    %v1727 = vunpack.c.h.b16 %v404
    %v1728 = vunpack.c.l.b16 %v405
    %v1729 = vunpack.c.h.b16 %v405
    %v1730 = vunpack.c.l.b16 %v406
    %v1731 = vunpack.c.h.b16 %v406
    %v1732 = vunpack.c.l.b16 %v407
    %v1733 = vunpack.c.h.b16 %v407
    %v1734 = vunpack.c.l.b16 %v408
    %v1735 = vunpack.c.h.b16 %v408
    %v1736 = vunpack.c.l.b16 %v409
    %v1737 = vunpack.c.h.b16 %v409
    %v1738 = vunpack.c.l.b16 %v410
    %v1739 = vunpack.c.h.b16 %v410
    %v1740 = vunpack.c.l.b16 %v411
    %v1741 = vunpack.c.h.b16 %v411
    %v1742 = vunpack.c.l.b16 %v412
    %v1743 = vunpack.c.h.b16 %v412
    %v1744 = vunpack.c.l.b16 %v413
    %v1745 = vunpack.c.h.b16 %v413
    %v1746 = vunpack.c.l.b16 %v414
    %v1747 = vunpack.c.h.b16 %v414
    %v1748 = vunpack.c.l.b16 %v415
    %v1749 = vunpack.c.h.b16 %v415
    %v1750 = vunpack.c.l.b16 %v416
    %v1751 = vunpack.c.h.b16 %v416
    %v1752 = vunpack.c.l.b16 %v417
    %v1753 = vunpack.c.h.b16 %v417
    %v1754 = vunpack.c.l.b16 %v418
    %v1755 = vunpack.c.h.b16 %v418
    %v1756 = vunpack.c.l.b16 %v419
    %v1757 = vunpack.c.h.b16 %v419
    %v1758 = vunpack.c.l.b16 %v420
    %v1759 = vunpack.c.h.b16 %v420
    %v1760 = vunpack.c.l.b16 %v421
    %v1761 = vunpack.c.h.b16 %v421
    %v1762 = vunpack.c.l.b16 %v422
    %v1763 = vunpack.c.h.b16 %v422
    %v1764 = vunpack.c.l.b16 %v423
    %v1765 = vunpack.c.h.b16 %v423
    %v1766 = vunpack.c.l.b16 %v424
    %v1767 = vunpack.c.h.b16 %v424
    %v1768 = vunpack.c.l.b16 %v425
    %v1769 = vunpack.c.h.b16 %v425
    %v1770 = vunpack.c.l.b16 %v426
    %v1771 = vunpack.c.h.b16 %v426
    %v1772 = vunpack.c.l.b16 %v427
    %v1773 = vunpack.c.h.b16 %v427
    %v1774 = vunpack.c.l.b16 %v428
    %v1775 = vunpack.c.h.b16 %v428
    %v1776 = vunpack.c.l.b16 %v429
    %v1777 = vunpack.c.h.b16 %v429
    %v1778 = vunpack.c.l.b16 %v430
    %v1779 = vunpack.c.h.b16 %v430
    %v1780 = vunpack.c.l.b16 %v431
    %v1781 = vunpack.c.h.b16 %v431
    %v1782 = vunpack.c.l.b16 %v432
    %v1783 = vunpack.c.h.b16 %v432
    %v1784 = vunpack.c.l.b16 %v433
    %v1785 = vunpack.c.h.b16 %v433
    %v1786 = vunpack.c.l.b16 %v434
    %v1787 = vunpack.c.h.b16 %v434
    %v1788 = vpack.c.b16 %v990, %v988
    %v1789 = vpack.c.b16 %v991, %v989
    %v1790 = vpack.c.b16 %v994, %v992
    %v1791 = vpack.c.b16 %v995, %v993
    %v1792 = vpack.c.b16 %v998, %v996
    %v1793 = vpack.c.b16 %v999, %v997
    %v1794 = vpack.c.b16 %v1002, %v1000
    %v1795 = vpack.c.b16 %v1003, %v1001
    %v1796 = vpack.c.b16 %v1006, %v1004
    %v1797 = vpack.c.b16 %v1007, %v1005
    %v1798 = vpack.c.b16 %v1010, %v1008
    %v1799 = vpack.c.b16 %v1011, %v1009
    %v1800 = vpack.c.b16 %v1014, %v1012
    %v1801 = vpack.c.b16 %v1015, %v1013
    %v1802 = vpack.c.b16 %v1018, %v1016
    %v1803 = vpack.c.b16 %v1019, %v1017
    %v1804 = vpack.c.b16 %v1022, %v1020
    %v1805 = vpack.c.b16 %v1023, %v1021
    %v1806 = vpack.c.b16 %v1026, %v1024
    %v1807 = vpack.c.b16 %v1027, %v1025
    %v1808 = vpack.c.b16 %v1030, %v1028
    %v1809 = vpack.c.b16 %v1031, %v1029
    %v1810 = vpack.c.b16 %v1034, %v1032
    %v1811 = vpack.c.b16 %v1035, %v1033
    %v1812 = vpack.c.b16 %v1038, %v1036
    %v1813 = vpack.c.b16 %v1039, %v1037
    %v1814 = vpack.c.b16 %v1042, %v1040
    %v1815 = vpack.c.b16 %v1043, %v1041
    %v1816 = vpack.c.b16 %v1046, %v1044
    %v1817 = vpack.c.b16 %v1047, %v1045
    %v1818 = vpack.c.b16 %v1050, %v1048
    %v1819 = vpack.c.b16 %v1051, %v1049
    %v1820 = vpack.c.b16 %v1054, %v1052
    %v1821 = vpack.c.b16 %v1055, %v1053
    %v1822 = vpack.c.b16 %v1058, %v1056
    %v1823 = vpack.c.b16 %v1059, %v1057
    %v1824 = vpack.c.b16 %v1062, %v1060
    %v1825 = vpack.c.b16 %v1063, %v1061
    %v1826 = vpack.c.b16 %v1066, %v1064
    %v1827 = vpack.c.b16 %v1067, %v1065
    %v1828 = vpack.c.b16 %v1070, %v1068
    %v1829 = vpack.c.b16 %v1071, %v1069
    %v1830 = vpack.c.b16 %v1074, %v1072
    %v1831 = vpack.c.b16 %v1075, %v1073
    %v1832 = vpack.c.b16 %v1078, %v1076
    %v1833 = vpack.c.b16 %v1079, %v1077
    %v1834 = vpack.c.b16 %v1082, %v1080
    %v1835 = vpack.c.b16 %v1083, %v1081
    %v1836 = vpack.c.b16 %v1086, %v1084
    %v1837 = vpack.c.b16 %v1087, %v1085
    %v1838 = vpack.c.b16 %v1090, %v1088
    %v1839 = vpack.c.b16 %v1091, %v1089
    %v1840 = vpack.c.b16 %v1094, %v1092
    %v1841 = vpack.c.b16 %v1095, %v1093
    %v1842 = vpack.c.b16 %v1098, %v1096
    %v1843 = vpack.c.b16 %v1099, %v1097
    %v1844 = vpack.c.b16 %v1102, %v1100
    %v1845 = vpack.c.b16 %v1103, %v1101
    %v1846 = vpack.c.b16 %v1106, %v1104
    %v1847 = vpack.c.b16 %v1107, %v1105
    %v1848 = vpack.c.b16 %v1110, %v1108
    %v1849 = vpack.c.b16 %v1111, %v1109
    %v1850 = vpack.c.b16 %v1114, %v1112
    %v1851 = vpack.c.b16 %v1115, %v1113
    %v1852 = vpack.c.b16 %v1118, %v1116
    %v1853 = vpack.c.b16 %v1119, %v1117
    %v1854 = vpack.c.b16 %v1122, %v1120
    %v1855 = vpack.c.b16 %v1123, %v1121
    %v1856 = vpack.c.b16 %v1126, %v1124
    %v1857 = vpack.c.b16 %v1127, %v1125
    %v1858 = vpack.c.b16 %v1130, %v1128
    %v1859 = vpack.c.b16 %v1131, %v1129
    %v1860 = vpack.c.b16 %v1134, %v1132
    %v1861 = vpack.c.b16 %v1135, %v1133
    %v1862 = vpack.c.b16 %v1138, %v1136
    %v1863 = vpack.c.b16 %v1139, %v1137
    %v1864 = vpack.c.b16 %v1142, %v1140
    %v1865 = vpack.c.b16 %v1143, %v1141
    %v1866 = vpack.c.b16 %v1146, %v1144
    %v1867 = vpack.c.b16 %v1147, %v1145
    %v1868 = vpack.c.b16 %v1150, %v1148
    %v1869 = vpack.c.b16 %v1151, %v1149
    %v1870 = vpack.c.b16 %v1154, %v1152
    %v1871 = vpack.c.b16 %v1155, %v1153
    %v1872 = vpack.c.b16 %v1158, %v1156
    %v1873 = vpack.c.b16 %v1159, %v1157
    %v1874 = vpack.c.b16 %v1162, %v1160
    %v1875 = vpack.c.b16 %v1163, %v1161
    %v1876 = vpack.c.b16 %v1166, %v1164
    %v1877 = vpack.c.b16 %v1167, %v1165
    %v1878 = vpack.c.b16 %v1170, %v1168
    %v1879 = vpack.c.b16 %v1171, %v1169
    %v1880 = vpack.c.b16 %v1174, %v1172
    %v1881 = vpack.c.b16 %v1175, %v1173
    %v1882 = vpack.c.b16 %v1178, %v1176
    %v1883 = vpack.c.b16 %v1179, %v1177
    %v1884 = vpack.c.b16 %v1182, %v1180
    %v1885 = vpack.c.b16 %v1183, %v1181
    %v1886 = vpack.c.b16 %v1186, %v1184
    %v1887 = vpack.c.b16 %v1187, %v1185
    %v1888 = vpack.c.b16 %v1190, %v1188
    %v1889 = vpack.c.b16 %v1191, %v1189
    %v1890 = vpack.c.b16 %v1194, %v1192
    %v1891 = vpack.c.b16 %v1195, %v1193
    %v1892 = vpack.c.b16 %v1198, %v1196
    %v1893 = vpack.c.b16 %v1199, %v1197
    %v1894 = vpack.c.b16 %v1202, %v1200
    %v1895 = vpack.c.b16 %v1203, %v1201
    %v1896 = vpack.c.b16 %v1206, %v1204
    %v1897 = vpack.c.b16 %v1207, %v1205
    %v1898 = vpack.c.b16 %v1210, %v1208
    %v1899 = vpack.c.b16 %v1211, %v1209
    %v1900 = vpack.c.b16 %v1214, %v1212
    %v1901 = vpack.c.b16 %v1215, %v1213
    %v1902 = vpack.c.b16 %v1218, %v1216
    %v1903 = vpack.c.b16 %v1219, %v1217
    %v1904 = vpack.c.b16 %v1222, %v1220
    %v1905 = vpack.c.b16 %v1223, %v1221
    %v1906 = vpack.c.b16 %v1226, %v1224
    %v1907 = vpack.c.b16 %v1227, %v1225
    %v1908 = vpack.c.b16 %v1230, %v1228
    %v1909 = vpack.c.b16 %v1231, %v1229
    %v1910 = vpack.c.b16 %v1234, %v1232
    %v1911 = vpack.c.b16 %v1235, %v1233
    %v1912 = vpack.c.b16 %v1238, %v1236
    %v1913 = vpack.c.b16 %v1239, %v1237
    %v1914 = vpack.c.b16 %v1242, %v1240
    %v1915 = vpack.c.b16 %v1243, %v1241
    %v1916 = vpack.c.b16 %v1246, %v1244
    %v1917 = vpack.c.b16 %v1247, %v1245
    %v1918 = vpack.c.b16 %v1250, %v1248
    %v1919 = vpack.c.b16 %v1251, %v1249
    %v1920 = vpack.c.b16 %v1254, %v1252
    %v1921 = vpack.c.b16 %v1255, %v1253
    %v1922 = vpack.c.b16 %v1258, %v1256
    %v1923 = vpack.c.b16 %v1259, %v1257
    %v1924 = vpack.c.b16 %v1262, %v1260
    %v1925 = vpack.c.b16 %v1263, %v1261
    %v1926 = vpack.c.b16 %v1266, %v1264
    %v1927 = vpack.c.b16 %v1267, %v1265
    %v1928 = vpack.c.b16 %v1270, %v1268
    %v1929 = vpack.c.b16 %v1271, %v1269
    %v1930 = vpack.c.b16 %v1274, %v1272
    %v1931 = vpack.c.b16 %v1275, %v1273
    %v1932 = vpack.c.b16 %v1278, %v1276
    %v1933 = vpack.c.b16 %v1279, %v1277
    %v1934 = vpack.c.b16 %v1282, %v1280
    %v1935 = vpack.c.b16 %v1283, %v1281
    %v1936 = vpack.c.b16 %v1286, %v1284
    %v1937 = vpack.c.b16 %v1287, %v1285
    %v1938 = vpack.c.b16 %v1290, %v1288
    %v1939 = vpack.c.b16 %v1291, %v1289
    %v1940 = vpack.c.b16 %v1294, %v1292
    %v1941 = vpack.c.b16 %v1295, %v1293
    %v1942 = vpack.c.b16 %v1298, %v1296
    %v1943 = vpack.c.b16 %v1299, %v1297
    %v1944 = vpack.c.b16 %v1302, %v1300
    %v1945 = vpack.c.b16 %v1303, %v1301
    %v1946 = vpack.c.b16 %v1306, %v1304
    %v1947 = vpack.c.b16 %v1307, %v1305
    %v1948 = vpack.c.b16 %v1310, %v1308
    %v1949 = vpack.c.b16 %v1311, %v1309
    %v1950 = vpack.c.b16 %v1314, %v1312
    %v1951 = vpack.c.b16 %v1315, %v1313
    %v1952 = vpack.c.b16 %v1318, %v1316
    %v1953 = vpack.c.b16 %v1319, %v1317
    %v1954 = vpack.c.b16 %v1322, %v1320
    %v1955 = vpack.c.b16 %v1323, %v1321
    %v1956 = vpack.c.b16 %v1326, %v1324
    %v1957 = vpack.c.b16 %v1327, %v1325
    %v1958 = vpack.c.b16 %v1330, %v1328
    %v1959 = vpack.c.b16 %v1331, %v1329
    %v1960 = vpack.c.b16 %v1334, %v1332
    %v1961 = vpack.c.b16 %v1335, %v1333
    %v1962 = vpack.c.b16 %v1338, %v1336
    %v1963 = vpack.c.b16 %v1339, %v1337
    %v1964 = vpack.c.b16 %v1342, %v1340
    %v1965 = vpack.c.b16 %v1343, %v1341
    %v1966 = vpack.c.b16 %v1346, %v1344
    %v1967 = vpack.c.b16 %v1347, %v1345
    %v1968 = vpack.c.b16 %v1350, %v1348
    %v1969 = vpack.c.b16 %v1351, %v1349
    %v1970 = vpack.c.b16 %v1354, %v1352
    %v1971 = vpack.c.b16 %v1355, %v1353
    %v1972 = vpack.c.b16 %v1358, %v1356
    %v1973 = vpack.c.b16 %v1359, %v1357
    %v1974 = vpack.c.b16 %v1362, %v1360
    %v1975 = vpack.c.b16 %v1363, %v1361
    %v1976 = vpack.c.b16 %v1366, %v1364
    %v1977 = vpack.c.b16 %v1367, %v1365
    %v1978 = vpack.c.b16 %v1370, %v1368
    %v1979 = vpack.c.b16 %v1371, %v1369
    %v1980 = vpack.c.b16 %v1374, %v1372
    %v1981 = vpack.c.b16 %v1375, %v1373
    %v1982 = vpack.c.b16 %v1378, %v1376
    %v1983 = vpack.c.b16 %v1379, %v1377
    %v1984 = vpack.c.b16 %v1382, %v1380
    %v1985 = vpack.c.b16 %v1383, %v1381
    %v1986 = vpack.c.b16 %v1386, %v1384
    %v1987 = vpack.c.b16 %v1387, %v1385
    %v1988 = vpack.c.b16 %v1390, %v1388
    %v1989 = vpack.c.b16 %v1391, %v1389
    %v1990 = vpack.c.b16 %v1394, %v1392
    %v1991 = vpack.c.b16 %v1395, %v1393
    %v1992 = vpack.c.b16 %v1398, %v1396
    %v1993 = vpack.c.b16 %v1399, %v1397
    %v1994 = vpack.c.b16 %v1402, %v1400
    %v1995 = vpack.c.b16 %v1403, %v1401
    %v1996 = vpack.c.b16 %v1406, %v1404
    %v1997 = vpack.c.b16 %v1407, %v1405
    %v1998 = vpack.c.b16 %v1410, %v1408
    %v1999 = vpack.c.b16 %v1411, %v1409
    %v2000 = vpack.c.b16 %v1414, %v1412
    %v2001 = vpack.c.b16 %v1415, %v1413
    %v2002 = vpack.c.b16 %v1418, %v1416
    %v2003 = vpack.c.b16 %v1419, %v1417
    %v2004 = vpack.c.b16 %v1422, %v1420
    %v2005 = vpack.c.b16 %v1423, %v1421
    %v2006 = vpack.c.b16 %v1426, %v1424
    %v2007 = vpack.c.b16 %v1427, %v1425
    %v2008 = vpack.c.b16 %v1430, %v1428
    %v2009 = vpack.c.b16 %v1431, %v1429
    %v2010 = vpack.c.b16 %v1434, %v1432
    %v2011 = vpack.c.b16 %v1435, %v1433
    %v2012 = vpack.c.b16 %v1438, %v1436
    %v2013 = vpack.c.b16 %v1439, %v1437
    %v2014 = vpack.c.b16 %v1442, %v1440
    %v2015 = vpack.c.b16 %v1443, %v1441
    %v2016 = vpack.c.b16 %v1446, %v1444
    %v2017 = vpack.c.b16 %v1447, %v1445
    %v2018 = vpack.c.b16 %v1450, %v1448
    %v2019 = vpack.c.b16 %v1451, %v1449
    %v2020 = vpack.c.b16 %v1454, %v1452
    %v2021 = vpack.c.b16 %v1455, %v1453
    %v2022 = vpack.c.b16 %v1458, %v1456
    %v2023 = vpack.c.b16 %v1459, %v1457
    %v2024 = vpack.c.b16 %v1462, %v1460
    %v2025 = vpack.c.b16 %v1463, %v1461
    %v2026 = vpack.c.b16 %v1466, %v1464
    %v2027 = vpack.c.b16 %v1467, %v1465
    %v2028 = vpack.c.b16 %v1470, %v1468
    %v2029 = vpack.c.b16 %v1471, %v1469
    %v2030 = vpack.c.b16 %v1474, %v1472
    %v2031 = vpack.c.b16 %v1475, %v1473
    %v2032 = vpack.c.b16 %v1478, %v1476
    %v2033 = vpack.c.b16 %v1479, %v1477
    %v2034 = vpack.c.b16 %v1482, %v1480
    %v2035 = vpack.c.b16 %v1483, %v1481
    %v2036 = vpack.c.b16 %v1486, %v1484
    %v2037 = vpack.c.b16 %v1487, %v1485
    %v2038 = vpack.c.b16 %v1490, %v1488
    %v2039 = vpack.c.b16 %v1491, %v1489
    %v2040 = vpack.c.b16 %v1494, %v1492
    %v2041 = vpack.c.b16 %v1495, %v1493
    %v2042 = vpack.c.b16 %v1498, %v1496
    %v2043 = vpack.c.b16 %v1499, %v1497
    %v2044 = vpack.c.b16 %v1502, %v1500
    %v2045 = vpack.c.b16 %v1503, %v1501
    %v2046 = vpack.c.b16 %v1506, %v1504
    %v2047 = vpack.c.b16 %v1507, %v1505
    %v2048 = vpack.c.b16 %v1510, %v1508
    %v2049 = vpack.c.b16 %v1511, %v1509
    %v2050 = vpack.c.b16 %v1514, %v1512
    %v2051 = vpack.c.b16 %v1515, %v1513
    %v2052 = vpack.c.b16 %v1518, %v1516
    %v2053 = vpack.c.b16 %v1519, %v1517
    %v2054 = vpack.c.b16 %v1522, %v1520
    %v2055 = vpack.c.b16 %v1523, %v1521
    %v2056 = vpack.c.b16 %v1526, %v1524
    %v2057 = vpack.c.b16 %v1527, %v1525
    %v2058 = vpack.c.b16 %v1530, %v1528
    %v2059 = vpack.c.b16 %v1531, %v1529
    %v2060 = vpack.c.b16 %v1534, %v1532
    %v2061 = vpack.c.b16 %v1535, %v1533
    %v2062 = vpack.c.b16 %v1538, %v1536
    %v2063 = vpack.c.b16 %v1539, %v1537
    %v2064 = vpack.c.b16 %v1542, %v1540
    %v2065 = vpack.c.b16 %v1543, %v1541
    %v2066 = vpack.c.b16 %v1546, %v1544
    %v2067 = vpack.c.b16 %v1547, %v1545
    %v2068 = vpack.c.b16 %v1550, %v1548
    %v2069 = vpack.c.b16 %v1551, %v1549
    %v2070 = vpack.c.b16 %v1554, %v1552
    %v2071 = vpack.c.b16 %v1555, %v1553
    %v2072 = vpack.c.b16 %v1558, %v1556
    %v2073 = vpack.c.b16 %v1559, %v1557
    %v2074 = vpack.c.b16 %v1562, %v1560
    %v2075 = vpack.c.b16 %v1563, %v1561
    %v2076 = vpack.c.b16 %v1566, %v1564
    %v2077 = vpack.c.b16 %v1567, %v1565
    %v2078 = vpack.c.b16 %v1570, %v1568
    %v2079 = vpack.c.b16 %v1571, %v1569
    %v2080 = vpack.c.b16 %v1574, %v1572
    %v2081 = vpack.c.b16 %v1575, %v1573
    %v2082 = vpack.c.b16 %v1578, %v1576
    %v2083 = vpack.c.b16 %v1579, %v1577
    %v2084 = vpack.c.b16 %v1582, %v1580
    %v2085 = vpack.c.b16 %v1583, %v1581
    %v2086 = vpack.c.b16 %v1586, %v1584
    %v2087 = vpack.c.b16 %v1587, %v1585
    %v2088 = vpack.c.b16 %v1590, %v1588
    %v2089 = vpack.c.b16 %v1591, %v1589
    %v2090 = vpack.c.b16 %v1594, %v1592
    %v2091 = vpack.c.b16 %v1595, %v1593
    %v2092 = vpack.c.b16 %v1598, %v1596
    %v2093 = vpack.c.b16 %v1599, %v1597
    %v2094 = vpack.c.b16 %v1602, %v1600
    %v2095 = vpack.c.b16 %v1603, %v1601
    %v2096 = vpack.c.b16 %v1606, %v1604
    %v2097 = vpack.c.b16 %v1607, %v1605
    %v2098 = vpack.c.b16 %v1610, %v1608
    %v2099 = vpack.c.b16 %v1611, %v1609
    %v2100 = vpack.c.b16 %v1614, %v1612
    %v2101 = vpack.c.b16 %v1615, %v1613
    %v2102 = vpack.c.b16 %v1618, %v1616
    %v2103 = vpack.c.b16 %v1619, %v1617
    %v2104 = vpack.c.b16 %v1622, %v1620
    %v2105 = vpack.c.b16 %v1623, %v1621
    %v2106 = vpack.c.b16 %v1626, %v1624
    %v2107 = vpack.c.b16 %v1627, %v1625
    %v2108 = vpack.c.b16 %v1630, %v1628
    %v2109 = vpack.c.b16 %v1631, %v1629
    %v2110 = vpack.c.b16 %v1634, %v1632
    %v2111 = vpack.c.b16 %v1635, %v1633
    %v2112 = vpack.c.b16 %v1638, %v1636
    %v2113 = vpack.c.b16 %v1639, %v1637
    %v2114 = vpack.c.b16 %v1642, %v1640
    %v2115 = vpack.c.b16 %v1643, %v1641
    %v2116 = vpack.c.b16 %v1646, %v1644
    %v2117 = vpack.c.b16 %v1647, %v1645
    %v2118 = vpack.c.b16 %v1650, %v1648
    %v2119 = vpack.c.b16 %v1651, %v1649
    %v2120 = vpack.c.b16 %v1654, %v1652
    %v2121 = vpack.c.b16 %v1655, %v1653
    %v2122 = vpack.c.b16 %v1658, %v1656
    %v2123 = vpack.c.b16 %v1659, %v1657
    %v2124 = vpack.c.b16 %v1662, %v1660
    %v2125 = vpack.c.b16 %v1663, %v1661
    %v2126 = vpack.c.b16 %v1666, %v1664
    %v2127 = vpack.c.b16 %v1667, %v1665
    %v2128 = vpack.c.b16 %v1670, %v1668
    %v2129 = vpack.c.b16 %v1671, %v1669
    %v2130 = vpack.c.b16 %v1674, %v1672
    %v2131 = vpack.c.b16 %v1675, %v1673
    %v2132 = vpack.c.b16 %v1678, %v1676
    %v2133 = vpack.c.b16 %v1679, %v1677
    %v2134 = vpack.c.b16 %v1682, %v1680
    %v2135 = vpack.c.b16 %v1683, %v1681
    %v2136 = vpack.c.b16 %v1686, %v1684
    %v2137 = vpack.c.b16 %v1687, %v1685
    %v2138 = vpack.c.b16 %v1690, %v1688
    %v2139 = vpack.c.b16 %v1691, %v1689
    %v2140 = vpack.c.b16 %v1694, %v1692
    %v2141 = vpack.c.b16 %v1695, %v1693
    %v2142 = vpack.c.b16 %v1698, %v1696
    %v2143 = vpack.c.b16 %v1699, %v1697
    %v2144 = vpack.c.b16 %v1702, %v1700
    %v2145 = vpack.c.b16 %v1703, %v1701
    %v2146 = vpack.c.b16 %v1706, %v1704
    %v2147 = vpack.c.b16 %v1707, %v1705
    %v2148 = vpack.c.b16 %v1710, %v1708
    %v2149 = vpack.c.b16 %v1711, %v1709
    %v2150 = vpack.c.b16 %v1714, %v1712
    %v2151 = vpack.c.b16 %v1715, %v1713
    %v2152 = vpack.c.b16 %v1718, %v1716
    %v2153 = vpack.c.b16 %v1719, %v1717
    %v2154 = vpack.c.b16 %v1722, %v1720
    %v2155 = vpack.c.b16 %v1723, %v1721
    %v2156 = vpack.c.b16 %v1726, %v1724
    %v2157 = vpack.c.b16 %v1727, %v1725
    %v2158 = vpack.c.b16 %v1730, %v1728
    %v2159 = vpack.c.b16 %v1731, %v1729
    %v2160 = vpack.c.b16 %v1734, %v1732
    %v2161 = vpack.c.b16 %v1735, %v1733
    %v2162 = vpack.c.b16 %v1738, %v1736
    %v2163 = vpack.c.b16 %v1739, %v1737
    %v2164 = vpack.c.b16 %v1742, %v1740
    %v2165 = vpack.c.b16 %v1743, %v1741
    %v2166 = vpack.c.b16 %v1746, %v1744
    %v2167 = vpack.c.b16 %v1747, %v1745
    %v2168 = vpack.c.b16 %v1750, %v1748
    %v2169 = vpack.c.b16 %v1751, %v1749
    %v2170 = vpack.c.b16 %v1754, %v1752
    %v2171 = vpack.c.b16 %v1755, %v1753
    %v2172 = vpack.c.b16 %v1758, %v1756
    %v2173 = vpack.c.b16 %v1759, %v1757
    %v2174 = vpack.c.b16 %v1762, %v1760
    %v2175 = vpack.c.b16 %v1763, %v1761
    %v2176 = vpack.c.b16 %v1766, %v1764
    %v2177 = vpack.c.b16 %v1767, %v1765
    %v2178 = vpack.c.b16 %v1770, %v1768
    %v2179 = vpack.c.b16 %v1771, %v1769
    %v2180 = vpack.c.b16 %v1774, %v1772
    %v2181 = vpack.c.b16 %v1775, %v1773
    %v2182 = vpack.c.b16 %v1778, %v1776
    %v2183 = vpack.c.b16 %v1779, %v1777
    %v2184 = vpack.c.b16 %v1782, %v1780
    %v2185 = vpack.c.b16 %v1783, %v1781
    %v2186 = vpack.c.b16 %v1786, %v1784
    %v2187 = vpack.c.b16 %v1787, %v1785
    %2588 = vmatprep.subr.bf16.mxu0 %v1789
    %2589 = vmatpush1.bf16.msra.mxu0 %v1788
    %2590 = vmatprep.subr.bf16.mxu0 %v1791
    %2591 = vmatpush1.bf16.msra.mxu0 %v1790
    %2592 = vmatprep.subr.bf16.mxu0 %v1793
    %2593 = vmatpush1.bf16.msra.mxu0 %v1792
    %2594 = vmatprep.subr.bf16.mxu0 %v1795
    %2595 = vmatpush1.bf16.msra.mxu0 %v1794
    %2596 = vmatprep.subr.bf16.mxu0 %v1797
    %2597 = vmatpush1.bf16.msra.mxu0 %v1796
    %2598 = vmatprep.subr.bf16.mxu0 %v1799
    %2599 = vmatpush1.bf16.msra.mxu0 %v1798
    %2600 = vmatprep.subr.bf16.mxu0 %v1801
    %2601 = vmatpush1.bf16.msra.mxu0 %v1800
    %2602 = vmatprep.subr.bf16.mxu0 %v1803
    %2603 = vmatpush1.bf16.msra.mxu0 %v1802
    %2604 = vmatprep.subr.bf16.mxu0 %v1805
    %2605 = vmatpush1.bf16.msra.mxu0 %v1804
    %2606 = vmatprep.subr.bf16.mxu0 %v1807
    %2607 = vmatpush1.bf16.msra.mxu0 %v1806
    %2608 = vmatprep.subr.bf16.mxu0 %v1809
    %2609 = vmatpush1.bf16.msra.mxu0 %v1808
    %2610 = vmatprep.subr.bf16.mxu0 %v1811
    %2611 = vmatpush1.bf16.msra.mxu0 %v1810
    %2612 = vmatprep.subr.bf16.mxu0 %v1813
    %2613 = vmatpush1.bf16.msra.mxu0 %v1812
    %2614 = vmatprep.subr.bf16.mxu0 %v1815
    %2615 = vmatpush1.bf16.msra.mxu0 %v1814
    %2616 = vmatprep.subr.bf16.mxu0 %v1817
    %2617 = vmatpush1.bf16.msra.mxu0 %v1816
    %2618 = vmatprep.subr.bf16.mxu0 %v1819
    %2619 = vmatpush1.bf16.msra.mxu0 %v1818
    %2620 = vmatprep.mubr.bf16.mxu0 %v469
    %2621 = vmatmul.mubr.bf16.gmra.mrb[0].mxu0 %v461
    %v2622 = vpop.f32.mrb[0].mxu0
    %v2623 = vadd.f32 %v440, %v2622
    %v2624 = vpop.f32.mrb[0].mxu0
    %v2625 = vadd.f32 %v444, %v2624
    %v2626 = vpop.f32.mrb[0].mxu0
    %v2627 = vpop.f32.mrb[0].mxu0
    %2628 = vdwg.mxu0
    %2629 = vmatprep.subr.bf16.mxu0 %v1821
    %2630 = vmatpush1.bf16.msra.mxu0 %v1820
    %2631 = vmatprep.subr.bf16.mxu0 %v1823
    %2632 = vmatpush1.bf16.msra.mxu0 %v1822
    %2633 = vmatprep.subr.bf16.mxu0 %v1825
    %2634 = vmatpush1.bf16.msra.mxu0 %v1824
    %2635 = vmatprep.subr.bf16.mxu0 %v1827
    %2636 = vmatpush1.bf16.msra.mxu0 %v1826
    %2637 = vmatprep.subr.bf16.mxu0 %v1829
    %2638 = vmatpush1.bf16.msra.mxu0 %v1828
    %2639 = vmatprep.subr.bf16.mxu0 %v1831
    %2640 = vmatpush1.bf16.msra.mxu0 %v1830
    %2641 = vmatprep.subr.bf16.mxu0 %v1833
    %2642 = vmatpush1.bf16.msra.mxu0 %v1832
    %2643 = vmatprep.subr.bf16.mxu0 %v1835
    %2644 = vmatpush1.bf16.msra.mxu0 %v1834
    %2645 = vmatprep.subr.bf16.mxu0 %v1837
    %2646 = vmatpush1.bf16.msra.mxu0 %v1836
    %2647 = vmatprep.subr.bf16.mxu0 %v1839
    %2648 = vmatpush1.bf16.msra.mxu0 %v1838
    %2649 = vmatprep.subr.bf16.mxu0 %v1841
    %2650 = vmatpush1.bf16.msra.mxu0 %v1840
    %2651 = vmatprep.subr.bf16.mxu0 %v1843
    %2652 = vmatpush1.bf16.msra.mxu0 %v1842
    %2653 = vmatprep.subr.bf16.mxu0 %v1845
    %2654 = vmatpush1.bf16.msra.mxu0 %v1844
    %2655 = vmatprep.subr.bf16.mxu0 %v1847
    %2656 = vmatpush1.bf16.msra.mxu0 %v1846
    %2657 = vmatprep.subr.bf16.mxu0 %v1849
    %2658 = vmatpush1.bf16.msra.mxu0 %v1848
    %2659 = vmatprep.subr.bf16.mxu0 %v1851
    %2660 = vmatpush1.bf16.msra.mxu0 %v1850
    %2661 = vmatprep.mubr.bf16.mxu0 %v470
    %2662 = vmatmul.mubr.bf16.gmra.mrb[0].mxu0 %v468
    %v2663 = vpop.f32.mrb[0].mxu0
    %v2664 = vadd.f32 %v2623, %v2663
    %v2665 = vpop.f32.mrb[0].mxu0
    %v2666 = vadd.f32 %v2625, %v2665
    %v2667 = vpop.f32.mrb[0].mxu0
    %v2668 = vpop.f32.mrb[0].mxu0
    %2669 = vdwg.mxu0
    %2670 = vmatprep.subr.bf16.mxu0 %v1853
    %2671 = vmatpush1.bf16.msra.mxu0 %v1852
    %2672 = vmatprep.subr.bf16.mxu0 %v1855
    %2673 = vmatpush1.bf16.msra.mxu0 %v1854
    %2674 = vmatprep.subr.bf16.mxu0 %v1857
    %2675 = vmatpush1.bf16.msra.mxu0 %v1856
    %2676 = vmatprep.subr.bf16.mxu0 %v1859
    %2677 = vmatpush1.bf16.msra.mxu0 %v1858
    %2678 = vmatprep.subr.bf16.mxu0 %v1861
    %2679 = vmatpush1.bf16.msra.mxu0 %v1860
    %2680 = vmatprep.subr.bf16.mxu0 %v1863
    %2681 = vmatpush1.bf16.msra.mxu0 %v1862
    %2682 = vmatprep.subr.bf16.mxu0 %v1865
    %2683 = vmatpush1.bf16.msra.mxu0 %v1864
    %2684 = vmatprep.subr.bf16.mxu0 %v1867
    %2685 = vmatpush1.bf16.msra.mxu0 %v1866
    %2686 = vmatprep.subr.bf16.mxu0 %v1869
    %2687 = vmatpush1.bf16.msra.mxu0 %v1868
    %2688 = vmatprep.subr.bf16.mxu0 %v1871
    %2689 = vmatpush1.bf16.msra.mxu0 %v1870
    %2690 = vmatprep.subr.bf16.mxu0 %v1873
    %2691 = vmatpush1.bf16.msra.mxu0 %v1872
    %2692 = vmatprep.subr.bf16.mxu0 %v1875
    %2693 = vmatpush1.bf16.msra.mxu0 %v1874
    %2694 = vmatprep.subr.bf16.mxu0 %v1877
    %2695 = vmatpush1.bf16.msra.mxu0 %v1876
    %2696 = vmatprep.subr.bf16.mxu0 %v1879
    %2697 = vmatpush1.bf16.msra.mxu0 %v1878
    %2698 = vmatprep.subr.bf16.mxu0 %v1881
    %2699 = vmatpush1.bf16.msra.mxu0 %v1880
    %2700 = vmatprep.subr.bf16.mxu0 %v1883
    %2701 = vmatpush1.bf16.msra.mxu0 %v1882
    %2702 = vmatprep.mubr.bf16.mxu0 %v486
    %2703 = vmatmul.mubr.bf16.gmra.mrb[0].mxu0 %v478
    %v2704 = vpop.f32.mrb[0].mxu0
    %v2705 = vadd.f32 %v2664, %v2704
    %v2706 = vpop.f32.mrb[0].mxu0
    %v2707 = vadd.f32 %v2666, %v2706
    %v2708 = vpop.f32.mrb[0].mxu0
    %v2709 = vpop.f32.mrb[0].mxu0
    %2710 = vdwg.mxu0
    %2711 = vmatprep.subr.bf16.mxu0 %v1885
    %2712 = vmatpush1.bf16.msra.mxu0 %v1884
    %2713 = vmatprep.subr.bf16.mxu0 %v1887
    %2714 = vmatpush1.bf16.msra.mxu0 %v1886
    %2715 = vmatprep.subr.bf16.mxu0 %v1889
    %2716 = vmatpush1.bf16.msra.mxu0 %v1888
    %2717 = vmatprep.subr.bf16.mxu0 %v1891
    %2718 = vmatpush1.bf16.msra.mxu0 %v1890
    %2719 = vmatprep.subr.bf16.mxu0 %v1893
    %2720 = vmatpush1.bf16.msra.mxu0 %v1892
    %2721 = vmatprep.subr.bf16.mxu0 %v1895
    %2722 = vmatpush1.bf16.msra.mxu0 %v1894
    %2723 = vmatprep.subr.bf16.mxu0 %v1897
    %2724 = vmatpush1.bf16.msra.mxu0 %v1896
    %2725 = vmatprep.subr.bf16.mxu0 %v1899
    %2726 = vmatpush1.bf16.msra.mxu0 %v1898
    %2727 = vmatprep.subr.bf16.mxu0 %v1901
    %2728 = vmatpush1.bf16.msra.mxu0 %v1900
    %2729 = vmatprep.subr.bf16.mxu0 %v1903
    %2730 = vmatpush1.bf16.msra.mxu0 %v1902
    %2731 = vmatprep.subr.bf16.mxu0 %v1905
    %2732 = vmatpush1.bf16.msra.mxu0 %v1904
    %2733 = vmatprep.subr.bf16.mxu0 %v1907
    %2734 = vmatpush1.bf16.msra.mxu0 %v1906
    %2735 = vmatprep.subr.bf16.mxu0 %v1909
    %2736 = vmatpush1.bf16.msra.mxu0 %v1908
    %2737 = vmatprep.subr.bf16.mxu0 %v1911
    %2738 = vmatpush1.bf16.msra.mxu0 %v1910
    %2739 = vmatprep.subr.bf16.mxu0 %v1913
    %2740 = vmatpush1.bf16.msra.mxu0 %v1912
    %2741 = vmatprep.subr.bf16.mxu0 %v1915
    %2742 = vmatpush1.bf16.msra.mxu0 %v1914
    %2743 = vmatprep.mubr.bf16.mxu0 %v487
    %2744 = vmatmul.mubr.bf16.gmra.mrb[0].mxu0 %v485
    %v2745 = vpop.f32.mrb[0].mxu0
    %v2746 = vadd.f32 %v2705, %v2745
    %v2747 = vpop.f32.mrb[0].mxu0
    %v2748 = vadd.f32 %v2707, %v2747
    %v2749 = vpop.f32.mrb[0].mxu0
    %v2750 = vpop.f32.mrb[0].mxu0
    %2751 = vdwg.mxu0
    %2752 = vmatprep.subr.bf16.mxu0 %v1917
    %2753 = vmatpush1.bf16.msra.mxu0 %v1916
    %2754 = vmatprep.subr.bf16.mxu0 %v1919
    %2755 = vmatpush1.bf16.msra.mxu0 %v1918
    %2756 = vmatprep.subr.bf16.mxu0 %v1921
    %2757 = vmatpush1.bf16.msra.mxu0 %v1920
    %2758 = vmatprep.subr.bf16.mxu0 %v1923
    %2759 = vmatpush1.bf16.msra.mxu0 %v1922
    %2760 = vmatprep.subr.bf16.mxu0 %v1925
    %2761 = vmatpush1.bf16.msra.mxu0 %v1924
    %2762 = vmatprep.subr.bf16.mxu0 %v1927
    %2763 = vmatpush1.bf16.msra.mxu0 %v1926
    %2764 = vmatprep.subr.bf16.mxu0 %v1929
    %2765 = vmatpush1.bf16.msra.mxu0 %v1928
    %2766 = vmatprep.subr.bf16.mxu0 %v1931
    %2767 = vmatpush1.bf16.msra.mxu0 %v1930
    %2768 = vmatprep.subr.bf16.mxu0 %v1933
    %2769 = vmatpush1.bf16.msra.mxu0 %v1932
    %2770 = vmatprep.subr.bf16.mxu0 %v1935
    %2771 = vmatpush1.bf16.msra.mxu0 %v1934
    %2772 = vmatprep.subr.bf16.mxu0 %v1937
    %2773 = vmatpush1.bf16.msra.mxu0 %v1936
    %2774 = vmatprep.subr.bf16.mxu0 %v1939
    %2775 = vmatpush1.bf16.msra.mxu0 %v1938
    %2776 = vmatprep.subr.bf16.mxu0 %v1941
    %2777 = vmatpush1.bf16.msra.mxu0 %v1940
    %2778 = vmatprep.subr.bf16.mxu0 %v1943
    %2779 = vmatpush1.bf16.msra.mxu0 %v1942
    %2780 = vmatprep.subr.bf16.mxu0 %v1945
    %2781 = vmatpush1.bf16.msra.mxu0 %v1944
    %2782 = vmatprep.subr.bf16.mxu0 %v1947
    %2783 = vmatpush1.bf16.msra.mxu0 %v1946
    %2784 = vmatprep.mubr.bf16.mxu0 %v503
    %2785 = vmatmul.mubr.bf16.gmra.mrb[0].mxu0 %v495
    %v2786 = vpop.f32.mrb[0].mxu0
    %v2787 = vadd.f32 %v2746, %v2786
    %v2788 = vpop.f32.mrb[0].mxu0
    %v2789 = vadd.f32 %v2748, %v2788
    %v2790 = vpop.f32.mrb[0].mxu0
    %v2791 = vpop.f32.mrb[0].mxu0
    %2792 = vdwg.mxu0
    %2793 = vmatprep.subr.bf16.mxu0 %v1949
    %2794 = vmatpush1.bf16.msra.mxu0 %v1948
    %2795 = vmatprep.subr.bf16.mxu0 %v1951
    %2796 = vmatpush1.bf16.msra.mxu0 %v1950
    %2797 = vmatprep.subr.bf16.mxu0 %v1953
    %2798 = vmatpush1.bf16.msra.mxu0 %v1952
    %2799 = vmatprep.subr.bf16.mxu0 %v1955
    %2800 = vmatpush1.bf16.msra.mxu0 %v1954
    %2801 = vmatprep.subr.bf16.mxu0 %v1957
    %2802 = vmatpush1.bf16.msra.mxu0 %v1956
    %2803 = vmatprep.subr.bf16.mxu0 %v1959
    %2804 = vmatpush1.bf16.msra.mxu0 %v1958
    %2805 = vmatprep.subr.bf16.mxu0 %v1961
    %2806 = vmatpush1.bf16.msra.mxu0 %v1960
    %2807 = vmatprep.subr.bf16.mxu0 %v1963
    %2808 = vmatpush1.bf16.msra.mxu0 %v1962
    %2809 = vmatprep.subr.bf16.mxu0 %v1965
    %2810 = vmatpush1.bf16.msra.mxu0 %v1964
    %2811 = vmatprep.subr.bf16.mxu0 %v1967
    %2812 = vmatpush1.bf16.msra.mxu0 %v1966
    %2813 = vmatprep.subr.bf16.mxu0 %v1969
    %2814 = vmatpush1.bf16.msra.mxu0 %v1968
    %2815 = vmatprep.subr.bf16.mxu0 %v1971
    %2816 = vmatpush1.bf16.msra.mxu0 %v1970
    %2817 = vmatprep.subr.bf16.mxu0 %v1973
    %2818 = vmatpush1.bf16.msra.mxu0 %v1972
    %2819 = vmatprep.subr.bf16.mxu0 %v1975
    %2820 = vmatpush1.bf16.msra.mxu0 %v1974
    %2821 = vmatprep.subr.bf16.mxu0 %v1977
    %2822 = vmatpush1.bf16.msra.mxu0 %v1976
    %2823 = vmatprep.subr.bf16.mxu0 %v1979
    %2824 = vmatpush1.bf16.msra.mxu0 %v1978
    %2825 = vmatprep.mubr.bf16.mxu0 %v504
    %2826 = vmatmul.mubr.bf16.gmra.mrb[0].mxu0 %v502
    %v2827 = vpop.f32.mrb[0].mxu0
    %v2828 = vadd.f32 %v2787, %v2827
    %v2829 = vpop.f32.mrb[0].mxu0
    %v2830 = vadd.f32 %v2789, %v2829
    %v2831 = vpop.f32.mrb[0].mxu0
    %v2832 = vpop.f32.mrb[0].mxu0
    %2833 = vdwg.mxu0
    %2834 = vmatprep.subr.bf16.mxu0 %v1981
    %2835 = vmatpush1.bf16.msra.mxu0 %v1980
    %2836 = vmatprep.subr.bf16.mxu0 %v1983
    %2837 = vmatpush1.bf16.msra.mxu0 %v1982
    %2838 = vmatprep.subr.bf16.mxu0 %v1985
    %2839 = vmatpush1.bf16.msra.mxu0 %v1984
    %2840 = vmatprep.subr.bf16.mxu0 %v1987
    %2841 = vmatpush1.bf16.msra.mxu0 %v1986
    %2842 = vmatprep.subr.bf16.mxu0 %v1989
    %2843 = vmatpush1.bf16.msra.mxu0 %v1988
    %2844 = vmatprep.subr.bf16.mxu0 %v1991
    %2845 = vmatpush1.bf16.msra.mxu0 %v1990
    %2846 = vmatprep.subr.bf16.mxu0 %v1993
    %2847 = vmatpush1.bf16.msra.mxu0 %v1992
    %2848 = vmatprep.subr.bf16.mxu0 %v1995
    %2849 = vmatpush1.bf16.msra.mxu0 %v1994
    %2850 = vmatprep.subr.bf16.mxu0 %v1997
    %2851 = vmatpush1.bf16.msra.mxu0 %v1996
    %2852 = vmatprep.subr.bf16.mxu0 %v1999
    %2853 = vmatpush1.bf16.msra.mxu0 %v1998
    %2854 = vmatprep.subr.bf16.mxu0 %v2001
    %2855 = vmatpush1.bf16.msra.mxu0 %v2000
    %2856 = vmatprep.subr.bf16.mxu0 %v2003
    %2857 = vmatpush1.bf16.msra.mxu0 %v2002
    %2858 = vmatprep.subr.bf16.mxu0 %v2005
    %2859 = vmatpush1.bf16.msra.mxu0 %v2004
    %2860 = vmatprep.subr.bf16.mxu0 %v2007
    %2861 = vmatpush1.bf16.msra.mxu0 %v2006
    %2862 = vmatprep.subr.bf16.mxu0 %v2009
    %2863 = vmatpush1.bf16.msra.mxu0 %v2008
    %2864 = vmatprep.subr.bf16.mxu0 %v2011
    %2865 = vmatpush1.bf16.msra.mxu0 %v2010
    %2866 = vmatprep.mubr.bf16.mxu0 %v520
    %2867 = vmatmul.mubr.bf16.gmra.mrb[0].mxu0 %v512
    %v2868 = vpop.f32.mrb[0].mxu0
    %v2869 = vadd.f32 %v2828, %v2868
    %v2870 = vpop.f32.mrb[0].mxu0
    %v2871 = vadd.f32 %v2830, %v2870
    %v2872 = vpop.f32.mrb[0].mxu0
    %v2873 = vpop.f32.mrb[0].mxu0
    %2874 = vdwg.mxu0
    %2875 = vmatprep.subr.bf16.mxu0 %v2013
    %2876 = vmatpush1.bf16.msra.mxu0 %v2012
    %2877 = vmatprep.subr.bf16.mxu0 %v2015
    %2878 = vmatpush1.bf16.msra.mxu0 %v2014
    %2879 = vmatprep.subr.bf16.mxu0 %v2017
    %2880 = vmatpush1.bf16.msra.mxu0 %v2016
    %2881 = vmatprep.subr.bf16.mxu0 %v2019
    %2882 = vmatpush1.bf16.msra.mxu0 %v2018
    %2883 = vmatprep.subr.bf16.mxu0 %v2021
    %2884 = vmatpush1.bf16.msra.mxu0 %v2020
    %2885 = vmatprep.subr.bf16.mxu0 %v2023
    %2886 = vmatpush1.bf16.msra.mxu0 %v2022
    %2887 = vmatprep.subr.bf16.mxu0 %v2025
    %2888 = vmatpush1.bf16.msra.mxu0 %v2024
    %2889 = vmatprep.subr.bf16.mxu0 %v2027
    %2890 = vmatpush1.bf16.msra.mxu0 %v2026
    %2891 = vmatprep.subr.bf16.mxu0 %v2029
    %2892 = vmatpush1.bf16.msra.mxu0 %v2028
    %2893 = vmatprep.subr.bf16.mxu0 %v2031
    %2894 = vmatpush1.bf16.msra.mxu0 %v2030
    %2895 = vmatprep.subr.bf16.mxu0 %v2033
    %2896 = vmatpush1.bf16.msra.mxu0 %v2032
    %2897 = vmatprep.subr.bf16.mxu0 %v2035
    %2898 = vmatpush1.bf16.msra.mxu0 %v2034
    %2899 = vmatprep.subr.bf16.mxu0 %v2037
    %2900 = vmatpush1.bf16.msra.mxu0 %v2036
    %2901 = vmatprep.subr.bf16.mxu0 %v2039
    %2902 = vmatpush1.bf16.msra.mxu0 %v2038
    %2903 = vmatprep.subr.bf16.mxu0 %v2041
    %2904 = vmatpush1.bf16.msra.mxu0 %v2040
    %2905 = vmatprep.subr.bf16.mxu0 %v2043
    %2906 = vmatpush1.bf16.msra.mxu0 %v2042
    %2907 = vmatprep.mubr.bf16.mxu0 %v521
    %2908 = vmatmul.mubr.bf16.gmra.mrb[0].mxu0 %v519
    %v2909 = vpop.f32.mrb[0].mxu0
    %v2910 = vadd.f32 %v2869, %v2909
    %v2911 = vpop.f32.mrb[0].mxu0
    %v2912 = vadd.f32 %v2871, %v2911
    %v2913 = vpop.f32.mrb[0].mxu0
    %v2914 = vpop.f32.mrb[0].mxu0
    %2915 = vdwg.mxu0
    %2916 = vmatprep.subr.bf16.mxu0 %v2045
    %2917 = vmatpush1.bf16.msra.mxu0 %v2044
    %2918 = vmatprep.subr.bf16.mxu0 %v2047
    %2919 = vmatpush1.bf16.msra.mxu0 %v2046
    %2920 = vmatprep.subr.bf16.mxu0 %v2049
    %2921 = vmatpush1.bf16.msra.mxu0 %v2048
    %2922 = vmatprep.subr.bf16.mxu0 %v2051
    %2923 = vmatpush1.bf16.msra.mxu0 %v2050
    %2924 = vmatprep.subr.bf16.mxu0 %v2053
    %2925 = vmatpush1.bf16.msra.mxu0 %v2052
    %2926 = vmatprep.subr.bf16.mxu0 %v2055
    %2927 = vmatpush1.bf16.msra.mxu0 %v2054
    %2928 = vmatprep.subr.bf16.mxu0 %v2057
    %2929 = vmatpush1.bf16.msra.mxu0 %v2056
    %2930 = vmatprep.subr.bf16.mxu0 %v2059
    %2931 = vmatpush1.bf16.msra.mxu0 %v2058
    %2932 = vmatprep.subr.bf16.mxu0 %v2061
    %2933 = vmatpush1.bf16.msra.mxu0 %v2060
    %2934 = vmatprep.subr.bf16.mxu0 %v2063
    %2935 = vmatpush1.bf16.msra.mxu0 %v2062
    %2936 = vmatprep.subr.bf16.mxu0 %v2065
    %2937 = vmatpush1.bf16.msra.mxu0 %v2064
    %2938 = vmatprep.subr.bf16.mxu0 %v2067
    %2939 = vmatpush1.bf16.msra.mxu0 %v2066
    %2940 = vmatprep.subr.bf16.mxu0 %v2069
    %2941 = vmatpush1.bf16.msra.mxu0 %v2068
    %2942 = vmatprep.subr.bf16.mxu0 %v2071
    %2943 = vmatpush1.bf16.msra.mxu0 %v2070
    %2944 = vmatprep.subr.bf16.mxu0 %v2073
    %2945 = vmatpush1.bf16.msra.mxu0 %v2072
    %2946 = vmatprep.subr.bf16.mxu0 %v2075
    %2947 = vmatpush1.bf16.msra.mxu0 %v2074
    %2948 = vmatprep.mubr.bf16.mxu0 %v537
    %2949 = vmatmul.mubr.bf16.gmra.mrb[0].mxu0 %v529
    %v2950 = vpop.f32.mrb[0].mxu0
    %v2951 = vadd.f32 %v2910, %v2950
    %v2952 = vpop.f32.mrb[0].mxu0
    %v2953 = vadd.f32 %v2912, %v2952
    %v2954 = vpop.f32.mrb[0].mxu0
    %v2955 = vpop.f32.mrb[0].mxu0
    %2956 = vdwg.mxu0
    %2957 = vmatprep.subr.bf16.mxu0 %v2077
    %2958 = vmatpush1.bf16.msra.mxu0 %v2076
    %2959 = vmatprep.subr.bf16.mxu0 %v2079
    %2960 = vmatpush1.bf16.msra.mxu0 %v2078
    %2961 = vmatprep.subr.bf16.mxu0 %v2081
    %2962 = vmatpush1.bf16.msra.mxu0 %v2080
    %2963 = vmatprep.subr.bf16.mxu0 %v2083
    %2964 = vmatpush1.bf16.msra.mxu0 %v2082
    %2965 = vmatprep.subr.bf16.mxu0 %v2085
    %2966 = vmatpush1.bf16.msra.mxu0 %v2084
    %2967 = vmatprep.subr.bf16.mxu0 %v2087
    %2968 = vmatpush1.bf16.msra.mxu0 %v2086
    %2969 = vmatprep.subr.bf16.mxu0 %v2089
    %2970 = vmatpush1.bf16.msra.mxu0 %v2088
    %2971 = vmatprep.subr.bf16.mxu0 %v2091
    %2972 = vmatpush1.bf16.msra.mxu0 %v2090
    %2973 = vmatprep.subr.bf16.mxu0 %v2093
    %2974 = vmatpush1.bf16.msra.mxu0 %v2092
    %2975 = vmatprep.subr.bf16.mxu0 %v2095
    %2976 = vmatpush1.bf16.msra.mxu0 %v2094
    %2977 = vmatprep.subr.bf16.mxu0 %v2097
    %2978 = vmatpush1.bf16.msra.mxu0 %v2096
    %2979 = vmatprep.subr.bf16.mxu0 %v2099
    %2980 = vmatpush1.bf16.msra.mxu0 %v2098
    %2981 = vmatprep.subr.bf16.mxu0 %v2101
    %2982 = vmatpush1.bf16.msra.mxu0 %v2100
    %2983 = vmatprep.subr.bf16.mxu0 %v2103
    %2984 = vmatpush1.bf16.msra.mxu0 %v2102
    %2985 = vmatprep.subr.bf16.mxu0 %v2105
    %2986 = vmatpush1.bf16.msra.mxu0 %v2104
    %2987 = vmatprep.subr.bf16.mxu0 %v2107
    %2988 = vmatpush1.bf16.msra.mxu0 %v2106
    %2989 = vmatprep.mubr.bf16.mxu0 %v538
    %2990 = vmatmul.mubr.bf16.gmra.mrb[0].mxu0 %v536
    %v2991 = vpop.f32.mrb[0].mxu0
    %v2992 = vadd.f32 %v2951, %v2991
    %v2993 = vpop.f32.mrb[0].mxu0
    %v2994 = vadd.f32 %v2953, %v2993
    %v2995 = vpop.f32.mrb[0].mxu0
    %v2996 = vpop.f32.mrb[0].mxu0
    %2997 = vdwg.mxu0
    %2998 = vmatprep.subr.bf16.mxu0 %v2109
    %2999 = vmatpush1.bf16.msra.mxu0 %v2108
    %3000 = vmatprep.subr.bf16.mxu0 %v2111
    %3001 = vmatpush1.bf16.msra.mxu0 %v2110
    %3002 = vmatprep.subr.bf16.mxu0 %v2113
    %3003 = vmatpush1.bf16.msra.mxu0 %v2112
    %3004 = vmatprep.subr.bf16.mxu0 %v2115
    %3005 = vmatpush1.bf16.msra.mxu0 %v2114
    %3006 = vmatprep.subr.bf16.mxu0 %v2117
    %3007 = vmatpush1.bf16.msra.mxu0 %v2116
    %3008 = vmatprep.subr.bf16.mxu0 %v2119
    %3009 = vmatpush1.bf16.msra.mxu0 %v2118
    %3010 = vmatprep.subr.bf16.mxu0 %v2121
    %3011 = vmatpush1.bf16.msra.mxu0 %v2120
    %3012 = vmatprep.subr.bf16.mxu0 %v2123
    %3013 = vmatpush1.bf16.msra.mxu0 %v2122
    %3014 = vmatprep.subr.bf16.mxu0 %v2125
    %3015 = vmatpush1.bf16.msra.mxu0 %v2124
    %3016 = vmatprep.subr.bf16.mxu0 %v2127
    %3017 = vmatpush1.bf16.msra.mxu0 %v2126
    %3018 = vmatprep.subr.bf16.mxu0 %v2129
    %3019 = vmatpush1.bf16.msra.mxu0 %v2128
    %3020 = vmatprep.subr.bf16.mxu0 %v2131
    %3021 = vmatpush1.bf16.msra.mxu0 %v2130
    %3022 = vmatprep.subr.bf16.mxu0 %v2133
    %3023 = vmatpush1.bf16.msra.mxu0 %v2132
    %3024 = vmatprep.subr.bf16.mxu0 %v2135
    %3025 = vmatpush1.bf16.msra.mxu0 %v2134
    %3026 = vmatprep.subr.bf16.mxu0 %v2137
    %3027 = vmatpush1.bf16.msra.mxu0 %v2136
    %3028 = vmatprep.subr.bf16.mxu0 %v2139
    %3029 = vmatpush1.bf16.msra.mxu0 %v2138
    %3030 = vmatprep.mubr.bf16.mxu0 %v554
    %3031 = vmatmul.mubr.bf16.gmra.mrb[0].mxu0 %v546
    %v3032 = vpop.f32.mrb[0].mxu0
    %v3033 = vadd.f32 %v2992, %v3032
    %v3034 = vpop.f32.mrb[0].mxu0
    %v3035 = vadd.f32 %v2994, %v3034
    %v3036 = vpop.f32.mrb[0].mxu0
    %v3037 = vpop.f32.mrb[0].mxu0
    %3038 = vdwg.mxu0
    %3039 = vmatprep.subr.bf16.mxu0 %v2141
    %3040 = vmatpush1.bf16.msra.mxu0 %v2140
    %3041 = vmatprep.subr.bf16.mxu0 %v2143
    %3042 = vmatpush1.bf16.msra.mxu0 %v2142
    %3043 = vmatprep.subr.bf16.mxu0 %v2145
    %3044 = vmatpush1.bf16.msra.mxu0 %v2144
    %3045 = vmatprep.subr.bf16.mxu0 %v2147
    %3046 = vmatpush1.bf16.msra.mxu0 %v2146
    %3047 = vmatprep.subr.bf16.mxu0 %v2149
    %3048 = vmatpush1.bf16.msra.mxu0 %v2148
    %3049 = vmatprep.subr.bf16.mxu0 %v2151
    %3050 = vmatpush1.bf16.msra.mxu0 %v2150
    %3051 = vmatprep.subr.bf16.mxu0 %v2153
    %3052 = vmatpush1.bf16.msra.mxu0 %v2152
    %3053 = vmatprep.subr.bf16.mxu0 %v2155
    %3054 = vmatpush1.bf16.msra.mxu0 %v2154
    %3055 = vmatprep.subr.bf16.mxu0 %v2157
    %3056 = vmatpush1.bf16.msra.mxu0 %v2156
    %3057 = vmatprep.subr.bf16.mxu0 %v2159
    %3058 = vmatpush1.bf16.msra.mxu0 %v2158
    %3059 = vmatprep.subr.bf16.mxu0 %v2161
    %3060 = vmatpush1.bf16.msra.mxu0 %v2160
    %3061 = vmatprep.subr.bf16.mxu0 %v2163
    %3062 = vmatpush1.bf16.msra.mxu0 %v2162
    %3063 = vmatprep.subr.bf16.mxu0 %v2165
    %3064 = vmatpush1.bf16.msra.mxu0 %v2164
    %3065 = vmatprep.subr.bf16.mxu0 %v2167
    %3066 = vmatpush1.bf16.msra.mxu0 %v2166
    %3067 = vmatprep.subr.bf16.mxu0 %v2169
    %3068 = vmatpush1.bf16.msra.mxu0 %v2168
    %3069 = vmatprep.subr.bf16.mxu0 %v2171
    %3070 = vmatpush1.bf16.msra.mxu0 %v2170
    %3071 = vmatprep.mubr.bf16.mxu0 %v555
    %3072 = vmatmul.mubr.bf16.gmra.mrb[0].mxu0 %v553
    %v3073 = vpop.f32.mrb[0].mxu0
    %v3074 = vadd.f32 %v3033, %v3073
    %v3075 = vpop.f32.mrb[0].mxu0
    %v3076 = vadd.f32 %v3035, %v3075
    %v3077 = vpop.f32.mrb[0].mxu0
    %v3078 = vpop.f32.mrb[0].mxu0
    %3079 = vdwg.mxu0
    %3080 = vmatprep.subr.bf16.mxu0 %v2173
    %3081 = vmatpush1.bf16.msra.mxu0 %v2172
    %3082 = vmatprep.subr.bf16.mxu0 %v2175
    %3083 = vmatpush1.bf16.msra.mxu0 %v2174
    %3084 = vmatprep.subr.bf16.mxu0 %v2177
    %3085 = vmatpush1.bf16.msra.mxu0 %v2176
    %3086 = vmatprep.subr.bf16.mxu0 %v2179
    %3087 = vmatpush1.bf16.msra.mxu0 %v2178
    %3088 = vmatprep.subr.bf16.mxu0 %v2181
    %3089 = vmatpush1.bf16.msra.mxu0 %v2180
    %3090 = vmatprep.subr.bf16.mxu0 %v2183
    %3091 = vmatpush1.bf16.msra.mxu0 %v2182
    %3092 = vmatprep.subr.bf16.mxu0 %v2185
    %3093 = vmatpush1.bf16.msra.mxu0 %v2184
    %3094 = vmatprep.subr.bf16.mxu0 %v2187
    %3095 = vmatpush1.bf16.msra.mxu0 %v2186
    %3096 = vmatprep.subr.bf16.mxu0 0
    %3097 = vmatpush1.bf16.msra.mxu0 0
    %3098 = vmatprep.subr.bf16.mxu0 0
    %3099 = vmatpush1.bf16.msra.mxu0 0
    %3100 = vmatprep.subr.bf16.mxu0 0
    %3101 = vmatpush1.bf16.msra.mxu0 0
    %3102 = vmatprep.subr.bf16.mxu0 0
    %3103 = vmatpush1.bf16.msra.mxu0 0
    %3104 = vmatprep.subr.bf16.mxu0 0
    %3105 = vmatpush1.bf16.msra.mxu0 0
    %3106 = vmatprep.subr.bf16.mxu0 0
    %3107 = vmatpush1.bf16.msra.mxu0 0
    %3108 = vmatprep.subr.bf16.mxu0 0
    %3109 = vmatpush1.bf16.msra.mxu0 0
    %3110 = vmatprep.subr.bf16.mxu0 0
    %3111 = vmatpush1.bf16.msra.mxu0 0
    %3112 = vmatprep.mubr.bf16.mxu0 0
    %3113 = vmatmul.mubr.bf16.gmra.mrb[0].mxu0 %v562
    %v3114 = vpop.f32.mrb[0].mxu0
    %v3115 = vadd.f32 %v3074, %v3114
    %v3116 = vpop.f32.mrb[0].mxu0
    %v3117 = vadd.f32 %v3076, %v3116
    %v3118 = vpop.f32.mrb[0].mxu0
    %v3119 = vpop.f32.mrb[0].mxu0
    %3120 = vdwg.mxu0
    %v3121 = vmax.f32 %v3115, 0.0
    %v3122 = vmax.f32 %v3117, 0.0
    %v3123 = vpack.c.bf16 %v3121, %v3121
    %v3124 = vpack.c.bf16 %v3122, %v3122
    %v3125 = vld [vmem:[%s3] sm:$0xff]
    %v3126 = vld [vmem:[%s3 + $0x8] sm:$0xff]
    %v3127 = vld [vmem:[%s3 + $0x10] sm:$0xff]
    %v3128 = vld [vmem:[%s3 + $0x18] sm:$0xff]
    %v3129 = vld [vmem:[%s3 + $0x20] sm:$0xff]
    %v3130 = vld [vmem:[%s3 + $0x28] sm:$0xff]
    %v3131 = vld [vmem:[%s3 + $0x30] sm:$0xff]
    %v3132 = vld [vmem:[%s3 + $0x38] sm:$0xff]
    %v3133 = vld [vmem:[%s3 + $0x40] sm:$0xff]
    %v3134 = vld [vmem:[%s3 + $0x48] sm:$0xff]
    %v3135 = vld [vmem:[%s3 + $0x50] sm:$0xff]
    %v3136 = vld [vmem:[%s3 + $0x58] sm:$0xff]
    %v3137 = vld [vmem:[%s3 + $0x60] sm:$0xff]
    %v3138 = vld [vmem:[%s3 + $0x68] sm:$0xff]
    %v3139 = vld [vmem:[%s3 + $0x70] sm:$0xff]
    %v3140 = vld [vmem:[%s3 + $0x78] sm:$0xff]
    %v3141 = vld [vmem:[%s3 + $0x80] sm:$0xff]
    %v3142 = vld [vmem:[%s3 + $0x88] sm:$0xff]
    %v3143 = vld [vmem:[%s3 + $0x90] sm:$0xff]
    %v3144 = vld [vmem:[%s3 + $0x98] sm:$0xff]
    %v3145 = vld [vmem:[%s3 + $0xa0] sm:$0xff]
    %v3146 = vld [vmem:[%s3 + $0xa8] sm:$0xff]
    %v3147 = vld [vmem:[%s3 + $0xb0] sm:$0xff]
    %v3148 = vld [vmem:[%s3 + $0xb8] sm:$0xff]
    %v3149 = vld [vmem:[%s3 + $0xc0] sm:$0xff]
    %v3150 = vld [vmem:[%s3 + $0xc8] sm:$0xff]
    %v3151 = vld [vmem:[%s3 + $0xd0] sm:$0xff]
    %v3152 = vld [vmem:[%s3 + $0xd8] sm:$0xff]
    %v3153 = vld [vmem:[%s3 + $0xe0] sm:$0xff]
    %v3154 = vld [vmem:[%s3 + $0xe8] sm:$0xff]
    %v3155 = vld [vmem:[%s3 + $0xf0] sm:$0xff]
    %v3156 = vld [vmem:[%s3 + $0xf8] sm:$0xff]
    %v3157 = vld [vmem:[%s4] sm:$0x3]
    %v3159 = vlaneseq
    %v3160 = vshrl.u32 %v3159, 7
    %v3161 = vsub.s32 0, %v3160
    %v3162 = vrot.slane %v3157, %v3161
    %v3163 = vlaneseq
    %v3164 = vshrl.u32 %v3163, 7
    %v3165 = vsub.s32 1, %v3164
    %v3166 = vrot.slane %v3157, %v3165
    %v3201 = vunpack.c.l.b16 %v3125
    %v3202 = vunpack.c.h.b16 %v3125
    %v3203 = vunpack.c.l.b16 %v3126
    %v3204 = vunpack.c.h.b16 %v3126
    %v3205 = vunpack.c.l.b16 %v3127
    %v3206 = vunpack.c.h.b16 %v3127
    %v3207 = vunpack.c.l.b16 %v3128
    %v3208 = vunpack.c.h.b16 %v3128
    %v3209 = vunpack.c.l.b16 %v3129
    %v3210 = vunpack.c.h.b16 %v3129
    %v3211 = vunpack.c.l.b16 %v3130
    %v3212 = vunpack.c.h.b16 %v3130
    %v3213 = vunpack.c.l.b16 %v3131
    %v3214 = vunpack.c.h.b16 %v3131
    %v3215 = vunpack.c.l.b16 %v3132
    %v3216 = vunpack.c.h.b16 %v3132
    %v3217 = vunpack.c.l.b16 %v3133
    %v3218 = vunpack.c.h.b16 %v3133
    %v3219 = vunpack.c.l.b16 %v3134
    %v3220 = vunpack.c.h.b16 %v3134
    %v3221 = vunpack.c.l.b16 %v3135
    %v3222 = vunpack.c.h.b16 %v3135
    %v3223 = vunpack.c.l.b16 %v3136
    %v3224 = vunpack.c.h.b16 %v3136
    %v3225 = vunpack.c.l.b16 %v3137
    %v3226 = vunpack.c.h.b16 %v3137
    %v3227 = vunpack.c.l.b16 %v3138
    %v3228 = vunpack.c.h.b16 %v3138
    %v3229 = vunpack.c.l.b16 %v3139
    %v3230 = vunpack.c.h.b16 %v3139
    %v3231 = vunpack.c.l.b16 %v3140
    %v3232 = vunpack.c.h.b16 %v3140
    %v3233 = vunpack.c.l.b16 %v3141
    %v3234 = vunpack.c.h.b16 %v3141
    %v3235 = vunpack.c.l.b16 %v3142
    %v3236 = vunpack.c.h.b16 %v3142
    %v3237 = vunpack.c.l.b16 %v3143
    %v3238 = vunpack.c.h.b16 %v3143
    %v3239 = vunpack.c.l.b16 %v3144
    %v3240 = vunpack.c.h.b16 %v3144
    %v3241 = vunpack.c.l.b16 %v3145
    %v3242 = vunpack.c.h.b16 %v3145
    %v3243 = vunpack.c.l.b16 %v3146
    %v3244 = vunpack.c.h.b16 %v3146
    %v3245 = vunpack.c.l.b16 %v3147
    %v3246 = vunpack.c.h.b16 %v3147
    %v3247 = vunpack.c.l.b16 %v3148
    %v3248 = vunpack.c.h.b16 %v3148
    %v3249 = vunpack.c.l.b16 %v3149
    %v3250 = vunpack.c.h.b16 %v3149
    %v3251 = vunpack.c.l.b16 %v3150
    %v3252 = vunpack.c.h.b16 %v3150
    %v3253 = vunpack.c.l.b16 %v3151
    %v3254 = vunpack.c.h.b16 %v3151
    %v3255 = vunpack.c.l.b16 %v3152
    %v3256 = vunpack.c.h.b16 %v3152
    %v3257 = vunpack.c.l.b16 %v3153
    %v3258 = vunpack.c.h.b16 %v3153
    %v3259 = vunpack.c.l.b16 %v3154
    %v3260 = vunpack.c.h.b16 %v3154
    %v3261 = vunpack.c.l.b16 %v3155
    %v3262 = vunpack.c.h.b16 %v3155
    %v3263 = vunpack.c.l.b16 %v3156
    %v3264 = vunpack.c.h.b16 %v3156
    %v3265 = vpack.c.b16 %v3203, %v3201
    %v3266 = vpack.c.b16 %v3204, %v3202
    %v3267 = vpack.c.b16 %v3207, %v3205
    %v3268 = vpack.c.b16 %v3208, %v3206
    %v3269 = vpack.c.b16 %v3211, %v3209
    %v3270 = vpack.c.b16 %v3212, %v3210
    %v3271 = vpack.c.b16 %v3215, %v3213
    %v3272 = vpack.c.b16 %v3216, %v3214
    %v3273 = vpack.c.b16 %v3219, %v3217
    %v3274 = vpack.c.b16 %v3220, %v3218
    %v3275 = vpack.c.b16 %v3223, %v3221
    %v3276 = vpack.c.b16 %v3224, %v3222
    %v3277 = vpack.c.b16 %v3227, %v3225
    %v3278 = vpack.c.b16 %v3228, %v3226
    %v3279 = vpack.c.b16 %v3231, %v3229
    %v3280 = vpack.c.b16 %v3232, %v3230
    %v3281 = vpack.c.b16 %v3235, %v3233
    %v3282 = vpack.c.b16 %v3236, %v3234
    %v3283 = vpack.c.b16 %v3239, %v3237
    %v3284 = vpack.c.b16 %v3240, %v3238
    %v3285 = vpack.c.b16 %v3243, %v3241
    %v3286 = vpack.c.b16 %v3244, %v3242
    %v3287 = vpack.c.b16 %v3247, %v3245
    %v3288 = vpack.c.b16 %v3248, %v3246
    %v3289 = vpack.c.b16 %v3251, %v3249
    %v3290 = vpack.c.b16 %v3252, %v3250
    %v3291 = vpack.c.b16 %v3255, %v3253
    %v3292 = vpack.c.b16 %v3256, %v3254
    %v3293 = vpack.c.b16 %v3259, %v3257
    %v3294 = vpack.c.b16 %v3260, %v3258
    %v3295 = vpack.c.b16 %v3263, %v3261
    %v3296 = vpack.c.b16 %v3264, %v3262
    %3329 = vmatprep.subr.bf16.mxu0 %v3266
    %3330 = vmatpush1.bf16.msra.mxu0 %v3265
    %3331 = vmatprep.subr.bf16.mxu0 %v3268
    %3332 = vmatpush1.bf16.msra.mxu0 %v3267
    %3333 = vmatprep.subr.bf16.mxu0 %v3270
    %3334 = vmatpush1.bf16.msra.mxu0 %v3269
    %3335 = vmatprep.subr.bf16.mxu0 %v3272
    %3336 = vmatpush1.bf16.msra.mxu0 %v3271
    %3337 = vmatprep.subr.bf16.mxu0 %v3274
    %3338 = vmatpush1.bf16.msra.mxu0 %v3273
    %3339 = vmatprep.subr.bf16.mxu0 %v3276
    %3340 = vmatpush1.bf16.msra.mxu0 %v3275
    %3341 = vmatprep.subr.bf16.mxu0 %v3278
    %3342 = vmatpush1.bf16.msra.mxu0 %v3277
    %3343 = vmatprep.subr.bf16.mxu0 %v3280
    %3344 = vmatpush1.bf16.msra.mxu0 %v3279
    %3345 = vmatprep.subr.bf16.mxu0 %v3282
    %3346 = vmatpush1.bf16.msra.mxu0 %v3281
    %3347 = vmatprep.subr.bf16.mxu0 %v3284
    %3348 = vmatpush1.bf16.msra.mxu0 %v3283
    %3349 = vmatprep.subr.bf16.mxu0 %v3286
    %3350 = vmatpush1.bf16.msra.mxu0 %v3285
    %3351 = vmatprep.subr.bf16.mxu0 %v3288
    %3352 = vmatpush1.bf16.msra.mxu0 %v3287
    %3353 = vmatprep.subr.bf16.mxu0 %v3290
    %3354 = vmatpush1.bf16.msra.mxu0 %v3289
    %3355 = vmatprep.subr.bf16.mxu0 %v3292
    %3356 = vmatpush1.bf16.msra.mxu0 %v3291
    %3357 = vmatprep.subr.bf16.mxu0 %v3294
    %3358 = vmatpush1.bf16.msra.mxu0 %v3293
    %3359 = vmatprep.subr.bf16.mxu0 %v3296
    %3360 = vmatpush1.bf16.msra.mxu0 %v3295
    %3361 = vmatprep.mubr.bf16.mxu0 %v3124
    %3362 = vmatmul.mubr.bf16.gmra.mrb[0].mxu0 %v3123
    %v3363 = vpop.f32.mrb[0].mxu0
    %v3364 = vadd.f32 %v3162, %v3363
    %v3365 = vpop.f32.mrb[0].mxu0
    %v3366 = vadd.f32 %v3166, %v3365
    %v3367 = vpop.f32.mrb[0].mxu0
    %v3368 = vpop.f32.mrb[0].mxu0
    %3369 = vdwg.mxu0
    %v3370 = vmax.f32 %v3364, 0.0
    %v3371 = vmax.f32 %v3366, 0.0
    %v3372 = vpack.c.bf16 %v3370, %v3370
    %v3373 = vpack.c.bf16 %v3371, %v3371
    %v3374 = vld [vmem:[%s5] sm:$0xf]
    %v3375 = vld [vmem:[%s5 + $0x4] sm:$0xf]
    %v3376 = vld [vmem:[%s5 + $0x8] sm:$0xf]
    %v3377 = vld [vmem:[%s5 + $0xc] sm:$0xf]
    %v3378 = vld [vmem:[%s5 + $0x10] sm:$0xf]
    %v3379 = vld [vmem:[%s5 + $0x14] sm:$0xf]
    %v3380 = vld [vmem:[%s5 + $0x18] sm:$0xf]
    %v3381 = vld [vmem:[%s5 + $0x1c] sm:$0xf]
    %v3382 = vld [vmem:[%s5 + $0x20] sm:$0xf]
    %v3383 = vld [vmem:[%s5 + $0x24] sm:$0xf]
    %v3384 = vld [vmem:[%s5 + $0x28] sm:$0xf]
    %v3385 = vld [vmem:[%s5 + $0x2c] sm:$0xf]
    %v3386 = vld [vmem:[%s5 + $0x30] sm:$0xf]
    %v3387 = vld [vmem:[%s5 + $0x34] sm:$0xf]
    %v3388 = vld [vmem:[%s5 + $0x38] sm:$0xf]
    %v3389 = vld [vmem:[%s5 + $0x3c] sm:$0xf]
    %v3390 = vld [vmem:[%s5 + $0x40] sm:$0xf]
    %v3391 = vld [vmem:[%s5 + $0x44] sm:$0xf]
    %v3392 = vld [vmem:[%s5 + $0x48] sm:$0xf]
    %v3393 = vld [vmem:[%s5 + $0x4c] sm:$0xf]
    %v3394 = vld [vmem:[%s5 + $0x50] sm:$0xf]
    %v3395 = vld [vmem:[%s5 + $0x54] sm:$0xf]
    %v3396 = vld [vmem:[%s5 + $0x58] sm:$0xf]
    %v3397 = vld [vmem:[%s5 + $0x5c] sm:$0xf]
    %v3398 = vld [vmem:[%s5 + $0x60] sm:$0xf]
    %v3399 = vld [vmem:[%s5 + $0x64] sm:$0xf]
    %v3400 = vld [vmem:[%s5 + $0x68] sm:$0xf]
    %v3401 = vld [vmem:[%s5 + $0x6c] sm:$0xf]
    %v3402 = vld [vmem:[%s5 + $0x70] sm:$0xf]
    %v3403 = vld [vmem:[%s5 + $0x74] sm:$0xf]
    %v3404 = vld [vmem:[%s5 + $0x78] sm:$0xf]
    %v3405 = vld [vmem:[%s5 + $0x7c] sm:$0xf]
    %v3406 = vld [vmem:[%s6] sm:$0x1]
    %v3408 = vlaneseq
    %v3409 = vshrl.u32 %v3408, 7
    %v3410 = vsub.s32 0, %v3409
    %v3411 = vrot.slane %v3406, %v3410
    %v3445 = vunpack.c.l.b16 %v3374
    %v3446 = vunpack.c.l.b16 %v3375
    %v3447 = vunpack.c.l.b16 %v3376
    %v3448 = vunpack.c.l.b16 %v3377
    %v3449 = vunpack.c.l.b16 %v3378
    %v3450 = vunpack.c.l.b16 %v3379
    %v3451 = vunpack.c.l.b16 %v3380
    %v3452 = vunpack.c.l.b16 %v3381
    %v3453 = vunpack.c.l.b16 %v3382
    %v3454 = vunpack.c.l.b16 %v3383
    %v3455 = vunpack.c.l.b16 %v3384
    %v3456 = vunpack.c.l.b16 %v3385
    %v3457 = vunpack.c.l.b16 %v3386
    %v3458 = vunpack.c.l.b16 %v3387
    %v3459 = vunpack.c.l.b16 %v3388
    %v3460 = vunpack.c.l.b16 %v3389
    %v3461 = vunpack.c.l.b16 %v3390
    %v3462 = vunpack.c.l.b16 %v3391
    %v3463 = vunpack.c.l.b16 %v3392
    %v3464 = vunpack.c.l.b16 %v3393
    %v3465 = vunpack.c.l.b16 %v3394
    %v3466 = vunpack.c.l.b16 %v3395
    %v3467 = vunpack.c.l.b16 %v3396
    %v3468 = vunpack.c.l.b16 %v3397
    %v3469 = vunpack.c.l.b16 %v3398
    %v3470 = vunpack.c.l.b16 %v3399
    %v3471 = vunpack.c.l.b16 %v3400
    %v3472 = vunpack.c.l.b16 %v3401
    %v3473 = vunpack.c.l.b16 %v3402
    %v3474 = vunpack.c.l.b16 %v3403
    %v3475 = vunpack.c.l.b16 %v3404
    %v3476 = vunpack.c.l.b16 %v3405
    %v3477 = vpack.c.b16 %v3446, %v3445
    %v3478 = vpack.c.b16 %v3448, %v3447
    %v3479 = vpack.c.b16 %v3450, %v3449
    %v3480 = vpack.c.b16 %v3452, %v3451
    %v3481 = vpack.c.b16 %v3454, %v3453
    %v3482 = vpack.c.b16 %v3456, %v3455
    %v3483 = vpack.c.b16 %v3458, %v3457
    %v3484 = vpack.c.b16 %v3460, %v3459
    %v3485 = vpack.c.b16 %v3462, %v3461
    %v3486 = vpack.c.b16 %v3464, %v3463
    %v3487 = vpack.c.b16 %v3466, %v3465
    %v3488 = vpack.c.b16 %v3468, %v3467
    %v3489 = vpack.c.b16 %v3470, %v3469
    %v3490 = vpack.c.b16 %v3472, %v3471
    %v3491 = vpack.c.b16 %v3474, %v3473
    %v3492 = vpack.c.b16 %v3476, %v3475
    %3509 = vmatprep.subr.bf16.mxu0 0
    %3510 = vmatpush1.bf16.msra.mxu0 %v3477
    %3511 = vmatprep.subr.bf16.mxu0 0
    %3512 = vmatpush1.bf16.msra.mxu0 %v3478
    %3513 = vmatprep.subr.bf16.mxu0 0
    %3514 = vmatpush1.bf16.msra.mxu0 %v3479
    %3515 = vmatprep.subr.bf16.mxu0 0
    %3516 = vmatpush1.bf16.msra.mxu0 %v3480
    %3517 = vmatprep.subr.bf16.mxu0 0
    %3518 = vmatpush1.bf16.msra.mxu0 %v3481
    %3519 = vmatprep.subr.bf16.mxu0 0
    %3520 = vmatpush1.bf16.msra.mxu0 %v3482
    %3521 = vmatprep.subr.bf16.mxu0 0
    %3522 = vmatpush1.bf16.msra.mxu0 %v3483
    %3523 = vmatprep.subr.bf16.mxu0 0
    %3524 = vmatpush1.bf16.msra.mxu0 %v3484
    %3525 = vmatprep.subr.bf16.mxu0 0
    %3526 = vmatpush1.bf16.msra.mxu0 %v3485
    %3527 = vmatprep.subr.bf16.mxu0 0
    %3528 = vmatpush1.bf16.msra.mxu0 %v3486
    %3529 = vmatprep.subr.bf16.mxu0 0
    %3530 = vmatpush1.bf16.msra.mxu0 %v3487
    %3531 = vmatprep.subr.bf16.mxu0 0
    %3532 = vmatpush1.bf16.msra.mxu0 %v3488
    %3533 = vmatprep.subr.bf16.mxu0 0
    %3534 = vmatpush1.bf16.msra.mxu0 %v3489
    %3535 = vmatprep.subr.bf16.mxu0 0
    %3536 = vmatpush1.bf16.msra.mxu0 %v3490
    %3537 = vmatprep.subr.bf16.mxu0 0
    %3538 = vmatpush1.bf16.msra.mxu0 %v3491
    %3539 = vmatprep.subr.bf16.mxu0 0
    %3540 = vmatpush1.bf16.msra.mxu0 %v3492
    %3541 = vmatprep.mubr.bf16.mxu0 %v3373
    %3542 = vmatmul.mubr.bf16.gmra.mrb[0].mxu0 %v3372
    %v3543 = vpop.f32.mrb[0].mxu0
    %v3544 = vadd.f32 %v3411, %v3543
    %v3545 = vpop.f32.mrb[0].mxu0
    %v3546 = vpop.f32.mrb[0].mxu0
    %v3547 = vpop.f32.mrb[0].mxu0
    %3548 = vdwg.mxu0
    %3549 = vst [vmem:[#allocation2] sm:$0xf] %v3544
    // Predicated region
    $region30: #{net_forward.5} parent=1 // pred_check
      _
    $region31: #{net_forward.5} parent=1 // pred_check_branch
      %3551 = sbr.rel (0) target = $region33
    $region32: #{net_forward.5} parent=1 // pred_region
      %s3553 = ssub.s32 64, 64
      %3554 = vsyncadd [#allocation3], %s3553
      %s3556 = sshll.u32 [#allocation2], 4
      %s3557 = int_to_ptr.vmem [resolvable:$true] %s3556
      %3559 = dma.vmem_to_hbm [thread:$0]  %s3557, 64, %s7, [#allocation3]
    $region33: #{net_forward.5} parent=1 // pred_fallthru
      _
    // Predicated region
    $region34: #{net_forward.5} parent=1 // pred_check
      _
    $region35: #{net_forward.5} parent=1 // pred_check_branch
      %3561 = sbr.rel (0) target = $region37
    $region36: #{net_forward.5} parent=1 // pred_region
      %3562 = dma.done [#allocation3], 64
    $region37: #{net_forward.5} parent=1 // pred_fallthru
      _
    %3563 = vsyncpa [#allocation3], 1

// kernel: net_forward.4
$region0: #{net_forward.4}
  #allocation0 [shape = 'u32[]', space=smem, size = 0x4, offset = 0x4, fixed_abs, tag = 'smem constant byte address 0x4 - core index']
  #allocation1 [shape = 'u32[144,128]{1,0:T(1,128)}', space=vmem, size = 0x12000, scoped, tag = 'internal scratch']
  #allocation2 [shape = 'f32[196,128]{1,0:T(8,128)}', space=vmem, size = 0x19000, scoped, tag = 'scratch operand']
  #allocation3 [shape = 'f32[98,128]{1,0:T(8,128)}', space=vmem, size = 0xd000, scoped, tag = 'scratch operand']
  %s0 = inlined_call_operand.vmem [shape: bf16[1024,128], index: 0, kind: input, shape index: {}]
  %s1 = inlined_call_operand.vmem [shape: bf16[25,128,128], index: 1, kind: input, shape index: {}]
  %s2 = inlined_call_operand.vmem [shape: f32[1,128], index: 2, kind: input, shape index: {}]
  %s3 = inlined_call_operand.vmem [shape: bf16[4,25,128], index: 3, kind: output, shape index: {}]
  %s4 = sld [smem:[#allocation0]]
  $region45: #{net_forward.4} parent=0
    _
  %s6 = ssub.s32 1, %s4
  %s7 = scalar_select 0, %s6, %s4
  loop: start=0, step=1, limit=6
  $region2: #{net_forward.4} parent=0 // loop_pre_header
    _
  $region3: #{net_forward.4} parent=0 // loop_header
    %s9 = sphi 0, %s13
    %p10 = scmp.ge.s32.totalorder %s9, 6
    %s19 = sphi 0, %s21
    %s22 = sphi 0, %s19
    %s23 = sphi 0, %s22
    %s39 = sphi 0, %s23
    %s43 = sphi 0, %s43
    %s45 = sphi 0, %s43
    %s46 = sphi 0, %s45
    %s60 = sphi 0, %s46
    %s64 = sphi 0, %s64
    %s66 = sphi 0, %s64
    %s67 = sphi 0, %s66
    %s81 = sphi 0, %s67
    %s87 = sphi 0, %s89
    %s90 = sphi 0, %s87
    %s91 = sphi 0, %s90
    %s107 = sphi 0, %s91
  $region4: #{net_forward.4} parent=0 // loop_header_branch
    %12 = sbr.rel (%p10) target = $region8
  $region5: #{net_forward.4} parent=0 // loop_body
    %s14 = ssub.s32 %s9, 1
    %s15 = ssub.s32 %s9, 2
    %s16 = sadd.s32 %s9, 1
    %s17 = ssub.s32 %s9, %s16
    %p18 = scmp.eq.s32.totalorder %s17, 0
    %s20 = sadd.s32 %s19, 1
    %s21 = scalar_select %p18, %s19, %s20
    %p24 = pneg %p18
    %p25 = scmp.eq.s32.totalorder %s9, 3
    %p26 = por %p24, %p25
    %p27 = scmp.ne.s32.totalorder %s19, %s22
    %p28 = scmp.eq.s32.totalorder %s9, 0
    %p29 = por %p27, %p28
    %p30 = scmp.ne.s32.totalorder %s19, %s22
    %p31 = scmp.eq.s32.totalorder %s14, 3
    %p32 = por %p30, %p31
    %p33 = scmp.ne.s32.totalorder %s22, %s23
    %p34 = scmp.eq.s32.totalorder %s14, 0
    %p35 = por %p33, %p34
    %p36 = scmp.ne.s32.totalorder %s22, %s23
    %p37 = scmp.eq.s32.totalorder %s15, 3
    %p38 = por %p36, %p37
    %p40 = scmp.ne.s32.totalorder %s23, %s39
    %p41 = scmp.eq.s32.totalorder %s15, 0
    %p42 = por %p40, %p41
    %s44 = sadd.s32 %s43, 1
    %p47 = scmp.eq.s32.totalorder %s9, 3
    %p48 = scmp.ne.s32.totalorder %s43, %s45
    %p49 = scmp.eq.s32.totalorder %s9, 0
    %p50 = por %p48, %p49
    %p51 = scmp.ne.s32.totalorder %s43, %s45
    %p52 = scmp.eq.s32.totalorder %s14, 3
    %p53 = por %p51, %p52
    %p54 = scmp.ne.s32.totalorder %s45, %s46
    %p55 = scmp.eq.s32.totalorder %s14, 0
    %p56 = por %p54, %p55
    %p57 = scmp.ne.s32.totalorder %s45, %s46
    %p58 = scmp.eq.s32.totalorder %s15, 3
    %p59 = por %p57, %p58
    %p61 = scmp.ne.s32.totalorder %s46, %s60
    %p62 = scmp.eq.s32.totalorder %s15, 0
    %p63 = por %p61, %p62
    %s65 = sadd.s32 %s64, 1
    %p68 = scmp.eq.s32.totalorder %s9, 3
    %p69 = scmp.ne.s32.totalorder %s64, %s66
    %p70 = scmp.eq.s32.totalorder %s9, 0
    %p71 = por %p69, %p70
    %p72 = scmp.ne.s32.totalorder %s64, %s66
    %p73 = scmp.eq.s32.totalorder %s14, 3
    %p74 = por %p72, %p73
    %p75 = scmp.ne.s32.totalorder %s66, %s67
    %p76 = scmp.eq.s32.totalorder %s14, 0
    %p77 = por %p75, %p76
    %p78 = scmp.ne.s32.totalorder %s66, %s67
    %p79 = scmp.eq.s32.totalorder %s15, 3
    %p80 = por %p78, %p79
    %p82 = scmp.ne.s32.totalorder %s67, %s81
    %p83 = scmp.eq.s32.totalorder %s15, 0
    %p84 = por %p82, %p83
    %s85 = ssub.s32 %s9, %s16
    %p86 = scmp.eq.s32.totalorder %s85, 0
    %s88 = sadd.s32 %s87, 1
    %s89 = scalar_select %p86, %s87, %s88
    %p92 = pneg %p86
    %p93 = scmp.eq.s32.totalorder %s9, 3
    %p94 = por %p92, %p93
    %p95 = scmp.ne.s32.totalorder %s87, %s90
    %p96 = scmp.eq.s32.totalorder %s9, 0
    %p97 = por %p95, %p96
    %p98 = scmp.ne.s32.totalorder %s87, %s90
    %p99 = scmp.eq.s32.totalorder %s14, 3
    %p100 = por %p98, %p99
    %p101 = scmp.ne.s32.totalorder %s90, %s91
    %p102 = scmp.eq.s32.totalorder %s14, 0
    %p103 = por %p101, %p102
    %p104 = scmp.ne.s32.totalorder %s90, %s91
    %p105 = scmp.eq.s32.totalorder %s15, 3
    %p106 = por %p104, %p105
    %p108 = scmp.ne.s32.totalorder %s91, %s107
    %p109 = scmp.eq.s32.totalorder %s15, 0
    %p110 = por %p108, %p109
    %p111 = scmp.le.s32.totalorder 1, %s9
    %p112 = scmp.lt.s32.totalorder %s9, 5
    %p113 = pnand %p111, %p112
    %p114 = pneg %p113
    // Predicated region
    $region9: #{net_forward.4} parent=5 // pred_check
      _
    $region10: #{net_forward.4} parent=5 // pred_check_branch
      %116 = sbr.rel (%p113) target = $region12
    $region11: #{net_forward.4} parent=5 // pred_region
      %s117 = ssub.s32 %s9, 1
      // Predicated region
      $region13: #{net_forward.4} parent=11 // pred_check
        %p118 = pneg %p56
      $region14: #{net_forward.4} parent=11 // pred_check_branch
        %120 = sbr.rel (%p118) target = $region16
      $region15: #{net_forward.4} parent=11 // pred_region
        _
      $region16: #{net_forward.4} parent=11 // pred_fallthru
        _
      // Predicated region
      $region17: #{net_forward.4} parent=11 // pred_check
        %p121 = pneg %p77
      $region18: #{net_forward.4} parent=11 // pred_check_branch
        %123 = sbr.rel (%p121) target = $region20
      $region19: #{net_forward.4} parent=11 // pred_region
        _
      $region20: #{net_forward.4} parent=11 // pred_fallthru
        _
    $region12: #{net_forward.4} parent=5 // pred_fallthru
      _
    %p124 = scmp.lt.s32.totalorder %s9, 4
    // Predicated region
    $region21: #{net_forward.4} parent=5 // pred_check
      %p125 = pneg %p124
    $region22: #{net_forward.4} parent=5 // pred_check_branch
      %127 = sbr.rel (%p125) target = $region24
    $region23: #{net_forward.4} parent=5 // pred_region
      // Predicated region
      $region25: #{net_forward.4} parent=23 // pred_check
        %p128 = pneg %p29
      $region26: #{net_forward.4} parent=23 // pred_check_branch
        %130 = sbr.rel (%p128) target = $region28
      $region27: #{net_forward.4} parent=23 // pred_region
        %s131 = smul.u32 32, %s9
        %p132 = scmp.lt.s32.totalorder %s131, 127
        %s133 = scalar_select %p132, %s131, 127
        %s134 = smul.addr %s133, 4
        %s135 = scalar_lea.vmem %s0, %s134
        %s136 = smul.u32 32, %s9
      $region28: #{net_forward.4} parent=23 // pred_fallthru
        _
    $region24: #{net_forward.4} parent=5 // pred_fallthru
      _
    %p137 = scmp.le.s32.totalorder 1, %s9
    %p138 = scmp.lt.s32.totalorder %s9, 5
    %p139 = pnand %p137, %p138
    %p140 = pneg %p139
    // Predicated region
    $region29: #{net_forward.4} parent=5 // pred_check
      _
    $region30: #{net_forward.4} parent=5 // pred_check_branch
      %142 = sbr.rel (%p139) target = $region32
    $region31: #{net_forward.4} parent=5 // pred_region
      %s143 = ssub.s32 %s9, 1
      %s144 = smul.u32 32, %s14
      %p145 = scmp.lt.s32.totalorder %s144, 127
      %s146 = scalar_select %p145, %s144, 127
      %s147 = smul.addr %s146, 4
      %s148 = scalar_lea.vmem %s0, %s147
      %p149 = pneg %p35
      %p150 = pneg %p32
      %p151 = pneg %p56
      %p152 = pneg %p53
      %p153 = pneg %p77
      %p154 = pneg %p74
      %p155 = pneg %p103
      %p156 = pneg %p100
      %p157 = scmp.lt.s32.totalorder %s14, 3
      %s158 = scalar_select %p157, %s14, 3
      %s159 = smul.addr %s158, 4
      %s160 = smul.addr %s159, 4
      %s161 = scalar_lea.vmem %s3, %s160
      %s162 = smul.u32 32, %s14
      %p163 = scmp.lt.s32.totalorder %s162, 127
      %s164 = scalar_select %p163, %s162, 127
      %s165 = smul.addr %s164, 4
      %s166 = scalar_lea.vmem %s0, %s165
      %s167 = smul.u32 32, %s14
      %p168 = scmp.lt.s32.totalorder %s14, 3
      %s169 = scalar_select %p168, %s14, 3
      %s170 = smul.addr %s169, 4
      %s171 = smul.addr %s170, 4
      %s172 = scalar_lea.vmem %s3, %s171
      %v174 = vld [vmem:[%s166] sm:$0xf]
      %v175 = vld [vmem:[%s166 + $0x4] sm:$0xf]
      %v176 = vld [vmem:[%s166 + $0x8] sm:$0xf]
      %v177 = vld [vmem:[%s166 + $0xc] sm:$0xf]
      %v178 = vld [vmem:[%s166 + $0x10] sm:$0xf]
      %v179 = vld [vmem:[%s166 + $0x14] sm:$0xf]
      %v180 = vld [vmem:[%s166 + $0x18] sm:$0xf]
      %v181 = vld [vmem:[%s166 + $0x1c] sm:$0xf]
      %v182 = vld [vmem:[%s166 + $0x20] sm:$0xf]
      %v183 = vld [vmem:[%s166 + $0x24] sm:$0xf]
      %v184 = vld [vmem:[%s166 + $0x28] sm:$0xf]
      %v185 = vld [vmem:[%s166 + $0x2c] sm:$0xf]
      %v186 = vld [vmem:[%s166 + $0x30] sm:$0xf]
      %v187 = vld [vmem:[%s166 + $0x34] sm:$0xf]
      %v188 = vld [vmem:[%s166 + $0x38] sm:$0xf]
      %v189 = vld [vmem:[%s166 + $0x3c] sm:$0xf]
      %v190 = vld [vmem:[%s166 + $0x40] sm:$0xf]
      %v191 = vld [vmem:[%s166 + $0x44] sm:$0xf]
      %v192 = vld [vmem:[%s166 + $0x48] sm:$0xf]
      %v193 = vld [vmem:[%s166 + $0x4c] sm:$0xf]
      %v194 = vld [vmem:[%s166 + $0x50] sm:$0xf]
      %v195 = vld [vmem:[%s166 + $0x54] sm:$0xf]
      %v196 = vld [vmem:[%s166 + $0x58] sm:$0xf]
      %v197 = vld [vmem:[%s166 + $0x5c] sm:$0xf]
      %v198 = vld [vmem:[%s166 + $0x60] sm:$0x3]
      %v199 = vld [vmem:[%s1] sm:$0xf]
      %v200 = vld [vmem:[%s1 + $0x4] sm:$0xf]
      %v201 = vld [vmem:[%s1 + $0x8] sm:$0xf]
      %v202 = vld [vmem:[%s1 + $0xc] sm:$0xf]
      %v203 = vld [vmem:[%s1 + $0x10] sm:$0xf]
      %v204 = vld [vmem:[%s1 + $0x14] sm:$0xf]
      %v205 = vld [vmem:[%s1 + $0x18] sm:$0xf]
      %v206 = vld [vmem:[%s1 + $0x1c] sm:$0xf]
      %v207 = vld [vmem:[%s1 + $0x20] sm:$0xf]
      %v208 = vld [vmem:[%s1 + $0x24] sm:$0xf]
      %v209 = vld [vmem:[%s1 + $0x28] sm:$0xf]
      %v210 = vld [vmem:[%s1 + $0x2c] sm:$0xf]
      %v211 = vld [vmem:[%s1 + $0x30] sm:$0xf]
      %v212 = vld [vmem:[%s1 + $0x34] sm:$0xf]
      %v213 = vld [vmem:[%s1 + $0x38] sm:$0xf]
      %v214 = vld [vmem:[%s1 + $0x3c] sm:$0xf]
      %v215 = vld [vmem:[%s166 + $0x60] sm:$0x7]
      %s216 = scalar_lea.vmem %s1, 64
      %v217 = vld [vmem:[%s216] sm:$0xf]
      %v218 = vld [vmem:[%s216 + $0x4] sm:$0xf]
      %v219 = vld [vmem:[%s216 + $0x8] sm:$0xf]
      %v220 = vld [vmem:[%s216 + $0xc] sm:$0xf]
      %v221 = vld [vmem:[%s216 + $0x10] sm:$0xf]
      %v222 = vld [vmem:[%s216 + $0x14] sm:$0xf]
      %v223 = vld [vmem:[%s216 + $0x18] sm:$0xf]
      %v224 = vld [vmem:[%s216 + $0x1c] sm:$0xf]
      %v225 = vld [vmem:[%s216 + $0x20] sm:$0xf]
      %v226 = vld [vmem:[%s216 + $0x24] sm:$0xf]
      %v227 = vld [vmem:[%s216 + $0x28] sm:$0xf]
      %v228 = vld [vmem:[%s216 + $0x2c] sm:$0xf]
      %v229 = vld [vmem:[%s216 + $0x30] sm:$0xf]
      %v230 = vld [vmem:[%s216 + $0x34] sm:$0xf]
      %v231 = vld [vmem:[%s216 + $0x38] sm:$0xf]
      %v232 = vld [vmem:[%s216 + $0x3c] sm:$0xf]
      %v258 = vunpack.c.l.b16 %v174
      %v259 = vunpack.c.l.b16 %v175
      %v260 = vunpack.c.l.b16 %v176
      %v261 = vunpack.c.l.b16 %v177
      %v262 = vunpack.c.l.b16 %v178
      %v263 = vunpack.c.l.b16 %v179
      %v264 = vunpack.c.l.b16 %v180
      %v265 = vunpack.c.l.b16 %v181
      %v266 = vunpack.c.l.b16 %v182
      %v267 = vunpack.c.l.b16 %v183
      %v268 = vunpack.c.l.b16 %v184
      %v269 = vunpack.c.l.b16 %v185
      %v270 = vunpack.c.l.b16 %v186
      %v271 = vunpack.c.l.b16 %v187
      %v272 = vunpack.c.l.b16 %v188
      %v273 = vunpack.c.l.b16 %v189
      %v274 = vunpack.c.l.b16 %v190
      %v275 = vunpack.c.l.b16 %v191
      %v276 = vunpack.c.l.b16 %v192
      %v277 = vunpack.c.l.b16 %v193
      %v278 = vunpack.c.l.b16 %v194
      %v279 = vunpack.c.l.b16 %v195
      %v280 = vunpack.c.l.b16 %v196
      %v281 = vunpack.c.l.b16 %v197
      %v282 = vunpack.c.l.b16 %v215
      %v283 = vpack.c.b16 %v259, %v258
      %v284 = vpack.c.b16 %v261, %v260
      %v285 = vpack.c.b16 %v263, %v262
      %v286 = vpack.c.b16 %v265, %v264
      %v287 = vpack.c.b16 %v267, %v266
      %v288 = vpack.c.b16 %v269, %v268
      %v289 = vpack.c.b16 %v271, %v270
      %v290 = vpack.c.b16 %v273, %v272
      %v291 = vpack.c.b16 %v275, %v274
      %v292 = vpack.c.b16 %v277, %v276
      %v293 = vpack.c.b16 %v279, %v278
      %v294 = vpack.c.b16 %v281, %v280
      %v295 = vpack.c.b16 %v282, %v282
      %vm296 = vsmask.f32 7424
      %v298 = vshrl.u32 %v283, 16
      %v300 = vshll.u32 %v283, 16
      %v302 = vrot.slane %v300, 1
      %v303 = vor.u32 %v298, %v302
      %v305 = vshll.u32 %v284, 16
      %v307 = vrot.slane %v305, 1
      %v308 = vsel %vm296, %v303, %v307
      %v309 = vshrl.u32 %v284, 16
      %v311 = vor.u32 %v309, %v307
      %v313 = vshll.u32 %v285, 16
      %v315 = vrot.slane %v313, 1
      %v316 = vsel %vm296, %v311, %v315
      %v317 = vshrl.u32 %v285, 16
      %v319 = vor.u32 %v317, %v315
      %v321 = vshll.u32 %v286, 16
      %v323 = vrot.slane %v321, 1
      %v324 = vsel %vm296, %v319, %v323
      %v325 = vshrl.u32 %v286, 16
      %v327 = vor.u32 %v325, %v323
      %v329 = vshll.u32 %v287, 16
      %v331 = vrot.slane %v329, 1
      %v332 = vsel %vm296, %v327, %v331
      %v333 = vshrl.u32 %v287, 16
      %v335 = vor.u32 %v333, %v331
      %v337 = vshll.u32 %v288, 16
      %v339 = vrot.slane %v337, 1
      %v340 = vsel %vm296, %v335, %v339
      %v341 = vshrl.u32 %v288, 16
      %v343 = vor.u32 %v341, %v339
      %v345 = vshll.u32 %v289, 16
      %v347 = vrot.slane %v345, 1
      %v348 = vsel %vm296, %v343, %v347
      %v349 = vshrl.u32 %v289, 16
      %v351 = vor.u32 %v349, %v347
      %v353 = vshll.u32 %v290, 16
      %v355 = vrot.slane %v353, 1
      %v356 = vsel %vm296, %v351, %v355
      %v357 = vshrl.u32 %v290, 16
      %v359 = vor.u32 %v357, %v355
      %v361 = vshll.u32 %v291, 16
      %v363 = vrot.slane %v361, 1
      %v364 = vsel %vm296, %v359, %v363
      %v365 = vshrl.u32 %v291, 16
      %v367 = vor.u32 %v365, %v363
      %v369 = vshll.u32 %v292, 16
      %v371 = vrot.slane %v369, 1
      %v372 = vsel %vm296, %v367, %v371
      %v373 = vshrl.u32 %v292, 16
      %v375 = vor.u32 %v373, %v371
      %v377 = vshll.u32 %v293, 16
      %v379 = vrot.slane %v377, 1
      %v380 = vsel %vm296, %v375, %v379
      %v381 = vshrl.u32 %v293, 16
      %v383 = vor.u32 %v381, %v379
      %v385 = vshll.u32 %v294, 16
      %v387 = vrot.slane %v385, 1
      %v388 = vsel %vm296, %v383, %v387
      %v389 = vshrl.u32 %v294, 16
      %v391 = vor.u32 %v389, %v387
      %v393 = vshll.u32 %v295, 16
      %v395 = vrot.slane %v393, 1
      %v396 = vsel %vm296, %v391, %v395
      %v397 = vshrl.u32 %v295, 16
      %v399 = vor.u32 %v397, %v395
      %v429 = vunpack.c.l.b16 %v217
      %v430 = vunpack.c.l.b16 %v218
      %v431 = vunpack.c.l.b16 %v219
      %v432 = vunpack.c.l.b16 %v220
      %v433 = vunpack.c.l.b16 %v221
      %v434 = vunpack.c.l.b16 %v222
      %v435 = vunpack.c.l.b16 %v223
      %v436 = vunpack.c.l.b16 %v224
      %v437 = vunpack.c.l.b16 %v225
      %v438 = vunpack.c.l.b16 %v226
      %v439 = vunpack.c.l.b16 %v227
      %v440 = vunpack.c.l.b16 %v228
      %v441 = vunpack.c.l.b16 %v229
      %v442 = vunpack.c.l.b16 %v230
      %v443 = vunpack.c.l.b16 %v231
      %v444 = vunpack.c.l.b16 %v232
      %v445 = vpack.c.b16 %v430, %v429
      %v446 = vpack.c.b16 %v432, %v431
      %v447 = vpack.c.b16 %v434, %v433
      %v448 = vpack.c.b16 %v436, %v435
      %v449 = vpack.c.b16 %v438, %v437
      %v450 = vpack.c.b16 %v440, %v439
      %v451 = vpack.c.b16 %v442, %v441
      %v452 = vpack.c.b16 %v444, %v443
      %461 = vmatprep.subr.bf16.mxu0 0
      %462 = vmatpush1.bf16.msra.mxu0 %v445
      %463 = vmatprep.subr.bf16.mxu0 0
      %464 = vmatpush1.bf16.msra.mxu0 %v446
      %465 = vmatprep.subr.bf16.mxu0 0
      %466 = vmatpush1.bf16.msra.mxu0 %v447
      %467 = vmatprep.subr.bf16.mxu0 0
      %468 = vmatpush1.bf16.msra.mxu0 %v448
      %469 = vmatprep.subr.bf16.mxu0 0
      %470 = vmatpush1.bf16.msra.mxu0 %v449
      %471 = vmatprep.subr.bf16.mxu0 0
      %472 = vmatpush1.bf16.msra.mxu0 %v450
      %473 = vmatprep.subr.bf16.mxu0 0
      %474 = vmatpush1.bf16.msra.mxu0 %v451
      %475 = vmatprep.subr.bf16.mxu0 0
      %476 = vmatpush1.bf16.msra.mxu0 %v452
      %477 = vmatprep.subr.bf16.mxu0 0
      %478 = vmatpush1.bf16.msra.mxu0 0
      %479 = vmatprep.subr.bf16.mxu0 0
      %480 = vmatpush1.bf16.msra.mxu0 0
      %481 = vmatprep.subr.bf16.mxu0 0
      %482 = vmatpush1.bf16.msra.mxu0 0
      %483 = vmatprep.subr.bf16.mxu0 0
      %484 = vmatpush1.bf16.msra.mxu0 0
      %485 = vmatprep.subr.bf16.mxu0 0
      %486 = vmatpush1.bf16.msra.mxu0 0
      %487 = vmatprep.subr.bf16.mxu0 0
      %488 = vmatpush1.bf16.msra.mxu0 0
      %489 = vmatprep.subr.bf16.mxu0 0
      %490 = vmatpush1.bf16.msra.mxu0 0
      %491 = vmatprep.subr.bf16.mxu0 0
      %492 = vmatpush1.bf16.msra.mxu0 0
      %493 = vmatprep.mubr.bf16.mxu0 0
      %494 = vmatmul.mubr.bf16.gmra.mrb[0].mxu0 %v308
      %v495 = vpop.f32.mrb[0].mxu0
      %v496 = vadd.f32 0.0, %v495
      %v497 = vpop.f32.mrb[0].mxu0
      %v498 = vpop.f32.mrb[0].mxu0
      %v499 = vadd.f32 0.0, %v498
      %v500 = vpop.f32.mrb[0].mxu0
      %501 = vmatprep.mubr.bf16.mxu0 0
      %502 = vmatmul.mubr.bf16.gmra.mrb[0].mxu0 %v316
      %v503 = vpop.f32.mrb[0].mxu0
      %v504 = vadd.f32 0.0, %v503
      %v505 = vpop.f32.mrb[0].mxu0
      %v506 = vpop.f32.mrb[0].mxu0
      %v507 = vadd.f32 0.0, %v506
      %v508 = vpop.f32.mrb[0].mxu0
      %509 = vmatprep.mubr.bf16.mxu0 0
      %510 = vmatmul.mubr.bf16.gmra.mrb[0].mxu0 %v324
      %v511 = vpop.f32.mrb[0].mxu0
      %v512 = vadd.f32 0.0, %v511
      %v513 = vpop.f32.mrb[0].mxu0
      %v514 = vpop.f32.mrb[0].mxu0
      %v515 = vadd.f32 0.0, %v514
      %v516 = vpop.f32.mrb[0].mxu0
      %517 = vmatprep.mubr.bf16.mxu0 0
      %518 = vmatmul.mubr.bf16.gmra.mrb[0].mxu0 %v332
      %v519 = vpop.f32.mrb[0].mxu0
      %v520 = vadd.f32 0.0, %v519
      %v521 = vpop.f32.mrb[0].mxu0
      %v522 = vpop.f32.mrb[0].mxu0
      %v523 = vadd.f32 0.0, %v522
      %v524 = vpop.f32.mrb[0].mxu0
      %525 = vmatprep.mubr.bf16.mxu0 0
      %526 = vmatmul.mubr.bf16.gmra.mrb[0].mxu0 %v340
      %v527 = vpop.f32.mrb[0].mxu0
      %v528 = vadd.f32 0.0, %v527
      %v529 = vpop.f32.mrb[0].mxu0
      %v530 = vpop.f32.mrb[0].mxu0
      %v531 = vadd.f32 0.0, %v530
      %v532 = vpop.f32.mrb[0].mxu0
      %533 = vmatprep.mubr.bf16.mxu0 0
      %534 = vmatmul.mubr.bf16.gmra.mrb[0].mxu0 %v348
      %v535 = vpop.f32.mrb[0].mxu0
      %v536 = vadd.f32 0.0, %v535
      %v537 = vpop.f32.mrb[0].mxu0
      %v538 = vpop.f32.mrb[0].mxu0
      %v539 = vadd.f32 0.0, %v538
      %v540 = vpop.f32.mrb[0].mxu0
      %541 = vmatprep.mubr.bf16.mxu0 0
      %542 = vmatmul.mubr.bf16.gmra.mrb[0].mxu0 %v356
      %v543 = vpop.f32.mrb[0].mxu0
      %v544 = vadd.f32 0.0, %v543
      %v545 = vpop.f32.mrb[0].mxu0
      %v546 = vpop.f32.mrb[0].mxu0
      %v547 = vadd.f32 0.0, %v546
      %v548 = vpop.f32.mrb[0].mxu0
      %549 = vmatprep.mubr.bf16.mxu0 0
      %550 = vmatmul.mubr.bf16.gmra.mrb[0].mxu0 %v364
      %v551 = vpop.f32.mrb[0].mxu0
      %v552 = vadd.f32 0.0, %v551
      %v553 = vpop.f32.mrb[0].mxu0
      %v554 = vpop.f32.mrb[0].mxu0
      %v555 = vadd.f32 0.0, %v554
      %v556 = vpop.f32.mrb[0].mxu0
      %557 = vmatprep.mubr.bf16.mxu0 0
      %558 = vmatmul.mubr.bf16.gmra.mrb[0].mxu0 %v372
      %v559 = vpop.f32.mrb[0].mxu0
      %v560 = vadd.f32 0.0, %v559
      %v561 = vpop.f32.mrb[0].mxu0
      %v562 = vpop.f32.mrb[0].mxu0
      %v563 = vadd.f32 0.0, %v562
      %v564 = vpop.f32.mrb[0].mxu0
      %565 = vmatprep.mubr.bf16.mxu0 0
      %566 = vmatmul.mubr.bf16.gmra.mrb[0].mxu0 %v380
      %v567 = vpop.f32.mrb[0].mxu0
      %v568 = vadd.f32 0.0, %v567
      %v569 = vpop.f32.mrb[0].mxu0
      %v570 = vpop.f32.mrb[0].mxu0
      %v571 = vadd.f32 0.0, %v570
      %v572 = vpop.f32.mrb[0].mxu0
      %573 = vmatprep.mubr.bf16.mxu0 0
      %574 = vmatmul.mubr.bf16.gmra.mrb[0].mxu0 %v388
      %v575 = vpop.f32.mrb[0].mxu0
      %v576 = vadd.f32 0.0, %v575
      %v577 = vpop.f32.mrb[0].mxu0
      %v578 = vpop.f32.mrb[0].mxu0
      %v579 = vadd.f32 0.0, %v578
      %v580 = vpop.f32.mrb[0].mxu0
      %581 = vmatprep.mubr.bf16.mxu0 0
      %582 = vmatmul.mubr.bf16.gmra.mrb[0].mxu0 %v396
      %v583 = vpop.f32.mrb[0].mxu0
      %v584 = vadd.f32 0.0, %v583
      %v585 = vpop.f32.mrb[0].mxu0
      %v586 = vpop.f32.mrb[0].mxu0
      %v587 = vadd.f32 0.0, %v586
      %v588 = vpop.f32.mrb[0].mxu0
      %589 = vmatprep.mubr.bf16.mxu0 0
      %590 = vmatmul.mubr.bf16.gmra.mrb[0].mxu0 %v399
      %v591 = vpop.f32.mrb[0].mxu0
      %v592 = vadd.f32 0.0, %v591
      %v593 = vpop.f32.mrb[0].mxu0
      %v594 = vpop.f32.mrb[0].mxu0
      %v595 = vpop.f32.mrb[0].mxu0
      %596 = vdwg.mxu0
      %v598 = vunpack.c.l.b16 %v198
      %v599 = vpack.c.b16 %v598, %v598
      %v629 = vunpack.c.l.b16 %v199
      %v630 = vunpack.c.l.b16 %v200
      %v631 = vunpack.c.l.b16 %v201
      %v632 = vunpack.c.l.b16 %v202
      %v633 = vunpack.c.l.b16 %v203
      %v634 = vunpack.c.l.b16 %v204
      %v635 = vunpack.c.l.b16 %v205
      %v636 = vunpack.c.l.b16 %v206
      %v637 = vunpack.c.l.b16 %v207
      %v638 = vunpack.c.l.b16 %v208
      %v639 = vunpack.c.l.b16 %v209
      %v640 = vunpack.c.l.b16 %v210
      %v641 = vunpack.c.l.b16 %v211
      %v642 = vunpack.c.l.b16 %v212
      %v643 = vunpack.c.l.b16 %v213
      %v644 = vunpack.c.l.b16 %v214
      %v645 = vpack.c.b16 %v630, %v629
      %v646 = vpack.c.b16 %v632, %v631
      %v647 = vpack.c.b16 %v634, %v633
      %v648 = vpack.c.b16 %v636, %v635
      %v649 = vpack.c.b16 %v638, %v637
      %v650 = vpack.c.b16 %v640, %v639
      %v651 = vpack.c.b16 %v642, %v641
      %v652 = vpack.c.b16 %v644, %v643
      %661 = vmatprep.subr.bf16.mxu0 0
      %662 = vmatpush1.bf16.msra.mxu0 %v645
      %663 = vmatprep.subr.bf16.mxu0 0
      %664 = vmatpush1.bf16.msra.mxu0 %v646
      %665 = vmatprep.subr.bf16.mxu0 0
      %666 = vmatpush1.bf16.msra.mxu0 %v647
      %667 = vmatprep.subr.bf16.mxu0 0
      %668 = vmatpush1.bf16.msra.mxu0 %v648
      %669 = vmatprep.subr.bf16.mxu0 0
      %670 = vmatpush1.bf16.msra.mxu0 %v649
      %671 = vmatprep.subr.bf16.mxu0 0
      %672 = vmatpush1.bf16.msra.mxu0 %v650
      %673 = vmatprep.subr.bf16.mxu0 0
      %674 = vmatpush1.bf16.msra.mxu0 %v651
      %675 = vmatprep.subr.bf16.mxu0 0
      %676 = vmatpush1.bf16.msra.mxu0 %v652
      %677 = vmatprep.subr.bf16.mxu0 0
      %678 = vmatpush1.bf16.msra.mxu0 0
      %679 = vmatprep.subr.bf16.mxu0 0
      %680 = vmatpush1.bf16.msra.mxu0 0
      %681 = vmatprep.subr.bf16.mxu0 0
      %682 = vmatpush1.bf16.msra.mxu0 0
      %683 = vmatprep.subr.bf16.mxu0 0
      %684 = vmatpush1.bf16.msra.mxu0 0
      %685 = vmatprep.subr.bf16.mxu0 0
      %686 = vmatpush1.bf16.msra.mxu0 0
      %687 = vmatprep.subr.bf16.mxu0 0
      %688 = vmatpush1.bf16.msra.mxu0 0
      %689 = vmatprep.subr.bf16.mxu0 0
      %690 = vmatpush1.bf16.msra.mxu0 0
      %691 = vmatprep.subr.bf16.mxu0 0
      %692 = vmatpush1.bf16.msra.mxu0 0
      %693 = vmatprep.mubr.bf16.mxu0 0
      %694 = vmatmul.mubr.bf16.gmra.mrb[0].mxu0 %v283
      %v695 = vpop.f32.mrb[0].mxu0
      %v696 = vadd.f32 %v496, %v695
      %v697 = vpop.f32.mrb[0].mxu0
      %v698 = vpop.f32.mrb[0].mxu0
      %v699 = vadd.f32 %v499, %v698
      %v700 = vpop.f32.mrb[0].mxu0
      %701 = vmatprep.mubr.bf16.mxu0 0
      %702 = vmatmul.mubr.bf16.gmra.mrb[0].mxu0 %v284
      %v703 = vpop.f32.mrb[0].mxu0
      %v704 = vadd.f32 %v504, %v703
      %v705 = vpop.f32.mrb[0].mxu0
      %v706 = vpop.f32.mrb[0].mxu0
      %v707 = vadd.f32 %v507, %v706
      %v708 = vpop.f32.mrb[0].mxu0
      %709 = vmatprep.mubr.bf16.mxu0 0
      %710 = vmatmul.mubr.bf16.gmra.mrb[0].mxu0 %v285
      %v711 = vpop.f32.mrb[0].mxu0
      %v712 = vadd.f32 %v512, %v711
      %v713 = vpop.f32.mrb[0].mxu0
      %v714 = vpop.f32.mrb[0].mxu0
      %v715 = vadd.f32 %v515, %v714
      %v716 = vpop.f32.mrb[0].mxu0
      %717 = vmatprep.mubr.bf16.mxu0 0
      %718 = vmatmul.mubr.bf16.gmra.mrb[0].mxu0 %v286
      %v719 = vpop.f32.mrb[0].mxu0
      %v720 = vadd.f32 %v520, %v719
      %v721 = vpop.f32.mrb[0].mxu0
      %v722 = vpop.f32.mrb[0].mxu0
      %v723 = vadd.f32 %v523, %v722
      %v724 = vpop.f32.mrb[0].mxu0
      %725 = vmatprep.mubr.bf16.mxu0 0
      %726 = vmatmul.mubr.bf16.gmra.mrb[0].mxu0 %v287
      %v727 = vpop.f32.mrb[0].mxu0
      %v728 = vadd.f32 %v528, %v727
      %v729 = vpop.f32.mrb[0].mxu0
      %v730 = vpop.f32.mrb[0].mxu0
      %v731 = vadd.f32 %v531, %v730
      %v732 = vpop.f32.mrb[0].mxu0
      %733 = vmatprep.mubr.bf16.mxu0 0
      %734 = vmatmul.mubr.bf16.gmra.mrb[0].mxu0 %v288
      %v735 = vpop.f32.mrb[0].mxu0
      %v736 = vadd.f32 %v536, %v735
      %v737 = vpop.f32.mrb[0].mxu0
      %v738 = vpop.f32.mrb[0].mxu0
      %v739 = vadd.f32 %v539, %v738
      %v740 = vpop.f32.mrb[0].mxu0
      %741 = vmatprep.mubr.bf16.mxu0 0
      %742 = vmatmul.mubr.bf16.gmra.mrb[0].mxu0 %v289
      %v743 = vpop.f32.mrb[0].mxu0
      %v744 = vadd.f32 %v544, %v743
      %v745 = vpop.f32.mrb[0].mxu0
      %v746 = vpop.f32.mrb[0].mxu0
      %v747 = vadd.f32 %v547, %v746
      %v748 = vpop.f32.mrb[0].mxu0
      %749 = vmatprep.mubr.bf16.mxu0 0
      %750 = vmatmul.mubr.bf16.gmra.mrb[0].mxu0 %v290
      %v751 = vpop.f32.mrb[0].mxu0
      %v752 = vadd.f32 %v552, %v751
      %v753 = vpop.f32.mrb[0].mxu0
      %v754 = vpop.f32.mrb[0].mxu0
      %v755 = vadd.f32 %v555, %v754
      %v756 = vpop.f32.mrb[0].mxu0
      %757 = vmatprep.mubr.bf16.mxu0 0
      %758 = vmatmul.mubr.bf16.gmra.mrb[0].mxu0 %v291
      %v759 = vpop.f32.mrb[0].mxu0
      %v760 = vadd.f32 %v560, %v759
      %v761 = vpop.f32.mrb[0].mxu0
      %v762 = vpop.f32.mrb[0].mxu0
      %v763 = vadd.f32 %v563, %v762
      %v764 = vpop.f32.mrb[0].mxu0
      %765 = vmatprep.mubr.bf16.mxu0 0
      %766 = vmatmul.mubr.bf16.gmra.mrb[0].mxu0 %v292
      %v767 = vpop.f32.mrb[0].mxu0
      %v768 = vadd.f32 %v568, %v767
      %v769 = vpop.f32.mrb[0].mxu0
      %v770 = vpop.f32.mrb[0].mxu0
      %v771 = vadd.f32 %v571, %v770
      %v772 = vpop.f32.mrb[0].mxu0
      %773 = vmatprep.mubr.bf16.mxu0 0
      %774 = vmatmul.mubr.bf16.gmra.mrb[0].mxu0 %v293
      %v775 = vpop.f32.mrb[0].mxu0
      %v776 = vadd.f32 %v576, %v775
      %v777 = vpop.f32.mrb[0].mxu0
      %v778 = vpop.f32.mrb[0].mxu0
      %v779 = vadd.f32 %v579, %v778
      %v780 = vpop.f32.mrb[0].mxu0
      %781 = vmatprep.mubr.bf16.mxu0 0
      %782 = vmatmul.mubr.bf16.gmra.mrb[0].mxu0 %v294
      %v783 = vpop.f32.mrb[0].mxu0
      %v784 = vadd.f32 %v584, %v783
      %v785 = vpop.f32.mrb[0].mxu0
      %v786 = vpop.f32.mrb[0].mxu0
      %v787 = vadd.f32 %v587, %v786
      %v788 = vpop.f32.mrb[0].mxu0
      %789 = vmatprep.mubr.bf16.mxu0 0
      %790 = vmatmul.mubr.bf16.gmra.mrb[0].mxu0 %v599
      %v791 = vpop.f32.mrb[0].mxu0
      %v792 = vadd.f32 %v592, %v791
      %v793 = vpop.f32.mrb[0].mxu0
      %v794 = vpop.f32.mrb[0].mxu0
      %v795 = vpop.f32.mrb[0].mxu0
      %796 = vdwg.mxu0
      %v797 = vld [vmem:[%s166] sm:$0xe]
      %s798 = scalar_lea.vmem %s1, 128
      %v799 = vld [vmem:[%s798] sm:$0xf]
      %v800 = vld [vmem:[%s798 + $0x4] sm:$0xf]
      %v801 = vld [vmem:[%s798 + $0x8] sm:$0xf]
      %v802 = vld [vmem:[%s798 + $0xc] sm:$0xf]
      %v803 = vld [vmem:[%s798 + $0x10] sm:$0xf]
      %v804 = vld [vmem:[%s798 + $0x14] sm:$0xf]
      %v805 = vld [vmem:[%s798 + $0x18] sm:$0xf]
      %v806 = vld [vmem:[%s798 + $0x1c] sm:$0xf]
      %v807 = vld [vmem:[%s798 + $0x20] sm:$0xf]
      %v808 = vld [vmem:[%s798 + $0x24] sm:$0xf]
      %v809 = vld [vmem:[%s798 + $0x28] sm:$0xf]
      %v810 = vld [vmem:[%s798 + $0x2c] sm:$0xf]
      %v811 = vld [vmem:[%s798 + $0x30] sm:$0xf]
      %v812 = vld [vmem:[%s798 + $0x34] sm:$0xf]
      %v813 = vld [vmem:[%s798 + $0x38] sm:$0xf]
      %v814 = vld [vmem:[%s798 + $0x3c] sm:$0xf]
      %v816 = vunpack.c.l.b16 %v797
      %v817 = vpack.c.b16 %v259, %v816
      %vm818 = vcmask 1046528
      %v819 = vrot.slane %v817, 1
      %v820 = vrot.slane %v284, 1
      %v821 = vsel %vm818, %v819, %v820
      %v822 = vrot.slane %v285, 1
      %v823 = vsel %vm818, %v820, %v822
      %v824 = vrot.slane %v286, 1
      %v825 = vsel %vm818, %v822, %v824
      %v826 = vrot.slane %v287, 1
      %v827 = vsel %vm818, %v824, %v826
      %v828 = vrot.slane %v288, 1
      %v829 = vsel %vm818, %v826, %v828
      %v830 = vrot.slane %v289, 1
      %v831 = vsel %vm818, %v828, %v830
      %v832 = vrot.slane %v290, 1
      %v833 = vsel %vm818, %v830, %v832
      %v834 = vrot.slane %v291, 1
      %v835 = vsel %vm818, %v832, %v834
      %v836 = vrot.slane %v292, 1
      %v837 = vsel %vm818, %v834, %v836
      %v838 = vrot.slane %v293, 1
      %v839 = vsel %vm818, %v836, %v838
      %v840 = vrot.slane %v294, 1
      %v841 = vsel %vm818, %v838, %v840
      %v842 = vrot.slane %v295, 1
      %v843 = vsel %vm818, %v840, %v842
      %v873 = vunpack.c.l.b16 %v799
      %v874 = vunpack.c.l.b16 %v800
      %v875 = vunpack.c.l.b16 %v801
      %v876 = vunpack.c.l.b16 %v802
      %v877 = vunpack.c.l.b16 %v803
      %v878 = vunpack.c.l.b16 %v804
      %v879 = vunpack.c.l.b16 %v805
      %v880 = vunpack.c.l.b16 %v806
      %v881 = vunpack.c.l.b16 %v807
      %v882 = vunpack.c.l.b16 %v808
      %v883 = vunpack.c.l.b16 %v809
      %v884 = vunpack.c.l.b16 %v810
      %v885 = vunpack.c.l.b16 %v811
      %v886 = vunpack.c.l.b16 %v812
      %v887 = vunpack.c.l.b16 %v813
      %v888 = vunpack.c.l.b16 %v814
      %v889 = vpack.c.b16 %v874, %v873
      %v890 = vpack.c.b16 %v876, %v875
      %v891 = vpack.c.b16 %v878, %v877
      %v892 = vpack.c.b16 %v880, %v879
      %v893 = vpack.c.b16 %v882, %v881
      %v894 = vpack.c.b16 %v884, %v883
      %v895 = vpack.c.b16 %v886, %v885
      %v896 = vpack.c.b16 %v888, %v887
      %905 = vmatprep.subr.bf16.mxu0 0
      %906 = vmatpush1.bf16.msra.mxu0 %v889
      %907 = vmatprep.subr.bf16.mxu0 0
      %908 = vmatpush1.bf16.msra.mxu0 %v890
      %909 = vmatprep.subr.bf16.mxu0 0
      %910 = vmatpush1.bf16.msra.mxu0 %v891
      %911 = vmatprep.subr.bf16.mxu0 0
      %912 = vmatpush1.bf16.msra.mxu0 %v892
      %913 = vmatprep.subr.bf16.mxu0 0
      %914 = vmatpush1.bf16.msra.mxu0 %v893
      %915 = vmatprep.subr.bf16.mxu0 0
      %916 = vmatpush1.bf16.msra.mxu0 %v894
      %917 = vmatprep.subr.bf16.mxu0 0
      %918 = vmatpush1.bf16.msra.mxu0 %v895
      %919 = vmatprep.subr.bf16.mxu0 0
      %920 = vmatpush1.bf16.msra.mxu0 %v896
      %921 = vmatprep.subr.bf16.mxu0 0
      %922 = vmatpush1.bf16.msra.mxu0 0
      %923 = vmatprep.subr.bf16.mxu0 0
      %924 = vmatpush1.bf16.msra.mxu0 0
      %925 = vmatprep.subr.bf16.mxu0 0
      %926 = vmatpush1.bf16.msra.mxu0 0
      %927 = vmatprep.subr.bf16.mxu0 0
      %928 = vmatpush1.bf16.msra.mxu0 0
      %929 = vmatprep.subr.bf16.mxu0 0
      %930 = vmatpush1.bf16.msra.mxu0 0
      %931 = vmatprep.subr.bf16.mxu0 0
      %932 = vmatpush1.bf16.msra.mxu0 0
      %933 = vmatprep.subr.bf16.mxu0 0
      %934 = vmatpush1.bf16.msra.mxu0 0
      %935 = vmatprep.subr.bf16.mxu0 0
      %936 = vmatpush1.bf16.msra.mxu0 0
      %937 = vmatprep.mubr.bf16.mxu0 0
      %938 = vmatmul.mubr.bf16.gmra.mrb[0].mxu0 %v821
      %v939 = vpop.f32.mrb[0].mxu0
      %v940 = vadd.f32 0.0, %v939
      %v941 = vpop.f32.mrb[0].mxu0
      %v942 = vpop.f32.mrb[0].mxu0
      %v943 = vadd.f32 0.0, %v942
      %v944 = vpop.f32.mrb[0].mxu0
      %945 = vmatprep.mubr.bf16.mxu0 0
      %946 = vmatmul.mubr.bf16.gmra.mrb[0].mxu0 %v823
      %v947 = vpop.f32.mrb[0].mxu0
      %v948 = vadd.f32 0.0, %v947
      %v949 = vpop.f32.mrb[0].mxu0
      %v950 = vpop.f32.mrb[0].mxu0
      %v951 = vadd.f32 0.0, %v950
      %v952 = vpop.f32.mrb[0].mxu0
      %953 = vmatprep.mubr.bf16.mxu0 0
      %954 = vmatmul.mubr.bf16.gmra.mrb[0].mxu0 %v825
      %v955 = vpop.f32.mrb[0].mxu0
      %v956 = vadd.f32 0.0, %v955
      %v957 = vpop.f32.mrb[0].mxu0
      %v958 = vpop.f32.mrb[0].mxu0
      %v959 = vadd.f32 0.0, %v958
      %v960 = vpop.f32.mrb[0].mxu0
      %961 = vmatprep.mubr.bf16.mxu0 0
      %962 = vmatmul.mubr.bf16.gmra.mrb[0].mxu0 %v827
      %v963 = vpop.f32.mrb[0].mxu0
      %v964 = vadd.f32 0.0, %v963
      %v965 = vpop.f32.mrb[0].mxu0
      %v966 = vpop.f32.mrb[0].mxu0
      %v967 = vadd.f32 0.0, %v966
      %v968 = vpop.f32.mrb[0].mxu0
      %969 = vmatprep.mubr.bf16.mxu0 0
      %970 = vmatmul.mubr.bf16.gmra.mrb[0].mxu0 %v829
      %v971 = vpop.f32.mrb[0].mxu0
      %v972 = vadd.f32 0.0, %v971
      %v973 = vpop.f32.mrb[0].mxu0
      %v974 = vpop.f32.mrb[0].mxu0
      %v975 = vadd.f32 0.0, %v974
      %v976 = vpop.f32.mrb[0].mxu0
      %977 = vmatprep.mubr.bf16.mxu0 0
      %978 = vmatmul.mubr.bf16.gmra.mrb[0].mxu0 %v831
      %v979 = vpop.f32.mrb[0].mxu0
      %v980 = vadd.f32 0.0, %v979
      %v981 = vpop.f32.mrb[0].mxu0
      %v982 = vpop.f32.mrb[0].mxu0
      %v983 = vadd.f32 0.0, %v982
      %v984 = vpop.f32.mrb[0].mxu0
      %985 = vmatprep.mubr.bf16.mxu0 0
      %986 = vmatmul.mubr.bf16.gmra.mrb[0].mxu0 %v833
      %v987 = vpop.f32.mrb[0].mxu0
      %v988 = vadd.f32 0.0, %v987
      %v989 = vpop.f32.mrb[0].mxu0
      %v990 = vpop.f32.mrb[0].mxu0
      %v991 = vadd.f32 0.0, %v990
      %v992 = vpop.f32.mrb[0].mxu0
      %993 = vmatprep.mubr.bf16.mxu0 0
      %994 = vmatmul.mubr.bf16.gmra.mrb[0].mxu0 %v835
      %v995 = vpop.f32.mrb[0].mxu0
      %v996 = vadd.f32 0.0, %v995
      %v997 = vpop.f32.mrb[0].mxu0
      %v998 = vpop.f32.mrb[0].mxu0
      %v999 = vadd.f32 0.0, %v998
      %v1000 = vpop.f32.mrb[0].mxu0
      %1001 = vmatprep.mubr.bf16.mxu0 0
      %1002 = vmatmul.mubr.bf16.gmra.mrb[0].mxu0 %v837
      %v1003 = vpop.f32.mrb[0].mxu0
      %v1004 = vadd.f32 0.0, %v1003
      %v1005 = vpop.f32.mrb[0].mxu0
      %v1006 = vpop.f32.mrb[0].mxu0
      %v1007 = vadd.f32 0.0, %v1006
      %v1008 = vpop.f32.mrb[0].mxu0
      %1009 = vmatprep.mubr.bf16.mxu0 0
      %1010 = vmatmul.mubr.bf16.gmra.mrb[0].mxu0 %v839
      %v1011 = vpop.f32.mrb[0].mxu0
      %v1012 = vadd.f32 0.0, %v1011
      %v1013 = vpop.f32.mrb[0].mxu0
      %v1014 = vpop.f32.mrb[0].mxu0
      %v1015 = vadd.f32 0.0, %v1014
      %v1016 = vpop.f32.mrb[0].mxu0
      %1017 = vmatprep.mubr.bf16.mxu0 0
      %1018 = vmatmul.mubr.bf16.gmra.mrb[0].mxu0 %v841
      %v1019 = vpop.f32.mrb[0].mxu0
      %v1020 = vadd.f32 0.0, %v1019
      %v1021 = vpop.f32.mrb[0].mxu0
      %v1022 = vpop.f32.mrb[0].mxu0
      %v1023 = vadd.f32 0.0, %v1022
      %v1024 = vpop.f32.mrb[0].mxu0
      %1025 = vmatprep.mubr.bf16.mxu0 0
      %1026 = vmatmul.mubr.bf16.gmra.mrb[0].mxu0 %v843
      %v1027 = vpop.f32.mrb[0].mxu0
      %v1028 = vadd.f32 0.0, %v1027
      %v1029 = vpop.f32.mrb[0].mxu0
      %v1030 = vpop.f32.mrb[0].mxu0
      %v1031 = vadd.f32 0.0, %v1030
      %v1032 = vpop.f32.mrb[0].mxu0
      %1033 = vmatprep.mubr.bf16.mxu0 0
      %1034 = vmatmul.mubr.bf16.gmra.mrb[0].mxu0 %v842
      %v1035 = vpop.f32.mrb[0].mxu0
      %v1036 = vadd.f32 0.0, %v1035
      %v1037 = vpop.f32.mrb[0].mxu0
      %v1038 = vpop.f32.mrb[0].mxu0
      %v1039 = vpop.f32.mrb[0].mxu0
      %1040 = vdwg.mxu0
      %v1041 = vadd.f32 %v696, %v940
      %v1042 = vadd.f32 %v699, %v943
      %v1043 = vadd.f32 %v704, %v948
      %v1044 = vadd.f32 %v707, %v951
      %v1045 = vadd.f32 %v712, %v956
      %v1046 = vadd.f32 %v715, %v959
      %v1047 = vadd.f32 %v720, %v964
      %v1048 = vadd.f32 %v723, %v967
      %v1049 = vadd.f32 %v728, %v972
      %v1050 = vadd.f32 %v731, %v975
      %v1051 = vadd.f32 %v736, %v980
      %v1052 = vadd.f32 %v739, %v983
      %v1053 = vadd.f32 %v744, %v988
      %v1054 = vadd.f32 %v747, %v991
      %v1055 = vadd.f32 %v752, %v996
      %v1056 = vadd.f32 %v755, %v999
      %v1057 = vadd.f32 %v760, %v1004
      %v1058 = vadd.f32 %v763, %v1007
      %v1059 = vadd.f32 %v768, %v1012
      %v1060 = vadd.f32 %v771, %v1015
      %v1061 = vadd.f32 %v776, %v1020
      %v1062 = vadd.f32 %v779, %v1023
      %v1063 = vadd.f32 %v784, %v1028
      %v1064 = vadd.f32 %v787, %v1031
      %v1065 = vadd.f32 %v792, %v1036
      %v1066 = vld [vmem:[%s166 + $0x60] sm:$0xf]
      %s1067 = scalar_lea.vmem %s1, 192
      %v1068 = vld [vmem:[%s1067] sm:$0xf]
      %v1069 = vld [vmem:[%s1067 + $0x4] sm:$0xf]
      %v1070 = vld [vmem:[%s1067 + $0x8] sm:$0xf]
      %v1071 = vld [vmem:[%s1067 + $0xc] sm:$0xf]
      %v1072 = vld [vmem:[%s1067 + $0x10] sm:$0xf]
      %v1073 = vld [vmem:[%s1067 + $0x14] sm:$0xf]
      %v1074 = vld [vmem:[%s1067 + $0x18] sm:$0xf]
      %v1075 = vld [vmem:[%s1067 + $0x1c] sm:$0xf]
      %v1076 = vld [vmem:[%s1067 + $0x20] sm:$0xf]
      %v1077 = vld [vmem:[%s1067 + $0x24] sm:$0xf]
      %v1078 = vld [vmem:[%s1067 + $0x28] sm:$0xf]
      %v1079 = vld [vmem:[%s1067 + $0x2c] sm:$0xf]
      %v1080 = vld [vmem:[%s1067 + $0x30] sm:$0xf]
      %v1081 = vld [vmem:[%s1067 + $0x34] sm:$0xf]
      %v1082 = vld [vmem:[%s1067 + $0x38] sm:$0xf]
      %v1083 = vld [vmem:[%s1067 + $0x3c] sm:$0xf]
      %v1085 = vunpack.c.l.b16 %v1066
      %v1086 = vpack.c.b16 %v1085, %v1085
      %vm1087 = vsmask.f32 6400
      %v1089 = vshrl.u32 %v817, 16
      %v1091 = vrot.slane %v1089, 1
      %v1092 = vshll.u32 %v817, 16
      %v1094 = vrot.slane %v1092, 2
      %v1095 = vor.u32 %v1091, %v1094
      %v1096 = vrot.slane %v309, 1
      %v1097 = vrot.slane %v305, 2
      %v1098 = vor.u32 %v1096, %v1097
      %v1099 = vsel %vm1087, %v1095, %v1098
      %v1100 = vrot.slane %v317, 1
      %v1101 = vrot.slane %v313, 2
      %v1102 = vor.u32 %v1100, %v1101
      %v1103 = vsel %vm1087, %v1098, %v1102
      %v1104 = vrot.slane %v325, 1
      %v1105 = vrot.slane %v321, 2
      %v1106 = vor.u32 %v1104, %v1105
      %v1107 = vsel %vm1087, %v1102, %v1106
      %v1108 = vrot.slane %v333, 1
      %v1109 = vrot.slane %v329, 2
      %v1110 = vor.u32 %v1108, %v1109
      %v1111 = vsel %vm1087, %v1106, %v1110
      %v1112 = vrot.slane %v341, 1
      %v1113 = vrot.slane %v337, 2
      %v1114 = vor.u32 %v1112, %v1113
      %v1115 = vsel %vm1087, %v1110, %v1114
      %v1116 = vrot.slane %v349, 1
      %v1117 = vrot.slane %v345, 2
      %v1118 = vor.u32 %v1116, %v1117
      %v1119 = vsel %vm1087, %v1114, %v1118
      %v1120 = vrot.slane %v357, 1
      %v1121 = vrot.slane %v353, 2
      %v1122 = vor.u32 %v1120, %v1121
      %v1123 = vsel %vm1087, %v1118, %v1122
      %v1124 = vrot.slane %v365, 1
      %v1125 = vrot.slane %v361, 2
      %v1126 = vor.u32 %v1124, %v1125
      %v1127 = vsel %vm1087, %v1122, %v1126
      %v1128 = vrot.slane %v373, 1
      %v1129 = vrot.slane %v369, 2
      %v1130 = vor.u32 %v1128, %v1129
      %v1131 = vsel %vm1087, %v1126, %v1130
      %v1132 = vrot.slane %v381, 1
      %v1133 = vrot.slane %v377, 2
      %v1134 = vor.u32 %v1132, %v1133
      %v1135 = vsel %vm1087, %v1130, %v1134
      %v1136 = vrot.slane %v389, 1
      %v1137 = vrot.slane %v385, 2
      %v1138 = vor.u32 %v1136, %v1137
      %v1139 = vsel %vm1087, %v1134, %v1138
      %v1141 = vshrl.u32 %v1086, 16
      %v1143 = vrot.slane %v1141, 1
      %v1144 = vshll.u32 %v1086, 16
      %v1146 = vrot.slane %v1144, 2
      %v1147 = vor.u32 %v1143, %v1146
      %v1148 = vsel %vm1087, %v1138, %v1147
      %v1178 = vunpack.c.l.b16 %v1068
      %v1179 = vunpack.c.l.b16 %v1069
      %v1180 = vunpack.c.l.b16 %v1070
      %v1181 = vunpack.c.l.b16 %v1071
      %v1182 = vunpack.c.l.b16 %v1072
      %v1183 = vunpack.c.l.b16 %v1073
      %v1184 = vunpack.c.l.b16 %v1074
      %v1185 = vunpack.c.l.b16 %v1075
      %v1186 = vunpack.c.l.b16 %v1076
      %v1187 = vunpack.c.l.b16 %v1077
      %v1188 = vunpack.c.l.b16 %v1078
      %v1189 = vunpack.c.l.b16 %v1079
      %v1190 = vunpack.c.l.b16 %v1080
      %v1191 = vunpack.c.l.b16 %v1081
      %v1192 = vunpack.c.l.b16 %v1082
      %v1193 = vunpack.c.l.b16 %v1083
      %v1194 = vpack.c.b16 %v1179, %v1178
      %v1195 = vpack.c.b16 %v1181, %v1180
      %v1196 = vpack.c.b16 %v1183, %v1182
      %v1197 = vpack.c.b16 %v1185, %v1184
      %v1198 = vpack.c.b16 %v1187, %v1186
      %v1199 = vpack.c.b16 %v1189, %v1188
      %v1200 = vpack.c.b16 %v1191, %v1190
      %v1201 = vpack.c.b16 %v1193, %v1192
      %1210 = vmatprep.subr.bf16.mxu0 0
      %1211 = vmatpush1.bf16.msra.mxu0 %v1194
      %1212 = vmatprep.subr.bf16.mxu0 0
      %1213 = vmatpush1.bf16.msra.mxu0 %v1195
      %1214 = vmatprep.subr.bf16.mxu0 0
      %1215 = vmatpush1.bf16.msra.mxu0 %v1196
      %1216 = vmatprep.subr.bf16.mxu0 0
      %1217 = vmatpush1.bf16.msra.mxu0 %v1197
      %1218 = vmatprep.subr.bf16.mxu0 0
      %1219 = vmatpush1.bf16.msra.mxu0 %v1198
      %1220 = vmatprep.subr.bf16.mxu0 0
      %1221 = vmatpush1.bf16.msra.mxu0 %v1199
      %1222 = vmatprep.subr.bf16.mxu0 0
      %1223 = vmatpush1.bf16.msra.mxu0 %v1200
      %1224 = vmatprep.subr.bf16.mxu0 0
      %1225 = vmatpush1.bf16.msra.mxu0 %v1201
      %1226 = vmatprep.subr.bf16.mxu0 0
      %1227 = vmatpush1.bf16.msra.mxu0 0
      %1228 = vmatprep.subr.bf16.mxu0 0
      %1229 = vmatpush1.bf16.msra.mxu0 0
      %1230 = vmatprep.subr.bf16.mxu0 0
      %1231 = vmatpush1.bf16.msra.mxu0 0
      %1232 = vmatprep.subr.bf16.mxu0 0
      %1233 = vmatpush1.bf16.msra.mxu0 0
      %1234 = vmatprep.subr.bf16.mxu0 0
      %1235 = vmatpush1.bf16.msra.mxu0 0
      %1236 = vmatprep.subr.bf16.mxu0 0
      %1237 = vmatpush1.bf16.msra.mxu0 0
      %1238 = vmatprep.subr.bf16.mxu0 0
      %1239 = vmatpush1.bf16.msra.mxu0 0
      %1240 = vmatprep.subr.bf16.mxu0 0
      %1241 = vmatpush1.bf16.msra.mxu0 0
      %1242 = vmatprep.mubr.bf16.mxu0 0
      %1243 = vmatmul.mubr.bf16.gmra.mrb[0].mxu0 %v1099
      %v1244 = vpop.f32.mrb[0].mxu0
      %v1245 = vadd.f32 0.0, %v1244
      %v1246 = vpop.f32.mrb[0].mxu0
      %v1247 = vpop.f32.mrb[0].mxu0
      %v1248 = vadd.f32 0.0, %v1247
      %v1249 = vpop.f32.mrb[0].mxu0
      %1250 = vmatprep.mubr.bf16.mxu0 0
      %1251 = vmatmul.mubr.bf16.gmra.mrb[0].mxu0 %v1103
      %v1252 = vpop.f32.mrb[0].mxu0
      %v1253 = vadd.f32 0.0, %v1252
      %v1254 = vpop.f32.mrb[0].mxu0
      %v1255 = vpop.f32.mrb[0].mxu0
      %v1256 = vadd.f32 0.0, %v1255
      %v1257 = vpop.f32.mrb[0].mxu0
      %1258 = vmatprep.mubr.bf16.mxu0 0
      %1259 = vmatmul.mubr.bf16.gmra.mrb[0].mxu0 %v1107
      %v1260 = vpop.f32.mrb[0].mxu0
      %v1261 = vadd.f32 0.0, %v1260
      %v1262 = vpop.f32.mrb[0].mxu0
      %v1263 = vpop.f32.mrb[0].mxu0
      %v1264 = vadd.f32 0.0, %v1263
      %v1265 = vpop.f32.mrb[0].mxu0
      %1266 = vmatprep.mubr.bf16.mxu0 0
      %1267 = vmatmul.mubr.bf16.gmra.mrb[0].mxu0 %v1111
      %v1268 = vpop.f32.mrb[0].mxu0
      %v1269 = vadd.f32 0.0, %v1268
      %v1270 = vpop.f32.mrb[0].mxu0
      %v1271 = vpop.f32.mrb[0].mxu0
      %v1272 = vadd.f32 0.0, %v1271
      %v1273 = vpop.f32.mrb[0].mxu0
      %1274 = vmatprep.mubr.bf16.mxu0 0
      %1275 = vmatmul.mubr.bf16.gmra.mrb[0].mxu0 %v1115
      %v1276 = vpop.f32.mrb[0].mxu0
      %v1277 = vadd.f32 0.0, %v1276
      %v1278 = vpop.f32.mrb[0].mxu0
      %v1279 = vpop.f32.mrb[0].mxu0
      %v1280 = vadd.f32 0.0, %v1279
      %v1281 = vpop.f32.mrb[0].mxu0
      %1282 = vmatprep.mubr.bf16.mxu0 0
      %1283 = vmatmul.mubr.bf16.gmra.mrb[0].mxu0 %v1119
      %v1284 = vpop.f32.mrb[0].mxu0
      %v1285 = vadd.f32 0.0, %v1284
      %v1286 = vpop.f32.mrb[0].mxu0
      %v1287 = vpop.f32.mrb[0].mxu0
      %v1288 = vadd.f32 0.0, %v1287
      %v1289 = vpop.f32.mrb[0].mxu0
      %1290 = vmatprep.mubr.bf16.mxu0 0
      %1291 = vmatmul.mubr.bf16.gmra.mrb[0].mxu0 %v1123
      %v1292 = vpop.f32.mrb[0].mxu0
      %v1293 = vadd.f32 0.0, %v1292
      %v1294 = vpop.f32.mrb[0].mxu0
      %v1295 = vpop.f32.mrb[0].mxu0
      %v1296 = vadd.f32 0.0, %v1295
      %v1297 = vpop.f32.mrb[0].mxu0
      %1298 = vmatprep.mubr.bf16.mxu0 0
      %1299 = vmatmul.mubr.bf16.gmra.mrb[0].mxu0 %v1127
      %v1300 = vpop.f32.mrb[0].mxu0
      %v1301 = vadd.f32 0.0, %v1300
      %v1302 = vpop.f32.mrb[0].mxu0
      %v1303 = vpop.f32.mrb[0].mxu0
      %v1304 = vadd.f32 0.0, %v1303
      %v1305 = vpop.f32.mrb[0].mxu0
      %1306 = vmatprep.mubr.bf16.mxu0 0
      %1307 = vmatmul.mubr.bf16.gmra.mrb[0].mxu0 %v1131
      %v1308 = vpop.f32.mrb[0].mxu0
      %v1309 = vadd.f32 0.0, %v1308
      %v1310 = vpop.f32.mrb[0].mxu0
      %v1311 = vpop.f32.mrb[0].mxu0
      %v1312 = vadd.f32 0.0, %v1311
      %v1313 = vpop.f32.mrb[0].mxu0
      %1314 = vmatprep.mubr.bf16.mxu0 0
      %1315 = vmatmul.mubr.bf16.gmra.mrb[0].mxu0 %v1135
      %v1316 = vpop.f32.mrb[0].mxu0
      %v1317 = vadd.f32 0.0, %v1316
      %v1318 = vpop.f32.mrb[0].mxu0
      %v1319 = vpop.f32.mrb[0].mxu0
      %v1320 = vadd.f32 0.0, %v1319
      %v1321 = vpop.f32.mrb[0].mxu0
      %1322 = vmatprep.mubr.bf16.mxu0 0
      %1323 = vmatmul.mubr.bf16.gmra.mrb[0].mxu0 %v1139
      %v1324 = vpop.f32.mrb[0].mxu0
      %v1325 = vadd.f32 0.0, %v1324
      %v1326 = vpop.f32.mrb[0].mxu0
      %v1327 = vpop.f32.mrb[0].mxu0
      %v1328 = vadd.f32 0.0, %v1327
      %v1329 = vpop.f32.mrb[0].mxu0
      %1330 = vmatprep.mubr.bf16.mxu0 0
      %1331 = vmatmul.mubr.bf16.gmra.mrb[0].mxu0 %v1148
      %v1332 = vpop.f32.mrb[0].mxu0
      %v1333 = vadd.f32 0.0, %v1332
      %v1334 = vpop.f32.mrb[0].mxu0
      %v1335 = vpop.f32.mrb[0].mxu0
      %v1336 = vadd.f32 0.0, %v1335
      %v1337 = vpop.f32.mrb[0].mxu0
      %1338 = vmatprep.mubr.bf16.mxu0 0
      %1339 = vmatmul.mubr.bf16.gmra.mrb[0].mxu0 %v1147
      %v1340 = vpop.f32.mrb[0].mxu0
      %v1341 = vadd.f32 0.0, %v1340
      %v1342 = vpop.f32.mrb[0].mxu0
      %v1343 = vpop.f32.mrb[0].mxu0
      %v1344 = vpop.f32.mrb[0].mxu0
      %1345 = vdwg.mxu0
      %v1346 = vadd.f32 %v1041, %v1245
      %v1347 = vadd.f32 %v1042, %v1248
      %v1348 = vadd.f32 %v1043, %v1253
      %v1349 = vadd.f32 %v1044, %v1256
      %v1350 = vadd.f32 %v1045, %v1261
      %v1351 = vadd.f32 %v1046, %v1264
      %v1352 = vadd.f32 %v1047, %v1269
      %v1353 = vadd.f32 %v1048, %v1272
      %v1354 = vadd.f32 %v1049, %v1277
      %v1355 = vadd.f32 %v1050, %v1280
      %v1356 = vadd.f32 %v1051, %v1285
      %v1357 = vadd.f32 %v1052, %v1288
      %v1358 = vadd.f32 %v1053, %v1293
      %v1359 = vadd.f32 %v1054, %v1296
      %v1360 = vadd.f32 %v1055, %v1301
      %v1361 = vadd.f32 %v1056, %v1304
      %v1362 = vadd.f32 %v1057, %v1309
      %v1363 = vadd.f32 %v1058, %v1312
      %v1364 = vadd.f32 %v1059, %v1317
      %v1365 = vadd.f32 %v1060, %v1320
      %v1366 = vadd.f32 %v1061, %v1325
      %v1367 = vadd.f32 %v1062, %v1328
      %v1368 = vadd.f32 %v1063, %v1333
      %v1369 = vadd.f32 %v1064, %v1336
      %v1370 = vadd.f32 %v1065, %v1341
      %v1371 = vld [vmem:[%s166] sm:$0xc]
      %s1372 = scalar_lea.vmem %s1, 256
      %v1373 = vld [vmem:[%s1372] sm:$0xf]
      %v1374 = vld [vmem:[%s1372 + $0x4] sm:$0xf]
      %v1375 = vld [vmem:[%s1372 + $0x8] sm:$0xf]
      %v1376 = vld [vmem:[%s1372 + $0xc] sm:$0xf]
      %v1377 = vld [vmem:[%s1372 + $0x10] sm:$0xf]
      %v1378 = vld [vmem:[%s1372 + $0x14] sm:$0xf]
      %v1379 = vld [vmem:[%s1372 + $0x18] sm:$0xf]
      %v1380 = vld [vmem:[%s1372 + $0x1c] sm:$0xf]
      %v1381 = vld [vmem:[%s1372 + $0x20] sm:$0xf]
      %v1382 = vld [vmem:[%s1372 + $0x24] sm:$0xf]
      %v1383 = vld [vmem:[%s1372 + $0x28] sm:$0xf]
      %v1384 = vld [vmem:[%s1372 + $0x2c] sm:$0xf]
      %v1385 = vld [vmem:[%s1372 + $0x30] sm:$0xf]
      %v1386 = vld [vmem:[%s1372 + $0x34] sm:$0xf]
      %v1387 = vld [vmem:[%s1372 + $0x38] sm:$0xf]
      %v1388 = vld [vmem:[%s1372 + $0x3c] sm:$0xf]
      %v1390 = vunpack.c.l.b16 %v1371
      %v1391 = vpack.c.b16 %v259, %v1390
      %vm1392 = vcmask 1045504
      %v1393 = vrot.slane %v1391, 2
      %v1394 = vrot.slane %v284, 2
      %v1395 = vsel %vm1392, %v1393, %v1394
      %v1396 = vrot.slane %v285, 2
      %v1397 = vsel %vm1392, %v1394, %v1396
      %v1398 = vrot.slane %v286, 2
      %v1399 = vsel %vm1392, %v1396, %v1398
      %v1400 = vrot.slane %v287, 2
      %v1401 = vsel %vm1392, %v1398, %v1400
      %v1402 = vrot.slane %v288, 2
      %v1403 = vsel %vm1392, %v1400, %v1402
      %v1404 = vrot.slane %v289, 2
      %v1405 = vsel %vm1392, %v1402, %v1404
      %v1406 = vrot.slane %v290, 2
      %v1407 = vsel %vm1392, %v1404, %v1406
      %v1408 = vrot.slane %v291, 2
      %v1409 = vsel %vm1392, %v1406, %v1408
      %v1410 = vrot.slane %v292, 2
      %v1411 = vsel %vm1392, %v1408, %v1410
      %v1412 = vrot.slane %v293, 2
      %v1413 = vsel %vm1392, %v1410, %v1412
      %v1414 = vrot.slane %v294, 2
      %v1415 = vsel %vm1392, %v1412, %v1414
      %v1416 = vrot.slane %v1086, 2
      %v1417 = vsel %vm1392, %v1414, %v1416
      %v1447 = vunpack.c.l.b16 %v1373
      %v1448 = vunpack.c.l.b16 %v1374
      %v1449 = vunpack.c.l.b16 %v1375
      %v1450 = vunpack.c.l.b16 %v1376
      %v1451 = vunpack.c.l.b16 %v1377
      %v1452 = vunpack.c.l.b16 %v1378
      %v1453 = vunpack.c.l.b16 %v1379
      %v1454 = vunpack.c.l.b16 %v1380
      %v1455 = vunpack.c.l.b16 %v1381
      %v1456 = vunpack.c.l.b16 %v1382
      %v1457 = vunpack.c.l.b16 %v1383
      %v1458 = vunpack.c.l.b16 %v1384
      %v1459 = vunpack.c.l.b16 %v1385
      %v1460 = vunpack.c.l.b16 %v1386
      %v1461 = vunpack.c.l.b16 %v1387
      %v1462 = vunpack.c.l.b16 %v1388
      %v1463 = vpack.c.b16 %v1448, %v1447
      %v1464 = vpack.c.b16 %v1450, %v1449
      %v1465 = vpack.c.b16 %v1452, %v1451
      %v1466 = vpack.c.b16 %v1454, %v1453
      %v1467 = vpack.c.b16 %v1456, %v1455
      %v1468 = vpack.c.b16 %v1458, %v1457
      %v1469 = vpack.c.b16 %v1460, %v1459
      %v1470 = vpack.c.b16 %v1462, %v1461
      %1479 = vmatprep.subr.bf16.mxu0 0
      %1480 = vmatpush1.bf16.msra.mxu0 %v1463
      %1481 = vmatprep.subr.bf16.mxu0 0
      %1482 = vmatpush1.bf16.msra.mxu0 %v1464
      %1483 = vmatprep.subr.bf16.mxu0 0
      %1484 = vmatpush1.bf16.msra.mxu0 %v1465
      %1485 = vmatprep.subr.bf16.mxu0 0
      %1486 = vmatpush1.bf16.msra.mxu0 %v1466
      %1487 = vmatprep.subr.bf16.mxu0 0
      %1488 = vmatpush1.bf16.msra.mxu0 %v1467
      %1489 = vmatprep.subr.bf16.mxu0 0
      %1490 = vmatpush1.bf16.msra.mxu0 %v1468
      %1491 = vmatprep.subr.bf16.mxu0 0
      %1492 = vmatpush1.bf16.msra.mxu0 %v1469
      %1493 = vmatprep.subr.bf16.mxu0 0
      %1494 = vmatpush1.bf16.msra.mxu0 %v1470
      %1495 = vmatprep.subr.bf16.mxu0 0
      %1496 = vmatpush1.bf16.msra.mxu0 0
      %1497 = vmatprep.subr.bf16.mxu0 0
      %1498 = vmatpush1.bf16.msra.mxu0 0
      %1499 = vmatprep.subr.bf16.mxu0 0
      %1500 = vmatpush1.bf16.msra.mxu0 0
      %1501 = vmatprep.subr.bf16.mxu0 0
      %1502 = vmatpush1.bf16.msra.mxu0 0
      %1503 = vmatprep.subr.bf16.mxu0 0
      %1504 = vmatpush1.bf16.msra.mxu0 0
      %1505 = vmatprep.subr.bf16.mxu0 0
      %1506 = vmatpush1.bf16.msra.mxu0 0
      %1507 = vmatprep.subr.bf16.mxu0 0
      %1508 = vmatpush1.bf16.msra.mxu0 0
      %1509 = vmatprep.subr.bf16.mxu0 0
      %1510 = vmatpush1.bf16.msra.mxu0 0
      %1511 = vmatprep.mubr.bf16.mxu0 0
      %1512 = vmatmul.mubr.bf16.gmra.mrb[0].mxu0 %v1395
      %v1513 = vpop.f32.mrb[0].mxu0
      %v1514 = vadd.f32 0.0, %v1513
      %v1515 = vpop.f32.mrb[0].mxu0
      %v1516 = vpop.f32.mrb[0].mxu0
      %v1517 = vadd.f32 0.0, %v1516
      %v1518 = vpop.f32.mrb[0].mxu0
      %1519 = vmatprep.mubr.bf16.mxu0 0
      %1520 = vmatmul.mubr.bf16.gmra.mrb[0].mxu0 %v1397
      %v1521 = vpop.f32.mrb[0].mxu0
      %v1522 = vadd.f32 0.0, %v1521
      %v1523 = vpop.f32.mrb[0].mxu0
      %v1524 = vpop.f32.mrb[0].mxu0
      %v1525 = vadd.f32 0.0, %v1524
      %v1526 = vpop.f32.mrb[0].mxu0
      %1527 = vmatprep.mubr.bf16.mxu0 0
      %1528 = vmatmul.mubr.bf16.gmra.mrb[0].mxu0 %v1399
      %v1529 = vpop.f32.mrb[0].mxu0
      %v1530 = vadd.f32 0.0, %v1529
      %v1531 = vpop.f32.mrb[0].mxu0
      %v1532 = vpop.f32.mrb[0].mxu0
      %v1533 = vadd.f32 0.0, %v1532
      %v1534 = vpop.f32.mrb[0].mxu0
      %1535 = vmatprep.mubr.bf16.mxu0 0
      %1536 = vmatmul.mubr.bf16.gmra.mrb[0].mxu0 %v1401
      %v1537 = vpop.f32.mrb[0].mxu0
      %v1538 = vadd.f32 0.0, %v1537
      %v1539 = vpop.f32.mrb[0].mxu0
      %v1540 = vpop.f32.mrb[0].mxu0
      %v1541 = vadd.f32 0.0, %v1540
      %v1542 = vpop.f32.mrb[0].mxu0
      %1543 = vmatprep.mubr.bf16.mxu0 0
      %1544 = vmatmul.mubr.bf16.gmra.mrb[0].mxu0 %v1403
      %v1545 = vpop.f32.mrb[0].mxu0
      %v1546 = vadd.f32 0.0, %v1545
      %v1547 = vpop.f32.mrb[0].mxu0
      %v1548 = vpop.f32.mrb[0].mxu0
      %v1549 = vadd.f32 0.0, %v1548
      %v1550 = vpop.f32.mrb[0].mxu0
      %1551 = vmatprep.mubr.bf16.mxu0 0
      %1552 = vmatmul.mubr.bf16.gmra.mrb[0].mxu0 %v1405
      %v1553 = vpop.f32.mrb[0].mxu0
      %v1554 = vadd.f32 0.0, %v1553
      %v1555 = vpop.f32.mrb[0].mxu0
      %v1556 = vpop.f32.mrb[0].mxu0
      %v1557 = vadd.f32 0.0, %v1556
      %v1558 = vpop.f32.mrb[0].mxu0
      %1559 = vmatprep.mubr.bf16.mxu0 0
      %1560 = vmatmul.mubr.bf16.gmra.mrb[0].mxu0 %v1407
      %v1561 = vpop.f32.mrb[0].mxu0
      %v1562 = vadd.f32 0.0, %v1561
      %v1563 = vpop.f32.mrb[0].mxu0
      %v1564 = vpop.f32.mrb[0].mxu0
      %v1565 = vadd.f32 0.0, %v1564
      %v1566 = vpop.f32.mrb[0].mxu0
      %1567 = vmatprep.mubr.bf16.mxu0 0
      %1568 = vmatmul.mubr.bf16.gmra.mrb[0].mxu0 %v1409
      %v1569 = vpop.f32.mrb[0].mxu0
      %v1570 = vadd.f32 0.0, %v1569
      %v1571 = vpop.f32.mrb[0].mxu0
      %v1572 = vpop.f32.mrb[0].mxu0
      %v1573 = vadd.f32 0.0, %v1572
      %v1574 = vpop.f32.mrb[0].mxu0
      %1575 = vmatprep.mubr.bf16.mxu0 0
      %1576 = vmatmul.mubr.bf16.gmra.mrb[0].mxu0 %v1411
      %v1577 = vpop.f32.mrb[0].mxu0
      %v1578 = vadd.f32 0.0, %v1577
      %v1579 = vpop.f32.mrb[0].mxu0
      %v1580 = vpop.f32.mrb[0].mxu0
      %v1581 = vadd.f32 0.0, %v1580
      %v1582 = vpop.f32.mrb[0].mxu0
      %1583 = vmatprep.mubr.bf16.mxu0 0
      %1584 = vmatmul.mubr.bf16.gmra.mrb[0].mxu0 %v1413
      %v1585 = vpop.f32.mrb[0].mxu0
      %v1586 = vadd.f32 0.0, %v1585
      %v1587 = vpop.f32.mrb[0].mxu0
      %v1588 = vpop.f32.mrb[0].mxu0
      %v1589 = vadd.f32 0.0, %v1588
      %v1590 = vpop.f32.mrb[0].mxu0
      %1591 = vmatprep.mubr.bf16.mxu0 0
      %1592 = vmatmul.mubr.bf16.gmra.mrb[0].mxu0 %v1415
      %v1593 = vpop.f32.mrb[0].mxu0
      %v1594 = vadd.f32 0.0, %v1593
      %v1595 = vpop.f32.mrb[0].mxu0
      %v1596 = vpop.f32.mrb[0].mxu0
      %v1597 = vadd.f32 0.0, %v1596
      %v1598 = vpop.f32.mrb[0].mxu0
      %1599 = vmatprep.mubr.bf16.mxu0 0
      %1600 = vmatmul.mubr.bf16.gmra.mrb[0].mxu0 %v1417
      %v1601 = vpop.f32.mrb[0].mxu0
      %v1602 = vadd.f32 0.0, %v1601
      %v1603 = vpop.f32.mrb[0].mxu0
      %v1604 = vpop.f32.mrb[0].mxu0
      %v1605 = vadd.f32 0.0, %v1604
      %v1606 = vpop.f32.mrb[0].mxu0
      %1607 = vmatprep.mubr.bf16.mxu0 0
      %1608 = vmatmul.mubr.bf16.gmra.mrb[0].mxu0 %v1416
      %v1609 = vpop.f32.mrb[0].mxu0
      %v1610 = vadd.f32 0.0, %v1609
      %v1611 = vpop.f32.mrb[0].mxu0
      %v1612 = vpop.f32.mrb[0].mxu0
      %v1613 = vpop.f32.mrb[0].mxu0
      %1614 = vdwg.mxu0
      %v1615 = vadd.f32 %v1346, %v1514
      %v1616 = vadd.f32 %v1347, %v1517
      %v1617 = vadd.f32 %v1348, %v1522
      %v1618 = vadd.f32 %v1349, %v1525
      %v1619 = vadd.f32 %v1350, %v1530
      %v1620 = vadd.f32 %v1351, %v1533
      %v1621 = vadd.f32 %v1352, %v1538
      %v1622 = vadd.f32 %v1353, %v1541
      %v1623 = vadd.f32 %v1354, %v1546
      %v1624 = vadd.f32 %v1355, %v1549
      %v1625 = vadd.f32 %v1356, %v1554
      %v1626 = vadd.f32 %v1357, %v1557
      %v1627 = vadd.f32 %v1358, %v1562
      %v1628 = vadd.f32 %v1359, %v1565
      %v1629 = vadd.f32 %v1360, %v1570
      %v1630 = vadd.f32 %v1361, %v1573
      %v1631 = vadd.f32 %v1362, %v1578
      %v1632 = vadd.f32 %v1363, %v1581
      %v1633 = vadd.f32 %v1364, %v1586
      %v1634 = vadd.f32 %v1365, %v1589
      %v1635 = vadd.f32 %v1366, %v1594
      %v1636 = vadd.f32 %v1367, %v1597
      %v1637 = vadd.f32 %v1368, %v1602
      %v1638 = vadd.f32 %v1369, %v1605
      %v1639 = vadd.f32 %v1370, %v1610
      %v1640 = vld [vmem:[%s166 + $0x4] sm:$0x8]
      %v1641 = vld [vmem:[%s166 + $0x8] sm:$0xf]
      %v1642 = vld [vmem:[%s166 + $0xc] sm:$0xf]
      %v1643 = vld [vmem:[%s166 + $0x10] sm:$0xf]
      %v1644 = vld [vmem:[%s166 + $0x14] sm:$0xf]
      %v1645 = vld [vmem:[%s166 + $0x18] sm:$0xf]
      %v1646 = vld [vmem:[%s166 + $0x1c] sm:$0xf]
      %v1647 = vld [vmem:[%s166 + $0x20] sm:$0xf]
      %v1648 = vld [vmem:[%s166 + $0x24] sm:$0xf]
      %v1649 = vld [vmem:[%s166 + $0x28] sm:$0xf]
      %v1650 = vld [vmem:[%s166 + $0x2c] sm:$0xf]
      %v1651 = vld [vmem:[%s166 + $0x30] sm:$0xf]
      %v1652 = vld [vmem:[%s166 + $0x34] sm:$0xf]
      %v1653 = vld [vmem:[%s166 + $0x38] sm:$0xf]
      %v1654 = vld [vmem:[%s166 + $0x3c] sm:$0xf]
      %v1655 = vld [vmem:[%s166 + $0x40] sm:$0xf]
      %v1656 = vld [vmem:[%s166 + $0x44] sm:$0xf]
      %v1657 = vld [vmem:[%s166 + $0x48] sm:$0xf]
      %v1658 = vld [vmem:[%s166 + $0x4c] sm:$0xf]
      %v1659 = vld [vmem:[%s166 + $0x50] sm:$0xf]
      %v1660 = vld [vmem:[%s166 + $0x54] sm:$0xf]
      %v1661 = vld [vmem:[%s166 + $0x58] sm:$0xf]
      %v1662 = vld [vmem:[%s166 + $0x5c] sm:$0xf]
      %v1663 = vld [vmem:[%s166 + $0x60] sm:$0xf]
      %v1664 = vld [vmem:[%s166 + $0x64] sm:$0xf]
      %v1665 = vld [vmem:[%s166 + $0x68] sm:$0x1]
      %s1666 = scalar_lea.vmem %s1, 320
      %v1667 = vld [vmem:[%s1666] sm:$0xf]
      %v1668 = vld [vmem:[%s1666 + $0x4] sm:$0xf]
      %v1669 = vld [vmem:[%s1666 + $0x8] sm:$0xf]
      %v1670 = vld [vmem:[%s1666 + $0xc] sm:$0xf]
      %v1671 = vld [vmem:[%s1666 + $0x10] sm:$0xf]
      %v1672 = vld [vmem:[%s1666 + $0x14] sm:$0xf]
      %v1673 = vld [vmem:[%s1666 + $0x18] sm:$0xf]
      %v1674 = vld [vmem:[%s1666 + $0x1c] sm:$0xf]
      %v1675 = vld [vmem:[%s1666 + $0x20] sm:$0xf]
      %v1676 = vld [vmem:[%s1666 + $0x24] sm:$0xf]
      %v1677 = vld [vmem:[%s1666 + $0x28] sm:$0xf]
      %v1678 = vld [vmem:[%s1666 + $0x2c] sm:$0xf]
      %v1679 = vld [vmem:[%s1666 + $0x30] sm:$0xf]
      %v1680 = vld [vmem:[%s1666 + $0x34] sm:$0xf]
      %v1681 = vld [vmem:[%s1666 + $0x38] sm:$0xf]
      %v1682 = vld [vmem:[%s1666 + $0x3c] sm:$0xf]
      %v1709 = vunpack.c.l.b16 %v1640
      %v1710 = vunpack.c.l.b16 %v1641
      %v1711 = vunpack.c.l.b16 %v1642
      %v1712 = vunpack.c.l.b16 %v1643
      %v1713 = vunpack.c.l.b16 %v1644
      %v1714 = vunpack.c.l.b16 %v1645
      %v1715 = vunpack.c.l.b16 %v1646
      %v1716 = vunpack.c.l.b16 %v1647
      %v1717 = vunpack.c.l.b16 %v1648
      %v1718 = vunpack.c.l.b16 %v1649
      %v1719 = vunpack.c.l.b16 %v1650
      %v1720 = vunpack.c.l.b16 %v1651
      %v1721 = vunpack.c.l.b16 %v1652
      %v1722 = vunpack.c.l.b16 %v1653
      %v1723 = vunpack.c.l.b16 %v1654
      %v1724 = vunpack.c.l.b16 %v1655
      %v1725 = vunpack.c.l.b16 %v1656
      %v1726 = vunpack.c.l.b16 %v1657
      %v1727 = vunpack.c.l.b16 %v1658
      %v1728 = vunpack.c.l.b16 %v1659
      %v1729 = vunpack.c.l.b16 %v1660
      %v1730 = vunpack.c.l.b16 %v1661
      %v1731 = vunpack.c.l.b16 %v1662
      %v1732 = vunpack.c.l.b16 %v1663
      %v1733 = vunpack.c.l.b16 %v1664
      %v1734 = vunpack.c.l.b16 %v1665
      %v1735 = vpack.c.b16 %v1710, %v1709
      %v1736 = vpack.c.b16 %v1712, %v1711
      %v1737 = vpack.c.b16 %v1714, %v1713
      %v1738 = vpack.c.b16 %v1716, %v1715
      %v1739 = vpack.c.b16 %v1718, %v1717
      %v1740 = vpack.c.b16 %v1720, %v1719
      %v1741 = vpack.c.b16 %v1722, %v1721
      %v1742 = vpack.c.b16 %v1724, %v1723
      %v1743 = vpack.c.b16 %v1726, %v1725
      %v1744 = vpack.c.b16 %v1728, %v1727
      %v1745 = vpack.c.b16 %v1730, %v1729
      %v1746 = vpack.c.b16 %v1732, %v1731
      %v1747 = vpack.c.b16 %v1734, %v1733
      %vm1748 = vcmask 1044480
      %v1749 = vrot.slane %v1735, 3
      %v1750 = vrot.slane %v1736, 3
      %v1751 = vsel %vm1748, %v1749, %v1750
      %v1752 = vrot.slane %v1737, 3
      %v1753 = vsel %vm1748, %v1750, %v1752
      %v1754 = vrot.slane %v1738, 3
      %v1755 = vsel %vm1748, %v1752, %v1754
      %v1756 = vrot.slane %v1739, 3
      %v1757 = vsel %vm1748, %v1754, %v1756
      %v1758 = vrot.slane %v1740, 3
      %v1759 = vsel %vm1748, %v1756, %v1758
      %v1760 = vrot.slane %v1741, 3
      %v1761 = vsel %vm1748, %v1758, %v1760
      %v1762 = vrot.slane %v1742, 3
      %v1763 = vsel %vm1748, %v1760, %v1762
      %v1764 = vrot.slane %v1743, 3
      %v1765 = vsel %vm1748, %v1762, %v1764
      %v1766 = vrot.slane %v1744, 3
      %v1767 = vsel %vm1748, %v1764, %v1766
      %v1768 = vrot.slane %v1745, 3
      %v1769 = vsel %vm1748, %v1766, %v1768
      %v1770 = vrot.slane %v1746, 3
      %v1771 = vsel %vm1748, %v1768, %v1770
      %v1772 = vrot.slane %v1747, 3
      %v1773 = vsel %vm1748, %v1770, %v1772
      %v1803 = vunpack.c.l.b16 %v1667
      %v1804 = vunpack.c.l.b16 %v1668
      %v1805 = vunpack.c.l.b16 %v1669
      %v1806 = vunpack.c.l.b16 %v1670
      %v1807 = vunpack.c.l.b16 %v1671
      %v1808 = vunpack.c.l.b16 %v1672
      %v1809 = vunpack.c.l.b16 %v1673
      %v1810 = vunpack.c.l.b16 %v1674
      %v1811 = vunpack.c.l.b16 %v1675
      %v1812 = vunpack.c.l.b16 %v1676
      %v1813 = vunpack.c.l.b16 %v1677
      %v1814 = vunpack.c.l.b16 %v1678
      %v1815 = vunpack.c.l.b16 %v1679
      %v1816 = vunpack.c.l.b16 %v1680
      %v1817 = vunpack.c.l.b16 %v1681
      %v1818 = vunpack.c.l.b16 %v1682
      %v1819 = vpack.c.b16 %v1804, %v1803
      %v1820 = vpack.c.b16 %v1806, %v1805
      %v1821 = vpack.c.b16 %v1808, %v1807
      %v1822 = vpack.c.b16 %v1810, %v1809
      %v1823 = vpack.c.b16 %v1812, %v1811
      %v1824 = vpack.c.b16 %v1814, %v1813
      %v1825 = vpack.c.b16 %v1816, %v1815
      %v1826 = vpack.c.b16 %v1818, %v1817
      %1835 = vmatprep.subr.bf16.mxu0 0
      %1836 = vmatpush1.bf16.msra.mxu0 %v1819
      %1837 = vmatprep.subr.bf16.mxu0 0
      %1838 = vmatpush1.bf16.msra.mxu0 %v1820
      %1839 = vmatprep.subr.bf16.mxu0 0
      %1840 = vmatpush1.bf16.msra.mxu0 %v1821
      %1841 = vmatprep.subr.bf16.mxu0 0
      %1842 = vmatpush1.bf16.msra.mxu0 %v1822
      %1843 = vmatprep.subr.bf16.mxu0 0
      %1844 = vmatpush1.bf16.msra.mxu0 %v1823
      %1845 = vmatprep.subr.bf16.mxu0 0
      %1846 = vmatpush1.bf16.msra.mxu0 %v1824
      %1847 = vmatprep.subr.bf16.mxu0 0
      %1848 = vmatpush1.bf16.msra.mxu0 %v1825
      %1849 = vmatprep.subr.bf16.mxu0 0
      %1850 = vmatpush1.bf16.msra.mxu0 %v1826
      %1851 = vmatprep.subr.bf16.mxu0 0
      %1852 = vmatpush1.bf16.msra.mxu0 0
      %1853 = vmatprep.subr.bf16.mxu0 0
      %1854 = vmatpush1.bf16.msra.mxu0 0
      %1855 = vmatprep.subr.bf16.mxu0 0
      %1856 = vmatpush1.bf16.msra.mxu0 0
      %1857 = vmatprep.subr.bf16.mxu0 0
      %1858 = vmatpush1.bf16.msra.mxu0 0
      %1859 = vmatprep.subr.bf16.mxu0 0
      %1860 = vmatpush1.bf16.msra.mxu0 0
      %1861 = vmatprep.subr.bf16.mxu0 0
      %1862 = vmatpush1.bf16.msra.mxu0 0
      %1863 = vmatprep.subr.bf16.mxu0 0
      %1864 = vmatpush1.bf16.msra.mxu0 0
      %1865 = vmatprep.subr.bf16.mxu0 0
      %1866 = vmatpush1.bf16.msra.mxu0 0
      %1867 = vmatprep.mubr.bf16.mxu0 0
      %1868 = vmatmul.mubr.bf16.gmra.mrb[0].mxu0 %v1751
      %v1869 = vpop.f32.mrb[0].mxu0
      %v1870 = vadd.f32 0.0, %v1869
      %v1871 = vpop.f32.mrb[0].mxu0
      %v1872 = vpop.f32.mrb[0].mxu0
      %v1873 = vadd.f32 0.0, %v1872
      %v1874 = vpop.f32.mrb[0].mxu0
      %1875 = vmatprep.mubr.bf16.mxu0 0
      %1876 = vmatmul.mubr.bf16.gmra.mrb[0].mxu0 %v1753
      %v1877 = vpop.f32.mrb[0].mxu0
      %v1878 = vadd.f32 0.0, %v1877
      %v1879 = vpop.f32.mrb[0].mxu0
      %v1880 = vpop.f32.mrb[0].mxu0
      %v1881 = vadd.f32 0.0, %v1880
      %v1882 = vpop.f32.mrb[0].mxu0
      %1883 = vmatprep.mubr.bf16.mxu0 0
      %1884 = vmatmul.mubr.bf16.gmra.mrb[0].mxu0 %v1755
      %v1885 = vpop.f32.mrb[0].mxu0
      %v1886 = vadd.f32 0.0, %v1885
      %v1887 = vpop.f32.mrb[0].mxu0
      %v1888 = vpop.f32.mrb[0].mxu0
      %v1889 = vadd.f32 0.0, %v1888
      %v1890 = vpop.f32.mrb[0].mxu0
      %1891 = vmatprep.mubr.bf16.mxu0 0
      %1892 = vmatmul.mubr.bf16.gmra.mrb[0].mxu0 %v1757
      %v1893 = vpop.f32.mrb[0].mxu0
      %v1894 = vadd.f32 0.0, %v1893
      %v1895 = vpop.f32.mrb[0].mxu0
      %v1896 = vpop.f32.mrb[0].mxu0
      %v1897 = vadd.f32 0.0, %v1896
      %v1898 = vpop.f32.mrb[0].mxu0
      %1899 = vmatprep.mubr.bf16.mxu0 0
      %1900 = vmatmul.mubr.bf16.gmra.mrb[0].mxu0 %v1759
      %v1901 = vpop.f32.mrb[0].mxu0
      %v1902 = vadd.f32 0.0, %v1901
      %v1903 = vpop.f32.mrb[0].mxu0
      %v1904 = vpop.f32.mrb[0].mxu0
      %v1905 = vadd.f32 0.0, %v1904
      %v1906 = vpop.f32.mrb[0].mxu0
      %1907 = vmatprep.mubr.bf16.mxu0 0
      %1908 = vmatmul.mubr.bf16.gmra.mrb[0].mxu0 %v1761
      %v1909 = vpop.f32.mrb[0].mxu0
      %v1910 = vadd.f32 0.0, %v1909
      %v1911 = vpop.f32.mrb[0].mxu0
      %v1912 = vpop.f32.mrb[0].mxu0
      %v1913 = vadd.f32 0.0, %v1912
      %v1914 = vpop.f32.mrb[0].mxu0
      %1915 = vmatprep.mubr.bf16.mxu0 0
      %1916 = vmatmul.mubr.bf16.gmra.mrb[0].mxu0 %v1763
      %v1917 = vpop.f32.mrb[0].mxu0
      %v1918 = vadd.f32 0.0, %v1917
      %v1919 = vpop.f32.mrb[0].mxu0
      %v1920 = vpop.f32.mrb[0].mxu0
      %v1921 = vadd.f32 0.0, %v1920
      %v1922 = vpop.f32.mrb[0].mxu0
      %1923 = vmatprep.mubr.bf16.mxu0 0
      %1924 = vmatmul.mubr.bf16.gmra.mrb[0].mxu0 %v1765
      %v1925 = vpop.f32.mrb[0].mxu0
      %v1926 = vadd.f32 0.0, %v1925
      %v1927 = vpop.f32.mrb[0].mxu0
      %v1928 = vpop.f32.mrb[0].mxu0
      %v1929 = vadd.f32 0.0, %v1928
      %v1930 = vpop.f32.mrb[0].mxu0
      %1931 = vmatprep.mubr.bf16.mxu0 0
      %1932 = vmatmul.mubr.bf16.gmra.mrb[0].mxu0 %v1767
      %v1933 = vpop.f32.mrb[0].mxu0
      %v1934 = vadd.f32 0.0, %v1933
      %v1935 = vpop.f32.mrb[0].mxu0
      %v1936 = vpop.f32.mrb[0].mxu0
      %v1937 = vadd.f32 0.0, %v1936
      %v1938 = vpop.f32.mrb[0].mxu0
      %1939 = vmatprep.mubr.bf16.mxu0 0
      %1940 = vmatmul.mubr.bf16.gmra.mrb[0].mxu0 %v1769
      %v1941 = vpop.f32.mrb[0].mxu0
      %v1942 = vadd.f32 0.0, %v1941
      %v1943 = vpop.f32.mrb[0].mxu0
      %v1944 = vpop.f32.mrb[0].mxu0
      %v1945 = vadd.f32 0.0, %v1944
      %v1946 = vpop.f32.mrb[0].mxu0
      %1947 = vmatprep.mubr.bf16.mxu0 0
      %1948 = vmatmul.mubr.bf16.gmra.mrb[0].mxu0 %v1771
      %v1949 = vpop.f32.mrb[0].mxu0
      %v1950 = vadd.f32 0.0, %v1949
      %v1951 = vpop.f32.mrb[0].mxu0
      %v1952 = vpop.f32.mrb[0].mxu0
      %v1953 = vadd.f32 0.0, %v1952
      %v1954 = vpop.f32.mrb[0].mxu0
      %1955 = vmatprep.mubr.bf16.mxu0 0
      %1956 = vmatmul.mubr.bf16.gmra.mrb[0].mxu0 %v1773
      %v1957 = vpop.f32.mrb[0].mxu0
      %v1958 = vadd.f32 0.0, %v1957
      %v1959 = vpop.f32.mrb[0].mxu0
      %v1960 = vpop.f32.mrb[0].mxu0
      %v1961 = vadd.f32 0.0, %v1960
      %v1962 = vpop.f32.mrb[0].mxu0
      %1963 = vmatprep.mubr.bf16.mxu0 0
      %1964 = vmatmul.mubr.bf16.gmra.mrb[0].mxu0 %v1772
      %v1965 = vpop.f32.mrb[0].mxu0
      %v1966 = vadd.f32 0.0, %v1965
      %v1967 = vpop.f32.mrb[0].mxu0
      %v1968 = vpop.f32.mrb[0].mxu0
      %v1969 = vpop.f32.mrb[0].mxu0
      %1970 = vdwg.mxu0
      %v1971 = vadd.f32 %v1615, %v1870
      %v1972 = vadd.f32 %v1616, %v1873
      %v1973 = vadd.f32 %v1617, %v1878
      %v1974 = vadd.f32 %v1618, %v1881
      %v1975 = vadd.f32 %v1619, %v1886
      %v1976 = vadd.f32 %v1620, %v1889
      %v1977 = vadd.f32 %v1621, %v1894
      %v1978 = vadd.f32 %v1622, %v1897
      %v1979 = vadd.f32 %v1623, %v1902
      %v1980 = vadd.f32 %v1624, %v1905
      %v1981 = vadd.f32 %v1625, %v1910
      %v1982 = vadd.f32 %v1626, %v1913
      %v1983 = vadd.f32 %v1627, %v1918
      %v1984 = vadd.f32 %v1628, %v1921
      %v1985 = vadd.f32 %v1629, %v1926
      %v1986 = vadd.f32 %v1630, %v1929
      %v1987 = vadd.f32 %v1631, %v1934
      %v1988 = vadd.f32 %v1632, %v1937
      %v1989 = vadd.f32 %v1633, %v1942
      %v1990 = vadd.f32 %v1634, %v1945
      %v1991 = vadd.f32 %v1635, %v1950
      %v1992 = vadd.f32 %v1636, %v1953
      %v1993 = vadd.f32 %v1637, %v1958
      %v1994 = vadd.f32 %v1638, %v1961
      %v1995 = vadd.f32 %v1639, %v1966
      %v1996 = vld [vmem:[%s166 + $0x68] sm:$0x3]
      %s1997 = scalar_lea.vmem %s1, 384
      %v1998 = vld [vmem:[%s1997] sm:$0xf]
      %v1999 = vld [vmem:[%s1997 + $0x4] sm:$0xf]
      %v2000 = vld [vmem:[%s1997 + $0x8] sm:$0xf]
      %v2001 = vld [vmem:[%s1997 + $0xc] sm:$0xf]
      %v2002 = vld [vmem:[%s1997 + $0x10] sm:$0xf]
      %v2003 = vld [vmem:[%s1997 + $0x14] sm:$0xf]
      %v2004 = vld [vmem:[%s1997 + $0x18] sm:$0xf]
      %v2005 = vld [vmem:[%s1997 + $0x1c] sm:$0xf]
      %v2006 = vld [vmem:[%s1997 + $0x20] sm:$0xf]
      %v2007 = vld [vmem:[%s1997 + $0x24] sm:$0xf]
      %v2008 = vld [vmem:[%s1997 + $0x28] sm:$0xf]
      %v2009 = vld [vmem:[%s1997 + $0x2c] sm:$0xf]
      %v2010 = vld [vmem:[%s1997 + $0x30] sm:$0xf]
      %v2011 = vld [vmem:[%s1997 + $0x34] sm:$0xf]
      %v2012 = vld [vmem:[%s1997 + $0x38] sm:$0xf]
      %v2013 = vld [vmem:[%s1997 + $0x3c] sm:$0xf]
      %v2015 = vunpack.c.l.b16 %v1996
      %v2016 = vpack.c.b16 %v2015, %v1733
      %vm2017 = vsmask.f32 4352
      %v2019 = vshrl.u32 %v1735, 16
      %v2021 = vrot.slane %v2019, 3
      %v2022 = vshll.u32 %v1735, 16
      %v2024 = vrot.slane %v2022, 4
      %v2025 = vor.u32 %v2021, %v2024
      %v2027 = vshrl.u32 %v1736, 16
      %v2029 = vrot.slane %v2027, 3
      %v2030 = vshll.u32 %v1736, 16
      %v2032 = vrot.slane %v2030, 4
      %v2033 = vor.u32 %v2029, %v2032
      %v2034 = vsel %vm2017, %v2025, %v2033
      %v2036 = vshrl.u32 %v1737, 16
      %v2038 = vrot.slane %v2036, 3
      %v2039 = vshll.u32 %v1737, 16
      %v2041 = vrot.slane %v2039, 4
      %v2042 = vor.u32 %v2038, %v2041
      %v2043 = vsel %vm2017, %v2033, %v2042
      %v2045 = vshrl.u32 %v1738, 16
      %v2047 = vrot.slane %v2045, 3
      %v2048 = vshll.u32 %v1738, 16
      %v2050 = vrot.slane %v2048, 4
      %v2051 = vor.u32 %v2047, %v2050
      %v2052 = vsel %vm2017, %v2042, %v2051
      %v2054 = vshrl.u32 %v1739, 16
      %v2056 = vrot.slane %v2054, 3
      %v2057 = vshll.u32 %v1739, 16
      %v2059 = vrot.slane %v2057, 4
      %v2060 = vor.u32 %v2056, %v2059
      %v2061 = vsel %vm2017, %v2051, %v2060
      %v2063 = vshrl.u32 %v1740, 16
      %v2065 = vrot.slane %v2063, 3
      %v2066 = vshll.u32 %v1740, 16
      %v2068 = vrot.slane %v2066, 4
      %v2069 = vor.u32 %v2065, %v2068
      %v2070 = vsel %vm2017, %v2060, %v2069
      %v2072 = vshrl.u32 %v1741, 16
      %v2074 = vrot.slane %v2072, 3
      %v2075 = vshll.u32 %v1741, 16
      %v2077 = vrot.slane %v2075, 4
      %v2078 = vor.u32 %v2074, %v2077
      %v2079 = vsel %vm2017, %v2069, %v2078
      %v2081 = vshrl.u32 %v1742, 16
      %v2083 = vrot.slane %v2081, 3
      %v2084 = vshll.u32 %v1742, 16
      %v2086 = vrot.slane %v2084, 4
      %v2087 = vor.u32 %v2083, %v2086
      %v2088 = vsel %vm2017, %v2078, %v2087
      %v2090 = vshrl.u32 %v1743, 16
      %v2092 = vrot.slane %v2090, 3
      %v2093 = vshll.u32 %v1743, 16
      %v2095 = vrot.slane %v2093, 4
      %v2096 = vor.u32 %v2092, %v2095
      %v2097 = vsel %vm2017, %v2087, %v2096
      %v2099 = vshrl.u32 %v1744, 16
      %v2101 = vrot.slane %v2099, 3
      %v2102 = vshll.u32 %v1744, 16
      %v2104 = vrot.slane %v2102, 4
      %v2105 = vor.u32 %v2101, %v2104
      %v2106 = vsel %vm2017, %v2096, %v2105
      %v2108 = vshrl.u32 %v1745, 16
      %v2110 = vrot.slane %v2108, 3
      %v2111 = vshll.u32 %v1745, 16
      %v2113 = vrot.slane %v2111, 4
      %v2114 = vor.u32 %v2110, %v2113
      %v2115 = vsel %vm2017, %v2105, %v2114
      %v2117 = vshrl.u32 %v1746, 16
      %v2119 = vrot.slane %v2117, 3
      %v2120 = vshll.u32 %v1746, 16
      %v2122 = vrot.slane %v2120, 4
      %v2123 = vor.u32 %v2119, %v2122
      %v2124 = vsel %vm2017, %v2114, %v2123
      %v2126 = vshrl.u32 %v2016, 16
      %v2128 = vrot.slane %v2126, 3
      %v2129 = vshll.u32 %v2016, 16
      %v2131 = vrot.slane %v2129, 4
      %v2132 = vor.u32 %v2128, %v2131
      %v2133 = vsel %vm2017, %v2123, %v2132
      %v2163 = vunpack.c.l.b16 %v1998
      %v2164 = vunpack.c.l.b16 %v1999
      %v2165 = vunpack.c.l.b16 %v2000
      %v2166 = vunpack.c.l.b16 %v2001
      %v2167 = vunpack.c.l.b16 %v2002
      %v2168 = vunpack.c.l.b16 %v2003
      %v2169 = vunpack.c.l.b16 %v2004
      %v2170 = vunpack.c.l.b16 %v2005
      %v2171 = vunpack.c.l.b16 %v2006
      %v2172 = vunpack.c.l.b16 %v2007
      %v2173 = vunpack.c.l.b16 %v2008
      %v2174 = vunpack.c.l.b16 %v2009
      %v2175 = vunpack.c.l.b16 %v2010
      %v2176 = vunpack.c.l.b16 %v2011
      %v2177 = vunpack.c.l.b16 %v2012
      %v2178 = vunpack.c.l.b16 %v2013
      %v2179 = vpack.c.b16 %v2164, %v2163
      %v2180 = vpack.c.b16 %v2166, %v2165
      %v2181 = vpack.c.b16 %v2168, %v2167
      %v2182 = vpack.c.b16 %v2170, %v2169
      %v2183 = vpack.c.b16 %v2172, %v2171
      %v2184 = vpack.c.b16 %v2174, %v2173
      %v2185 = vpack.c.b16 %v2176, %v2175
      %v2186 = vpack.c.b16 %v2178, %v2177
      %2195 = vmatprep.subr.bf16.mxu0 0
      %2196 = vmatpush1.bf16.msra.mxu0 %v2179
      %2197 = vmatprep.subr.bf16.mxu0 0
      %2198 = vmatpush1.bf16.msra.mxu0 %v2180
      %2199 = vmatprep.subr.bf16.mxu0 0
      %2200 = vmatpush1.bf16.msra.mxu0 %v2181
      %2201 = vmatprep.subr.bf16.mxu0 0
      %2202 = vmatpush1.bf16.msra.mxu0 %v2182
      %2203 = vmatprep.subr.bf16.mxu0 0
      %2204 = vmatpush1.bf16.msra.mxu0 %v2183
      %2205 = vmatprep.subr.bf16.mxu0 0
      %2206 = vmatpush1.bf16.msra.mxu0 %v2184
      %2207 = vmatprep.subr.bf16.mxu0 0
      %2208 = vmatpush1.bf16.msra.mxu0 %v2185
      %2209 = vmatprep.subr.bf16.mxu0 0
      %2210 = vmatpush1.bf16.msra.mxu0 %v2186
      %2211 = vmatprep.subr.bf16.mxu0 0
      %2212 = vmatpush1.bf16.msra.mxu0 0
      %2213 = vmatprep.subr.bf16.mxu0 0
      %2214 = vmatpush1.bf16.msra.mxu0 0
      %2215 = vmatprep.subr.bf16.mxu0 0
      %2216 = vmatpush1.bf16.msra.mxu0 0
      %2217 = vmatprep.subr.bf16.mxu0 0
      %2218 = vmatpush1.bf16.msra.mxu0 0
      %2219 = vmatprep.subr.bf16.mxu0 0
      %2220 = vmatpush1.bf16.msra.mxu0 0
      %2221 = vmatprep.subr.bf16.mxu0 0
      %2222 = vmatpush1.bf16.msra.mxu0 0
      %2223 = vmatprep.subr.bf16.mxu0 0
      %2224 = vmatpush1.bf16.msra.mxu0 0
      %2225 = vmatprep.subr.bf16.mxu0 0
      %2226 = vmatpush1.bf16.msra.mxu0 0
      %2227 = vmatprep.mubr.bf16.mxu0 0
      %2228 = vmatmul.mubr.bf16.gmra.mrb[0].mxu0 %v2034
      %v2229 = vpop.f32.mrb[0].mxu0
      %v2230 = vadd.f32 0.0, %v2229
      %v2231 = vpop.f32.mrb[0].mxu0
      %v2232 = vpop.f32.mrb[0].mxu0
      %v2233 = vadd.f32 0.0, %v2232
      %v2234 = vpop.f32.mrb[0].mxu0
      %2235 = vmatprep.mubr.bf16.mxu0 0
      %2236 = vmatmul.mubr.bf16.gmra.mrb[0].mxu0 %v2043
      %v2237 = vpop.f32.mrb[0].mxu0
      %v2238 = vadd.f32 0.0, %v2237
      %v2239 = vpop.f32.mrb[0].mxu0
      %v2240 = vpop.f32.mrb[0].mxu0
      %v2241 = vadd.f32 0.0, %v2240
      %v2242 = vpop.f32.mrb[0].mxu0
      %2243 = vmatprep.mubr.bf16.mxu0 0
      %2244 = vmatmul.mubr.bf16.gmra.mrb[0].mxu0 %v2052
      %v2245 = vpop.f32.mrb[0].mxu0
      %v2246 = vadd.f32 0.0, %v2245
      %v2247 = vpop.f32.mrb[0].mxu0
      %v2248 = vpop.f32.mrb[0].mxu0
      %v2249 = vadd.f32 0.0, %v2248
      %v2250 = vpop.f32.mrb[0].mxu0
      %2251 = vmatprep.mubr.bf16.mxu0 0
      %2252 = vmatmul.mubr.bf16.gmra.mrb[0].mxu0 %v2061
      %v2253 = vpop.f32.mrb[0].mxu0
      %v2254 = vadd.f32 0.0, %v2253
      %v2255 = vpop.f32.mrb[0].mxu0
      %v2256 = vpop.f32.mrb[0].mxu0
      %v2257 = vadd.f32 0.0, %v2256
      %v2258 = vpop.f32.mrb[0].mxu0
      %2259 = vmatprep.mubr.bf16.mxu0 0
      %2260 = vmatmul.mubr.bf16.gmra.mrb[0].mxu0 %v2070
      %v2261 = vpop.f32.mrb[0].mxu0
      %v2262 = vadd.f32 0.0, %v2261
      %v2263 = vpop.f32.mrb[0].mxu0
      %v2264 = vpop.f32.mrb[0].mxu0
      %v2265 = vadd.f32 0.0, %v2264
      %v2266 = vpop.f32.mrb[0].mxu0
      %2267 = vmatprep.mubr.bf16.mxu0 0
      %2268 = vmatmul.mubr.bf16.gmra.mrb[0].mxu0 %v2079
      %v2269 = vpop.f32.mrb[0].mxu0
      %v2270 = vadd.f32 0.0, %v2269
      %v2271 = vpop.f32.mrb[0].mxu0
      %v2272 = vpop.f32.mrb[0].mxu0
      %v2273 = vadd.f32 0.0, %v2272
      %v2274 = vpop.f32.mrb[0].mxu0
      %2275 = vmatprep.mubr.bf16.mxu0 0
      %2276 = vmatmul.mubr.bf16.gmra.mrb[0].mxu0 %v2088
      %v2277 = vpop.f32.mrb[0].mxu0
      %v2278 = vadd.f32 0.0, %v2277
      %v2279 = vpop.f32.mrb[0].mxu0
      %v2280 = vpop.f32.mrb[0].mxu0
      %v2281 = vadd.f32 0.0, %v2280
      %v2282 = vpop.f32.mrb[0].mxu0
      %2283 = vmatprep.mubr.bf16.mxu0 0
      %2284 = vmatmul.mubr.bf16.gmra.mrb[0].mxu0 %v2097
      %v2285 = vpop.f32.mrb[0].mxu0
      %v2286 = vadd.f32 0.0, %v2285
      %v2287 = vpop.f32.mrb[0].mxu0
      %v2288 = vpop.f32.mrb[0].mxu0
      %v2289 = vadd.f32 0.0, %v2288
      %v2290 = vpop.f32.mrb[0].mxu0
      %2291 = vmatprep.mubr.bf16.mxu0 0
      %2292 = vmatmul.mubr.bf16.gmra.mrb[0].mxu0 %v2106
      %v2293 = vpop.f32.mrb[0].mxu0
      %v2294 = vadd.f32 0.0, %v2293
      %v2295 = vpop.f32.mrb[0].mxu0
      %v2296 = vpop.f32.mrb[0].mxu0
      %v2297 = vadd.f32 0.0, %v2296
      %v2298 = vpop.f32.mrb[0].mxu0
      %2299 = vmatprep.mubr.bf16.mxu0 0
      %2300 = vmatmul.mubr.bf16.gmra.mrb[0].mxu0 %v2115
      %v2301 = vpop.f32.mrb[0].mxu0
      %v2302 = vadd.f32 0.0, %v2301
      %v2303 = vpop.f32.mrb[0].mxu0
      %v2304 = vpop.f32.mrb[0].mxu0
      %v2305 = vadd.f32 0.0, %v2304
      %v2306 = vpop.f32.mrb[0].mxu0
      %2307 = vmatprep.mubr.bf16.mxu0 0
      %2308 = vmatmul.mubr.bf16.gmra.mrb[0].mxu0 %v2124
      %v2309 = vpop.f32.mrb[0].mxu0
      %v2310 = vadd.f32 0.0, %v2309
      %v2311 = vpop.f32.mrb[0].mxu0
      %v2312 = vpop.f32.mrb[0].mxu0
      %v2313 = vadd.f32 0.0, %v2312
      %v2314 = vpop.f32.mrb[0].mxu0
      %2315 = vmatprep.mubr.bf16.mxu0 0
      %2316 = vmatmul.mubr.bf16.gmra.mrb[0].mxu0 %v2133
      %v2317 = vpop.f32.mrb[0].mxu0
      %v2318 = vadd.f32 0.0, %v2317
      %v2319 = vpop.f32.mrb[0].mxu0
      %v2320 = vpop.f32.mrb[0].mxu0
      %v2321 = vadd.f32 0.0, %v2320
      %v2322 = vpop.f32.mrb[0].mxu0
      %2323 = vmatprep.mubr.bf16.mxu0 0
      %2324 = vmatmul.mubr.bf16.gmra.mrb[0].mxu0 %v2132
      %v2325 = vpop.f32.mrb[0].mxu0
      %v2326 = vadd.f32 0.0, %v2325
      %v2327 = vpop.f32.mrb[0].mxu0
      %v2328 = vpop.f32.mrb[0].mxu0
      %v2329 = vpop.f32.mrb[0].mxu0
      %2330 = vdwg.mxu0
      %v2331 = vadd.f32 %v1971, %v2230
      %v2332 = vadd.f32 %v1972, %v2233
      %v2333 = vadd.f32 %v1973, %v2238
      %v2334 = vadd.f32 %v1974, %v2241
      %v2335 = vadd.f32 %v1975, %v2246
      %v2336 = vadd.f32 %v1976, %v2249
      %v2337 = vadd.f32 %v1977, %v2254
      %v2338 = vadd.f32 %v1978, %v2257
      %v2339 = vadd.f32 %v1979, %v2262
      %v2340 = vadd.f32 %v1980, %v2265
      %v2341 = vadd.f32 %v1981, %v2270
      %v2342 = vadd.f32 %v1982, %v2273
      %v2343 = vadd.f32 %v1983, %v2278
      %v2344 = vadd.f32 %v1984, %v2281
      %v2345 = vadd.f32 %v1985, %v2286
      %v2346 = vadd.f32 %v1986, %v2289
      %v2347 = vadd.f32 %v1987, %v2294
      %v2348 = vadd.f32 %v1988, %v2297
      %v2349 = vadd.f32 %v1989, %v2302
      %v2350 = vadd.f32 %v1990, %v2305
      %v2351 = vadd.f32 %v1991, %v2310
      %v2352 = vadd.f32 %v1992, %v2313
      %v2353 = vadd.f32 %v1993, %v2318
      %v2354 = vadd.f32 %v1994, %v2321
      %v2355 = vadd.f32 %v1995, %v2326
      %s2356 = scalar_lea.vmem %s1, 448
      %v2357 = vld [vmem:[%s2356] sm:$0xf]
      %v2358 = vld [vmem:[%s2356 + $0x4] sm:$0xf]
      %v2359 = vld [vmem:[%s2356 + $0x8] sm:$0xf]
      %v2360 = vld [vmem:[%s2356 + $0xc] sm:$0xf]
      %v2361 = vld [vmem:[%s2356 + $0x10] sm:$0xf]
      %v2362 = vld [vmem:[%s2356 + $0x14] sm:$0xf]
      %v2363 = vld [vmem:[%s2356 + $0x18] sm:$0xf]
      %v2364 = vld [vmem:[%s2356 + $0x1c] sm:$0xf]
      %v2365 = vld [vmem:[%s2356 + $0x20] sm:$0xf]
      %v2366 = vld [vmem:[%s2356 + $0x24] sm:$0xf]
      %v2367 = vld [vmem:[%s2356 + $0x28] sm:$0xf]
      %v2368 = vld [vmem:[%s2356 + $0x2c] sm:$0xf]
      %v2369 = vld [vmem:[%s2356 + $0x30] sm:$0xf]
      %v2370 = vld [vmem:[%s2356 + $0x34] sm:$0xf]
      %v2371 = vld [vmem:[%s2356 + $0x38] sm:$0xf]
      %v2372 = vld [vmem:[%s2356 + $0x3c] sm:$0xf]
      %v2373 = vpack.c.b16 %v1711, %v1710
      %v2374 = vpack.c.b16 %v1713, %v1712
      %v2375 = vpack.c.b16 %v1715, %v1714
      %v2376 = vpack.c.b16 %v1717, %v1716
      %v2377 = vpack.c.b16 %v1719, %v1718
      %v2378 = vpack.c.b16 %v1721, %v1720
      %v2379 = vpack.c.b16 %v1723, %v1722
      %v2380 = vpack.c.b16 %v1725, %v1724
      %v2381 = vpack.c.b16 %v1727, %v1726
      %v2382 = vpack.c.b16 %v1729, %v1728
      %v2383 = vpack.c.b16 %v1731, %v1730
      %v2384 = vpack.c.b16 %v1733, %v1732
      %v2385 = vpack.c.b16 %v2015, %v2015
      %v2415 = vunpack.c.l.b16 %v2357
      %v2416 = vunpack.c.l.b16 %v2358
      %v2417 = vunpack.c.l.b16 %v2359
      %v2418 = vunpack.c.l.b16 %v2360
      %v2419 = vunpack.c.l.b16 %v2361
      %v2420 = vunpack.c.l.b16 %v2362
      %v2421 = vunpack.c.l.b16 %v2363
      %v2422 = vunpack.c.l.b16 %v2364
      %v2423 = vunpack.c.l.b16 %v2365
      %v2424 = vunpack.c.l.b16 %v2366
      %v2425 = vunpack.c.l.b16 %v2367
      %v2426 = vunpack.c.l.b16 %v2368
      %v2427 = vunpack.c.l.b16 %v2369
      %v2428 = vunpack.c.l.b16 %v2370
      %v2429 = vunpack.c.l.b16 %v2371
      %v2430 = vunpack.c.l.b16 %v2372
      %v2431 = vpack.c.b16 %v2416, %v2415
      %v2432 = vpack.c.b16 %v2418, %v2417
      %v2433 = vpack.c.b16 %v2420, %v2419
      %v2434 = vpack.c.b16 %v2422, %v2421
      %v2435 = vpack.c.b16 %v2424, %v2423
      %v2436 = vpack.c.b16 %v2426, %v2425
      %v2437 = vpack.c.b16 %v2428, %v2427
      %v2438 = vpack.c.b16 %v2430, %v2429
      %2447 = vmatprep.subr.bf16.mxu0 0
      %2448 = vmatpush1.bf16.msra.mxu0 %v2431
      %2449 = vmatprep.subr.bf16.mxu0 0
      %2450 = vmatpush1.bf16.msra.mxu0 %v2432
      %2451 = vmatprep.subr.bf16.mxu0 0
      %2452 = vmatpush1.bf16.msra.mxu0 %v2433
      %2453 = vmatprep.subr.bf16.mxu0 0
      %2454 = vmatpush1.bf16.msra.mxu0 %v2434
      %2455 = vmatprep.subr.bf16.mxu0 0
      %2456 = vmatpush1.bf16.msra.mxu0 %v2435
      %2457 = vmatprep.subr.bf16.mxu0 0
      %2458 = vmatpush1.bf16.msra.mxu0 %v2436
      %2459 = vmatprep.subr.bf16.mxu0 0
      %2460 = vmatpush1.bf16.msra.mxu0 %v2437
      %2461 = vmatprep.subr.bf16.mxu0 0
      %2462 = vmatpush1.bf16.msra.mxu0 %v2438
      %2463 = vmatprep.subr.bf16.mxu0 0
      %2464 = vmatpush1.bf16.msra.mxu0 0
      %2465 = vmatprep.subr.bf16.mxu0 0
      %2466 = vmatpush1.bf16.msra.mxu0 0
      %2467 = vmatprep.subr.bf16.mxu0 0
      %2468 = vmatpush1.bf16.msra.mxu0 0
      %2469 = vmatprep.subr.bf16.mxu0 0
      %2470 = vmatpush1.bf16.msra.mxu0 0
      %2471 = vmatprep.subr.bf16.mxu0 0
      %2472 = vmatpush1.bf16.msra.mxu0 0
      %2473 = vmatprep.subr.bf16.mxu0 0
      %2474 = vmatpush1.bf16.msra.mxu0 0
      %2475 = vmatprep.subr.bf16.mxu0 0
      %2476 = vmatpush1.bf16.msra.mxu0 0
      %2477 = vmatprep.subr.bf16.mxu0 0
      %2478 = vmatpush1.bf16.msra.mxu0 0
      %2479 = vmatprep.mubr.bf16.mxu0 0
      %2480 = vmatmul.mubr.bf16.gmra.mrb[0].mxu0 %v2373
      %v2481 = vpop.f32.mrb[0].mxu0
      %v2482 = vadd.f32 0.0, %v2481
      %v2483 = vpop.f32.mrb[0].mxu0
      %v2484 = vpop.f32.mrb[0].mxu0
      %v2485 = vadd.f32 0.0, %v2484
      %v2486 = vpop.f32.mrb[0].mxu0
      %2487 = vmatprep.mubr.bf16.mxu0 0
      %2488 = vmatmul.mubr.bf16.gmra.mrb[0].mxu0 %v2374
      %v2489 = vpop.f32.mrb[0].mxu0
      %v2490 = vadd.f32 0.0, %v2489
      %v2491 = vpop.f32.mrb[0].mxu0
      %v2492 = vpop.f32.mrb[0].mxu0
      %v2493 = vadd.f32 0.0, %v2492
      %v2494 = vpop.f32.mrb[0].mxu0
      %2495 = vmatprep.mubr.bf16.mxu0 0
      %2496 = vmatmul.mubr.bf16.gmra.mrb[0].mxu0 %v2375
      %v2497 = vpop.f32.mrb[0].mxu0
      %v2498 = vadd.f32 0.0, %v2497
      %v2499 = vpop.f32.mrb[0].mxu0
      %v2500 = vpop.f32.mrb[0].mxu0
      %v2501 = vadd.f32 0.0, %v2500
      %v2502 = vpop.f32.mrb[0].mxu0
      %2503 = vmatprep.mubr.bf16.mxu0 0
      %2504 = vmatmul.mubr.bf16.gmra.mrb[0].mxu0 %v2376
      %v2505 = vpop.f32.mrb[0].mxu0
      %v2506 = vadd.f32 0.0, %v2505
      %v2507 = vpop.f32.mrb[0].mxu0
      %v2508 = vpop.f32.mrb[0].mxu0
      %v2509 = vadd.f32 0.0, %v2508
      %v2510 = vpop.f32.mrb[0].mxu0
      %2511 = vmatprep.mubr.bf16.mxu0 0
      %2512 = vmatmul.mubr.bf16.gmra.mrb[0].mxu0 %v2377
      %v2513 = vpop.f32.mrb[0].mxu0
      %v2514 = vadd.f32 0.0, %v2513
      %v2515 = vpop.f32.mrb[0].mxu0
      %v2516 = vpop.f32.mrb[0].mxu0
      %v2517 = vadd.f32 0.0, %v2516
      %v2518 = vpop.f32.mrb[0].mxu0
      %2519 = vmatprep.mubr.bf16.mxu0 0
      %2520 = vmatmul.mubr.bf16.gmra.mrb[0].mxu0 %v2378
      %v2521 = vpop.f32.mrb[0].mxu0
      %v2522 = vadd.f32 0.0, %v2521
      %v2523 = vpop.f32.mrb[0].mxu0
      %v2524 = vpop.f32.mrb[0].mxu0
      %v2525 = vadd.f32 0.0, %v2524
      %v2526 = vpop.f32.mrb[0].mxu0
      %2527 = vmatprep.mubr.bf16.mxu0 0
      %2528 = vmatmul.mubr.bf16.gmra.mrb[0].mxu0 %v2379
      %v2529 = vpop.f32.mrb[0].mxu0
      %v2530 = vadd.f32 0.0, %v2529
      %v2531 = vpop.f32.mrb[0].mxu0
      %v2532 = vpop.f32.mrb[0].mxu0
      %v2533 = vadd.f32 0.0, %v2532
      %v2534 = vpop.f32.mrb[0].mxu0
      %2535 = vmatprep.mubr.bf16.mxu0 0
      %2536 = vmatmul.mubr.bf16.gmra.mrb[0].mxu0 %v2380
      %v2537 = vpop.f32.mrb[0].mxu0
      %v2538 = vadd.f32 0.0, %v2537
      %v2539 = vpop.f32.mrb[0].mxu0
      %v2540 = vpop.f32.mrb[0].mxu0
      %v2541 = vadd.f32 0.0, %v2540
      %v2542 = vpop.f32.mrb[0].mxu0
      %2543 = vmatprep.mubr.bf16.mxu0 0
      %2544 = vmatmul.mubr.bf16.gmra.mrb[0].mxu0 %v2381
      %v2545 = vpop.f32.mrb[0].mxu0
      %v2546 = vadd.f32 0.0, %v2545
      %v2547 = vpop.f32.mrb[0].mxu0
      %v2548 = vpop.f32.mrb[0].mxu0
      %v2549 = vadd.f32 0.0, %v2548
      %v2550 = vpop.f32.mrb[0].mxu0
      %2551 = vmatprep.mubr.bf16.mxu0 0
      %2552 = vmatmul.mubr.bf16.gmra.mrb[0].mxu0 %v2382
      %v2553 = vpop.f32.mrb[0].mxu0
      %v2554 = vadd.f32 0.0, %v2553
      %v2555 = vpop.f32.mrb[0].mxu0
      %v2556 = vpop.f32.mrb[0].mxu0
      %v2557 = vadd.f32 0.0, %v2556
      %v2558 = vpop.f32.mrb[0].mxu0
      %2559 = vmatprep.mubr.bf16.mxu0 0
      %2560 = vmatmul.mubr.bf16.gmra.mrb[0].mxu0 %v2383
      %v2561 = vpop.f32.mrb[0].mxu0
      %v2562 = vadd.f32 0.0, %v2561
      %v2563 = vpop.f32.mrb[0].mxu0
      %v2564 = vpop.f32.mrb[0].mxu0
      %v2565 = vadd.f32 0.0, %v2564
      %v2566 = vpop.f32.mrb[0].mxu0
      %2567 = vmatprep.mubr.bf16.mxu0 0
      %2568 = vmatmul.mubr.bf16.gmra.mrb[0].mxu0 %v2384
      %v2569 = vpop.f32.mrb[0].mxu0
      %v2570 = vadd.f32 0.0, %v2569
      %v2571 = vpop.f32.mrb[0].mxu0
      %v2572 = vpop.f32.mrb[0].mxu0
      %v2573 = vadd.f32 0.0, %v2572
      %v2574 = vpop.f32.mrb[0].mxu0
      %2575 = vmatprep.mubr.bf16.mxu0 0
      %2576 = vmatmul.mubr.bf16.gmra.mrb[0].mxu0 %v2385
      %v2577 = vpop.f32.mrb[0].mxu0
      %v2578 = vadd.f32 0.0, %v2577
      %v2579 = vpop.f32.mrb[0].mxu0
      %v2580 = vpop.f32.mrb[0].mxu0
      %v2581 = vpop.f32.mrb[0].mxu0
      %2582 = vdwg.mxu0
      %v2583 = vadd.f32 %v2331, %v2482
      %v2584 = vadd.f32 %v2332, %v2485
      %v2585 = vadd.f32 %v2333, %v2490
      %v2586 = vadd.f32 %v2334, %v2493
      %v2587 = vadd.f32 %v2335, %v2498
      %v2588 = vadd.f32 %v2336, %v2501
      %v2589 = vadd.f32 %v2337, %v2506
      %v2590 = vadd.f32 %v2338, %v2509
      %v2591 = vadd.f32 %v2339, %v2514
      %v2592 = vadd.f32 %v2340, %v2517
      %v2593 = vadd.f32 %v2341, %v2522
      %v2594 = vadd.f32 %v2342, %v2525
      %v2595 = vadd.f32 %v2343, %v2530
      %v2596 = vadd.f32 %v2344, %v2533
      %v2597 = vadd.f32 %v2345, %v2538
      %v2598 = vadd.f32 %v2346, %v2541
      %v2599 = vadd.f32 %v2347, %v2546
      %v2600 = vadd.f32 %v2348, %v2549
      %v2601 = vadd.f32 %v2349, %v2554
      %v2602 = vadd.f32 %v2350, %v2557
      %v2603 = vadd.f32 %v2351, %v2562
      %v2604 = vadd.f32 %v2352, %v2565
      %v2605 = vadd.f32 %v2353, %v2570
      %v2606 = vadd.f32 %v2354, %v2573
      %v2607 = vadd.f32 %v2355, %v2578
      %v2608 = vld [vmem:[%s166 + $0x68] sm:$0x7]
      %s2609 = scalar_lea.vmem %s1, 512
      %v2610 = vld [vmem:[%s2609] sm:$0xf]
      %v2611 = vld [vmem:[%s2609 + $0x4] sm:$0xf]
      %v2612 = vld [vmem:[%s2609 + $0x8] sm:$0xf]
      %v2613 = vld [vmem:[%s2609 + $0xc] sm:$0xf]
      %v2614 = vld [vmem:[%s2609 + $0x10] sm:$0xf]
      %v2615 = vld [vmem:[%s2609 + $0x14] sm:$0xf]
      %v2616 = vld [vmem:[%s2609 + $0x18] sm:$0xf]
      %v2617 = vld [vmem:[%s2609 + $0x1c] sm:$0xf]
      %v2618 = vld [vmem:[%s2609 + $0x20] sm:$0xf]
      %v2619 = vld [vmem:[%s2609 + $0x24] sm:$0xf]
      %v2620 = vld [vmem:[%s2609 + $0x28] sm:$0xf]
      %v2621 = vld [vmem:[%s2609 + $0x2c] sm:$0xf]
      %v2622 = vld [vmem:[%s2609 + $0x30] sm:$0xf]
      %v2623 = vld [vmem:[%s2609 + $0x34] sm:$0xf]
      %v2624 = vld [vmem:[%s2609 + $0x38] sm:$0xf]
      %v2625 = vld [vmem:[%s2609 + $0x3c] sm:$0xf]
      %v2627 = vunpack.c.l.b16 %v2608
      %v2628 = vpack.c.b16 %v2627, %v2627
      %v2630 = vshrl.u32 %v2373, 16
      %v2632 = vshll.u32 %v2373, 16
      %v2634 = vrot.slane %v2632, 1
      %v2635 = vor.u32 %v2630, %v2634
      %v2637 = vshll.u32 %v2374, 16
      %v2639 = vrot.slane %v2637, 1
      %v2640 = vsel %vm296, %v2635, %v2639
      %v2641 = vshrl.u32 %v2374, 16
      %v2643 = vor.u32 %v2641, %v2639
      %v2645 = vshll.u32 %v2375, 16
      %v2647 = vrot.slane %v2645, 1
      %v2648 = vsel %vm296, %v2643, %v2647
      %v2649 = vshrl.u32 %v2375, 16
      %v2651 = vor.u32 %v2649, %v2647
      %v2653 = vshll.u32 %v2376, 16
      %v2655 = vrot.slane %v2653, 1
      %v2656 = vsel %vm296, %v2651, %v2655
      %v2657 = vshrl.u32 %v2376, 16
      %v2659 = vor.u32 %v2657, %v2655
      %v2661 = vshll.u32 %v2377, 16
      %v2663 = vrot.slane %v2661, 1
      %v2664 = vsel %vm296, %v2659, %v2663
      %v2665 = vshrl.u32 %v2377, 16
      %v2667 = vor.u32 %v2665, %v2663
      %v2669 = vshll.u32 %v2378, 16
      %v2671 = vrot.slane %v2669, 1
      %v2672 = vsel %vm296, %v2667, %v2671
      %v2673 = vshrl.u32 %v2378, 16
      %v2675 = vor.u32 %v2673, %v2671
      %v2677 = vshll.u32 %v2379, 16
      %v2679 = vrot.slane %v2677, 1
      %v2680 = vsel %vm296, %v2675, %v2679
      %v2681 = vshrl.u32 %v2379, 16
      %v2683 = vor.u32 %v2681, %v2679
      %v2685 = vshll.u32 %v2380, 16
      %v2687 = vrot.slane %v2685, 1
      %v2688 = vsel %vm296, %v2683, %v2687
      %v2689 = vshrl.u32 %v2380, 16
      %v2691 = vor.u32 %v2689, %v2687
      %v2693 = vshll.u32 %v2381, 16
      %v2695 = vrot.slane %v2693, 1
      %v2696 = vsel %vm296, %v2691, %v2695
      %v2697 = vshrl.u32 %v2381, 16
      %v2699 = vor.u32 %v2697, %v2695
      %v2701 = vshll.u32 %v2382, 16
      %v2703 = vrot.slane %v2701, 1
      %v2704 = vsel %vm296, %v2699, %v2703
      %v2705 = vshrl.u32 %v2382, 16
      %v2707 = vor.u32 %v2705, %v2703
      %v2709 = vshll.u32 %v2383, 16
      %v2711 = vrot.slane %v2709, 1
      %v2712 = vsel %vm296, %v2707, %v2711
      %v2713 = vshrl.u32 %v2383, 16
      %v2715 = vor.u32 %v2713, %v2711
      %v2717 = vshll.u32 %v2384, 16
      %v2719 = vrot.slane %v2717, 1
      %v2720 = vsel %vm296, %v2715, %v2719
      %v2721 = vshrl.u32 %v2384, 16
      %v2723 = vor.u32 %v2721, %v2719
      %v2725 = vshll.u32 %v2628, 16
      %v2727 = vrot.slane %v2725, 1
      %v2728 = vsel %vm296, %v2723, %v2727
      %v2729 = vshrl.u32 %v2628, 16
      %v2731 = vor.u32 %v2729, %v2727
      %v2761 = vunpack.c.l.b16 %v2610
      %v2762 = vunpack.c.l.b16 %v2611
      %v2763 = vunpack.c.l.b16 %v2612
      %v2764 = vunpack.c.l.b16 %v2613
      %v2765 = vunpack.c.l.b16 %v2614
      %v2766 = vunpack.c.l.b16 %v2615
      %v2767 = vunpack.c.l.b16 %v2616
      %v2768 = vunpack.c.l.b16 %v2617
      %v2769 = vunpack.c.l.b16 %v2618
      %v2770 = vunpack.c.l.b16 %v2619
      %v2771 = vunpack.c.l.b16 %v2620
      %v2772 = vunpack.c.l.b16 %v2621
      %v2773 = vunpack.c.l.b16 %v2622
      %v2774 = vunpack.c.l.b16 %v2623
      %v2775 = vunpack.c.l.b16 %v2624
      %v2776 = vunpack.c.l.b16 %v2625
      %v2777 = vpack.c.b16 %v2762, %v2761
      %v2778 = vpack.c.b16 %v2764, %v2763
      %v2779 = vpack.c.b16 %v2766, %v2765
      %v2780 = vpack.c.b16 %v2768, %v2767
      %v2781 = vpack.c.b16 %v2770, %v2769
      %v2782 = vpack.c.b16 %v2772, %v2771
      %v2783 = vpack.c.b16 %v2774, %v2773
      %v2784 = vpack.c.b16 %v2776, %v2775
      %2793 = vmatprep.subr.bf16.mxu0 0
      %2794 = vmatpush1.bf16.msra.mxu0 %v2777
      %2795 = vmatprep.subr.bf16.mxu0 0
      %2796 = vmatpush1.bf16.msra.mxu0 %v2778
      %2797 = vmatprep.subr.bf16.mxu0 0
      %2798 = vmatpush1.bf16.msra.mxu0 %v2779
      %2799 = vmatprep.subr.bf16.mxu0 0
      %2800 = vmatpush1.bf16.msra.mxu0 %v2780
      %2801 = vmatprep.subr.bf16.mxu0 0
      %2802 = vmatpush1.bf16.msra.mxu0 %v2781
      %2803 = vmatprep.subr.bf16.mxu0 0
      %2804 = vmatpush1.bf16.msra.mxu0 %v2782
      %2805 = vmatprep.subr.bf16.mxu0 0
      %2806 = vmatpush1.bf16.msra.mxu0 %v2783
      %2807 = vmatprep.subr.bf16.mxu0 0
      %2808 = vmatpush1.bf16.msra.mxu0 %v2784
      %2809 = vmatprep.subr.bf16.mxu0 0
      %2810 = vmatpush1.bf16.msra.mxu0 0
      %2811 = vmatprep.subr.bf16.mxu0 0
      %2812 = vmatpush1.bf16.msra.mxu0 0
      %2813 = vmatprep.subr.bf16.mxu0 0
      %2814 = vmatpush1.bf16.msra.mxu0 0
      %2815 = vmatprep.subr.bf16.mxu0 0
      %2816 = vmatpush1.bf16.msra.mxu0 0
      %2817 = vmatprep.subr.bf16.mxu0 0
      %2818 = vmatpush1.bf16.msra.mxu0 0
      %2819 = vmatprep.subr.bf16.mxu0 0
      %2820 = vmatpush1.bf16.msra.mxu0 0
      %2821 = vmatprep.subr.bf16.mxu0 0
      %2822 = vmatpush1.bf16.msra.mxu0 0
      %2823 = vmatprep.subr.bf16.mxu0 0
      %2824 = vmatpush1.bf16.msra.mxu0 0
      %2825 = vmatprep.mubr.bf16.mxu0 0
      %2826 = vmatmul.mubr.bf16.gmra.mrb[0].mxu0 %v2640
      %v2827 = vpop.f32.mrb[0].mxu0
      %v2828 = vadd.f32 0.0, %v2827
      %v2829 = vpop.f32.mrb[0].mxu0
      %v2830 = vpop.f32.mrb[0].mxu0
      %v2831 = vadd.f32 0.0, %v2830
      %v2832 = vpop.f32.mrb[0].mxu0
      %2833 = vmatprep.mubr.bf16.mxu0 0
      %2834 = vmatmul.mubr.bf16.gmra.mrb[0].mxu0 %v2648
      %v2835 = vpop.f32.mrb[0].mxu0
      %v2836 = vadd.f32 0.0, %v2835
      %v2837 = vpop.f32.mrb[0].mxu0
      %v2838 = vpop.f32.mrb[0].mxu0
      %v2839 = vadd.f32 0.0, %v2838
      %v2840 = vpop.f32.mrb[0].mxu0
      %2841 = vmatprep.mubr.bf16.mxu0 0
      %2842 = vmatmul.mubr.bf16.gmra.mrb[0].mxu0 %v2656
      %v2843 = vpop.f32.mrb[0].mxu0
      %v2844 = vadd.f32 0.0, %v2843
      %v2845 = vpop.f32.mrb[0].mxu0
      %v2846 = vpop.f32.mrb[0].mxu0
      %v2847 = vadd.f32 0.0, %v2846
      %v2848 = vpop.f32.mrb[0].mxu0
      %2849 = vmatprep.mubr.bf16.mxu0 0
      %2850 = vmatmul.mubr.bf16.gmra.mrb[0].mxu0 %v2664
      %v2851 = vpop.f32.mrb[0].mxu0
      %v2852 = vadd.f32 0.0, %v2851
      %v2853 = vpop.f32.mrb[0].mxu0
      %v2854 = vpop.f32.mrb[0].mxu0
      %v2855 = vadd.f32 0.0, %v2854
      %v2856 = vpop.f32.mrb[0].mxu0
      %2857 = vmatprep.mubr.bf16.mxu0 0
      %2858 = vmatmul.mubr.bf16.gmra.mrb[0].mxu0 %v2672
      %v2859 = vpop.f32.mrb[0].mxu0
      %v2860 = vadd.f32 0.0, %v2859
      %v2861 = vpop.f32.mrb[0].mxu0
      %v2862 = vpop.f32.mrb[0].mxu0
      %v2863 = vadd.f32 0.0, %v2862
      %v2864 = vpop.f32.mrb[0].mxu0
      %2865 = vmatprep.mubr.bf16.mxu0 0
      %2866 = vmatmul.mubr.bf16.gmra.mrb[0].mxu0 %v2680
      %v2867 = vpop.f32.mrb[0].mxu0
      %v2868 = vadd.f32 0.0, %v2867
      %v2869 = vpop.f32.mrb[0].mxu0
      %v2870 = vpop.f32.mrb[0].mxu0
      %v2871 = vadd.f32 0.0, %v2870
      %v2872 = vpop.f32.mrb[0].mxu0
      %2873 = vmatprep.mubr.bf16.mxu0 0
      %2874 = vmatmul.mubr.bf16.gmra.mrb[0].mxu0 %v2688
      %v2875 = vpop.f32.mrb[0].mxu0
      %v2876 = vadd.f32 0.0, %v2875
      %v2877 = vpop.f32.mrb[0].mxu0
      %v2878 = vpop.f32.mrb[0].mxu0
      %v2879 = vadd.f32 0.0, %v2878
      %v2880 = vpop.f32.mrb[0].mxu0
      %2881 = vmatprep.mubr.bf16.mxu0 0
      %2882 = vmatmul.mubr.bf16.gmra.mrb[0].mxu0 %v2696
      %v2883 = vpop.f32.mrb[0].mxu0
      %v2884 = vadd.f32 0.0, %v2883
      %v2885 = vpop.f32.mrb[0].mxu0
      %v2886 = vpop.f32.mrb[0].mxu0
      %v2887 = vadd.f32 0.0, %v2886
      %v2888 = vpop.f32.mrb[0].mxu0
      %2889 = vmatprep.mubr.bf16.mxu0 0
      %2890 = vmatmul.mubr.bf16.gmra.mrb[0].mxu0 %v2704
      %v2891 = vpop.f32.mrb[0].mxu0
      %v2892 = vadd.f32 0.0, %v2891
      %v2893 = vpop.f32.mrb[0].mxu0
      %v2894 = vpop.f32.mrb[0].mxu0
      %v2895 = vadd.f32 0.0, %v2894
      %v2896 = vpop.f32.mrb[0].mxu0
      %2897 = vmatprep.mubr.bf16.mxu0 0
      %2898 = vmatmul.mubr.bf16.gmra.mrb[0].mxu0 %v2712
      %v2899 = vpop.f32.mrb[0].mxu0
      %v2900 = vadd.f32 0.0, %v2899
      %v2901 = vpop.f32.mrb[0].mxu0
      %v2902 = vpop.f32.mrb[0].mxu0
      %v2903 = vadd.f32 0.0, %v2902
      %v2904 = vpop.f32.mrb[0].mxu0
      %2905 = vmatprep.mubr.bf16.mxu0 0
      %2906 = vmatmul.mubr.bf16.gmra.mrb[0].mxu0 %v2720
      %v2907 = vpop.f32.mrb[0].mxu0
      %v2908 = vadd.f32 0.0, %v2907
      %v2909 = vpop.f32.mrb[0].mxu0
      %v2910 = vpop.f32.mrb[0].mxu0
      %v2911 = vadd.f32 0.0, %v2910
      %v2912 = vpop.f32.mrb[0].mxu0
      %2913 = vmatprep.mubr.bf16.mxu0 0
      %2914 = vmatmul.mubr.bf16.gmra.mrb[0].mxu0 %v2728
      %v2915 = vpop.f32.mrb[0].mxu0
      %v2916 = vadd.f32 0.0, %v2915
      %v2917 = vpop.f32.mrb[0].mxu0
      %v2918 = vpop.f32.mrb[0].mxu0
      %v2919 = vadd.f32 0.0, %v2918
      %v2920 = vpop.f32.mrb[0].mxu0
      %2921 = vmatprep.mubr.bf16.mxu0 0
      %2922 = vmatmul.mubr.bf16.gmra.mrb[0].mxu0 %v2731
      %v2923 = vpop.f32.mrb[0].mxu0
      %v2924 = vadd.f32 0.0, %v2923
      %v2925 = vpop.f32.mrb[0].mxu0
      %v2926 = vpop.f32.mrb[0].mxu0
      %v2927 = vpop.f32.mrb[0].mxu0
      %2928 = vdwg.mxu0
      %v2929 = vadd.f32 %v2583, %v2828
      %v2930 = vadd.f32 %v2584, %v2831
      %v2931 = vadd.f32 %v2585, %v2836
      %v2932 = vadd.f32 %v2586, %v2839
      %v2933 = vadd.f32 %v2587, %v2844
      %v2934 = vadd.f32 %v2588, %v2847
      %v2935 = vadd.f32 %v2589, %v2852
      %v2936 = vadd.f32 %v2590, %v2855
      %v2937 = vadd.f32 %v2591, %v2860
      %v2938 = vadd.f32 %v2592, %v2863
      %v2939 = vadd.f32 %v2593, %v2868
      %v2940 = vadd.f32 %v2594, %v2871
      %v2941 = vadd.f32 %v2595, %v2876
      %v2942 = vadd.f32 %v2596, %v2879
      %v2943 = vadd.f32 %v2597, %v2884
      %v2944 = vadd.f32 %v2598, %v2887
      %v2945 = vadd.f32 %v2599, %v2892
      %v2946 = vadd.f32 %v2600, %v2895
      %v2947 = vadd.f32 %v2601, %v2900
      %v2948 = vadd.f32 %v2602, %v2903
      %v2949 = vadd.f32 %v2603, %v2908
      %v2950 = vadd.f32 %v2604, %v2911
      %v2951 = vadd.f32 %v2605, %v2916
      %v2952 = vadd.f32 %v2606, %v2919
      %v2953 = vadd.f32 %v2607, %v2924
      %v2954 = vld [vmem:[%s166 + $0x8] sm:$0xe]
      %s2955 = scalar_lea.vmem %s1, 576
      %v2956 = vld [vmem:[%s2955] sm:$0xf]
      %v2957 = vld [vmem:[%s2955 + $0x4] sm:$0xf]
      %v2958 = vld [vmem:[%s2955 + $0x8] sm:$0xf]
      %v2959 = vld [vmem:[%s2955 + $0xc] sm:$0xf]
      %v2960 = vld [vmem:[%s2955 + $0x10] sm:$0xf]
      %v2961 = vld [vmem:[%s2955 + $0x14] sm:$0xf]
      %v2962 = vld [vmem:[%s2955 + $0x18] sm:$0xf]
      %v2963 = vld [vmem:[%s2955 + $0x1c] sm:$0xf]
      %v2964 = vld [vmem:[%s2955 + $0x20] sm:$0xf]
      %v2965 = vld [vmem:[%s2955 + $0x24] sm:$0xf]
      %v2966 = vld [vmem:[%s2955 + $0x28] sm:$0xf]
      %v2967 = vld [vmem:[%s2955 + $0x2c] sm:$0xf]
      %v2968 = vld [vmem:[%s2955 + $0x30] sm:$0xf]
      %v2969 = vld [vmem:[%s2955 + $0x34] sm:$0xf]
      %v2970 = vld [vmem:[%s2955 + $0x38] sm:$0xf]
      %v2971 = vld [vmem:[%s2955 + $0x3c] sm:$0xf]
      %v2973 = vunpack.c.l.b16 %v2954
      %v2974 = vpack.c.b16 %v1711, %v2973
      %v2975 = vrot.slane %v2974, 1
      %v2976 = vrot.slane %v2374, 1
      %v2977 = vsel %vm818, %v2975, %v2976
      %v2978 = vrot.slane %v2375, 1
      %v2979 = vsel %vm818, %v2976, %v2978
      %v2980 = vrot.slane %v2376, 1
      %v2981 = vsel %vm818, %v2978, %v2980
      %v2982 = vrot.slane %v2377, 1
      %v2983 = vsel %vm818, %v2980, %v2982
      %v2984 = vrot.slane %v2378, 1
      %v2985 = vsel %vm818, %v2982, %v2984
      %v2986 = vrot.slane %v2379, 1
      %v2987 = vsel %vm818, %v2984, %v2986
      %v2988 = vrot.slane %v2380, 1
      %v2989 = vsel %vm818, %v2986, %v2988
      %v2990 = vrot.slane %v2381, 1
      %v2991 = vsel %vm818, %v2988, %v2990
      %v2992 = vrot.slane %v2382, 1
      %v2993 = vsel %vm818, %v2990, %v2992
      %v2994 = vrot.slane %v2383, 1
      %v2995 = vsel %vm818, %v2992, %v2994
      %v2996 = vrot.slane %v2384, 1
      %v2997 = vsel %vm818, %v2994, %v2996
      %v2998 = vrot.slane %v2628, 1
      %v2999 = vsel %vm818, %v2996, %v2998
      %v3029 = vunpack.c.l.b16 %v2956
      %v3030 = vunpack.c.l.b16 %v2957
      %v3031 = vunpack.c.l.b16 %v2958
      %v3032 = vunpack.c.l.b16 %v2959
      %v3033 = vunpack.c.l.b16 %v2960
      %v3034 = vunpack.c.l.b16 %v2961
      %v3035 = vunpack.c.l.b16 %v2962
      %v3036 = vunpack.c.l.b16 %v2963
      %v3037 = vunpack.c.l.b16 %v2964
      %v3038 = vunpack.c.l.b16 %v2965
      %v3039 = vunpack.c.l.b16 %v2966
      %v3040 = vunpack.c.l.b16 %v2967
      %v3041 = vunpack.c.l.b16 %v2968
      %v3042 = vunpack.c.l.b16 %v2969
      %v3043 = vunpack.c.l.b16 %v2970
      %v3044 = vunpack.c.l.b16 %v2971
      %v3045 = vpack.c.b16 %v3030, %v3029
      %v3046 = vpack.c.b16 %v3032, %v3031
      %v3047 = vpack.c.b16 %v3034, %v3033
      %v3048 = vpack.c.b16 %v3036, %v3035
      %v3049 = vpack.c.b16 %v3038, %v3037
      %v3050 = vpack.c.b16 %v3040, %v3039
      %v3051 = vpack.c.b16 %v3042, %v3041
      %v3052 = vpack.c.b16 %v3044, %v3043
      %3061 = vmatprep.subr.bf16.mxu0 0
      %3062 = vmatpush1.bf16.msra.mxu0 %v3045
      %3063 = vmatprep.subr.bf16.mxu0 0
      %3064 = vmatpush1.bf16.msra.mxu0 %v3046
      %3065 = vmatprep.subr.bf16.mxu0 0
      %3066 = vmatpush1.bf16.msra.mxu0 %v3047
      %3067 = vmatprep.subr.bf16.mxu0 0
      %3068 = vmatpush1.bf16.msra.mxu0 %v3048
      %3069 = vmatprep.subr.bf16.mxu0 0
      %3070 = vmatpush1.bf16.msra.mxu0 %v3049
      %3071 = vmatprep.subr.bf16.mxu0 0
      %3072 = vmatpush1.bf16.msra.mxu0 %v3050
      %3073 = vmatprep.subr.bf16.mxu0 0
      %3074 = vmatpush1.bf16.msra.mxu0 %v3051
      %3075 = vmatprep.subr.bf16.mxu0 0
      %3076 = vmatpush1.bf16.msra.mxu0 %v3052
      %3077 = vmatprep.subr.bf16.mxu0 0
      %3078 = vmatpush1.bf16.msra.mxu0 0
      %3079 = vmatprep.subr.bf16.mxu0 0
      %3080 = vmatpush1.bf16.msra.mxu0 0
      %3081 = vmatprep.subr.bf16.mxu0 0
      %3082 = vmatpush1.bf16.msra.mxu0 0
      %3083 = vmatprep.subr.bf16.mxu0 0
      %3084 = vmatpush1.bf16.msra.mxu0 0
      %3085 = vmatprep.subr.bf16.mxu0 0
      %3086 = vmatpush1.bf16.msra.mxu0 0
      %3087 = vmatprep.subr.bf16.mxu0 0
      %3088 = vmatpush1.bf16.msra.mxu0 0
      %3089 = vmatprep.subr.bf16.mxu0 0
      %3090 = vmatpush1.bf16.msra.mxu0 0
      %3091 = vmatprep.subr.bf16.mxu0 0
      %3092 = vmatpush1.bf16.msra.mxu0 0
      %3093 = vmatprep.mubr.bf16.mxu0 0
      %3094 = vmatmul.mubr.bf16.gmra.mrb[0].mxu0 %v2977
      %v3095 = vpop.f32.mrb[0].mxu0
      %v3096 = vadd.f32 0.0, %v3095
      %v3097 = vpop.f32.mrb[0].mxu0
      %v3098 = vpop.f32.mrb[0].mxu0
      %v3099 = vadd.f32 0.0, %v3098
      %v3100 = vpop.f32.mrb[0].mxu0
      %3101 = vmatprep.mubr.bf16.mxu0 0
      %3102 = vmatmul.mubr.bf16.gmra.mrb[0].mxu0 %v2979
      %v3103 = vpop.f32.mrb[0].mxu0
      %v3104 = vadd.f32 0.0, %v3103
      %v3105 = vpop.f32.mrb[0].mxu0
      %v3106 = vpop.f32.mrb[0].mxu0
      %v3107 = vadd.f32 0.0, %v3106
      %v3108 = vpop.f32.mrb[0].mxu0
      %3109 = vmatprep.mubr.bf16.mxu0 0
      %3110 = vmatmul.mubr.bf16.gmra.mrb[0].mxu0 %v2981
      %v3111 = vpop.f32.mrb[0].mxu0
      %v3112 = vadd.f32 0.0, %v3111
      %v3113 = vpop.f32.mrb[0].mxu0
      %v3114 = vpop.f32.mrb[0].mxu0
      %v3115 = vadd.f32 0.0, %v3114
      %v3116 = vpop.f32.mrb[0].mxu0
      %3117 = vmatprep.mubr.bf16.mxu0 0
      %3118 = vmatmul.mubr.bf16.gmra.mrb[0].mxu0 %v2983
      %v3119 = vpop.f32.mrb[0].mxu0
      %v3120 = vadd.f32 0.0, %v3119
      %v3121 = vpop.f32.mrb[0].mxu0
      %v3122 = vpop.f32.mrb[0].mxu0
      %v3123 = vadd.f32 0.0, %v3122
      %v3124 = vpop.f32.mrb[0].mxu0
      %3125 = vmatprep.mubr.bf16.mxu0 0
      %3126 = vmatmul.mubr.bf16.gmra.mrb[0].mxu0 %v2985
      %v3127 = vpop.f32.mrb[0].mxu0
      %v3128 = vadd.f32 0.0, %v3127
      %v3129 = vpop.f32.mrb[0].mxu0
      %v3130 = vpop.f32.mrb[0].mxu0
      %v3131 = vadd.f32 0.0, %v3130
      %v3132 = vpop.f32.mrb[0].mxu0
      %3133 = vmatprep.mubr.bf16.mxu0 0
      %3134 = vmatmul.mubr.bf16.gmra.mrb[0].mxu0 %v2987
      %v3135 = vpop.f32.mrb[0].mxu0
      %v3136 = vadd.f32 0.0, %v3135
      %v3137 = vpop.f32.mrb[0].mxu0
      %v3138 = vpop.f32.mrb[0].mxu0
      %v3139 = vadd.f32 0.0, %v3138
      %v3140 = vpop.f32.mrb[0].mxu0
      %3141 = vmatprep.mubr.bf16.mxu0 0
      %3142 = vmatmul.mubr.bf16.gmra.mrb[0].mxu0 %v2989
      %v3143 = vpop.f32.mrb[0].mxu0
      %v3144 = vadd.f32 0.0, %v3143
      %v3145 = vpop.f32.mrb[0].mxu0
      %v3146 = vpop.f32.mrb[0].mxu0
      %v3147 = vadd.f32 0.0, %v3146
      %v3148 = vpop.f32.mrb[0].mxu0
      %3149 = vmatprep.mubr.bf16.mxu0 0
      %3150 = vmatmul.mubr.bf16.gmra.mrb[0].mxu0 %v2991
      %v3151 = vpop.f32.mrb[0].mxu0
      %v3152 = vadd.f32 0.0, %v3151
      %v3153 = vpop.f32.mrb[0].mxu0
      %v3154 = vpop.f32.mrb[0].mxu0
      %v3155 = vadd.f32 0.0, %v3154
      %v3156 = vpop.f32.mrb[0].mxu0
      %3157 = vmatprep.mubr.bf16.mxu0 0
      %3158 = vmatmul.mubr.bf16.gmra.mrb[0].mxu0 %v2993
      %v3159 = vpop.f32.mrb[0].mxu0
      %v3160 = vadd.f32 0.0, %v3159
      %v3161 = vpop.f32.mrb[0].mxu0
      %v3162 = vpop.f32.mrb[0].mxu0
      %v3163 = vadd.f32 0.0, %v3162
      %v3164 = vpop.f32.mrb[0].mxu0
      %3165 = vmatprep.mubr.bf16.mxu0 0
      %3166 = vmatmul.mubr.bf16.gmra.mrb[0].mxu0 %v2995
      %v3167 = vpop.f32.mrb[0].mxu0
      %v3168 = vadd.f32 0.0, %v3167
      %v3169 = vpop.f32.mrb[0].mxu0
      %v3170 = vpop.f32.mrb[0].mxu0
      %v3171 = vadd.f32 0.0, %v3170
      %v3172 = vpop.f32.mrb[0].mxu0
      %3173 = vmatprep.mubr.bf16.mxu0 0
      %3174 = vmatmul.mubr.bf16.gmra.mrb[0].mxu0 %v2997
      %v3175 = vpop.f32.mrb[0].mxu0
      %v3176 = vadd.f32 0.0, %v3175
      %v3177 = vpop.f32.mrb[0].mxu0
      %v3178 = vpop.f32.mrb[0].mxu0
      %v3179 = vadd.f32 0.0, %v3178
      %v3180 = vpop.f32.mrb[0].mxu0
      %3181 = vmatprep.mubr.bf16.mxu0 0
      %3182 = vmatmul.mubr.bf16.gmra.mrb[0].mxu0 %v2999
      %v3183 = vpop.f32.mrb[0].mxu0
      %v3184 = vadd.f32 0.0, %v3183
      %v3185 = vpop.f32.mrb[0].mxu0
      %v3186 = vpop.f32.mrb[0].mxu0
      %v3187 = vadd.f32 0.0, %v3186
      %v3188 = vpop.f32.mrb[0].mxu0
      %3189 = vmatprep.mubr.bf16.mxu0 0
      %3190 = vmatmul.mubr.bf16.gmra.mrb[0].mxu0 %v2998
      %v3191 = vpop.f32.mrb[0].mxu0
      %v3192 = vadd.f32 0.0, %v3191
      %v3193 = vpop.f32.mrb[0].mxu0
      %v3194 = vpop.f32.mrb[0].mxu0
      %v3195 = vpop.f32.mrb[0].mxu0
      %3196 = vdwg.mxu0
      %v3197 = vadd.f32 %v2929, %v3096
      %v3198 = vadd.f32 %v2930, %v3099
      %v3199 = vadd.f32 %v2931, %v3104
      %v3200 = vadd.f32 %v2932, %v3107
      %v3201 = vadd.f32 %v2933, %v3112
      %v3202 = vadd.f32 %v2934, %v3115
      %v3203 = vadd.f32 %v2935, %v3120
      %v3204 = vadd.f32 %v2936, %v3123
      %v3205 = vadd.f32 %v2937, %v3128
      %v3206 = vadd.f32 %v2938, %v3131
      %v3207 = vadd.f32 %v2939, %v3136
      %v3208 = vadd.f32 %v2940, %v3139
      %v3209 = vadd.f32 %v2941, %v3144
      %v3210 = vadd.f32 %v2942, %v3147
      %v3211 = vadd.f32 %v2943, %v3152
      %v3212 = vadd.f32 %v2944, %v3155
      %v3213 = vadd.f32 %v2945, %v3160
      %v3214 = vadd.f32 %v2946, %v3163
      %v3215 = vadd.f32 %v2947, %v3168
      %v3216 = vadd.f32 %v2948, %v3171
      %v3217 = vadd.f32 %v2949, %v3176
      %v3218 = vadd.f32 %v2950, %v3179
      %v3219 = vadd.f32 %v2951, %v3184
      %v3220 = vadd.f32 %v2952, %v3187
      %v3221 = vadd.f32 %v2953, %v3192
      %v3222 = vld [vmem:[%s166 + $0xc] sm:$0xc]
      %v3223 = vld [vmem:[%s166 + $0x10] sm:$0xf]
      %v3224 = vld [vmem:[%s166 + $0x14] sm:$0xf]
      %v3225 = vld [vmem:[%s166 + $0x18] sm:$0xf]
      %v3226 = vld [vmem:[%s166 + $0x1c] sm:$0xf]
      %v3227 = vld [vmem:[%s166 + $0x20] sm:$0xf]
      %v3228 = vld [vmem:[%s166 + $0x24] sm:$0xf]
      %v3229 = vld [vmem:[%s166 + $0x28] sm:$0xf]
      %v3230 = vld [vmem:[%s166 + $0x2c] sm:$0xf]
      %v3231 = vld [vmem:[%s166 + $0x30] sm:$0xf]
      %v3232 = vld [vmem:[%s166 + $0x34] sm:$0xf]
      %v3233 = vld [vmem:[%s166 + $0x38] sm:$0xf]
      %v3234 = vld [vmem:[%s166 + $0x3c] sm:$0xf]
      %v3235 = vld [vmem:[%s166 + $0x40] sm:$0xf]
      %v3236 = vld [vmem:[%s166 + $0x44] sm:$0xf]
      %v3237 = vld [vmem:[%s166 + $0x48] sm:$0xf]
      %v3238 = vld [vmem:[%s166 + $0x4c] sm:$0xf]
      %v3239 = vld [vmem:[%s166 + $0x50] sm:$0xf]
      %v3240 = vld [vmem:[%s166 + $0x54] sm:$0xf]
      %v3241 = vld [vmem:[%s166 + $0x58] sm:$0xf]
      %v3242 = vld [vmem:[%s166 + $0x5c] sm:$0xf]
      %v3243 = vld [vmem:[%s166 + $0x60] sm:$0xf]
      %v3244 = vld [vmem:[%s166 + $0x64] sm:$0xf]
      %v3245 = vld [vmem:[%s166 + $0x68] sm:$0xf]
      %v3246 = vld [vmem:[%s166 + $0x6c] sm:$0xf]
      %s3247 = scalar_lea.vmem %s1, 640
      %v3248 = vld [vmem:[%s3247] sm:$0xf]
      %v3249 = vld [vmem:[%s3247 + $0x4] sm:$0xf]
      %v3250 = vld [vmem:[%s3247 + $0x8] sm:$0xf]
      %v3251 = vld [vmem:[%s3247 + $0xc] sm:$0xf]
      %v3252 = vld [vmem:[%s3247 + $0x10] sm:$0xf]
      %v3253 = vld [vmem:[%s3247 + $0x14] sm:$0xf]
      %v3254 = vld [vmem:[%s3247 + $0x18] sm:$0xf]
      %v3255 = vld [vmem:[%s3247 + $0x1c] sm:$0xf]
      %v3256 = vld [vmem:[%s3247 + $0x20] sm:$0xf]
      %v3257 = vld [vmem:[%s3247 + $0x24] sm:$0xf]
      %v3258 = vld [vmem:[%s3247 + $0x28] sm:$0xf]
      %v3259 = vld [vmem:[%s3247 + $0x2c] sm:$0xf]
      %v3260 = vld [vmem:[%s3247 + $0x30] sm:$0xf]
      %v3261 = vld [vmem:[%s3247 + $0x34] sm:$0xf]
      %v3262 = vld [vmem:[%s3247 + $0x38] sm:$0xf]
      %v3263 = vld [vmem:[%s3247 + $0x3c] sm:$0xf]
      %v3289 = vunpack.c.l.b16 %v3222
      %v3290 = vunpack.c.l.b16 %v3223
      %v3291 = vunpack.c.l.b16 %v3224
      %v3292 = vunpack.c.l.b16 %v3225
      %v3293 = vunpack.c.l.b16 %v3226
      %v3294 = vunpack.c.l.b16 %v3227
      %v3295 = vunpack.c.l.b16 %v3228
      %v3296 = vunpack.c.l.b16 %v3229
      %v3297 = vunpack.c.l.b16 %v3230
      %v3298 = vunpack.c.l.b16 %v3231
      %v3299 = vunpack.c.l.b16 %v3232
      %v3300 = vunpack.c.l.b16 %v3233
      %v3301 = vunpack.c.l.b16 %v3234
      %v3302 = vunpack.c.l.b16 %v3235
      %v3303 = vunpack.c.l.b16 %v3236
      %v3304 = vunpack.c.l.b16 %v3237
      %v3305 = vunpack.c.l.b16 %v3238
      %v3306 = vunpack.c.l.b16 %v3239
      %v3307 = vunpack.c.l.b16 %v3240
      %v3308 = vunpack.c.l.b16 %v3241
      %v3309 = vunpack.c.l.b16 %v3242
      %v3310 = vunpack.c.l.b16 %v3243
      %v3311 = vunpack.c.l.b16 %v3244
      %v3312 = vunpack.c.l.b16 %v3245
      %v3313 = vunpack.c.l.b16 %v3246
      %v3314 = vpack.c.b16 %v3290, %v3289
      %v3315 = vpack.c.b16 %v3292, %v3291
      %v3316 = vpack.c.b16 %v3294, %v3293
      %v3317 = vpack.c.b16 %v3296, %v3295
      %v3318 = vpack.c.b16 %v3298, %v3297
      %v3319 = vpack.c.b16 %v3300, %v3299
      %v3320 = vpack.c.b16 %v3302, %v3301
      %v3321 = vpack.c.b16 %v3304, %v3303
      %v3322 = vpack.c.b16 %v3306, %v3305
      %v3323 = vpack.c.b16 %v3308, %v3307
      %v3324 = vpack.c.b16 %v3310, %v3309
      %v3325 = vpack.c.b16 %v3312, %v3311
      %v3326 = vpack.c.b16 %v3313, %v3313
      %v3327 = vrot.slane %v3314, 2
      %v3328 = vrot.slane %v3315, 2
      %v3329 = vsel %vm1392, %v3327, %v3328
      %v3330 = vrot.slane %v3316, 2
      %v3331 = vsel %vm1392, %v3328, %v3330
      %v3332 = vrot.slane %v3317, 2
      %v3333 = vsel %vm1392, %v3330, %v3332
      %v3334 = vrot.slane %v3318, 2
      %v3335 = vsel %vm1392, %v3332, %v3334
      %v3336 = vrot.slane %v3319, 2
      %v3337 = vsel %vm1392, %v3334, %v3336
      %v3338 = vrot.slane %v3320, 2
      %v3339 = vsel %vm1392, %v3336, %v3338
      %v3340 = vrot.slane %v3321, 2
      %v3341 = vsel %vm1392, %v3338, %v3340
      %v3342 = vrot.slane %v3322, 2
      %v3343 = vsel %vm1392, %v3340, %v3342
      %v3344 = vrot.slane %v3323, 2
      %v3345 = vsel %vm1392, %v3342, %v3344
      %v3346 = vrot.slane %v3324, 2
      %v3347 = vsel %vm1392, %v3344, %v3346
      %v3348 = vrot.slane %v3325, 2
      %v3349 = vsel %vm1392, %v3346, %v3348
      %v3350 = vrot.slane %v3326, 2
      %v3351 = vsel %vm1392, %v3348, %v3350
      %v3381 = vunpack.c.l.b16 %v3248
      %v3382 = vunpack.c.l.b16 %v3249
      %v3383 = vunpack.c.l.b16 %v3250
      %v3384 = vunpack.c.l.b16 %v3251
      %v3385 = vunpack.c.l.b16 %v3252
      %v3386 = vunpack.c.l.b16 %v3253
      %v3387 = vunpack.c.l.b16 %v3254
      %v3388 = vunpack.c.l.b16 %v3255
      %v3389 = vunpack.c.l.b16 %v3256
      %v3390 = vunpack.c.l.b16 %v3257
      %v3391 = vunpack.c.l.b16 %v3258
      %v3392 = vunpack.c.l.b16 %v3259
      %v3393 = vunpack.c.l.b16 %v3260
      %v3394 = vunpack.c.l.b16 %v3261
      %v3395 = vunpack.c.l.b16 %v3262
      %v3396 = vunpack.c.l.b16 %v3263
      %v3397 = vpack.c.b16 %v3382, %v3381
      %v3398 = vpack.c.b16 %v3384, %v3383
      %v3399 = vpack.c.b16 %v3386, %v3385
      %v3400 = vpack.c.b16 %v3388, %v3387
      %v3401 = vpack.c.b16 %v3390, %v3389
      %v3402 = vpack.c.b16 %v3392, %v3391
      %v3403 = vpack.c.b16 %v3394, %v3393
      %v3404 = vpack.c.b16 %v3396, %v3395
      %3413 = vmatprep.subr.bf16.mxu0 0
      %3414 = vmatpush1.bf16.msra.mxu0 %v3397
      %3415 = vmatprep.subr.bf16.mxu0 0
      %3416 = vmatpush1.bf16.msra.mxu0 %v3398
      %3417 = vmatprep.subr.bf16.mxu0 0
      %3418 = vmatpush1.bf16.msra.mxu0 %v3399
      %3419 = vmatprep.subr.bf16.mxu0 0
      %3420 = vmatpush1.bf16.msra.mxu0 %v3400
      %3421 = vmatprep.subr.bf16.mxu0 0
      %3422 = vmatpush1.bf16.msra.mxu0 %v3401
      %3423 = vmatprep.subr.bf16.mxu0 0
      %3424 = vmatpush1.bf16.msra.mxu0 %v3402
      %3425 = vmatprep.subr.bf16.mxu0 0
      %3426 = vmatpush1.bf16.msra.mxu0 %v3403
      %3427 = vmatprep.subr.bf16.mxu0 0
      %3428 = vmatpush1.bf16.msra.mxu0 %v3404
      %3429 = vmatprep.subr.bf16.mxu0 0
      %3430 = vmatpush1.bf16.msra.mxu0 0
      %3431 = vmatprep.subr.bf16.mxu0 0
      %3432 = vmatpush1.bf16.msra.mxu0 0
      %3433 = vmatprep.subr.bf16.mxu0 0
      %3434 = vmatpush1.bf16.msra.mxu0 0
      %3435 = vmatprep.subr.bf16.mxu0 0
      %3436 = vmatpush1.bf16.msra.mxu0 0
      %3437 = vmatprep.subr.bf16.mxu0 0
      %3438 = vmatpush1.bf16.msra.mxu0 0
      %3439 = vmatprep.subr.bf16.mxu0 0
      %3440 = vmatpush1.bf16.msra.mxu0 0
      %3441 = vmatprep.subr.bf16.mxu0 0
      %3442 = vmatpush1.bf16.msra.mxu0 0
      %3443 = vmatprep.subr.bf16.mxu0 0
      %3444 = vmatpush1.bf16.msra.mxu0 0
      %3445 = vmatprep.mubr.bf16.mxu0 0
      %3446 = vmatmul.mubr.bf16.gmra.mrb[0].mxu0 %v3329
      %v3447 = vpop.f32.mrb[0].mxu0
      %v3448 = vadd.f32 0.0, %v3447
      %v3449 = vpop.f32.mrb[0].mxu0
      %v3450 = vpop.f32.mrb[0].mxu0
      %v3451 = vadd.f32 0.0, %v3450
      %v3452 = vpop.f32.mrb[0].mxu0
      %3453 = vmatprep.mubr.bf16.mxu0 0
      %3454 = vmatmul.mubr.bf16.gmra.mrb[0].mxu0 %v3331
      %v3455 = vpop.f32.mrb[0].mxu0
      %v3456 = vadd.f32 0.0, %v3455
      %v3457 = vpop.f32.mrb[0].mxu0
      %v3458 = vpop.f32.mrb[0].mxu0
      %v3459 = vadd.f32 0.0, %v3458
      %v3460 = vpop.f32.mrb[0].mxu0
      %3461 = vmatprep.mubr.bf16.mxu0 0
      %3462 = vmatmul.mubr.bf16.gmra.mrb[0].mxu0 %v3333
      %v3463 = vpop.f32.mrb[0].mxu0
      %v3464 = vadd.f32 0.0, %v3463
      %v3465 = vpop.f32.mrb[0].mxu0
      %v3466 = vpop.f32.mrb[0].mxu0
      %v3467 = vadd.f32 0.0, %v3466
      %v3468 = vpop.f32.mrb[0].mxu0
      %3469 = vmatprep.mubr.bf16.mxu0 0
      %3470 = vmatmul.mubr.bf16.gmra.mrb[0].mxu0 %v3335
      %v3471 = vpop.f32.mrb[0].mxu0
      %v3472 = vadd.f32 0.0, %v3471
      %v3473 = vpop.f32.mrb[0].mxu0
      %v3474 = vpop.f32.mrb[0].mxu0
      %v3475 = vadd.f32 0.0, %v3474
      %v3476 = vpop.f32.mrb[0].mxu0
      %3477 = vmatprep.mubr.bf16.mxu0 0
      %3478 = vmatmul.mubr.bf16.gmra.mrb[0].mxu0 %v3337
      %v3479 = vpop.f32.mrb[0].mxu0
      %v3480 = vadd.f32 0.0, %v3479
      %v3481 = vpop.f32.mrb[0].mxu0
      %v3482 = vpop.f32.mrb[0].mxu0
      %v3483 = vadd.f32 0.0, %v3482
      %v3484 = vpop.f32.mrb[0].mxu0
      %3485 = vmatprep.mubr.bf16.mxu0 0
      %3486 = vmatmul.mubr.bf16.gmra.mrb[0].mxu0 %v3339
      %v3487 = vpop.f32.mrb[0].mxu0
      %v3488 = vadd.f32 0.0, %v3487
      %v3489 = vpop.f32.mrb[0].mxu0
      %v3490 = vpop.f32.mrb[0].mxu0
      %v3491 = vadd.f32 0.0, %v3490
      %v3492 = vpop.f32.mrb[0].mxu0
      %3493 = vmatprep.mubr.bf16.mxu0 0
      %3494 = vmatmul.mubr.bf16.gmra.mrb[0].mxu0 %v3341
      %v3495 = vpop.f32.mrb[0].mxu0
      %v3496 = vadd.f32 0.0, %v3495
      %v3497 = vpop.f32.mrb[0].mxu0
      %v3498 = vpop.f32.mrb[0].mxu0
      %v3499 = vadd.f32 0.0, %v3498
      %v3500 = vpop.f32.mrb[0].mxu0
      %3501 = vmatprep.mubr.bf16.mxu0 0
      %3502 = vmatmul.mubr.bf16.gmra.mrb[0].mxu0 %v3343
      %v3503 = vpop.f32.mrb[0].mxu0
      %v3504 = vadd.f32 0.0, %v3503
      %v3505 = vpop.f32.mrb[0].mxu0
      %v3506 = vpop.f32.mrb[0].mxu0
      %v3507 = vadd.f32 0.0, %v3506
      %v3508 = vpop.f32.mrb[0].mxu0
      %3509 = vmatprep.mubr.bf16.mxu0 0
      %3510 = vmatmul.mubr.bf16.gmra.mrb[0].mxu0 %v3345
      %v3511 = vpop.f32.mrb[0].mxu0
      %v3512 = vadd.f32 0.0, %v3511
      %v3513 = vpop.f32.mrb[0].mxu0
      %v3514 = vpop.f32.mrb[0].mxu0
      %v3515 = vadd.f32 0.0, %v3514
      %v3516 = vpop.f32.mrb[0].mxu0
      %3517 = vmatprep.mubr.bf16.mxu0 0
      %3518 = vmatmul.mubr.bf16.gmra.mrb[0].mxu0 %v3347
      %v3519 = vpop.f32.mrb[0].mxu0
      %v3520 = vadd.f32 0.0, %v3519
      %v3521 = vpop.f32.mrb[0].mxu0
      %v3522 = vpop.f32.mrb[0].mxu0
      %v3523 = vadd.f32 0.0, %v3522
      %v3524 = vpop.f32.mrb[0].mxu0
      %3525 = vmatprep.mubr.bf16.mxu0 0
      %3526 = vmatmul.mubr.bf16.gmra.mrb[0].mxu0 %v3349
      %v3527 = vpop.f32.mrb[0].mxu0
      %v3528 = vadd.f32 0.0, %v3527
      %v3529 = vpop.f32.mrb[0].mxu0
      %v3530 = vpop.f32.mrb[0].mxu0
      %v3531 = vadd.f32 0.0, %v3530
      %v3532 = vpop.f32.mrb[0].mxu0
      %3533 = vmatprep.mubr.bf16.mxu0 0
      %3534 = vmatmul.mubr.bf16.gmra.mrb[0].mxu0 %v3351
      %v3535 = vpop.f32.mrb[0].mxu0
      %v3536 = vadd.f32 0.0, %v3535
      %v3537 = vpop.f32.mrb[0].mxu0
      %v3538 = vpop.f32.mrb[0].mxu0
      %v3539 = vadd.f32 0.0, %v3538
      %v3540 = vpop.f32.mrb[0].mxu0
      %3541 = vmatprep.mubr.bf16.mxu0 0
      %3542 = vmatmul.mubr.bf16.gmra.mrb[0].mxu0 %v3350
      %v3543 = vpop.f32.mrb[0].mxu0
      %v3544 = vadd.f32 0.0, %v3543
      %v3545 = vpop.f32.mrb[0].mxu0
      %v3546 = vpop.f32.mrb[0].mxu0
      %v3547 = vpop.f32.mrb[0].mxu0
      %3548 = vdwg.mxu0
      %v3549 = vadd.f32 %v3197, %v3448
      %v3550 = vadd.f32 %v3198, %v3451
      %v3551 = vadd.f32 %v3199, %v3456
      %v3552 = vadd.f32 %v3200, %v3459
      %v3553 = vadd.f32 %v3201, %v3464
      %v3554 = vadd.f32 %v3202, %v3467
      %v3555 = vadd.f32 %v3203, %v3472
      %v3556 = vadd.f32 %v3204, %v3475
      %v3557 = vadd.f32 %v3205, %v3480
      %v3558 = vadd.f32 %v3206, %v3483
      %v3559 = vadd.f32 %v3207, %v3488
      %v3560 = vadd.f32 %v3208, %v3491
      %v3561 = vadd.f32 %v3209, %v3496
      %v3562 = vadd.f32 %v3210, %v3499
      %v3563 = vadd.f32 %v3211, %v3504
      %v3564 = vadd.f32 %v3212, %v3507
      %v3565 = vadd.f32 %v3213, %v3512
      %v3566 = vadd.f32 %v3214, %v3515
      %v3567 = vadd.f32 %v3215, %v3520
      %v3568 = vadd.f32 %v3216, %v3523
      %v3569 = vadd.f32 %v3217, %v3528
      %v3570 = vadd.f32 %v3218, %v3531
      %v3571 = vadd.f32 %v3219, %v3536
      %v3572 = vadd.f32 %v3220, %v3539
      %v3573 = vadd.f32 %v3221, %v3544
      %v3574 = vld [vmem:[%s166 + $0xc] sm:$0xc]
      %v3575 = vld [vmem:[%s166 + $0x10] sm:$0xf]
      %v3576 = vld [vmem:[%s166 + $0x14] sm:$0xf]
      %v3577 = vld [vmem:[%s166 + $0x18] sm:$0xf]
      %v3578 = vld [vmem:[%s166 + $0x1c] sm:$0xf]
      %v3579 = vld [vmem:[%s166 + $0x20] sm:$0xf]
      %v3580 = vld [vmem:[%s166 + $0x24] sm:$0xf]
      %v3581 = vld [vmem:[%s166 + $0x28] sm:$0xf]
      %v3582 = vld [vmem:[%s166 + $0x2c] sm:$0xf]
      %v3583 = vld [vmem:[%s166 + $0x30] sm:$0xf]
      %v3584 = vld [vmem:[%s166 + $0x34] sm:$0xf]
      %v3585 = vld [vmem:[%s166 + $0x38] sm:$0xf]
      %v3586 = vld [vmem:[%s166 + $0x3c] sm:$0xf]
      %v3587 = vld [vmem:[%s166 + $0x40] sm:$0xf]
      %v3588 = vld [vmem:[%s166 + $0x44] sm:$0xf]
      %v3589 = vld [vmem:[%s166 + $0x48] sm:$0xf]
      %v3590 = vld [vmem:[%s166 + $0x4c] sm:$0xf]
      %v3591 = vld [vmem:[%s166 + $0x50] sm:$0xf]
      %v3592 = vld [vmem:[%s166 + $0x54] sm:$0xf]
      %v3593 = vld [vmem:[%s166 + $0x58] sm:$0xf]
      %v3594 = vld [vmem:[%s166 + $0x5c] sm:$0xf]
      %v3595 = vld [vmem:[%s166 + $0x60] sm:$0xf]
      %v3596 = vld [vmem:[%s166 + $0x64] sm:$0xf]
      %v3597 = vld [vmem:[%s166 + $0x68] sm:$0xf]
      %v3598 = vld [vmem:[%s166 + $0x6c] sm:$0xf]
      %v3599 = vld [vmem:[%s166 + $0x70] sm:$0x1]
      %s3600 = scalar_lea.vmem %s1, 704
      %v3601 = vld [vmem:[%s3600] sm:$0xf]
      %v3602 = vld [vmem:[%s3600 + $0x4] sm:$0xf]
      %v3603 = vld [vmem:[%s3600 + $0x8] sm:$0xf]
      %v3604 = vld [vmem:[%s3600 + $0xc] sm:$0xf]
      %v3605 = vld [vmem:[%s3600 + $0x10] sm:$0xf]
      %v3606 = vld [vmem:[%s3600 + $0x14] sm:$0xf]
      %v3607 = vld [vmem:[%s3600 + $0x18] sm:$0xf]
      %v3608 = vld [vmem:[%s3600 + $0x1c] sm:$0xf]
      %v3609 = vld [vmem:[%s3600 + $0x20] sm:$0xf]
      %v3610 = vld [vmem:[%s3600 + $0x24] sm:$0xf]
      %v3611 = vld [vmem:[%s3600 + $0x28] sm:$0xf]
      %v3612 = vld [vmem:[%s3600 + $0x2c] sm:$0xf]
      %v3613 = vld [vmem:[%s3600 + $0x30] sm:$0xf]
      %v3614 = vld [vmem:[%s3600 + $0x34] sm:$0xf]
      %v3615 = vld [vmem:[%s3600 + $0x38] sm:$0xf]
      %v3616 = vld [vmem:[%s3600 + $0x3c] sm:$0xf]
      %v3643 = vunpack.c.l.b16 %v3574
      %v3644 = vunpack.c.l.b16 %v3575
      %v3645 = vunpack.c.l.b16 %v3576
      %v3646 = vunpack.c.l.b16 %v3577
      %v3647 = vunpack.c.l.b16 %v3578
      %v3648 = vunpack.c.l.b16 %v3579
      %v3649 = vunpack.c.l.b16 %v3580
      %v3650 = vunpack.c.l.b16 %v3581
      %v3651 = vunpack.c.l.b16 %v3582
      %v3652 = vunpack.c.l.b16 %v3583
      %v3653 = vunpack.c.l.b16 %v3584
      %v3654 = vunpack.c.l.b16 %v3585
      %v3655 = vunpack.c.l.b16 %v3586
      %v3656 = vunpack.c.l.b16 %v3587
      %v3657 = vunpack.c.l.b16 %v3588
      %v3658 = vunpack.c.l.b16 %v3589
      %v3659 = vunpack.c.l.b16 %v3590
      %v3660 = vunpack.c.l.b16 %v3591
      %v3661 = vunpack.c.l.b16 %v3592
      %v3662 = vunpack.c.l.b16 %v3593
      %v3663 = vunpack.c.l.b16 %v3594
      %v3664 = vunpack.c.l.b16 %v3595
      %v3665 = vunpack.c.l.b16 %v3596
      %v3666 = vunpack.c.l.b16 %v3597
      %v3667 = vunpack.c.l.b16 %v3598
      %v3668 = vunpack.c.l.b16 %v3599
      %v3669 = vpack.c.b16 %v3644, %v3643
      %v3670 = vpack.c.b16 %v3646, %v3645
      %v3671 = vpack.c.b16 %v3648, %v3647
      %v3672 = vpack.c.b16 %v3650, %v3649
      %v3673 = vpack.c.b16 %v3652, %v3651
      %v3674 = vpack.c.b16 %v3654, %v3653
      %v3675 = vpack.c.b16 %v3656, %v3655
      %v3676 = vpack.c.b16 %v3658, %v3657
      %v3677 = vpack.c.b16 %v3660, %v3659
      %v3678 = vpack.c.b16 %v3662, %v3661
      %v3679 = vpack.c.b16 %v3664, %v3663
      %v3680 = vpack.c.b16 %v3666, %v3665
      %v3681 = vpack.c.b16 %v3668, %v3667
      %vm3682 = vsmask.f32 5376
      %v3684 = vshrl.u32 %v3669, 16
      %v3686 = vrot.slane %v3684, 2
      %v3687 = vshll.u32 %v3669, 16
      %v3689 = vrot.slane %v3687, 3
      %v3690 = vor.u32 %v3686, %v3689
      %v3692 = vshrl.u32 %v3670, 16
      %v3694 = vrot.slane %v3692, 2
      %v3695 = vshll.u32 %v3670, 16
      %v3697 = vrot.slane %v3695, 3
      %v3698 = vor.u32 %v3694, %v3697
      %v3699 = vsel %vm3682, %v3690, %v3698
      %v3701 = vshrl.u32 %v3671, 16
      %v3703 = vrot.slane %v3701, 2
      %v3704 = vshll.u32 %v3671, 16
      %v3706 = vrot.slane %v3704, 3
      %v3707 = vor.u32 %v3703, %v3706
      %v3708 = vsel %vm3682, %v3698, %v3707
      %v3710 = vshrl.u32 %v3672, 16
      %v3712 = vrot.slane %v3710, 2
      %v3713 = vshll.u32 %v3672, 16
      %v3715 = vrot.slane %v3713, 3
      %v3716 = vor.u32 %v3712, %v3715
      %v3717 = vsel %vm3682, %v3707, %v3716
      %v3719 = vshrl.u32 %v3673, 16
      %v3721 = vrot.slane %v3719, 2
      %v3722 = vshll.u32 %v3673, 16
      %v3724 = vrot.slane %v3722, 3
      %v3725 = vor.u32 %v3721, %v3724
      %v3726 = vsel %vm3682, %v3716, %v3725
      %v3728 = vshrl.u32 %v3674, 16
      %v3730 = vrot.slane %v3728, 2
      %v3731 = vshll.u32 %v3674, 16
      %v3733 = vrot.slane %v3731, 3
      %v3734 = vor.u32 %v3730, %v3733
      %v3735 = vsel %vm3682, %v3725, %v3734
      %v3737 = vshrl.u32 %v3675, 16
      %v3739 = vrot.slane %v3737, 2
      %v3740 = vshll.u32 %v3675, 16
      %v3742 = vrot.slane %v3740, 3
      %v3743 = vor.u32 %v3739, %v3742
      %v3744 = vsel %vm3682, %v3734, %v3743
      %v3746 = vshrl.u32 %v3676, 16
      %v3748 = vrot.slane %v3746, 2
      %v3749 = vshll.u32 %v3676, 16
      %v3751 = vrot.slane %v3749, 3
      %v3752 = vor.u32 %v3748, %v3751
      %v3753 = vsel %vm3682, %v3743, %v3752
      %v3755 = vshrl.u32 %v3677, 16
      %v3757 = vrot.slane %v3755, 2
      %v3758 = vshll.u32 %v3677, 16
      %v3760 = vrot.slane %v3758, 3
      %v3761 = vor.u32 %v3757, %v3760
      %v3762 = vsel %vm3682, %v3752, %v3761
      %v3764 = vshrl.u32 %v3678, 16
      %v3766 = vrot.slane %v3764, 2
      %v3767 = vshll.u32 %v3678, 16
      %v3769 = vrot.slane %v3767, 3
      %v3770 = vor.u32 %v3766, %v3769
      %v3771 = vsel %vm3682, %v3761, %v3770
      %v3773 = vshrl.u32 %v3679, 16
      %v3775 = vrot.slane %v3773, 2
      %v3776 = vshll.u32 %v3679, 16
      %v3778 = vrot.slane %v3776, 3
      %v3779 = vor.u32 %v3775, %v3778
      %v3780 = vsel %vm3682, %v3770, %v3779
      %v3782 = vshrl.u32 %v3680, 16
      %v3784 = vrot.slane %v3782, 2
      %v3785 = vshll.u32 %v3680, 16
      %v3787 = vrot.slane %v3785, 3
      %v3788 = vor.u32 %v3784, %v3787
      %v3789 = vsel %vm3682, %v3779, %v3788
      %v3791 = vshrl.u32 %v3681, 16
      %v3793 = vrot.slane %v3791, 2
      %v3794 = vshll.u32 %v3681, 16
      %v3796 = vrot.slane %v3794, 3
      %v3797 = vor.u32 %v3793, %v3796
      %v3798 = vsel %vm3682, %v3788, %v3797
      %v3828 = vunpack.c.l.b16 %v3601
      %v3829 = vunpack.c.l.b16 %v3602
      %v3830 = vunpack.c.l.b16 %v3603
      %v3831 = vunpack.c.l.b16 %v3604
      %v3832 = vunpack.c.l.b16 %v3605
      %v3833 = vunpack.c.l.b16 %v3606
      %v3834 = vunpack.c.l.b16 %v3607
      %v3835 = vunpack.c.l.b16 %v3608
      %v3836 = vunpack.c.l.b16 %v3609
      %v3837 = vunpack.c.l.b16 %v3610
      %v3838 = vunpack.c.l.b16 %v3611
      %v3839 = vunpack.c.l.b16 %v3612
      %v3840 = vunpack.c.l.b16 %v3613
      %v3841 = vunpack.c.l.b16 %v3614
      %v3842 = vunpack.c.l.b16 %v3615
      %v3843 = vunpack.c.l.b16 %v3616
      %v3844 = vpack.c.b16 %v3829, %v3828
      %v3845 = vpack.c.b16 %v3831, %v3830
      %v3846 = vpack.c.b16 %v3833, %v3832
      %v3847 = vpack.c.b16 %v3835, %v3834
      %v3848 = vpack.c.b16 %v3837, %v3836
      %v3849 = vpack.c.b16 %v3839, %v3838
      %v3850 = vpack.c.b16 %v3841, %v3840
      %v3851 = vpack.c.b16 %v3843, %v3842
      %3860 = vmatprep.subr.bf16.mxu0 0
      %3861 = vmatpush1.bf16.msra.mxu0 %v3844
      %3862 = vmatprep.subr.bf16.mxu0 0
      %3863 = vmatpush1.bf16.msra.mxu0 %v3845
      %3864 = vmatprep.subr.bf16.mxu0 0
      %3865 = vmatpush1.bf16.msra.mxu0 %v3846
      %3866 = vmatprep.subr.bf16.mxu0 0
      %3867 = vmatpush1.bf16.msra.mxu0 %v3847
      %3868 = vmatprep.subr.bf16.mxu0 0
      %3869 = vmatpush1.bf16.msra.mxu0 %v3848
      %3870 = vmatprep.subr.bf16.mxu0 0
      %3871 = vmatpush1.bf16.msra.mxu0 %v3849
      %3872 = vmatprep.subr.bf16.mxu0 0
      %3873 = vmatpush1.bf16.msra.mxu0 %v3850
      %3874 = vmatprep.subr.bf16.mxu0 0
      %3875 = vmatpush1.bf16.msra.mxu0 %v3851
      %3876 = vmatprep.subr.bf16.mxu0 0
      %3877 = vmatpush1.bf16.msra.mxu0 0
      %3878 = vmatprep.subr.bf16.mxu0 0
      %3879 = vmatpush1.bf16.msra.mxu0 0
      %3880 = vmatprep.subr.bf16.mxu0 0
      %3881 = vmatpush1.bf16.msra.mxu0 0
      %3882 = vmatprep.subr.bf16.mxu0 0
      %3883 = vmatpush1.bf16.msra.mxu0 0
      %3884 = vmatprep.subr.bf16.mxu0 0
      %3885 = vmatpush1.bf16.msra.mxu0 0
      %3886 = vmatprep.subr.bf16.mxu0 0
      %3887 = vmatpush1.bf16.msra.mxu0 0
      %3888 = vmatprep.subr.bf16.mxu0 0
      %3889 = vmatpush1.bf16.msra.mxu0 0
      %3890 = vmatprep.subr.bf16.mxu0 0
      %3891 = vmatpush1.bf16.msra.mxu0 0
      %3892 = vmatprep.mubr.bf16.mxu0 0
      %3893 = vmatmul.mubr.bf16.gmra.mrb[0].mxu0 %v3699
      %v3894 = vpop.f32.mrb[0].mxu0
      %v3895 = vadd.f32 0.0, %v3894
      %v3896 = vpop.f32.mrb[0].mxu0
      %v3897 = vpop.f32.mrb[0].mxu0
      %v3898 = vadd.f32 0.0, %v3897
      %v3899 = vpop.f32.mrb[0].mxu0
      %3900 = vmatprep.mubr.bf16.mxu0 0
      %3901 = vmatmul.mubr.bf16.gmra.mrb[0].mxu0 %v3708
      %v3902 = vpop.f32.mrb[0].mxu0
      %v3903 = vadd.f32 0.0, %v3902
      %v3904 = vpop.f32.mrb[0].mxu0
      %v3905 = vpop.f32.mrb[0].mxu0
      %v3906 = vadd.f32 0.0, %v3905
      %v3907 = vpop.f32.mrb[0].mxu0
      %3908 = vmatprep.mubr.bf16.mxu0 0
      %3909 = vmatmul.mubr.bf16.gmra.mrb[0].mxu0 %v3717
      %v3910 = vpop.f32.mrb[0].mxu0
      %v3911 = vadd.f32 0.0, %v3910
      %v3912 = vpop.f32.mrb[0].mxu0
      %v3913 = vpop.f32.mrb[0].mxu0
      %v3914 = vadd.f32 0.0, %v3913
      %v3915 = vpop.f32.mrb[0].mxu0
      %3916 = vmatprep.mubr.bf16.mxu0 0
      %3917 = vmatmul.mubr.bf16.gmra.mrb[0].mxu0 %v3726
      %v3918 = vpop.f32.mrb[0].mxu0
      %v3919 = vadd.f32 0.0, %v3918
      %v3920 = vpop.f32.mrb[0].mxu0
      %v3921 = vpop.f32.mrb[0].mxu0
      %v3922 = vadd.f32 0.0, %v3921
      %v3923 = vpop.f32.mrb[0].mxu0
      %3924 = vmatprep.mubr.bf16.mxu0 0
      %3925 = vmatmul.mubr.bf16.gmra.mrb[0].mxu0 %v3735
      %v3926 = vpop.f32.mrb[0].mxu0
      %v3927 = vadd.f32 0.0, %v3926
      %v3928 = vpop.f32.mrb[0].mxu0
      %v3929 = vpop.f32.mrb[0].mxu0
      %v3930 = vadd.f32 0.0, %v3929
      %v3931 = vpop.f32.mrb[0].mxu0
      %3932 = vmatprep.mubr.bf16.mxu0 0
      %3933 = vmatmul.mubr.bf16.gmra.mrb[0].mxu0 %v3744
      %v3934 = vpop.f32.mrb[0].mxu0
      %v3935 = vadd.f32 0.0, %v3934
      %v3936 = vpop.f32.mrb[0].mxu0
      %v3937 = vpop.f32.mrb[0].mxu0
      %v3938 = vadd.f32 0.0, %v3937
      %v3939 = vpop.f32.mrb[0].mxu0
      %3940 = vmatprep.mubr.bf16.mxu0 0
      %3941 = vmatmul.mubr.bf16.gmra.mrb[0].mxu0 %v3753
      %v3942 = vpop.f32.mrb[0].mxu0
      %v3943 = vadd.f32 0.0, %v3942
      %v3944 = vpop.f32.mrb[0].mxu0
      %v3945 = vpop.f32.mrb[0].mxu0
      %v3946 = vadd.f32 0.0, %v3945
      %v3947 = vpop.f32.mrb[0].mxu0
      %3948 = vmatprep.mubr.bf16.mxu0 0
      %3949 = vmatmul.mubr.bf16.gmra.mrb[0].mxu0 %v3762
      %v3950 = vpop.f32.mrb[0].mxu0
      %v3951 = vadd.f32 0.0, %v3950
      %v3952 = vpop.f32.mrb[0].mxu0
      %v3953 = vpop.f32.mrb[0].mxu0
      %v3954 = vadd.f32 0.0, %v3953
      %v3955 = vpop.f32.mrb[0].mxu0
      %3956 = vmatprep.mubr.bf16.mxu0 0
      %3957 = vmatmul.mubr.bf16.gmra.mrb[0].mxu0 %v3771
      %v3958 = vpop.f32.mrb[0].mxu0
      %v3959 = vadd.f32 0.0, %v3958
      %v3960 = vpop.f32.mrb[0].mxu0
      %v3961 = vpop.f32.mrb[0].mxu0
      %v3962 = vadd.f32 0.0, %v3961
      %v3963 = vpop.f32.mrb[0].mxu0
      %3964 = vmatprep.mubr.bf16.mxu0 0
      %3965 = vmatmul.mubr.bf16.gmra.mrb[0].mxu0 %v3780
      %v3966 = vpop.f32.mrb[0].mxu0
      %v3967 = vadd.f32 0.0, %v3966
      %v3968 = vpop.f32.mrb[0].mxu0
      %v3969 = vpop.f32.mrb[0].mxu0
      %v3970 = vadd.f32 0.0, %v3969
      %v3971 = vpop.f32.mrb[0].mxu0
      %3972 = vmatprep.mubr.bf16.mxu0 0
      %3973 = vmatmul.mubr.bf16.gmra.mrb[0].mxu0 %v3789
      %v3974 = vpop.f32.mrb[0].mxu0
      %v3975 = vadd.f32 0.0, %v3974
      %v3976 = vpop.f32.mrb[0].mxu0
      %v3977 = vpop.f32.mrb[0].mxu0
      %v3978 = vadd.f32 0.0, %v3977
      %v3979 = vpop.f32.mrb[0].mxu0
      %3980 = vmatprep.mubr.bf16.mxu0 0
      %3981 = vmatmul.mubr.bf16.gmra.mrb[0].mxu0 %v3798
      %v3982 = vpop.f32.mrb[0].mxu0
      %v3983 = vadd.f32 0.0, %v3982
      %v3984 = vpop.f32.mrb[0].mxu0
      %v3985 = vpop.f32.mrb[0].mxu0
      %v3986 = vadd.f32 0.0, %v3985
      %v3987 = vpop.f32.mrb[0].mxu0
      %3988 = vmatprep.mubr.bf16.mxu0 0
      %3989 = vmatmul.mubr.bf16.gmra.mrb[0].mxu0 %v3797
      %v3990 = vpop.f32.mrb[0].mxu0
      %v3991 = vadd.f32 0.0, %v3990
      %v3992 = vpop.f32.mrb[0].mxu0
      %v3993 = vpop.f32.mrb[0].mxu0
      %v3994 = vpop.f32.mrb[0].mxu0
      %3995 = vdwg.mxu0
      %v3996 = vadd.f32 %v3549, %v3895
      %v3997 = vadd.f32 %v3550, %v3898
      %v3998 = vadd.f32 %v3551, %v3903
      %v3999 = vadd.f32 %v3552, %v3906
      %v4000 = vadd.f32 %v3553, %v3911
      %v4001 = vadd.f32 %v3554, %v3914
      %v4002 = vadd.f32 %v3555, %v3919
      %v4003 = vadd.f32 %v3556, %v3922
      %v4004 = vadd.f32 %v3557, %v3927
      %v4005 = vadd.f32 %v3558, %v3930
      %v4006 = vadd.f32 %v3559, %v3935
      %v4007 = vadd.f32 %v3560, %v3938
      %v4008 = vadd.f32 %v3561, %v3943
      %v4009 = vadd.f32 %v3562, %v3946
      %v4010 = vadd.f32 %v3563, %v3951
      %v4011 = vadd.f32 %v3564, %v3954
      %v4012 = vadd.f32 %v3565, %v3959
      %v4013 = vadd.f32 %v3566, %v3962
      %v4014 = vadd.f32 %v3567, %v3967
      %v4015 = vadd.f32 %v3568, %v3970
      %v4016 = vadd.f32 %v3569, %v3975
      %v4017 = vadd.f32 %v3570, %v3978
      %v4018 = vadd.f32 %v3571, %v3983
      %v4019 = vadd.f32 %v3572, %v3986
      %v4020 = vadd.f32 %v3573, %v3991
      %v4021 = vld [vmem:[%s166 + $0xc] sm:$0x8]
      %s4022 = scalar_lea.vmem %s1, 768
      %v4023 = vld [vmem:[%s4022] sm:$0xf]
      %v4024 = vld [vmem:[%s4022 + $0x4] sm:$0xf]
      %v4025 = vld [vmem:[%s4022 + $0x8] sm:$0xf]
      %v4026 = vld [vmem:[%s4022 + $0xc] sm:$0xf]
      %v4027 = vld [vmem:[%s4022 + $0x10] sm:$0xf]
      %v4028 = vld [vmem:[%s4022 + $0x14] sm:$0xf]
      %v4029 = vld [vmem:[%s4022 + $0x18] sm:$0xf]
      %v4030 = vld [vmem:[%s4022 + $0x1c] sm:$0xf]
      %v4031 = vld [vmem:[%s4022 + $0x20] sm:$0xf]
      %v4032 = vld [vmem:[%s4022 + $0x24] sm:$0xf]
      %v4033 = vld [vmem:[%s4022 + $0x28] sm:$0xf]
      %v4034 = vld [vmem:[%s4022 + $0x2c] sm:$0xf]
      %v4035 = vld [vmem:[%s4022 + $0x30] sm:$0xf]
      %v4036 = vld [vmem:[%s4022 + $0x34] sm:$0xf]
      %v4037 = vld [vmem:[%s4022 + $0x38] sm:$0xf]
      %v4038 = vld [vmem:[%s4022 + $0x3c] sm:$0xf]
      %v4040 = vunpack.c.l.b16 %v4021
      %v4041 = vpack.c.b16 %v3644, %v4040
      %v4042 = vrot.slane %v4041, 3
      %v4043 = vrot.slane %v3670, 3
      %v4044 = vsel %vm1748, %v4042, %v4043
      %v4045 = vrot.slane %v3671, 3
      %v4046 = vsel %vm1748, %v4043, %v4045
      %v4047 = vrot.slane %v3672, 3
      %v4048 = vsel %vm1748, %v4045, %v4047
      %v4049 = vrot.slane %v3673, 3
      %v4050 = vsel %vm1748, %v4047, %v4049
      %v4051 = vrot.slane %v3674, 3
      %v4052 = vsel %vm1748, %v4049, %v4051
      %v4053 = vrot.slane %v3675, 3
      %v4054 = vsel %vm1748, %v4051, %v4053
      %v4055 = vrot.slane %v3676, 3
      %v4056 = vsel %vm1748, %v4053, %v4055
      %v4057 = vrot.slane %v3677, 3
      %v4058 = vsel %vm1748, %v4055, %v4057
      %v4059 = vrot.slane %v3678, 3
      %v4060 = vsel %vm1748, %v4057, %v4059
      %v4061 = vrot.slane %v3679, 3
      %v4062 = vsel %vm1748, %v4059, %v4061
      %v4063 = vrot.slane %v3680, 3
      %v4064 = vsel %vm1748, %v4061, %v4063
      %v4065 = vrot.slane %v3681, 3
      %v4066 = vsel %vm1748, %v4063, %v4065
      %v4096 = vunpack.c.l.b16 %v4023
      %v4097 = vunpack.c.l.b16 %v4024
      %v4098 = vunpack.c.l.b16 %v4025
      %v4099 = vunpack.c.l.b16 %v4026
      %v4100 = vunpack.c.l.b16 %v4027
      %v4101 = vunpack.c.l.b16 %v4028
      %v4102 = vunpack.c.l.b16 %v4029
      %v4103 = vunpack.c.l.b16 %v4030
      %v4104 = vunpack.c.l.b16 %v4031
      %v4105 = vunpack.c.l.b16 %v4032
      %v4106 = vunpack.c.l.b16 %v4033
      %v4107 = vunpack.c.l.b16 %v4034
      %v4108 = vunpack.c.l.b16 %v4035
      %v4109 = vunpack.c.l.b16 %v4036
      %v4110 = vunpack.c.l.b16 %v4037
      %v4111 = vunpack.c.l.b16 %v4038
      %v4112 = vpack.c.b16 %v4097, %v4096
      %v4113 = vpack.c.b16 %v4099, %v4098
      %v4114 = vpack.c.b16 %v4101, %v4100
      %v4115 = vpack.c.b16 %v4103, %v4102
      %v4116 = vpack.c.b16 %v4105, %v4104
      %v4117 = vpack.c.b16 %v4107, %v4106
      %v4118 = vpack.c.b16 %v4109, %v4108
      %v4119 = vpack.c.b16 %v4111, %v4110
      %4128 = vmatprep.subr.bf16.mxu0 0
      %4129 = vmatpush1.bf16.msra.mxu0 %v4112
      %4130 = vmatprep.subr.bf16.mxu0 0
      %4131 = vmatpush1.bf16.msra.mxu0 %v4113
      %4132 = vmatprep.subr.bf16.mxu0 0
      %4133 = vmatpush1.bf16.msra.mxu0 %v4114
      %4134 = vmatprep.subr.bf16.mxu0 0
      %4135 = vmatpush1.bf16.msra.mxu0 %v4115
      %4136 = vmatprep.subr.bf16.mxu0 0
      %4137 = vmatpush1.bf16.msra.mxu0 %v4116
      %4138 = vmatprep.subr.bf16.mxu0 0
      %4139 = vmatpush1.bf16.msra.mxu0 %v4117
      %4140 = vmatprep.subr.bf16.mxu0 0
      %4141 = vmatpush1.bf16.msra.mxu0 %v4118
      %4142 = vmatprep.subr.bf16.mxu0 0
      %4143 = vmatpush1.bf16.msra.mxu0 %v4119
      %4144 = vmatprep.subr.bf16.mxu0 0
      %4145 = vmatpush1.bf16.msra.mxu0 0
      %4146 = vmatprep.subr.bf16.mxu0 0
      %4147 = vmatpush1.bf16.msra.mxu0 0
      %4148 = vmatprep.subr.bf16.mxu0 0
      %4149 = vmatpush1.bf16.msra.mxu0 0
      %4150 = vmatprep.subr.bf16.mxu0 0
      %4151 = vmatpush1.bf16.msra.mxu0 0
      %4152 = vmatprep.subr.bf16.mxu0 0
      %4153 = vmatpush1.bf16.msra.mxu0 0
      %4154 = vmatprep.subr.bf16.mxu0 0
      %4155 = vmatpush1.bf16.msra.mxu0 0
      %4156 = vmatprep.subr.bf16.mxu0 0
      %4157 = vmatpush1.bf16.msra.mxu0 0
      %4158 = vmatprep.subr.bf16.mxu0 0
      %4159 = vmatpush1.bf16.msra.mxu0 0
      %4160 = vmatprep.mubr.bf16.mxu0 0
      %4161 = vmatmul.mubr.bf16.gmra.mrb[0].mxu0 %v4044
      %v4162 = vpop.f32.mrb[0].mxu0
      %v4163 = vadd.f32 0.0, %v4162
      %v4164 = vpop.f32.mrb[0].mxu0
      %v4165 = vpop.f32.mrb[0].mxu0
      %v4166 = vadd.f32 0.0, %v4165
      %v4167 = vpop.f32.mrb[0].mxu0
      %4168 = vmatprep.mubr.bf16.mxu0 0
      %4169 = vmatmul.mubr.bf16.gmra.mrb[0].mxu0 %v4046
      %v4170 = vpop.f32.mrb[0].mxu0
      %v4171 = vadd.f32 0.0, %v4170
      %v4172 = vpop.f32.mrb[0].mxu0
      %v4173 = vpop.f32.mrb[0].mxu0
      %v4174 = vadd.f32 0.0, %v4173
      %v4175 = vpop.f32.mrb[0].mxu0
      %4176 = vmatprep.mubr.bf16.mxu0 0
      %4177 = vmatmul.mubr.bf16.gmra.mrb[0].mxu0 %v4048
      %v4178 = vpop.f32.mrb[0].mxu0
      %v4179 = vadd.f32 0.0, %v4178
      %v4180 = vpop.f32.mrb[0].mxu0
      %v4181 = vpop.f32.mrb[0].mxu0
      %v4182 = vadd.f32 0.0, %v4181
      %v4183 = vpop.f32.mrb[0].mxu0
      %4184 = vmatprep.mubr.bf16.mxu0 0
      %4185 = vmatmul.mubr.bf16.gmra.mrb[0].mxu0 %v4050
      %v4186 = vpop.f32.mrb[0].mxu0
      %v4187 = vadd.f32 0.0, %v4186
      %v4188 = vpop.f32.mrb[0].mxu0
      %v4189 = vpop.f32.mrb[0].mxu0
      %v4190 = vadd.f32 0.0, %v4189
      %v4191 = vpop.f32.mrb[0].mxu0
      %4192 = vmatprep.mubr.bf16.mxu0 0
      %4193 = vmatmul.mubr.bf16.gmra.mrb[0].mxu0 %v4052
      %v4194 = vpop.f32.mrb[0].mxu0
      %v4195 = vadd.f32 0.0, %v4194
      %v4196 = vpop.f32.mrb[0].mxu0
      %v4197 = vpop.f32.mrb[0].mxu0
      %v4198 = vadd.f32 0.0, %v4197
      %v4199 = vpop.f32.mrb[0].mxu0
      %4200 = vmatprep.mubr.bf16.mxu0 0
      %4201 = vmatmul.mubr.bf16.gmra.mrb[0].mxu0 %v4054
      %v4202 = vpop.f32.mrb[0].mxu0
      %v4203 = vadd.f32 0.0, %v4202
      %v4204 = vpop.f32.mrb[0].mxu0
      %v4205 = vpop.f32.mrb[0].mxu0
      %v4206 = vadd.f32 0.0, %v4205
      %v4207 = vpop.f32.mrb[0].mxu0
      %4208 = vmatprep.mubr.bf16.mxu0 0
      %4209 = vmatmul.mubr.bf16.gmra.mrb[0].mxu0 %v4056
      %v4210 = vpop.f32.mrb[0].mxu0
      %v4211 = vadd.f32 0.0, %v4210
      %v4212 = vpop.f32.mrb[0].mxu0
      %v4213 = vpop.f32.mrb[0].mxu0
      %v4214 = vadd.f32 0.0, %v4213
      %v4215 = vpop.f32.mrb[0].mxu0
      %4216 = vmatprep.mubr.bf16.mxu0 0
      %4217 = vmatmul.mubr.bf16.gmra.mrb[0].mxu0 %v4058
      %v4218 = vpop.f32.mrb[0].mxu0
      %v4219 = vadd.f32 0.0, %v4218
      %v4220 = vpop.f32.mrb[0].mxu0
      %v4221 = vpop.f32.mrb[0].mxu0
      %v4222 = vadd.f32 0.0, %v4221
      %v4223 = vpop.f32.mrb[0].mxu0
      %4224 = vmatprep.mubr.bf16.mxu0 0
      %4225 = vmatmul.mubr.bf16.gmra.mrb[0].mxu0 %v4060
      %v4226 = vpop.f32.mrb[0].mxu0
      %v4227 = vadd.f32 0.0, %v4226
      %v4228 = vpop.f32.mrb[0].mxu0
      %v4229 = vpop.f32.mrb[0].mxu0
      %v4230 = vadd.f32 0.0, %v4229
      %v4231 = vpop.f32.mrb[0].mxu0
      %4232 = vmatprep.mubr.bf16.mxu0 0
      %4233 = vmatmul.mubr.bf16.gmra.mrb[0].mxu0 %v4062
      %v4234 = vpop.f32.mrb[0].mxu0
      %v4235 = vadd.f32 0.0, %v4234
      %v4236 = vpop.f32.mrb[0].mxu0
      %v4237 = vpop.f32.mrb[0].mxu0
      %v4238 = vadd.f32 0.0, %v4237
      %v4239 = vpop.f32.mrb[0].mxu0
      %4240 = vmatprep.mubr.bf16.mxu0 0
      %4241 = vmatmul.mubr.bf16.gmra.mrb[0].mxu0 %v4064
      %v4242 = vpop.f32.mrb[0].mxu0
      %v4243 = vadd.f32 0.0, %v4242
      %v4244 = vpop.f32.mrb[0].mxu0
      %v4245 = vpop.f32.mrb[0].mxu0
      %v4246 = vadd.f32 0.0, %v4245
      %v4247 = vpop.f32.mrb[0].mxu0
      %4248 = vmatprep.mubr.bf16.mxu0 0
      %4249 = vmatmul.mubr.bf16.gmra.mrb[0].mxu0 %v4066
      %v4250 = vpop.f32.mrb[0].mxu0
      %v4251 = vadd.f32 0.0, %v4250
      %v4252 = vpop.f32.mrb[0].mxu0
      %v4253 = vpop.f32.mrb[0].mxu0
      %v4254 = vadd.f32 0.0, %v4253
      %v4255 = vpop.f32.mrb[0].mxu0
      %4256 = vmatprep.mubr.bf16.mxu0 0
      %4257 = vmatmul.mubr.bf16.gmra.mrb[0].mxu0 %v4065
      %v4258 = vpop.f32.mrb[0].mxu0
      %v4259 = vadd.f32 0.0, %v4258
      %v4260 = vpop.f32.mrb[0].mxu0
      %v4261 = vpop.f32.mrb[0].mxu0
      %v4262 = vpop.f32.mrb[0].mxu0
      %4263 = vdwg.mxu0
      %v4264 = vadd.f32 %v3996, %v4163
      %v4265 = vadd.f32 %v3997, %v4166
      %v4266 = vadd.f32 %v3998, %v4171
      %v4267 = vadd.f32 %v3999, %v4174
      %v4268 = vadd.f32 %v4000, %v4179
      %v4269 = vadd.f32 %v4001, %v4182
      %v4270 = vadd.f32 %v4002, %v4187
      %v4271 = vadd.f32 %v4003, %v4190
      %v4272 = vadd.f32 %v4004, %v4195
      %v4273 = vadd.f32 %v4005, %v4198
      %v4274 = vadd.f32 %v4006, %v4203
      %v4275 = vadd.f32 %v4007, %v4206
      %v4276 = vadd.f32 %v4008, %v4211
      %v4277 = vadd.f32 %v4009, %v4214
      %v4278 = vadd.f32 %v4010, %v4219
      %v4279 = vadd.f32 %v4011, %v4222
      %v4280 = vadd.f32 %v4012, %v4227
      %v4281 = vadd.f32 %v4013, %v4230
      %v4282 = vadd.f32 %v4014, %v4235
      %v4283 = vadd.f32 %v4015, %v4238
      %v4284 = vadd.f32 %v4016, %v4243
      %v4285 = vadd.f32 %v4017, %v4246
      %v4286 = vadd.f32 %v4018, %v4251
      %v4287 = vadd.f32 %v4019, %v4254
      %v4288 = vadd.f32 %v4020, %v4259
      %v4289 = vld [vmem:[%s166 + $0x70] sm:$0x3]
      %s4290 = scalar_lea.vmem %s1, 832
      %v4291 = vld [vmem:[%s4290] sm:$0xf]
      %v4292 = vld [vmem:[%s4290 + $0x4] sm:$0xf]
      %v4293 = vld [vmem:[%s4290 + $0x8] sm:$0xf]
      %v4294 = vld [vmem:[%s4290 + $0xc] sm:$0xf]
      %v4295 = vld [vmem:[%s4290 + $0x10] sm:$0xf]
      %v4296 = vld [vmem:[%s4290 + $0x14] sm:$0xf]
      %v4297 = vld [vmem:[%s4290 + $0x18] sm:$0xf]
      %v4298 = vld [vmem:[%s4290 + $0x1c] sm:$0xf]
      %v4299 = vld [vmem:[%s4290 + $0x20] sm:$0xf]
      %v4300 = vld [vmem:[%s4290 + $0x24] sm:$0xf]
      %v4301 = vld [vmem:[%s4290 + $0x28] sm:$0xf]
      %v4302 = vld [vmem:[%s4290 + $0x2c] sm:$0xf]
      %v4303 = vld [vmem:[%s4290 + $0x30] sm:$0xf]
      %v4304 = vld [vmem:[%s4290 + $0x34] sm:$0xf]
      %v4305 = vld [vmem:[%s4290 + $0x38] sm:$0xf]
      %v4306 = vld [vmem:[%s4290 + $0x3c] sm:$0xf]
      %v4308 = vunpack.c.l.b16 %v4289
      %v4309 = vpack.c.b16 %v4308, %v3667
      %v4311 = vshrl.u32 %v4041, 16
      %v4313 = vrot.slane %v4311, 3
      %v4314 = vshll.u32 %v4041, 16
      %v4316 = vrot.slane %v4314, 4
      %v4317 = vor.u32 %v4313, %v4316
      %v4318 = vrot.slane %v3692, 3
      %v4319 = vrot.slane %v3695, 4
      %v4320 = vor.u32 %v4318, %v4319
      %v4321 = vsel %vm2017, %v4317, %v4320
      %v4322 = vrot.slane %v3701, 3
      %v4323 = vrot.slane %v3704, 4
      %v4324 = vor.u32 %v4322, %v4323
      %v4325 = vsel %vm2017, %v4320, %v4324
      %v4326 = vrot.slane %v3710, 3
      %v4327 = vrot.slane %v3713, 4
      %v4328 = vor.u32 %v4326, %v4327
      %v4329 = vsel %vm2017, %v4324, %v4328
      %v4330 = vrot.slane %v3719, 3
      %v4331 = vrot.slane %v3722, 4
      %v4332 = vor.u32 %v4330, %v4331
      %v4333 = vsel %vm2017, %v4328, %v4332
      %v4334 = vrot.slane %v3728, 3
      %v4335 = vrot.slane %v3731, 4
      %v4336 = vor.u32 %v4334, %v4335
      %v4337 = vsel %vm2017, %v4332, %v4336
      %v4338 = vrot.slane %v3737, 3
      %v4339 = vrot.slane %v3740, 4
      %v4340 = vor.u32 %v4338, %v4339
      %v4341 = vsel %vm2017, %v4336, %v4340
      %v4342 = vrot.slane %v3746, 3
      %v4343 = vrot.slane %v3749, 4
      %v4344 = vor.u32 %v4342, %v4343
      %v4345 = vsel %vm2017, %v4340, %v4344
      %v4346 = vrot.slane %v3755, 3
      %v4347 = vrot.slane %v3758, 4
      %v4348 = vor.u32 %v4346, %v4347
      %v4349 = vsel %vm2017, %v4344, %v4348
      %v4350 = vrot.slane %v3764, 3
      %v4351 = vrot.slane %v3767, 4
      %v4352 = vor.u32 %v4350, %v4351
      %v4353 = vsel %vm2017, %v4348, %v4352
      %v4354 = vrot.slane %v3773, 3
      %v4355 = vrot.slane %v3776, 4
      %v4356 = vor.u32 %v4354, %v4355
      %v4357 = vsel %vm2017, %v4352, %v4356
      %v4358 = vrot.slane %v3782, 3
      %v4359 = vrot.slane %v3785, 4
      %v4360 = vor.u32 %v4358, %v4359
      %v4361 = vsel %vm2017, %v4356, %v4360
      %v4363 = vshrl.u32 %v4309, 16
      %v4365 = vrot.slane %v4363, 3
      %v4366 = vshll.u32 %v4309, 16
      %v4368 = vrot.slane %v4366, 4
      %v4369 = vor.u32 %v4365, %v4368
      %v4370 = vsel %vm2017, %v4360, %v4369
      %v4400 = vunpack.c.l.b16 %v4291
      %v4401 = vunpack.c.l.b16 %v4292
      %v4402 = vunpack.c.l.b16 %v4293
      %v4403 = vunpack.c.l.b16 %v4294
      %v4404 = vunpack.c.l.b16 %v4295
      %v4405 = vunpack.c.l.b16 %v4296
      %v4406 = vunpack.c.l.b16 %v4297
      %v4407 = vunpack.c.l.b16 %v4298
      %v4408 = vunpack.c.l.b16 %v4299
      %v4409 = vunpack.c.l.b16 %v4300
      %v4410 = vunpack.c.l.b16 %v4301
      %v4411 = vunpack.c.l.b16 %v4302
      %v4412 = vunpack.c.l.b16 %v4303
      %v4413 = vunpack.c.l.b16 %v4304
      %v4414 = vunpack.c.l.b16 %v4305
      %v4415 = vunpack.c.l.b16 %v4306
      %v4416 = vpack.c.b16 %v4401, %v4400
      %v4417 = vpack.c.b16 %v4403, %v4402
      %v4418 = vpack.c.b16 %v4405, %v4404
      %v4419 = vpack.c.b16 %v4407, %v4406
      %v4420 = vpack.c.b16 %v4409, %v4408
      %v4421 = vpack.c.b16 %v4411, %v4410
      %v4422 = vpack.c.b16 %v4413, %v4412
      %v4423 = vpack.c.b16 %v4415, %v4414
      %4432 = vmatprep.subr.bf16.mxu0 0
      %4433 = vmatpush1.bf16.msra.mxu0 %v4416
      %4434 = vmatprep.subr.bf16.mxu0 0
      %4435 = vmatpush1.bf16.msra.mxu0 %v4417
      %4436 = vmatprep.subr.bf16.mxu0 0
      %4437 = vmatpush1.bf16.msra.mxu0 %v4418
      %4438 = vmatprep.subr.bf16.mxu0 0
      %4439 = vmatpush1.bf16.msra.mxu0 %v4419
      %4440 = vmatprep.subr.bf16.mxu0 0
      %4441 = vmatpush1.bf16.msra.mxu0 %v4420
      %4442 = vmatprep.subr.bf16.mxu0 0
      %4443 = vmatpush1.bf16.msra.mxu0 %v4421
      %4444 = vmatprep.subr.bf16.mxu0 0
      %4445 = vmatpush1.bf16.msra.mxu0 %v4422
      %4446 = vmatprep.subr.bf16.mxu0 0
      %4447 = vmatpush1.bf16.msra.mxu0 %v4423
      %4448 = vmatprep.subr.bf16.mxu0 0
      %4449 = vmatpush1.bf16.msra.mxu0 0
      %4450 = vmatprep.subr.bf16.mxu0 0
      %4451 = vmatpush1.bf16.msra.mxu0 0
      %4452 = vmatprep.subr.bf16.mxu0 0
      %4453 = vmatpush1.bf16.msra.mxu0 0
      %4454 = vmatprep.subr.bf16.mxu0 0
      %4455 = vmatpush1.bf16.msra.mxu0 0
      %4456 = vmatprep.subr.bf16.mxu0 0
      %4457 = vmatpush1.bf16.msra.mxu0 0
      %4458 = vmatprep.subr.bf16.mxu0 0
      %4459 = vmatpush1.bf16.msra.mxu0 0
      %4460 = vmatprep.subr.bf16.mxu0 0
      %4461 = vmatpush1.bf16.msra.mxu0 0
      %4462 = vmatprep.subr.bf16.mxu0 0
      %4463 = vmatpush1.bf16.msra.mxu0 0
      %4464 = vmatprep.mubr.bf16.mxu0 0
      %4465 = vmatmul.mubr.bf16.gmra.mrb[0].mxu0 %v4321
      %v4466 = vpop.f32.mrb[0].mxu0
      %v4467 = vadd.f32 0.0, %v4466
      %v4468 = vpop.f32.mrb[0].mxu0
      %v4469 = vpop.f32.mrb[0].mxu0
      %v4470 = vadd.f32 0.0, %v4469
      %v4471 = vpop.f32.mrb[0].mxu0
      %4472 = vmatprep.mubr.bf16.mxu0 0
      %4473 = vmatmul.mubr.bf16.gmra.mrb[0].mxu0 %v4325
      %v4474 = vpop.f32.mrb[0].mxu0
      %v4475 = vadd.f32 0.0, %v4474
      %v4476 = vpop.f32.mrb[0].mxu0
      %v4477 = vpop.f32.mrb[0].mxu0
      %v4478 = vadd.f32 0.0, %v4477
      %v4479 = vpop.f32.mrb[0].mxu0
      %4480 = vmatprep.mubr.bf16.mxu0 0
      %4481 = vmatmul.mubr.bf16.gmra.mrb[0].mxu0 %v4329
      %v4482 = vpop.f32.mrb[0].mxu0
      %v4483 = vadd.f32 0.0, %v4482
      %v4484 = vpop.f32.mrb[0].mxu0
      %v4485 = vpop.f32.mrb[0].mxu0
      %v4486 = vadd.f32 0.0, %v4485
      %v4487 = vpop.f32.mrb[0].mxu0
      %4488 = vmatprep.mubr.bf16.mxu0 0
      %4489 = vmatmul.mubr.bf16.gmra.mrb[0].mxu0 %v4333
      %v4490 = vpop.f32.mrb[0].mxu0
      %v4491 = vadd.f32 0.0, %v4490
      %v4492 = vpop.f32.mrb[0].mxu0
      %v4493 = vpop.f32.mrb[0].mxu0
      %v4494 = vadd.f32 0.0, %v4493
      %v4495 = vpop.f32.mrb[0].mxu0
      %4496 = vmatprep.mubr.bf16.mxu0 0
      %4497 = vmatmul.mubr.bf16.gmra.mrb[0].mxu0 %v4337
      %v4498 = vpop.f32.mrb[0].mxu0
      %v4499 = vadd.f32 0.0, %v4498
      %v4500 = vpop.f32.mrb[0].mxu0
      %v4501 = vpop.f32.mrb[0].mxu0
      %v4502 = vadd.f32 0.0, %v4501
      %v4503 = vpop.f32.mrb[0].mxu0
      %4504 = vmatprep.mubr.bf16.mxu0 0
      %4505 = vmatmul.mubr.bf16.gmra.mrb[0].mxu0 %v4341
      %v4506 = vpop.f32.mrb[0].mxu0
      %v4507 = vadd.f32 0.0, %v4506
      %v4508 = vpop.f32.mrb[0].mxu0
      %v4509 = vpop.f32.mrb[0].mxu0
      %v4510 = vadd.f32 0.0, %v4509
      %v4511 = vpop.f32.mrb[0].mxu0
      %4512 = vmatprep.mubr.bf16.mxu0 0
      %4513 = vmatmul.mubr.bf16.gmra.mrb[0].mxu0 %v4345
      %v4514 = vpop.f32.mrb[0].mxu0
      %v4515 = vadd.f32 0.0, %v4514
      %v4516 = vpop.f32.mrb[0].mxu0
      %v4517 = vpop.f32.mrb[0].mxu0
      %v4518 = vadd.f32 0.0, %v4517
      %v4519 = vpop.f32.mrb[0].mxu0
      %4520 = vmatprep.mubr.bf16.mxu0 0
      %4521 = vmatmul.mubr.bf16.gmra.mrb[0].mxu0 %v4349
      %v4522 = vpop.f32.mrb[0].mxu0
      %v4523 = vadd.f32 0.0, %v4522
      %v4524 = vpop.f32.mrb[0].mxu0
      %v4525 = vpop.f32.mrb[0].mxu0
      %v4526 = vadd.f32 0.0, %v4525
      %v4527 = vpop.f32.mrb[0].mxu0
      %4528 = vmatprep.mubr.bf16.mxu0 0
      %4529 = vmatmul.mubr.bf16.gmra.mrb[0].mxu0 %v4353
      %v4530 = vpop.f32.mrb[0].mxu0
      %v4531 = vadd.f32 0.0, %v4530
      %v4532 = vpop.f32.mrb[0].mxu0
      %v4533 = vpop.f32.mrb[0].mxu0
      %v4534 = vadd.f32 0.0, %v4533
      %v4535 = vpop.f32.mrb[0].mxu0
      %4536 = vmatprep.mubr.bf16.mxu0 0
      %4537 = vmatmul.mubr.bf16.gmra.mrb[0].mxu0 %v4357
      %v4538 = vpop.f32.mrb[0].mxu0
      %v4539 = vadd.f32 0.0, %v4538
      %v4540 = vpop.f32.mrb[0].mxu0
      %v4541 = vpop.f32.mrb[0].mxu0
      %v4542 = vadd.f32 0.0, %v4541
      %v4543 = vpop.f32.mrb[0].mxu0
      %4544 = vmatprep.mubr.bf16.mxu0 0
      %4545 = vmatmul.mubr.bf16.gmra.mrb[0].mxu0 %v4361
      %v4546 = vpop.f32.mrb[0].mxu0
      %v4547 = vadd.f32 0.0, %v4546
      %v4548 = vpop.f32.mrb[0].mxu0
      %v4549 = vpop.f32.mrb[0].mxu0
      %v4550 = vadd.f32 0.0, %v4549
      %v4551 = vpop.f32.mrb[0].mxu0
      %4552 = vmatprep.mubr.bf16.mxu0 0
      %4553 = vmatmul.mubr.bf16.gmra.mrb[0].mxu0 %v4370
      %v4554 = vpop.f32.mrb[0].mxu0
      %v4555 = vadd.f32 0.0, %v4554
      %v4556 = vpop.f32.mrb[0].mxu0
      %v4557 = vpop.f32.mrb[0].mxu0
      %v4558 = vadd.f32 0.0, %v4557
      %v4559 = vpop.f32.mrb[0].mxu0
      %4560 = vmatprep.mubr.bf16.mxu0 0
      %4561 = vmatmul.mubr.bf16.gmra.mrb[0].mxu0 %v4369
      %v4562 = vpop.f32.mrb[0].mxu0
      %v4563 = vadd.f32 0.0, %v4562
      %v4564 = vpop.f32.mrb[0].mxu0
      %v4565 = vpop.f32.mrb[0].mxu0
      %v4566 = vpop.f32.mrb[0].mxu0
      %4567 = vdwg.mxu0
      %v4568 = vadd.f32 %v4264, %v4467
      %v4569 = vadd.f32 %v4265, %v4470
      %v4570 = vadd.f32 %v4266, %v4475
      %v4571 = vadd.f32 %v4267, %v4478
      %v4572 = vadd.f32 %v4268, %v4483
      %v4573 = vadd.f32 %v4269, %v4486
      %v4574 = vadd.f32 %v4270, %v4491
      %v4575 = vadd.f32 %v4271, %v4494
      %v4576 = vadd.f32 %v4272, %v4499
      %v4577 = vadd.f32 %v4273, %v4502
      %v4578 = vadd.f32 %v4274, %v4507
      %v4579 = vadd.f32 %v4275, %v4510
      %v4580 = vadd.f32 %v4276, %v4515
      %v4581 = vadd.f32 %v4277, %v4518
      %v4582 = vadd.f32 %v4278, %v4523
      %v4583 = vadd.f32 %v4279, %v4526
      %v4584 = vadd.f32 %v4280, %v4531
      %v4585 = vadd.f32 %v4281, %v4534
      %v4586 = vadd.f32 %v4282, %v4539
      %v4587 = vadd.f32 %v4283, %v4542
      %v4588 = vadd.f32 %v4284, %v4547
      %v4589 = vadd.f32 %v4285, %v4550
      %v4590 = vadd.f32 %v4286, %v4555
      %v4591 = vadd.f32 %v4287, %v4558
      %v4592 = vadd.f32 %v4288, %v4563
      %s4593 = scalar_lea.vmem %s1, 896
      %v4594 = vld [vmem:[%s4593] sm:$0xf]
      %v4595 = vld [vmem:[%s4593 + $0x4] sm:$0xf]
      %v4596 = vld [vmem:[%s4593 + $0x8] sm:$0xf]
      %v4597 = vld [vmem:[%s4593 + $0xc] sm:$0xf]
      %v4598 = vld [vmem:[%s4593 + $0x10] sm:$0xf]
      %v4599 = vld [vmem:[%s4593 + $0x14] sm:$0xf]
      %v4600 = vld [vmem:[%s4593 + $0x18] sm:$0xf]
      %v4601 = vld [vmem:[%s4593 + $0x1c] sm:$0xf]
      %v4602 = vld [vmem:[%s4593 + $0x20] sm:$0xf]
      %v4603 = vld [vmem:[%s4593 + $0x24] sm:$0xf]
      %v4604 = vld [vmem:[%s4593 + $0x28] sm:$0xf]
      %v4605 = vld [vmem:[%s4593 + $0x2c] sm:$0xf]
      %v4606 = vld [vmem:[%s4593 + $0x30] sm:$0xf]
      %v4607 = vld [vmem:[%s4593 + $0x34] sm:$0xf]
      %v4608 = vld [vmem:[%s4593 + $0x38] sm:$0xf]
      %v4609 = vld [vmem:[%s4593 + $0x3c] sm:$0xf]
      %v4610 = vpack.c.b16 %v3645, %v3644
      %v4611 = vpack.c.b16 %v3647, %v3646
      %v4612 = vpack.c.b16 %v3649, %v3648
      %v4613 = vpack.c.b16 %v3651, %v3650
      %v4614 = vpack.c.b16 %v3653, %v3652
      %v4615 = vpack.c.b16 %v3655, %v3654
      %v4616 = vpack.c.b16 %v3657, %v3656
      %v4617 = vpack.c.b16 %v3659, %v3658
      %v4618 = vpack.c.b16 %v3661, %v3660
      %v4619 = vpack.c.b16 %v3663, %v3662
      %v4620 = vpack.c.b16 %v3665, %v3664
      %v4621 = vpack.c.b16 %v3667, %v3666
      %v4622 = vpack.c.b16 %v4308, %v4308
      %v4652 = vunpack.c.l.b16 %v4594
      %v4653 = vunpack.c.l.b16 %v4595
      %v4654 = vunpack.c.l.b16 %v4596
      %v4655 = vunpack.c.l.b16 %v4597
      %v4656 = vunpack.c.l.b16 %v4598
      %v4657 = vunpack.c.l.b16 %v4599
      %v4658 = vunpack.c.l.b16 %v4600
      %v4659 = vunpack.c.l.b16 %v4601
      %v4660 = vunpack.c.l.b16 %v4602
      %v4661 = vunpack.c.l.b16 %v4603
      %v4662 = vunpack.c.l.b16 %v4604
      %v4663 = vunpack.c.l.b16 %v4605
      %v4664 = vunpack.c.l.b16 %v4606
      %v4665 = vunpack.c.l.b16 %v4607
      %v4666 = vunpack.c.l.b16 %v4608
      %v4667 = vunpack.c.l.b16 %v4609
      %v4668 = vpack.c.b16 %v4653, %v4652
      %v4669 = vpack.c.b16 %v4655, %v4654
      %v4670 = vpack.c.b16 %v4657, %v4656
      %v4671 = vpack.c.b16 %v4659, %v4658
      %v4672 = vpack.c.b16 %v4661, %v4660
      %v4673 = vpack.c.b16 %v4663, %v4662
      %v4674 = vpack.c.b16 %v4665, %v4664
      %v4675 = vpack.c.b16 %v4667, %v4666
      %4684 = vmatprep.subr.bf16.mxu0 0
      %4685 = vmatpush1.bf16.msra.mxu0 %v4668
      %4686 = vmatprep.subr.bf16.mxu0 0
      %4687 = vmatpush1.bf16.msra.mxu0 %v4669
      %4688 = vmatprep.subr.bf16.mxu0 0
      %4689 = vmatpush1.bf16.msra.mxu0 %v4670
      %4690 = vmatprep.subr.bf16.mxu0 0
      %4691 = vmatpush1.bf16.msra.mxu0 %v4671
      %4692 = vmatprep.subr.bf16.mxu0 0
      %4693 = vmatpush1.bf16.msra.mxu0 %v4672
      %4694 = vmatprep.subr.bf16.mxu0 0
      %4695 = vmatpush1.bf16.msra.mxu0 %v4673
      %4696 = vmatprep.subr.bf16.mxu0 0
      %4697 = vmatpush1.bf16.msra.mxu0 %v4674
      %4698 = vmatprep.subr.bf16.mxu0 0
      %4699 = vmatpush1.bf16.msra.mxu0 %v4675
      %4700 = vmatprep.subr.bf16.mxu0 0
      %4701 = vmatpush1.bf16.msra.mxu0 0
      %4702 = vmatprep.subr.bf16.mxu0 0
      %4703 = vmatpush1.bf16.msra.mxu0 0
      %4704 = vmatprep.subr.bf16.mxu0 0
      %4705 = vmatpush1.bf16.msra.mxu0 0
      %4706 = vmatprep.subr.bf16.mxu0 0
      %4707 = vmatpush1.bf16.msra.mxu0 0
      %4708 = vmatprep.subr.bf16.mxu0 0
      %4709 = vmatpush1.bf16.msra.mxu0 0
      %4710 = vmatprep.subr.bf16.mxu0 0
      %4711 = vmatpush1.bf16.msra.mxu0 0
      %4712 = vmatprep.subr.bf16.mxu0 0
      %4713 = vmatpush1.bf16.msra.mxu0 0
      %4714 = vmatprep.subr.bf16.mxu0 0
      %4715 = vmatpush1.bf16.msra.mxu0 0
      %4716 = vmatprep.mubr.bf16.mxu0 0
      %4717 = vmatmul.mubr.bf16.gmra.mrb[0].mxu0 %v4610
      %v4718 = vpop.f32.mrb[0].mxu0
      %v4719 = vadd.f32 0.0, %v4718
      %v4720 = vpop.f32.mrb[0].mxu0
      %v4721 = vpop.f32.mrb[0].mxu0
      %v4722 = vadd.f32 0.0, %v4721
      %v4723 = vpop.f32.mrb[0].mxu0
      %4724 = vmatprep.mubr.bf16.mxu0 0
      %4725 = vmatmul.mubr.bf16.gmra.mrb[0].mxu0 %v4611
      %v4726 = vpop.f32.mrb[0].mxu0
      %v4727 = vadd.f32 0.0, %v4726
      %v4728 = vpop.f32.mrb[0].mxu0
      %v4729 = vpop.f32.mrb[0].mxu0
      %v4730 = vadd.f32 0.0, %v4729
      %v4731 = vpop.f32.mrb[0].mxu0
      %4732 = vmatprep.mubr.bf16.mxu0 0
      %4733 = vmatmul.mubr.bf16.gmra.mrb[0].mxu0 %v4612
      %v4734 = vpop.f32.mrb[0].mxu0
      %v4735 = vadd.f32 0.0, %v4734
      %v4736 = vpop.f32.mrb[0].mxu0
      %v4737 = vpop.f32.mrb[0].mxu0
      %v4738 = vadd.f32 0.0, %v4737
      %v4739 = vpop.f32.mrb[0].mxu0
      %4740 = vmatprep.mubr.bf16.mxu0 0
      %4741 = vmatmul.mubr.bf16.gmra.mrb[0].mxu0 %v4613
      %v4742 = vpop.f32.mrb[0].mxu0
      %v4743 = vadd.f32 0.0, %v4742
      %v4744 = vpop.f32.mrb[0].mxu0
      %v4745 = vpop.f32.mrb[0].mxu0
      %v4746 = vadd.f32 0.0, %v4745
      %v4747 = vpop.f32.mrb[0].mxu0
      %4748 = vmatprep.mubr.bf16.mxu0 0
      %4749 = vmatmul.mubr.bf16.gmra.mrb[0].mxu0 %v4614
      %v4750 = vpop.f32.mrb[0].mxu0
      %v4751 = vadd.f32 0.0, %v4750
      %v4752 = vpop.f32.mrb[0].mxu0
      %v4753 = vpop.f32.mrb[0].mxu0
      %v4754 = vadd.f32 0.0, %v4753
      %v4755 = vpop.f32.mrb[0].mxu0
      %4756 = vmatprep.mubr.bf16.mxu0 0
      %4757 = vmatmul.mubr.bf16.gmra.mrb[0].mxu0 %v4615
      %v4758 = vpop.f32.mrb[0].mxu0
      %v4759 = vadd.f32 0.0, %v4758
      %v4760 = vpop.f32.mrb[0].mxu0
      %v4761 = vpop.f32.mrb[0].mxu0
      %v4762 = vadd.f32 0.0, %v4761
      %v4763 = vpop.f32.mrb[0].mxu0
      %4764 = vmatprep.mubr.bf16.mxu0 0
      %4765 = vmatmul.mubr.bf16.gmra.mrb[0].mxu0 %v4616
      %v4766 = vpop.f32.mrb[0].mxu0
      %v4767 = vadd.f32 0.0, %v4766
      %v4768 = vpop.f32.mrb[0].mxu0
      %v4769 = vpop.f32.mrb[0].mxu0
      %v4770 = vadd.f32 0.0, %v4769
      %v4771 = vpop.f32.mrb[0].mxu0
      %4772 = vmatprep.mubr.bf16.mxu0 0
      %4773 = vmatmul.mubr.bf16.gmra.mrb[0].mxu0 %v4617
      %v4774 = vpop.f32.mrb[0].mxu0
      %v4775 = vadd.f32 0.0, %v4774
      %v4776 = vpop.f32.mrb[0].mxu0
      %v4777 = vpop.f32.mrb[0].mxu0
      %v4778 = vadd.f32 0.0, %v4777
      %v4779 = vpop.f32.mrb[0].mxu0
      %4780 = vmatprep.mubr.bf16.mxu0 0
      %4781 = vmatmul.mubr.bf16.gmra.mrb[0].mxu0 %v4618
      %v4782 = vpop.f32.mrb[0].mxu0
      %v4783 = vadd.f32 0.0, %v4782
      %v4784 = vpop.f32.mrb[0].mxu0
      %v4785 = vpop.f32.mrb[0].mxu0
      %v4786 = vadd.f32 0.0, %v4785
      %v4787 = vpop.f32.mrb[0].mxu0
      %4788 = vmatprep.mubr.bf16.mxu0 0
      %4789 = vmatmul.mubr.bf16.gmra.mrb[0].mxu0 %v4619
      %v4790 = vpop.f32.mrb[0].mxu0
      %v4791 = vadd.f32 0.0, %v4790
      %v4792 = vpop.f32.mrb[0].mxu0
      %v4793 = vpop.f32.mrb[0].mxu0
      %v4794 = vadd.f32 0.0, %v4793
      %v4795 = vpop.f32.mrb[0].mxu0
      %4796 = vmatprep.mubr.bf16.mxu0 0
      %4797 = vmatmul.mubr.bf16.gmra.mrb[0].mxu0 %v4620
      %v4798 = vpop.f32.mrb[0].mxu0
      %v4799 = vadd.f32 0.0, %v4798
      %v4800 = vpop.f32.mrb[0].mxu0
      %v4801 = vpop.f32.mrb[0].mxu0
      %v4802 = vadd.f32 0.0, %v4801
      %v4803 = vpop.f32.mrb[0].mxu0
      %4804 = vmatprep.mubr.bf16.mxu0 0
      %4805 = vmatmul.mubr.bf16.gmra.mrb[0].mxu0 %v4621
      %v4806 = vpop.f32.mrb[0].mxu0
      %v4807 = vadd.f32 0.0, %v4806
      %v4808 = vpop.f32.mrb[0].mxu0
      %v4809 = vpop.f32.mrb[0].mxu0
      %v4810 = vadd.f32 0.0, %v4809
      %v4811 = vpop.f32.mrb[0].mxu0
      %4812 = vmatprep.mubr.bf16.mxu0 0
      %4813 = vmatmul.mubr.bf16.gmra.mrb[0].mxu0 %v4622
      %v4814 = vpop.f32.mrb[0].mxu0
      %v4815 = vadd.f32 0.0, %v4814
      %v4816 = vpop.f32.mrb[0].mxu0
      %v4817 = vpop.f32.mrb[0].mxu0
      %v4818 = vpop.f32.mrb[0].mxu0
      %4819 = vdwg.mxu0
      %v4820 = vadd.f32 %v4568, %v4719
      %v4821 = vadd.f32 %v4569, %v4722
      %v4822 = vadd.f32 %v4570, %v4727
      %v4823 = vadd.f32 %v4571, %v4730
      %v4824 = vadd.f32 %v4572, %v4735
      %v4825 = vadd.f32 %v4573, %v4738
      %v4826 = vadd.f32 %v4574, %v4743
      %v4827 = vadd.f32 %v4575, %v4746
      %v4828 = vadd.f32 %v4576, %v4751
      %v4829 = vadd.f32 %v4577, %v4754
      %v4830 = vadd.f32 %v4578, %v4759
      %v4831 = vadd.f32 %v4579, %v4762
      %v4832 = vadd.f32 %v4580, %v4767
      %v4833 = vadd.f32 %v4581, %v4770
      %v4834 = vadd.f32 %v4582, %v4775
      %v4835 = vadd.f32 %v4583, %v4778
      %v4836 = vadd.f32 %v4584, %v4783
      %v4837 = vadd.f32 %v4585, %v4786
      %v4838 = vadd.f32 %v4586, %v4791
      %v4839 = vadd.f32 %v4587, %v4794
      %v4840 = vadd.f32 %v4588, %v4799
      %v4841 = vadd.f32 %v4589, %v4802
      %v4842 = vadd.f32 %v4590, %v4807
      %v4843 = vadd.f32 %v4591, %v4810
      %v4844 = vadd.f32 %v4592, %v4815
      %v4845 = vld [vmem:[%s166 + $0x14] sm:$0xe]
      %v4846 = vld [vmem:[%s166 + $0x18] sm:$0xf]
      %v4847 = vld [vmem:[%s166 + $0x1c] sm:$0xf]
      %v4848 = vld [vmem:[%s166 + $0x20] sm:$0xf]
      %v4849 = vld [vmem:[%s166 + $0x24] sm:$0xf]
      %v4850 = vld [vmem:[%s166 + $0x28] sm:$0xf]
      %v4851 = vld [vmem:[%s166 + $0x2c] sm:$0xf]
      %v4852 = vld [vmem:[%s166 + $0x30] sm:$0xf]
      %v4853 = vld [vmem:[%s166 + $0x34] sm:$0xf]
      %v4854 = vld [vmem:[%s166 + $0x38] sm:$0xf]
      %v4855 = vld [vmem:[%s166 + $0x3c] sm:$0xf]
      %v4856 = vld [vmem:[%s166 + $0x40] sm:$0xf]
      %v4857 = vld [vmem:[%s166 + $0x44] sm:$0xf]
      %v4858 = vld [vmem:[%s166 + $0x48] sm:$0xf]
      %v4859 = vld [vmem:[%s166 + $0x4c] sm:$0xf]
      %v4860 = vld [vmem:[%s166 + $0x50] sm:$0xf]
      %v4861 = vld [vmem:[%s166 + $0x54] sm:$0xf]
      %v4862 = vld [vmem:[%s166 + $0x58] sm:$0xf]
      %v4863 = vld [vmem:[%s166 + $0x5c] sm:$0xf]
      %v4864 = vld [vmem:[%s166 + $0x60] sm:$0xf]
      %v4865 = vld [vmem:[%s166 + $0x64] sm:$0xf]
      %v4866 = vld [vmem:[%s166 + $0x68] sm:$0xf]
      %v4867 = vld [vmem:[%s166 + $0x6c] sm:$0xf]
      %v4868 = vld [vmem:[%s166 + $0x70] sm:$0xf]
      %v4869 = vld [vmem:[%s166 + $0x74] sm:$0x7]
      %s4870 = scalar_lea.vmem %s1, 960
      %v4871 = vld [vmem:[%s4870] sm:$0xf]
      %v4872 = vld [vmem:[%s4870 + $0x4] sm:$0xf]
      %v4873 = vld [vmem:[%s4870 + $0x8] sm:$0xf]
      %v4874 = vld [vmem:[%s4870 + $0xc] sm:$0xf]
      %v4875 = vld [vmem:[%s4870 + $0x10] sm:$0xf]
      %v4876 = vld [vmem:[%s4870 + $0x14] sm:$0xf]
      %v4877 = vld [vmem:[%s4870 + $0x18] sm:$0xf]
      %v4878 = vld [vmem:[%s4870 + $0x1c] sm:$0xf]
      %v4879 = vld [vmem:[%s4870 + $0x20] sm:$0xf]
      %v4880 = vld [vmem:[%s4870 + $0x24] sm:$0xf]
      %v4881 = vld [vmem:[%s4870 + $0x28] sm:$0xf]
      %v4882 = vld [vmem:[%s4870 + $0x2c] sm:$0xf]
      %v4883 = vld [vmem:[%s4870 + $0x30] sm:$0xf]
      %v4884 = vld [vmem:[%s4870 + $0x34] sm:$0xf]
      %v4885 = vld [vmem:[%s4870 + $0x38] sm:$0xf]
      %v4886 = vld [vmem:[%s4870 + $0x3c] sm:$0xf]
      %v4912 = vunpack.c.l.b16 %v4845
      %v4913 = vunpack.c.l.b16 %v4846
      %v4914 = vunpack.c.l.b16 %v4847
      %v4915 = vunpack.c.l.b16 %v4848
      %v4916 = vunpack.c.l.b16 %v4849
      %v4917 = vunpack.c.l.b16 %v4850
      %v4918 = vunpack.c.l.b16 %v4851
      %v4919 = vunpack.c.l.b16 %v4852
      %v4920 = vunpack.c.l.b16 %v4853
      %v4921 = vunpack.c.l.b16 %v4854
      %v4922 = vunpack.c.l.b16 %v4855
      %v4923 = vunpack.c.l.b16 %v4856
      %v4924 = vunpack.c.l.b16 %v4857
      %v4925 = vunpack.c.l.b16 %v4858
      %v4926 = vunpack.c.l.b16 %v4859
      %v4927 = vunpack.c.l.b16 %v4860
      %v4928 = vunpack.c.l.b16 %v4861
      %v4929 = vunpack.c.l.b16 %v4862
      %v4930 = vunpack.c.l.b16 %v4863
      %v4931 = vunpack.c.l.b16 %v4864
      %v4932 = vunpack.c.l.b16 %v4865
      %v4933 = vunpack.c.l.b16 %v4866
      %v4934 = vunpack.c.l.b16 %v4867
      %v4935 = vunpack.c.l.b16 %v4868
      %v4936 = vunpack.c.l.b16 %v4869
      %v4937 = vpack.c.b16 %v4913, %v4912
      %v4938 = vpack.c.b16 %v4915, %v4914
      %v4939 = vpack.c.b16 %v4917, %v4916
      %v4940 = vpack.c.b16 %v4919, %v4918
      %v4941 = vpack.c.b16 %v4921, %v4920
      %v4942 = vpack.c.b16 %v4923, %v4922
      %v4943 = vpack.c.b16 %v4925, %v4924
      %v4944 = vpack.c.b16 %v4927, %v4926
      %v4945 = vpack.c.b16 %v4929, %v4928
      %v4946 = vpack.c.b16 %v4931, %v4930
      %v4947 = vpack.c.b16 %v4933, %v4932
      %v4948 = vpack.c.b16 %v4935, %v4934
      %v4949 = vpack.c.b16 %v4936, %v4936
      %v4950 = vrot.slane %v4937, 1
      %v4951 = vrot.slane %v4938, 1
      %v4952 = vsel %vm818, %v4950, %v4951
      %v4953 = vrot.slane %v4939, 1
      %v4954 = vsel %vm818, %v4951, %v4953
      %v4955 = vrot.slane %v4940, 1
      %v4956 = vsel %vm818, %v4953, %v4955
      %v4957 = vrot.slane %v4941, 1
      %v4958 = vsel %vm818, %v4955, %v4957
      %v4959 = vrot.slane %v4942, 1
      %v4960 = vsel %vm818, %v4957, %v4959
      %v4961 = vrot.slane %v4943, 1
      %v4962 = vsel %vm818, %v4959, %v4961
      %v4963 = vrot.slane %v4944, 1
      %v4964 = vsel %vm818, %v4961, %v4963
      %v4965 = vrot.slane %v4945, 1
      %v4966 = vsel %vm818, %v4963, %v4965
      %v4967 = vrot.slane %v4946, 1
      %v4968 = vsel %vm818, %v4965, %v4967
      %v4969 = vrot.slane %v4947, 1
      %v4970 = vsel %vm818, %v4967, %v4969
      %v4971 = vrot.slane %v4948, 1
      %v4972 = vsel %vm818, %v4969, %v4971
      %v4973 = vrot.slane %v4949, 1
      %v4974 = vsel %vm818, %v4971, %v4973
      %v5004 = vunpack.c.l.b16 %v4871
      %v5005 = vunpack.c.l.b16 %v4872
      %v5006 = vunpack.c.l.b16 %v4873
      %v5007 = vunpack.c.l.b16 %v4874
      %v5008 = vunpack.c.l.b16 %v4875
      %v5009 = vunpack.c.l.b16 %v4876
      %v5010 = vunpack.c.l.b16 %v4877
      %v5011 = vunpack.c.l.b16 %v4878
      %v5012 = vunpack.c.l.b16 %v4879
      %v5013 = vunpack.c.l.b16 %v4880
      %v5014 = vunpack.c.l.b16 %v4881
      %v5015 = vunpack.c.l.b16 %v4882
      %v5016 = vunpack.c.l.b16 %v4883
      %v5017 = vunpack.c.l.b16 %v4884
      %v5018 = vunpack.c.l.b16 %v4885
      %v5019 = vunpack.c.l.b16 %v4886
      %v5020 = vpack.c.b16 %v5005, %v5004
      %v5021 = vpack.c.b16 %v5007, %v5006
      %v5022 = vpack.c.b16 %v5009, %v5008
      %v5023 = vpack.c.b16 %v5011, %v5010
      %v5024 = vpack.c.b16 %v5013, %v5012
      %v5025 = vpack.c.b16 %v5015, %v5014
      %v5026 = vpack.c.b16 %v5017, %v5016
      %v5027 = vpack.c.b16 %v5019, %v5018
      %5036 = vmatprep.subr.bf16.mxu0 0
      %5037 = vmatpush1.bf16.msra.mxu0 %v5020
      %5038 = vmatprep.subr.bf16.mxu0 0
      %5039 = vmatpush1.bf16.msra.mxu0 %v5021
      %5040 = vmatprep.subr.bf16.mxu0 0
      %5041 = vmatpush1.bf16.msra.mxu0 %v5022
      %5042 = vmatprep.subr.bf16.mxu0 0
      %5043 = vmatpush1.bf16.msra.mxu0 %v5023
      %5044 = vmatprep.subr.bf16.mxu0 0
      %5045 = vmatpush1.bf16.msra.mxu0 %v5024
      %5046 = vmatprep.subr.bf16.mxu0 0
      %5047 = vmatpush1.bf16.msra.mxu0 %v5025
      %5048 = vmatprep.subr.bf16.mxu0 0
      %5049 = vmatpush1.bf16.msra.mxu0 %v5026
      %5050 = vmatprep.subr.bf16.mxu0 0
      %5051 = vmatpush1.bf16.msra.mxu0 %v5027
      %5052 = vmatprep.subr.bf16.mxu0 0
      %5053 = vmatpush1.bf16.msra.mxu0 0
      %5054 = vmatprep.subr.bf16.mxu0 0
      %5055 = vmatpush1.bf16.msra.mxu0 0
      %5056 = vmatprep.subr.bf16.mxu0 0
      %5057 = vmatpush1.bf16.msra.mxu0 0
      %5058 = vmatprep.subr.bf16.mxu0 0
      %5059 = vmatpush1.bf16.msra.mxu0 0
      %5060 = vmatprep.subr.bf16.mxu0 0
      %5061 = vmatpush1.bf16.msra.mxu0 0
      %5062 = vmatprep.subr.bf16.mxu0 0
      %5063 = vmatpush1.bf16.msra.mxu0 0
      %5064 = vmatprep.subr.bf16.mxu0 0
      %5065 = vmatpush1.bf16.msra.mxu0 0
      %5066 = vmatprep.subr.bf16.mxu0 0
      %5067 = vmatpush1.bf16.msra.mxu0 0
      %5068 = vmatprep.mubr.bf16.mxu0 0
      %5069 = vmatmul.mubr.bf16.gmra.mrb[0].mxu0 %v4952
      %v5070 = vpop.f32.mrb[0].mxu0
      %v5071 = vadd.f32 0.0, %v5070
      %v5072 = vpop.f32.mrb[0].mxu0
      %v5073 = vpop.f32.mrb[0].mxu0
      %v5074 = vadd.f32 0.0, %v5073
      %v5075 = vpop.f32.mrb[0].mxu0
      %5076 = vmatprep.mubr.bf16.mxu0 0
      %5077 = vmatmul.mubr.bf16.gmra.mrb[0].mxu0 %v4954
      %v5078 = vpop.f32.mrb[0].mxu0
      %v5079 = vadd.f32 0.0, %v5078
      %v5080 = vpop.f32.mrb[0].mxu0
      %v5081 = vpop.f32.mrb[0].mxu0
      %v5082 = vadd.f32 0.0, %v5081
      %v5083 = vpop.f32.mrb[0].mxu0
      %5084 = vmatprep.mubr.bf16.mxu0 0
      %5085 = vmatmul.mubr.bf16.gmra.mrb[0].mxu0 %v4956
      %v5086 = vpop.f32.mrb[0].mxu0
      %v5087 = vadd.f32 0.0, %v5086
      %v5088 = vpop.f32.mrb[0].mxu0
      %v5089 = vpop.f32.mrb[0].mxu0
      %v5090 = vadd.f32 0.0, %v5089
      %v5091 = vpop.f32.mrb[0].mxu0
      %5092 = vmatprep.mubr.bf16.mxu0 0
      %5093 = vmatmul.mubr.bf16.gmra.mrb[0].mxu0 %v4958
      %v5094 = vpop.f32.mrb[0].mxu0
      %v5095 = vadd.f32 0.0, %v5094
      %v5096 = vpop.f32.mrb[0].mxu0
      %v5097 = vpop.f32.mrb[0].mxu0
      %v5098 = vadd.f32 0.0, %v5097
      %v5099 = vpop.f32.mrb[0].mxu0
      %5100 = vmatprep.mubr.bf16.mxu0 0
      %5101 = vmatmul.mubr.bf16.gmra.mrb[0].mxu0 %v4960
      %v5102 = vpop.f32.mrb[0].mxu0
      %v5103 = vadd.f32 0.0, %v5102
      %v5104 = vpop.f32.mrb[0].mxu0
      %v5105 = vpop.f32.mrb[0].mxu0
      %v5106 = vadd.f32 0.0, %v5105
      %v5107 = vpop.f32.mrb[0].mxu0
      %5108 = vmatprep.mubr.bf16.mxu0 0
      %5109 = vmatmul.mubr.bf16.gmra.mrb[0].mxu0 %v4962
      %v5110 = vpop.f32.mrb[0].mxu0
      %v5111 = vadd.f32 0.0, %v5110
      %v5112 = vpop.f32.mrb[0].mxu0
      %v5113 = vpop.f32.mrb[0].mxu0
      %v5114 = vadd.f32 0.0, %v5113
      %v5115 = vpop.f32.mrb[0].mxu0
      %5116 = vmatprep.mubr.bf16.mxu0 0
      %5117 = vmatmul.mubr.bf16.gmra.mrb[0].mxu0 %v4964
      %v5118 = vpop.f32.mrb[0].mxu0
      %v5119 = vadd.f32 0.0, %v5118
      %v5120 = vpop.f32.mrb[0].mxu0
      %v5121 = vpop.f32.mrb[0].mxu0
      %v5122 = vadd.f32 0.0, %v5121
      %v5123 = vpop.f32.mrb[0].mxu0
      %5124 = vmatprep.mubr.bf16.mxu0 0
      %5125 = vmatmul.mubr.bf16.gmra.mrb[0].mxu0 %v4966
      %v5126 = vpop.f32.mrb[0].mxu0
      %v5127 = vadd.f32 0.0, %v5126
      %v5128 = vpop.f32.mrb[0].mxu0
      %v5129 = vpop.f32.mrb[0].mxu0
      %v5130 = vadd.f32 0.0, %v5129
      %v5131 = vpop.f32.mrb[0].mxu0
      %5132 = vmatprep.mubr.bf16.mxu0 0
      %5133 = vmatmul.mubr.bf16.gmra.mrb[0].mxu0 %v4968
      %v5134 = vpop.f32.mrb[0].mxu0
      %v5135 = vadd.f32 0.0, %v5134
      %v5136 = vpop.f32.mrb[0].mxu0
      %v5137 = vpop.f32.mrb[0].mxu0
      %v5138 = vadd.f32 0.0, %v5137
      %v5139 = vpop.f32.mrb[0].mxu0
      %5140 = vmatprep.mubr.bf16.mxu0 0
      %5141 = vmatmul.mubr.bf16.gmra.mrb[0].mxu0 %v4970
      %v5142 = vpop.f32.mrb[0].mxu0
      %v5143 = vadd.f32 0.0, %v5142
      %v5144 = vpop.f32.mrb[0].mxu0
      %v5145 = vpop.f32.mrb[0].mxu0
      %v5146 = vadd.f32 0.0, %v5145
      %v5147 = vpop.f32.mrb[0].mxu0
      %5148 = vmatprep.mubr.bf16.mxu0 0
      %5149 = vmatmul.mubr.bf16.gmra.mrb[0].mxu0 %v4972
      %v5150 = vpop.f32.mrb[0].mxu0
      %v5151 = vadd.f32 0.0, %v5150
      %v5152 = vpop.f32.mrb[0].mxu0
      %v5153 = vpop.f32.mrb[0].mxu0
      %v5154 = vadd.f32 0.0, %v5153
      %v5155 = vpop.f32.mrb[0].mxu0
      %5156 = vmatprep.mubr.bf16.mxu0 0
      %5157 = vmatmul.mubr.bf16.gmra.mrb[0].mxu0 %v4974
      %v5158 = vpop.f32.mrb[0].mxu0
      %v5159 = vadd.f32 0.0, %v5158
      %v5160 = vpop.f32.mrb[0].mxu0
      %v5161 = vpop.f32.mrb[0].mxu0
      %v5162 = vadd.f32 0.0, %v5161
      %v5163 = vpop.f32.mrb[0].mxu0
      %5164 = vmatprep.mubr.bf16.mxu0 0
      %5165 = vmatmul.mubr.bf16.gmra.mrb[0].mxu0 %v4973
      %v5166 = vpop.f32.mrb[0].mxu0
      %v5167 = vadd.f32 0.0, %v5166
      %v5168 = vpop.f32.mrb[0].mxu0
      %v5169 = vpop.f32.mrb[0].mxu0
      %v5170 = vpop.f32.mrb[0].mxu0
      %5171 = vdwg.mxu0
      %v5172 = vadd.f32 %v4820, %v5071
      %v5173 = vadd.f32 %v4821, %v5074
      %v5174 = vadd.f32 %v4822, %v5079
      %v5175 = vadd.f32 %v4823, %v5082
      %v5176 = vadd.f32 %v4824, %v5087
      %v5177 = vadd.f32 %v4825, %v5090
      %v5178 = vadd.f32 %v4826, %v5095
      %v5179 = vadd.f32 %v4827, %v5098
      %v5180 = vadd.f32 %v4828, %v5103
      %v5181 = vadd.f32 %v4829, %v5106
      %v5182 = vadd.f32 %v4830, %v5111
      %v5183 = vadd.f32 %v4831, %v5114
      %v5184 = vadd.f32 %v4832, %v5119
      %v5185 = vadd.f32 %v4833, %v5122
      %v5186 = vadd.f32 %v4834, %v5127
      %v5187 = vadd.f32 %v4835, %v5130
      %v5188 = vadd.f32 %v4836, %v5135
      %v5189 = vadd.f32 %v4837, %v5138
      %v5190 = vadd.f32 %v4838, %v5143
      %v5191 = vadd.f32 %v4839, %v5146
      %v5192 = vadd.f32 %v4840, %v5151
      %v5193 = vadd.f32 %v4841, %v5154
      %v5194 = vadd.f32 %v4842, %v5159
      %v5195 = vadd.f32 %v4843, %v5162
      %v5196 = vadd.f32 %v4844, %v5167
      %v5197 = vld [vmem:[%s166 + $0x74] sm:$0xf]
      %s5198 = scalar_lea.vmem %s1, 1024
      %v5199 = vld [vmem:[%s5198] sm:$0xf]
      %v5200 = vld [vmem:[%s5198 + $0x4] sm:$0xf]
      %v5201 = vld [vmem:[%s5198 + $0x8] sm:$0xf]
      %v5202 = vld [vmem:[%s5198 + $0xc] sm:$0xf]
      %v5203 = vld [vmem:[%s5198 + $0x10] sm:$0xf]
      %v5204 = vld [vmem:[%s5198 + $0x14] sm:$0xf]
      %v5205 = vld [vmem:[%s5198 + $0x18] sm:$0xf]
      %v5206 = vld [vmem:[%s5198 + $0x1c] sm:$0xf]
      %v5207 = vld [vmem:[%s5198 + $0x20] sm:$0xf]
      %v5208 = vld [vmem:[%s5198 + $0x24] sm:$0xf]
      %v5209 = vld [vmem:[%s5198 + $0x28] sm:$0xf]
      %v5210 = vld [vmem:[%s5198 + $0x2c] sm:$0xf]
      %v5211 = vld [vmem:[%s5198 + $0x30] sm:$0xf]
      %v5212 = vld [vmem:[%s5198 + $0x34] sm:$0xf]
      %v5213 = vld [vmem:[%s5198 + $0x38] sm:$0xf]
      %v5214 = vld [vmem:[%s5198 + $0x3c] sm:$0xf]
      %v5216 = vunpack.c.l.b16 %v5197
      %v5217 = vpack.c.b16 %v5216, %v5216
      %v5219 = vshrl.u32 %v4937, 16
      %v5221 = vrot.slane %v5219, 1
      %v5222 = vshll.u32 %v4937, 16
      %v5224 = vrot.slane %v5222, 2
      %v5225 = vor.u32 %v5221, %v5224
      %v5227 = vshrl.u32 %v4938, 16
      %v5229 = vrot.slane %v5227, 1
      %v5230 = vshll.u32 %v4938, 16
      %v5232 = vrot.slane %v5230, 2
      %v5233 = vor.u32 %v5229, %v5232
      %v5234 = vsel %vm1087, %v5225, %v5233
      %v5236 = vshrl.u32 %v4939, 16
      %v5238 = vrot.slane %v5236, 1
      %v5239 = vshll.u32 %v4939, 16
      %v5241 = vrot.slane %v5239, 2
      %v5242 = vor.u32 %v5238, %v5241
      %v5243 = vsel %vm1087, %v5233, %v5242
      %v5245 = vshrl.u32 %v4940, 16
      %v5247 = vrot.slane %v5245, 1
      %v5248 = vshll.u32 %v4940, 16
      %v5250 = vrot.slane %v5248, 2
      %v5251 = vor.u32 %v5247, %v5250
      %v5252 = vsel %vm1087, %v5242, %v5251
      %v5254 = vshrl.u32 %v4941, 16
      %v5256 = vrot.slane %v5254, 1
      %v5257 = vshll.u32 %v4941, 16
      %v5259 = vrot.slane %v5257, 2
      %v5260 = vor.u32 %v5256, %v5259
      %v5261 = vsel %vm1087, %v5251, %v5260
      %v5263 = vshrl.u32 %v4942, 16
      %v5265 = vrot.slane %v5263, 1
      %v5266 = vshll.u32 %v4942, 16
      %v5268 = vrot.slane %v5266, 2
      %v5269 = vor.u32 %v5265, %v5268
      %v5270 = vsel %vm1087, %v5260, %v5269
      %v5272 = vshrl.u32 %v4943, 16
      %v5274 = vrot.slane %v5272, 1
      %v5275 = vshll.u32 %v4943, 16
      %v5277 = vrot.slane %v5275, 2
      %v5278 = vor.u32 %v5274, %v5277
      %v5279 = vsel %vm1087, %v5269, %v5278
      %v5281 = vshrl.u32 %v4944, 16
      %v5283 = vrot.slane %v5281, 1
      %v5284 = vshll.u32 %v4944, 16
      %v5286 = vrot.slane %v5284, 2
      %v5287 = vor.u32 %v5283, %v5286
      %v5288 = vsel %vm1087, %v5278, %v5287
      %v5290 = vshrl.u32 %v4945, 16
      %v5292 = vrot.slane %v5290, 1
      %v5293 = vshll.u32 %v4945, 16
      %v5295 = vrot.slane %v5293, 2
      %v5296 = vor.u32 %v5292, %v5295
      %v5297 = vsel %vm1087, %v5287, %v5296
      %v5299 = vshrl.u32 %v4946, 16
      %v5301 = vrot.slane %v5299, 1
      %v5302 = vshll.u32 %v4946, 16
      %v5304 = vrot.slane %v5302, 2
      %v5305 = vor.u32 %v5301, %v5304
      %v5306 = vsel %vm1087, %v5296, %v5305
      %v5308 = vshrl.u32 %v4947, 16
      %v5310 = vrot.slane %v5308, 1
      %v5311 = vshll.u32 %v4947, 16
      %v5313 = vrot.slane %v5311, 2
      %v5314 = vor.u32 %v5310, %v5313
      %v5315 = vsel %vm1087, %v5305, %v5314
      %v5317 = vshrl.u32 %v4948, 16
      %v5319 = vrot.slane %v5317, 1
      %v5320 = vshll.u32 %v4948, 16
      %v5322 = vrot.slane %v5320, 2
      %v5323 = vor.u32 %v5319, %v5322
      %v5324 = vsel %vm1087, %v5314, %v5323
      %v5326 = vshrl.u32 %v5217, 16
      %v5328 = vrot.slane %v5326, 1
      %v5329 = vshll.u32 %v5217, 16
      %v5331 = vrot.slane %v5329, 2
      %v5332 = vor.u32 %v5328, %v5331
      %v5333 = vsel %vm1087, %v5323, %v5332
      %v5363 = vunpack.c.l.b16 %v5199
      %v5364 = vunpack.c.l.b16 %v5200
      %v5365 = vunpack.c.l.b16 %v5201
      %v5366 = vunpack.c.l.b16 %v5202
      %v5367 = vunpack.c.l.b16 %v5203
      %v5368 = vunpack.c.l.b16 %v5204
      %v5369 = vunpack.c.l.b16 %v5205
      %v5370 = vunpack.c.l.b16 %v5206
      %v5371 = vunpack.c.l.b16 %v5207
      %v5372 = vunpack.c.l.b16 %v5208
      %v5373 = vunpack.c.l.b16 %v5209
      %v5374 = vunpack.c.l.b16 %v5210
      %v5375 = vunpack.c.l.b16 %v5211
      %v5376 = vunpack.c.l.b16 %v5212
      %v5377 = vunpack.c.l.b16 %v5213
      %v5378 = vunpack.c.l.b16 %v5214
      %v5379 = vpack.c.b16 %v5364, %v5363
      %v5380 = vpack.c.b16 %v5366, %v5365
      %v5381 = vpack.c.b16 %v5368, %v5367
      %v5382 = vpack.c.b16 %v5370, %v5369
      %v5383 = vpack.c.b16 %v5372, %v5371
      %v5384 = vpack.c.b16 %v5374, %v5373
      %v5385 = vpack.c.b16 %v5376, %v5375
      %v5386 = vpack.c.b16 %v5378, %v5377
      %5395 = vmatprep.subr.bf16.mxu0 0
      %5396 = vmatpush1.bf16.msra.mxu0 %v5379
      %5397 = vmatprep.subr.bf16.mxu0 0
      %5398 = vmatpush1.bf16.msra.mxu0 %v5380
      %5399 = vmatprep.subr.bf16.mxu0 0
      %5400 = vmatpush1.bf16.msra.mxu0 %v5381
      %5401 = vmatprep.subr.bf16.mxu0 0
      %5402 = vmatpush1.bf16.msra.mxu0 %v5382
      %5403 = vmatprep.subr.bf16.mxu0 0
      %5404 = vmatpush1.bf16.msra.mxu0 %v5383
      %5405 = vmatprep.subr.bf16.mxu0 0
      %5406 = vmatpush1.bf16.msra.mxu0 %v5384
      %5407 = vmatprep.subr.bf16.mxu0 0
      %5408 = vmatpush1.bf16.msra.mxu0 %v5385
      %5409 = vmatprep.subr.bf16.mxu0 0
      %5410 = vmatpush1.bf16.msra.mxu0 %v5386
      %5411 = vmatprep.subr.bf16.mxu0 0
      %5412 = vmatpush1.bf16.msra.mxu0 0
      %5413 = vmatprep.subr.bf16.mxu0 0
      %5414 = vmatpush1.bf16.msra.mxu0 0
      %5415 = vmatprep.subr.bf16.mxu0 0
      %5416 = vmatpush1.bf16.msra.mxu0 0
      %5417 = vmatprep.subr.bf16.mxu0 0
      %5418 = vmatpush1.bf16.msra.mxu0 0
      %5419 = vmatprep.subr.bf16.mxu0 0
      %5420 = vmatpush1.bf16.msra.mxu0 0
      %5421 = vmatprep.subr.bf16.mxu0 0
      %5422 = vmatpush1.bf16.msra.mxu0 0
      %5423 = vmatprep.subr.bf16.mxu0 0
      %5424 = vmatpush1.bf16.msra.mxu0 0
      %5425 = vmatprep.subr.bf16.mxu0 0
      %5426 = vmatpush1.bf16.msra.mxu0 0
      %5427 = vmatprep.mubr.bf16.mxu0 0
      %5428 = vmatmul.mubr.bf16.gmra.mrb[0].mxu0 %v5234
      %v5429 = vpop.f32.mrb[0].mxu0
      %v5430 = vadd.f32 0.0, %v5429
      %v5431 = vpop.f32.mrb[0].mxu0
      %v5432 = vpop.f32.mrb[0].mxu0
      %v5433 = vadd.f32 0.0, %v5432
      %v5434 = vpop.f32.mrb[0].mxu0
      %5435 = vmatprep.mubr.bf16.mxu0 0
      %5436 = vmatmul.mubr.bf16.gmra.mrb[0].mxu0 %v5243
      %v5437 = vpop.f32.mrb[0].mxu0
      %v5438 = vadd.f32 0.0, %v5437
      %v5439 = vpop.f32.mrb[0].mxu0
      %v5440 = vpop.f32.mrb[0].mxu0
      %v5441 = vadd.f32 0.0, %v5440
      %v5442 = vpop.f32.mrb[0].mxu0
      %5443 = vmatprep.mubr.bf16.mxu0 0
      %5444 = vmatmul.mubr.bf16.gmra.mrb[0].mxu0 %v5252
      %v5445 = vpop.f32.mrb[0].mxu0
      %v5446 = vadd.f32 0.0, %v5445
      %v5447 = vpop.f32.mrb[0].mxu0
      %v5448 = vpop.f32.mrb[0].mxu0
      %v5449 = vadd.f32 0.0, %v5448
      %v5450 = vpop.f32.mrb[0].mxu0
      %5451 = vmatprep.mubr.bf16.mxu0 0
      %5452 = vmatmul.mubr.bf16.gmra.mrb[0].mxu0 %v5261
      %v5453 = vpop.f32.mrb[0].mxu0
      %v5454 = vadd.f32 0.0, %v5453
      %v5455 = vpop.f32.mrb[0].mxu0
      %v5456 = vpop.f32.mrb[0].mxu0
      %v5457 = vadd.f32 0.0, %v5456
      %v5458 = vpop.f32.mrb[0].mxu0
      %5459 = vmatprep.mubr.bf16.mxu0 0
      %5460 = vmatmul.mubr.bf16.gmra.mrb[0].mxu0 %v5270
      %v5461 = vpop.f32.mrb[0].mxu0
      %v5462 = vadd.f32 0.0, %v5461
      %v5463 = vpop.f32.mrb[0].mxu0
      %v5464 = vpop.f32.mrb[0].mxu0
      %v5465 = vadd.f32 0.0, %v5464
      %v5466 = vpop.f32.mrb[0].mxu0
      %5467 = vmatprep.mubr.bf16.mxu0 0
      %5468 = vmatmul.mubr.bf16.gmra.mrb[0].mxu0 %v5279
      %v5469 = vpop.f32.mrb[0].mxu0
      %v5470 = vadd.f32 0.0, %v5469
      %v5471 = vpop.f32.mrb[0].mxu0
      %v5472 = vpop.f32.mrb[0].mxu0
      %v5473 = vadd.f32 0.0, %v5472
      %v5474 = vpop.f32.mrb[0].mxu0
      %5475 = vmatprep.mubr.bf16.mxu0 0
      %5476 = vmatmul.mubr.bf16.gmra.mrb[0].mxu0 %v5288
      %v5477 = vpop.f32.mrb[0].mxu0
      %v5478 = vadd.f32 0.0, %v5477
      %v5479 = vpop.f32.mrb[0].mxu0
      %v5480 = vpop.f32.mrb[0].mxu0
      %v5481 = vadd.f32 0.0, %v5480
      %v5482 = vpop.f32.mrb[0].mxu0
      %5483 = vmatprep.mubr.bf16.mxu0 0
      %5484 = vmatmul.mubr.bf16.gmra.mrb[0].mxu0 %v5297
      %v5485 = vpop.f32.mrb[0].mxu0
      %v5486 = vadd.f32 0.0, %v5485
      %v5487 = vpop.f32.mrb[0].mxu0
      %v5488 = vpop.f32.mrb[0].mxu0
      %v5489 = vadd.f32 0.0, %v5488
      %v5490 = vpop.f32.mrb[0].mxu0
      %5491 = vmatprep.mubr.bf16.mxu0 0
      %5492 = vmatmul.mubr.bf16.gmra.mrb[0].mxu0 %v5306
      %v5493 = vpop.f32.mrb[0].mxu0
      %v5494 = vadd.f32 0.0, %v5493
      %v5495 = vpop.f32.mrb[0].mxu0
      %v5496 = vpop.f32.mrb[0].mxu0
      %v5497 = vadd.f32 0.0, %v5496
      %v5498 = vpop.f32.mrb[0].mxu0
      %5499 = vmatprep.mubr.bf16.mxu0 0
      %5500 = vmatmul.mubr.bf16.gmra.mrb[0].mxu0 %v5315
      %v5501 = vpop.f32.mrb[0].mxu0
      %v5502 = vadd.f32 0.0, %v5501
      %v5503 = vpop.f32.mrb[0].mxu0
      %v5504 = vpop.f32.mrb[0].mxu0
      %v5505 = vadd.f32 0.0, %v5504
      %v5506 = vpop.f32.mrb[0].mxu0
      %5507 = vmatprep.mubr.bf16.mxu0 0
      %5508 = vmatmul.mubr.bf16.gmra.mrb[0].mxu0 %v5324
      %v5509 = vpop.f32.mrb[0].mxu0
      %v5510 = vadd.f32 0.0, %v5509
      %v5511 = vpop.f32.mrb[0].mxu0
      %v5512 = vpop.f32.mrb[0].mxu0
      %v5513 = vadd.f32 0.0, %v5512
      %v5514 = vpop.f32.mrb[0].mxu0
      %5515 = vmatprep.mubr.bf16.mxu0 0
      %5516 = vmatmul.mubr.bf16.gmra.mrb[0].mxu0 %v5333
      %v5517 = vpop.f32.mrb[0].mxu0
      %v5518 = vadd.f32 0.0, %v5517
      %v5519 = vpop.f32.mrb[0].mxu0
      %v5520 = vpop.f32.mrb[0].mxu0
      %v5521 = vadd.f32 0.0, %v5520
      %v5522 = vpop.f32.mrb[0].mxu0
      %5523 = vmatprep.mubr.bf16.mxu0 0
      %5524 = vmatmul.mubr.bf16.gmra.mrb[0].mxu0 %v5332
      %v5525 = vpop.f32.mrb[0].mxu0
      %v5526 = vadd.f32 0.0, %v5525
      %v5527 = vpop.f32.mrb[0].mxu0
      %v5528 = vpop.f32.mrb[0].mxu0
      %v5529 = vpop.f32.mrb[0].mxu0
      %5530 = vdwg.mxu0
      %v5531 = vadd.f32 %v5172, %v5430
      %v5532 = vadd.f32 %v5173, %v5433
      %v5533 = vadd.f32 %v5174, %v5438
      %v5534 = vadd.f32 %v5175, %v5441
      %v5535 = vadd.f32 %v5176, %v5446
      %v5536 = vadd.f32 %v5177, %v5449
      %v5537 = vadd.f32 %v5178, %v5454
      %v5538 = vadd.f32 %v5179, %v5457
      %v5539 = vadd.f32 %v5180, %v5462
      %v5540 = vadd.f32 %v5181, %v5465
      %v5541 = vadd.f32 %v5182, %v5470
      %v5542 = vadd.f32 %v5183, %v5473
      %v5543 = vadd.f32 %v5184, %v5478
      %v5544 = vadd.f32 %v5185, %v5481
      %v5545 = vadd.f32 %v5186, %v5486
      %v5546 = vadd.f32 %v5187, %v5489
      %v5547 = vadd.f32 %v5188, %v5494
      %v5548 = vadd.f32 %v5189, %v5497
      %v5549 = vadd.f32 %v5190, %v5502
      %v5550 = vadd.f32 %v5191, %v5505
      %v5551 = vadd.f32 %v5192, %v5510
      %v5552 = vadd.f32 %v5193, %v5513
      %v5553 = vadd.f32 %v5194, %v5518
      %v5554 = vadd.f32 %v5195, %v5521
      %v5555 = vadd.f32 %v5196, %v5526
      %v5556 = vld [vmem:[%s166 + $0x14] sm:$0xc]
      %s5557 = scalar_lea.vmem %s1, 1088
      %v5558 = vld [vmem:[%s5557] sm:$0xf]
      %v5559 = vld [vmem:[%s5557 + $0x4] sm:$0xf]
      %v5560 = vld [vmem:[%s5557 + $0x8] sm:$0xf]
      %v5561 = vld [vmem:[%s5557 + $0xc] sm:$0xf]
      %v5562 = vld [vmem:[%s5557 + $0x10] sm:$0xf]
      %v5563 = vld [vmem:[%s5557 + $0x14] sm:$0xf]
      %v5564 = vld [vmem:[%s5557 + $0x18] sm:$0xf]
      %v5565 = vld [vmem:[%s5557 + $0x1c] sm:$0xf]
      %v5566 = vld [vmem:[%s5557 + $0x20] sm:$0xf]
      %v5567 = vld [vmem:[%s5557 + $0x24] sm:$0xf]
      %v5568 = vld [vmem:[%s5557 + $0x28] sm:$0xf]
      %v5569 = vld [vmem:[%s5557 + $0x2c] sm:$0xf]
      %v5570 = vld [vmem:[%s5557 + $0x30] sm:$0xf]
      %v5571 = vld [vmem:[%s5557 + $0x34] sm:$0xf]
      %v5572 = vld [vmem:[%s5557 + $0x38] sm:$0xf]
      %v5573 = vld [vmem:[%s5557 + $0x3c] sm:$0xf]
      %v5575 = vunpack.c.l.b16 %v5556
      %v5576 = vpack.c.b16 %v4913, %v5575
      %v5577 = vrot.slane %v5576, 2
      %v5578 = vrot.slane %v4938, 2
      %v5579 = vsel %vm1392, %v5577, %v5578
      %v5580 = vrot.slane %v4939, 2
      %v5581 = vsel %vm1392, %v5578, %v5580
      %v5582 = vrot.slane %v4940, 2
      %v5583 = vsel %vm1392, %v5580, %v5582
      %v5584 = vrot.slane %v4941, 2
      %v5585 = vsel %vm1392, %v5582, %v5584
      %v5586 = vrot.slane %v4942, 2
      %v5587 = vsel %vm1392, %v5584, %v5586
      %v5588 = vrot.slane %v4943, 2
      %v5589 = vsel %vm1392, %v5586, %v5588
      %v5590 = vrot.slane %v4944, 2
      %v5591 = vsel %vm1392, %v5588, %v5590
      %v5592 = vrot.slane %v4945, 2
      %v5593 = vsel %vm1392, %v5590, %v5592
      %v5594 = vrot.slane %v4946, 2
      %v5595 = vsel %vm1392, %v5592, %v5594
      %v5596 = vrot.slane %v4947, 2
      %v5597 = vsel %vm1392, %v5594, %v5596
      %v5598 = vrot.slane %v4948, 2
      %v5599 = vsel %vm1392, %v5596, %v5598
      %v5600 = vrot.slane %v5217, 2
      %v5601 = vsel %vm1392, %v5598, %v5600
      %v5631 = vunpack.c.l.b16 %v5558
      %v5632 = vunpack.c.l.b16 %v5559
      %v5633 = vunpack.c.l.b16 %v5560
      %v5634 = vunpack.c.l.b16 %v5561
      %v5635 = vunpack.c.l.b16 %v5562
      %v5636 = vunpack.c.l.b16 %v5563
      %v5637 = vunpack.c.l.b16 %v5564
      %v5638 = vunpack.c.l.b16 %v5565
      %v5639 = vunpack.c.l.b16 %v5566
      %v5640 = vunpack.c.l.b16 %v5567
      %v5641 = vunpack.c.l.b16 %v5568
      %v5642 = vunpack.c.l.b16 %v5569
      %v5643 = vunpack.c.l.b16 %v5570
      %v5644 = vunpack.c.l.b16 %v5571
      %v5645 = vunpack.c.l.b16 %v5572
      %v5646 = vunpack.c.l.b16 %v5573
      %v5647 = vpack.c.b16 %v5632, %v5631
      %v5648 = vpack.c.b16 %v5634, %v5633
      %v5649 = vpack.c.b16 %v5636, %v5635
      %v5650 = vpack.c.b16 %v5638, %v5637
      %v5651 = vpack.c.b16 %v5640, %v5639
      %v5652 = vpack.c.b16 %v5642, %v5641
      %v5653 = vpack.c.b16 %v5644, %v5643
      %v5654 = vpack.c.b16 %v5646, %v5645
      %5663 = vmatprep.subr.bf16.mxu0 0
      %5664 = vmatpush1.bf16.msra.mxu0 %v5647
      %5665 = vmatprep.subr.bf16.mxu0 0
      %5666 = vmatpush1.bf16.msra.mxu0 %v5648
      %5667 = vmatprep.subr.bf16.mxu0 0
      %5668 = vmatpush1.bf16.msra.mxu0 %v5649
      %5669 = vmatprep.subr.bf16.mxu0 0
      %5670 = vmatpush1.bf16.msra.mxu0 %v5650
      %5671 = vmatprep.subr.bf16.mxu0 0
      %5672 = vmatpush1.bf16.msra.mxu0 %v5651
      %5673 = vmatprep.subr.bf16.mxu0 0
      %5674 = vmatpush1.bf16.msra.mxu0 %v5652
      %5675 = vmatprep.subr.bf16.mxu0 0
      %5676 = vmatpush1.bf16.msra.mxu0 %v5653
      %5677 = vmatprep.subr.bf16.mxu0 0
      %5678 = vmatpush1.bf16.msra.mxu0 %v5654
      %5679 = vmatprep.subr.bf16.mxu0 0
      %5680 = vmatpush1.bf16.msra.mxu0 0
      %5681 = vmatprep.subr.bf16.mxu0 0
      %5682 = vmatpush1.bf16.msra.mxu0 0
      %5683 = vmatprep.subr.bf16.mxu0 0
      %5684 = vmatpush1.bf16.msra.mxu0 0
      %5685 = vmatprep.subr.bf16.mxu0 0
      %5686 = vmatpush1.bf16.msra.mxu0 0
      %5687 = vmatprep.subr.bf16.mxu0 0
      %5688 = vmatpush1.bf16.msra.mxu0 0
      %5689 = vmatprep.subr.bf16.mxu0 0
      %5690 = vmatpush1.bf16.msra.mxu0 0
      %5691 = vmatprep.subr.bf16.mxu0 0
      %5692 = vmatpush1.bf16.msra.mxu0 0
      %5693 = vmatprep.subr.bf16.mxu0 0
      %5694 = vmatpush1.bf16.msra.mxu0 0
      %5695 = vmatprep.mubr.bf16.mxu0 0
      %5696 = vmatmul.mubr.bf16.gmra.mrb[0].mxu0 %v5579
      %v5697 = vpop.f32.mrb[0].mxu0
      %v5698 = vadd.f32 0.0, %v5697
      %v5699 = vpop.f32.mrb[0].mxu0
      %v5700 = vpop.f32.mrb[0].mxu0
      %v5701 = vadd.f32 0.0, %v5700
      %v5702 = vpop.f32.mrb[0].mxu0
      %5703 = vmatprep.mubr.bf16.mxu0 0
      %5704 = vmatmul.mubr.bf16.gmra.mrb[0].mxu0 %v5581
      %v5705 = vpop.f32.mrb[0].mxu0
      %v5706 = vadd.f32 0.0, %v5705
      %v5707 = vpop.f32.mrb[0].mxu0
      %v5708 = vpop.f32.mrb[0].mxu0
      %v5709 = vadd.f32 0.0, %v5708
      %v5710 = vpop.f32.mrb[0].mxu0
      %5711 = vmatprep.mubr.bf16.mxu0 0
      %5712 = vmatmul.mubr.bf16.gmra.mrb[0].mxu0 %v5583
      %v5713 = vpop.f32.mrb[0].mxu0
      %v5714 = vadd.f32 0.0, %v5713
      %v5715 = vpop.f32.mrb[0].mxu0
      %v5716 = vpop.f32.mrb[0].mxu0
      %v5717 = vadd.f32 0.0, %v5716
      %v5718 = vpop.f32.mrb[0].mxu0
      %5719 = vmatprep.mubr.bf16.mxu0 0
      %5720 = vmatmul.mubr.bf16.gmra.mrb[0].mxu0 %v5585
      %v5721 = vpop.f32.mrb[0].mxu0
      %v5722 = vadd.f32 0.0, %v5721
      %v5723 = vpop.f32.mrb[0].mxu0
      %v5724 = vpop.f32.mrb[0].mxu0
      %v5725 = vadd.f32 0.0, %v5724
      %v5726 = vpop.f32.mrb[0].mxu0
      %5727 = vmatprep.mubr.bf16.mxu0 0
      %5728 = vmatmul.mubr.bf16.gmra.mrb[0].mxu0 %v5587
      %v5729 = vpop.f32.mrb[0].mxu0
      %v5730 = vadd.f32 0.0, %v5729
      %v5731 = vpop.f32.mrb[0].mxu0
      %v5732 = vpop.f32.mrb[0].mxu0
      %v5733 = vadd.f32 0.0, %v5732
      %v5734 = vpop.f32.mrb[0].mxu0
      %5735 = vmatprep.mubr.bf16.mxu0 0
      %5736 = vmatmul.mubr.bf16.gmra.mrb[0].mxu0 %v5589
      %v5737 = vpop.f32.mrb[0].mxu0
      %v5738 = vadd.f32 0.0, %v5737
      %v5739 = vpop.f32.mrb[0].mxu0
      %v5740 = vpop.f32.mrb[0].mxu0
      %v5741 = vadd.f32 0.0, %v5740
      %v5742 = vpop.f32.mrb[0].mxu0
      %5743 = vmatprep.mubr.bf16.mxu0 0
      %5744 = vmatmul.mubr.bf16.gmra.mrb[0].mxu0 %v5591
      %v5745 = vpop.f32.mrb[0].mxu0
      %v5746 = vadd.f32 0.0, %v5745
      %v5747 = vpop.f32.mrb[0].mxu0
      %v5748 = vpop.f32.mrb[0].mxu0
      %v5749 = vadd.f32 0.0, %v5748
      %v5750 = vpop.f32.mrb[0].mxu0
      %5751 = vmatprep.mubr.bf16.mxu0 0
      %5752 = vmatmul.mubr.bf16.gmra.mrb[0].mxu0 %v5593
      %v5753 = vpop.f32.mrb[0].mxu0
      %v5754 = vadd.f32 0.0, %v5753
      %v5755 = vpop.f32.mrb[0].mxu0
      %v5756 = vpop.f32.mrb[0].mxu0
      %v5757 = vadd.f32 0.0, %v5756
      %v5758 = vpop.f32.mrb[0].mxu0
      %5759 = vmatprep.mubr.bf16.mxu0 0
      %5760 = vmatmul.mubr.bf16.gmra.mrb[0].mxu0 %v5595
      %v5761 = vpop.f32.mrb[0].mxu0
      %v5762 = vadd.f32 0.0, %v5761
      %v5763 = vpop.f32.mrb[0].mxu0
      %v5764 = vpop.f32.mrb[0].mxu0
      %v5765 = vadd.f32 0.0, %v5764
      %v5766 = vpop.f32.mrb[0].mxu0
      %5767 = vmatprep.mubr.bf16.mxu0 0
      %5768 = vmatmul.mubr.bf16.gmra.mrb[0].mxu0 %v5597
      %v5769 = vpop.f32.mrb[0].mxu0
      %v5770 = vadd.f32 0.0, %v5769
      %v5771 = vpop.f32.mrb[0].mxu0
      %v5772 = vpop.f32.mrb[0].mxu0
      %v5773 = vadd.f32 0.0, %v5772
      %v5774 = vpop.f32.mrb[0].mxu0
      %5775 = vmatprep.mubr.bf16.mxu0 0
      %5776 = vmatmul.mubr.bf16.gmra.mrb[0].mxu0 %v5599
      %v5777 = vpop.f32.mrb[0].mxu0
      %v5778 = vadd.f32 0.0, %v5777
      %v5779 = vpop.f32.mrb[0].mxu0
      %v5780 = vpop.f32.mrb[0].mxu0
      %v5781 = vadd.f32 0.0, %v5780
      %v5782 = vpop.f32.mrb[0].mxu0
      %5783 = vmatprep.mubr.bf16.mxu0 0
      %5784 = vmatmul.mubr.bf16.gmra.mrb[0].mxu0 %v5601
      %v5785 = vpop.f32.mrb[0].mxu0
      %v5786 = vadd.f32 0.0, %v5785
      %v5787 = vpop.f32.mrb[0].mxu0
      %v5788 = vpop.f32.mrb[0].mxu0
      %v5789 = vadd.f32 0.0, %v5788
      %v5790 = vpop.f32.mrb[0].mxu0
      %5791 = vmatprep.mubr.bf16.mxu0 0
      %5792 = vmatmul.mubr.bf16.gmra.mrb[0].mxu0 %v5600
      %v5793 = vpop.f32.mrb[0].mxu0
      %v5794 = vadd.f32 0.0, %v5793
      %v5795 = vpop.f32.mrb[0].mxu0
      %v5796 = vpop.f32.mrb[0].mxu0
      %v5797 = vpop.f32.mrb[0].mxu0
      %5798 = vdwg.mxu0
      %v5799 = vadd.f32 %v5531, %v5698
      %v5800 = vadd.f32 %v5532, %v5701
      %v5801 = vadd.f32 %v5533, %v5706
      %v5802 = vadd.f32 %v5534, %v5709
      %v5803 = vadd.f32 %v5535, %v5714
      %v5804 = vadd.f32 %v5536, %v5717
      %v5805 = vadd.f32 %v5537, %v5722
      %v5806 = vadd.f32 %v5538, %v5725
      %v5807 = vadd.f32 %v5539, %v5730
      %v5808 = vadd.f32 %v5540, %v5733
      %v5809 = vadd.f32 %v5541, %v5738
      %v5810 = vadd.f32 %v5542, %v5741
      %v5811 = vadd.f32 %v5543, %v5746
      %v5812 = vadd.f32 %v5544, %v5749
      %v5813 = vadd.f32 %v5545, %v5754
      %v5814 = vadd.f32 %v5546, %v5757
      %v5815 = vadd.f32 %v5547, %v5762
      %v5816 = vadd.f32 %v5548, %v5765
      %v5817 = vadd.f32 %v5549, %v5770
      %v5818 = vadd.f32 %v5550, %v5773
      %v5819 = vadd.f32 %v5551, %v5778
      %v5820 = vadd.f32 %v5552, %v5781
      %v5821 = vadd.f32 %v5553, %v5786
      %v5822 = vadd.f32 %v5554, %v5789
      %v5823 = vadd.f32 %v5555, %v5794
      %v5824 = vld [vmem:[%s166 + $0x14] sm:$0xc]
      %v5825 = vld [vmem:[%s166 + $0x18] sm:$0xf]
      %v5826 = vld [vmem:[%s166 + $0x1c] sm:$0xf]
      %v5827 = vld [vmem:[%s166 + $0x20] sm:$0xf]
      %v5828 = vld [vmem:[%s166 + $0x24] sm:$0xf]
      %v5829 = vld [vmem:[%s166 + $0x28] sm:$0xf]
      %v5830 = vld [vmem:[%s166 + $0x2c] sm:$0xf]
      %v5831 = vld [vmem:[%s166 + $0x30] sm:$0xf]
      %v5832 = vld [vmem:[%s166 + $0x34] sm:$0xf]
      %v5833 = vld [vmem:[%s166 + $0x38] sm:$0xf]
      %v5834 = vld [vmem:[%s166 + $0x3c] sm:$0xf]
      %v5835 = vld [vmem:[%s166 + $0x40] sm:$0xf]
      %v5836 = vld [vmem:[%s166 + $0x44] sm:$0xf]
      %v5837 = vld [vmem:[%s166 + $0x48] sm:$0xf]
      %v5838 = vld [vmem:[%s166 + $0x4c] sm:$0xf]
      %v5839 = vld [vmem:[%s166 + $0x50] sm:$0xf]
      %v5840 = vld [vmem:[%s166 + $0x54] sm:$0xf]
      %v5841 = vld [vmem:[%s166 + $0x58] sm:$0xf]
      %v5842 = vld [vmem:[%s166 + $0x5c] sm:$0xf]
      %v5843 = vld [vmem:[%s166 + $0x60] sm:$0xf]
      %v5844 = vld [vmem:[%s166 + $0x64] sm:$0xf]
      %v5845 = vld [vmem:[%s166 + $0x68] sm:$0xf]
      %v5846 = vld [vmem:[%s166 + $0x6c] sm:$0xf]
      %v5847 = vld [vmem:[%s166 + $0x70] sm:$0xf]
      %v5848 = vld [vmem:[%s166 + $0x74] sm:$0xf]
      %v5849 = vld [vmem:[%s166 + $0x78] sm:$0x1]
      %s5850 = scalar_lea.vmem %s1, 1152
      %v5851 = vld [vmem:[%s5850] sm:$0xf]
      %v5852 = vld [vmem:[%s5850 + $0x4] sm:$0xf]
      %v5853 = vld [vmem:[%s5850 + $0x8] sm:$0xf]
      %v5854 = vld [vmem:[%s5850 + $0xc] sm:$0xf]
      %v5855 = vld [vmem:[%s5850 + $0x10] sm:$0xf]
      %v5856 = vld [vmem:[%s5850 + $0x14] sm:$0xf]
      %v5857 = vld [vmem:[%s5850 + $0x18] sm:$0xf]
      %v5858 = vld [vmem:[%s5850 + $0x1c] sm:$0xf]
      %v5859 = vld [vmem:[%s5850 + $0x20] sm:$0xf]
      %v5860 = vld [vmem:[%s5850 + $0x24] sm:$0xf]
      %v5861 = vld [vmem:[%s5850 + $0x28] sm:$0xf]
      %v5862 = vld [vmem:[%s5850 + $0x2c] sm:$0xf]
      %v5863 = vld [vmem:[%s5850 + $0x30] sm:$0xf]
      %v5864 = vld [vmem:[%s5850 + $0x34] sm:$0xf]
      %v5865 = vld [vmem:[%s5850 + $0x38] sm:$0xf]
      %v5866 = vld [vmem:[%s5850 + $0x3c] sm:$0xf]
      %v5893 = vunpack.c.l.b16 %v5824
      %v5894 = vunpack.c.l.b16 %v5825
      %v5895 = vunpack.c.l.b16 %v5826
      %v5896 = vunpack.c.l.b16 %v5827
      %v5897 = vunpack.c.l.b16 %v5828
      %v5898 = vunpack.c.l.b16 %v5829
      %v5899 = vunpack.c.l.b16 %v5830
      %v5900 = vunpack.c.l.b16 %v5831
      %v5901 = vunpack.c.l.b16 %v5832
      %v5902 = vunpack.c.l.b16 %v5833
      %v5903 = vunpack.c.l.b16 %v5834
      %v5904 = vunpack.c.l.b16 %v5835
      %v5905 = vunpack.c.l.b16 %v5836
      %v5906 = vunpack.c.l.b16 %v5837
      %v5907 = vunpack.c.l.b16 %v5838
      %v5908 = vunpack.c.l.b16 %v5839
      %v5909 = vunpack.c.l.b16 %v5840
      %v5910 = vunpack.c.l.b16 %v5841
      %v5911 = vunpack.c.l.b16 %v5842
      %v5912 = vunpack.c.l.b16 %v5843
      %v5913 = vunpack.c.l.b16 %v5844
      %v5914 = vunpack.c.l.b16 %v5845
      %v5915 = vunpack.c.l.b16 %v5846
      %v5916 = vunpack.c.l.b16 %v5847
      %v5917 = vunpack.c.l.b16 %v5848
      %v5918 = vunpack.c.l.b16 %v5849
      %v5919 = vpack.c.b16 %v5894, %v5893
      %v5920 = vpack.c.b16 %v5896, %v5895
      %v5921 = vpack.c.b16 %v5898, %v5897
      %v5922 = vpack.c.b16 %v5900, %v5899
      %v5923 = vpack.c.b16 %v5902, %v5901
      %v5924 = vpack.c.b16 %v5904, %v5903
      %v5925 = vpack.c.b16 %v5906, %v5905
      %v5926 = vpack.c.b16 %v5908, %v5907
      %v5927 = vpack.c.b16 %v5910, %v5909
      %v5928 = vpack.c.b16 %v5912, %v5911
      %v5929 = vpack.c.b16 %v5914, %v5913
      %v5930 = vpack.c.b16 %v5916, %v5915
      %v5931 = vpack.c.b16 %v5918, %v5917
      %v5933 = vshrl.u32 %v5919, 16
      %v5935 = vrot.slane %v5933, 2
      %v5936 = vshll.u32 %v5919, 16
      %v5938 = vrot.slane %v5936, 3
      %v5939 = vor.u32 %v5935, %v5938
      %v5941 = vshrl.u32 %v5920, 16
      %v5943 = vrot.slane %v5941, 2
      %v5944 = vshll.u32 %v5920, 16
      %v5946 = vrot.slane %v5944, 3
      %v5947 = vor.u32 %v5943, %v5946
      %v5948 = vsel %vm3682, %v5939, %v5947
      %v5950 = vshrl.u32 %v5921, 16
      %v5952 = vrot.slane %v5950, 2
      %v5953 = vshll.u32 %v5921, 16
      %v5955 = vrot.slane %v5953, 3
      %v5956 = vor.u32 %v5952, %v5955
      %v5957 = vsel %vm3682, %v5947, %v5956
      %v5959 = vshrl.u32 %v5922, 16
      %v5961 = vrot.slane %v5959, 2
      %v5962 = vshll.u32 %v5922, 16
      %v5964 = vrot.slane %v5962, 3
      %v5965 = vor.u32 %v5961, %v5964
      %v5966 = vsel %vm3682, %v5956, %v5965
      %v5968 = vshrl.u32 %v5923, 16
      %v5970 = vrot.slane %v5968, 2
      %v5971 = vshll.u32 %v5923, 16
      %v5973 = vrot.slane %v5971, 3
      %v5974 = vor.u32 %v5970, %v5973
      %v5975 = vsel %vm3682, %v5965, %v5974
      %v5977 = vshrl.u32 %v5924, 16
      %v5979 = vrot.slane %v5977, 2
      %v5980 = vshll.u32 %v5924, 16
      %v5982 = vrot.slane %v5980, 3
      %v5983 = vor.u32 %v5979, %v5982
      %v5984 = vsel %vm3682, %v5974, %v5983
      %v5986 = vshrl.u32 %v5925, 16
      %v5988 = vrot.slane %v5986, 2
      %v5989 = vshll.u32 %v5925, 16
      %v5991 = vrot.slane %v5989, 3
      %v5992 = vor.u32 %v5988, %v5991
      %v5993 = vsel %vm3682, %v5983, %v5992
      %v5995 = vshrl.u32 %v5926, 16
      %v5997 = vrot.slane %v5995, 2
      %v5998 = vshll.u32 %v5926, 16
      %v6000 = vrot.slane %v5998, 3
      %v6001 = vor.u32 %v5997, %v6000
      %v6002 = vsel %vm3682, %v5992, %v6001
      %v6004 = vshrl.u32 %v5927, 16
      %v6006 = vrot.slane %v6004, 2
      %v6007 = vshll.u32 %v5927, 16
      %v6009 = vrot.slane %v6007, 3
      %v6010 = vor.u32 %v6006, %v6009
      %v6011 = vsel %vm3682, %v6001, %v6010
      %v6013 = vshrl.u32 %v5928, 16
      %v6015 = vrot.slane %v6013, 2
      %v6016 = vshll.u32 %v5928, 16
      %v6018 = vrot.slane %v6016, 3
      %v6019 = vor.u32 %v6015, %v6018
      %v6020 = vsel %vm3682, %v6010, %v6019
      %v6022 = vshrl.u32 %v5929, 16
      %v6024 = vrot.slane %v6022, 2
      %v6025 = vshll.u32 %v5929, 16
      %v6027 = vrot.slane %v6025, 3
      %v6028 = vor.u32 %v6024, %v6027
      %v6029 = vsel %vm3682, %v6019, %v6028
      %v6031 = vshrl.u32 %v5930, 16
      %v6033 = vrot.slane %v6031, 2
      %v6034 = vshll.u32 %v5930, 16
      %v6036 = vrot.slane %v6034, 3
      %v6037 = vor.u32 %v6033, %v6036
      %v6038 = vsel %vm3682, %v6028, %v6037
      %v6040 = vshrl.u32 %v5931, 16
      %v6042 = vrot.slane %v6040, 2
      %v6043 = vshll.u32 %v5931, 16
      %v6045 = vrot.slane %v6043, 3
      %v6046 = vor.u32 %v6042, %v6045
      %v6047 = vsel %vm3682, %v6037, %v6046
      %v6077 = vunpack.c.l.b16 %v5851
      %v6078 = vunpack.c.l.b16 %v5852
      %v6079 = vunpack.c.l.b16 %v5853
      %v6080 = vunpack.c.l.b16 %v5854
      %v6081 = vunpack.c.l.b16 %v5855
      %v6082 = vunpack.c.l.b16 %v5856
      %v6083 = vunpack.c.l.b16 %v5857
      %v6084 = vunpack.c.l.b16 %v5858
      %v6085 = vunpack.c.l.b16 %v5859
      %v6086 = vunpack.c.l.b16 %v5860
      %v6087 = vunpack.c.l.b16 %v5861
      %v6088 = vunpack.c.l.b16 %v5862
      %v6089 = vunpack.c.l.b16 %v5863
      %v6090 = vunpack.c.l.b16 %v5864
      %v6091 = vunpack.c.l.b16 %v5865
      %v6092 = vunpack.c.l.b16 %v5866
      %v6093 = vpack.c.b16 %v6078, %v6077
      %v6094 = vpack.c.b16 %v6080, %v6079
      %v6095 = vpack.c.b16 %v6082, %v6081
      %v6096 = vpack.c.b16 %v6084, %v6083
      %v6097 = vpack.c.b16 %v6086, %v6085
      %v6098 = vpack.c.b16 %v6088, %v6087
      %v6099 = vpack.c.b16 %v6090, %v6089
      %v6100 = vpack.c.b16 %v6092, %v6091
      %6109 = vmatprep.subr.bf16.mxu0 0
      %6110 = vmatpush1.bf16.msra.mxu0 %v6093
      %6111 = vmatprep.subr.bf16.mxu0 0
      %6112 = vmatpush1.bf16.msra.mxu0 %v6094
      %6113 = vmatprep.subr.bf16.mxu0 0
      %6114 = vmatpush1.bf16.msra.mxu0 %v6095
      %6115 = vmatprep.subr.bf16.mxu0 0
      %6116 = vmatpush1.bf16.msra.mxu0 %v6096
      %6117 = vmatprep.subr.bf16.mxu0 0
      %6118 = vmatpush1.bf16.msra.mxu0 %v6097
      %6119 = vmatprep.subr.bf16.mxu0 0
      %6120 = vmatpush1.bf16.msra.mxu0 %v6098
      %6121 = vmatprep.subr.bf16.mxu0 0
      %6122 = vmatpush1.bf16.msra.mxu0 %v6099
      %6123 = vmatprep.subr.bf16.mxu0 0
      %6124 = vmatpush1.bf16.msra.mxu0 %v6100
      %6125 = vmatprep.subr.bf16.mxu0 0
      %6126 = vmatpush1.bf16.msra.mxu0 0
      %6127 = vmatprep.subr.bf16.mxu0 0
      %6128 = vmatpush1.bf16.msra.mxu0 0
      %6129 = vmatprep.subr.bf16.mxu0 0
      %6130 = vmatpush1.bf16.msra.mxu0 0
      %6131 = vmatprep.subr.bf16.mxu0 0
      %6132 = vmatpush1.bf16.msra.mxu0 0
      %6133 = vmatprep.subr.bf16.mxu0 0
      %6134 = vmatpush1.bf16.msra.mxu0 0
      %6135 = vmatprep.subr.bf16.mxu0 0
      %6136 = vmatpush1.bf16.msra.mxu0 0
      %6137 = vmatprep.subr.bf16.mxu0 0
      %6138 = vmatpush1.bf16.msra.mxu0 0
      %6139 = vmatprep.subr.bf16.mxu0 0
      %6140 = vmatpush1.bf16.msra.mxu0 0
      %6141 = vmatprep.mubr.bf16.mxu0 0
      %6142 = vmatmul.mubr.bf16.gmra.mrb[0].mxu0 %v5948
      %v6143 = vpop.f32.mrb[0].mxu0
      %v6144 = vadd.f32 0.0, %v6143
      %v6145 = vpop.f32.mrb[0].mxu0
      %v6146 = vpop.f32.mrb[0].mxu0
      %v6147 = vadd.f32 0.0, %v6146
      %v6148 = vpop.f32.mrb[0].mxu0
      %6149 = vmatprep.mubr.bf16.mxu0 0
      %6150 = vmatmul.mubr.bf16.gmra.mrb[0].mxu0 %v5957
      %v6151 = vpop.f32.mrb[0].mxu0
      %v6152 = vadd.f32 0.0, %v6151
      %v6153 = vpop.f32.mrb[0].mxu0
      %v6154 = vpop.f32.mrb[0].mxu0
      %v6155 = vadd.f32 0.0, %v6154
      %v6156 = vpop.f32.mrb[0].mxu0
      %6157 = vmatprep.mubr.bf16.mxu0 0
      %6158 = vmatmul.mubr.bf16.gmra.mrb[0].mxu0 %v5966
      %v6159 = vpop.f32.mrb[0].mxu0
      %v6160 = vadd.f32 0.0, %v6159
      %v6161 = vpop.f32.mrb[0].mxu0
      %v6162 = vpop.f32.mrb[0].mxu0
      %v6163 = vadd.f32 0.0, %v6162
      %v6164 = vpop.f32.mrb[0].mxu0
      %6165 = vmatprep.mubr.bf16.mxu0 0
      %6166 = vmatmul.mubr.bf16.gmra.mrb[0].mxu0 %v5975
      %v6167 = vpop.f32.mrb[0].mxu0
      %v6168 = vadd.f32 0.0, %v6167
      %v6169 = vpop.f32.mrb[0].mxu0
      %v6170 = vpop.f32.mrb[0].mxu0
      %v6171 = vadd.f32 0.0, %v6170
      %v6172 = vpop.f32.mrb[0].mxu0
      %6173 = vmatprep.mubr.bf16.mxu0 0
      %6174 = vmatmul.mubr.bf16.gmra.mrb[0].mxu0 %v5984
      %v6175 = vpop.f32.mrb[0].mxu0
      %v6176 = vadd.f32 0.0, %v6175
      %v6177 = vpop.f32.mrb[0].mxu0
      %v6178 = vpop.f32.mrb[0].mxu0
      %v6179 = vadd.f32 0.0, %v6178
      %v6180 = vpop.f32.mrb[0].mxu0
      %6181 = vmatprep.mubr.bf16.mxu0 0
      %6182 = vmatmul.mubr.bf16.gmra.mrb[0].mxu0 %v5993
      %v6183 = vpop.f32.mrb[0].mxu0
      %v6184 = vadd.f32 0.0, %v6183
      %v6185 = vpop.f32.mrb[0].mxu0
      %v6186 = vpop.f32.mrb[0].mxu0
      %v6187 = vadd.f32 0.0, %v6186
      %v6188 = vpop.f32.mrb[0].mxu0
      %6189 = vmatprep.mubr.bf16.mxu0 0
      %6190 = vmatmul.mubr.bf16.gmra.mrb[0].mxu0 %v6002
      %v6191 = vpop.f32.mrb[0].mxu0
      %v6192 = vadd.f32 0.0, %v6191
      %v6193 = vpop.f32.mrb[0].mxu0
      %v6194 = vpop.f32.mrb[0].mxu0
      %v6195 = vadd.f32 0.0, %v6194
      %v6196 = vpop.f32.mrb[0].mxu0
      %6197 = vmatprep.mubr.bf16.mxu0 0
      %6198 = vmatmul.mubr.bf16.gmra.mrb[0].mxu0 %v6011
      %v6199 = vpop.f32.mrb[0].mxu0
      %v6200 = vadd.f32 0.0, %v6199
      %v6201 = vpop.f32.mrb[0].mxu0
      %v6202 = vpop.f32.mrb[0].mxu0
      %v6203 = vadd.f32 0.0, %v6202
      %v6204 = vpop.f32.mrb[0].mxu0
      %6205 = vmatprep.mubr.bf16.mxu0 0
      %6206 = vmatmul.mubr.bf16.gmra.mrb[0].mxu0 %v6020
      %v6207 = vpop.f32.mrb[0].mxu0
      %v6208 = vadd.f32 0.0, %v6207
      %v6209 = vpop.f32.mrb[0].mxu0
      %v6210 = vpop.f32.mrb[0].mxu0
      %v6211 = vadd.f32 0.0, %v6210
      %v6212 = vpop.f32.mrb[0].mxu0
      %6213 = vmatprep.mubr.bf16.mxu0 0
      %6214 = vmatmul.mubr.bf16.gmra.mrb[0].mxu0 %v6029
      %v6215 = vpop.f32.mrb[0].mxu0
      %v6216 = vadd.f32 0.0, %v6215
      %v6217 = vpop.f32.mrb[0].mxu0
      %v6218 = vpop.f32.mrb[0].mxu0
      %v6219 = vadd.f32 0.0, %v6218
      %v6220 = vpop.f32.mrb[0].mxu0
      %6221 = vmatprep.mubr.bf16.mxu0 0
      %6222 = vmatmul.mubr.bf16.gmra.mrb[0].mxu0 %v6038
      %v6223 = vpop.f32.mrb[0].mxu0
      %v6224 = vadd.f32 0.0, %v6223
      %v6225 = vpop.f32.mrb[0].mxu0
      %v6226 = vpop.f32.mrb[0].mxu0
      %v6227 = vadd.f32 0.0, %v6226
      %v6228 = vpop.f32.mrb[0].mxu0
      %6229 = vmatprep.mubr.bf16.mxu0 0
      %6230 = vmatmul.mubr.bf16.gmra.mrb[0].mxu0 %v6047
      %v6231 = vpop.f32.mrb[0].mxu0
      %v6232 = vadd.f32 0.0, %v6231
      %v6233 = vpop.f32.mrb[0].mxu0
      %v6234 = vpop.f32.mrb[0].mxu0
      %v6235 = vadd.f32 0.0, %v6234
      %v6236 = vpop.f32.mrb[0].mxu0
      %6237 = vmatprep.mubr.bf16.mxu0 0
      %6238 = vmatmul.mubr.bf16.gmra.mrb[0].mxu0 %v6046
      %v6239 = vpop.f32.mrb[0].mxu0
      %v6240 = vadd.f32 0.0, %v6239
      %v6241 = vpop.f32.mrb[0].mxu0
      %v6242 = vpop.f32.mrb[0].mxu0
      %v6243 = vpop.f32.mrb[0].mxu0
      %6244 = vdwg.mxu0
      %v6245 = vadd.f32 %v5799, %v6144
      %v6246 = vadd.f32 %v5800, %v6147
      %v6247 = vadd.f32 %v5801, %v6152
      %v6248 = vadd.f32 %v5802, %v6155
      %v6249 = vadd.f32 %v5803, %v6160
      %v6250 = vadd.f32 %v5804, %v6163
      %v6251 = vadd.f32 %v5805, %v6168
      %v6252 = vadd.f32 %v5806, %v6171
      %v6253 = vadd.f32 %v5807, %v6176
      %v6254 = vadd.f32 %v5808, %v6179
      %v6255 = vadd.f32 %v5809, %v6184
      %v6256 = vadd.f32 %v5810, %v6187
      %v6257 = vadd.f32 %v5811, %v6192
      %v6258 = vadd.f32 %v5812, %v6195
      %v6259 = vadd.f32 %v5813, %v6200
      %v6260 = vadd.f32 %v5814, %v6203
      %v6261 = vadd.f32 %v5815, %v6208
      %v6262 = vadd.f32 %v5816, %v6211
      %v6263 = vadd.f32 %v5817, %v6216
      %v6264 = vadd.f32 %v5818, %v6219
      %v6265 = vadd.f32 %v5819, %v6224
      %v6266 = vadd.f32 %v5820, %v6227
      %v6267 = vadd.f32 %v5821, %v6232
      %v6268 = vadd.f32 %v5822, %v6235
      %v6269 = vadd.f32 %v5823, %v6240
      %v6270 = vld [vmem:[%s166 + $0x14] sm:$0x8]
      %s6271 = scalar_lea.vmem %s1, 1216
      %v6272 = vld [vmem:[%s6271] sm:$0xf]
      %v6273 = vld [vmem:[%s6271 + $0x4] sm:$0xf]
      %v6274 = vld [vmem:[%s6271 + $0x8] sm:$0xf]
      %v6275 = vld [vmem:[%s6271 + $0xc] sm:$0xf]
      %v6276 = vld [vmem:[%s6271 + $0x10] sm:$0xf]
      %v6277 = vld [vmem:[%s6271 + $0x14] sm:$0xf]
      %v6278 = vld [vmem:[%s6271 + $0x18] sm:$0xf]
      %v6279 = vld [vmem:[%s6271 + $0x1c] sm:$0xf]
      %v6280 = vld [vmem:[%s6271 + $0x20] sm:$0xf]
      %v6281 = vld [vmem:[%s6271 + $0x24] sm:$0xf]
      %v6282 = vld [vmem:[%s6271 + $0x28] sm:$0xf]
      %v6283 = vld [vmem:[%s6271 + $0x2c] sm:$0xf]
      %v6284 = vld [vmem:[%s6271 + $0x30] sm:$0xf]
      %v6285 = vld [vmem:[%s6271 + $0x34] sm:$0xf]
      %v6286 = vld [vmem:[%s6271 + $0x38] sm:$0xf]
      %v6287 = vld [vmem:[%s6271 + $0x3c] sm:$0xf]
      %v6289 = vunpack.c.l.b16 %v6270
      %v6290 = vpack.c.b16 %v5894, %v6289
      %v6291 = vrot.slane %v6290, 3
      %v6292 = vrot.slane %v5920, 3
      %v6293 = vsel %vm1748, %v6291, %v6292
      %v6294 = vrot.slane %v5921, 3
      %v6295 = vsel %vm1748, %v6292, %v6294
      %v6296 = vrot.slane %v5922, 3
      %v6297 = vsel %vm1748, %v6294, %v6296
      %v6298 = vrot.slane %v5923, 3
      %v6299 = vsel %vm1748, %v6296, %v6298
      %v6300 = vrot.slane %v5924, 3
      %v6301 = vsel %vm1748, %v6298, %v6300
      %v6302 = vrot.slane %v5925, 3
      %v6303 = vsel %vm1748, %v6300, %v6302
      %v6304 = vrot.slane %v5926, 3
      %v6305 = vsel %vm1748, %v6302, %v6304
      %v6306 = vrot.slane %v5927, 3
      %v6307 = vsel %vm1748, %v6304, %v6306
      %v6308 = vrot.slane %v5928, 3
      %v6309 = vsel %vm1748, %v6306, %v6308
      %v6310 = vrot.slane %v5929, 3
      %v6311 = vsel %vm1748, %v6308, %v6310
      %v6312 = vrot.slane %v5930, 3
      %v6313 = vsel %vm1748, %v6310, %v6312
      %v6314 = vrot.slane %v5931, 3
      %v6315 = vsel %vm1748, %v6312, %v6314
      %v6345 = vunpack.c.l.b16 %v6272
      %v6346 = vunpack.c.l.b16 %v6273
      %v6347 = vunpack.c.l.b16 %v6274
      %v6348 = vunpack.c.l.b16 %v6275
      %v6349 = vunpack.c.l.b16 %v6276
      %v6350 = vunpack.c.l.b16 %v6277
      %v6351 = vunpack.c.l.b16 %v6278
      %v6352 = vunpack.c.l.b16 %v6279
      %v6353 = vunpack.c.l.b16 %v6280
      %v6354 = vunpack.c.l.b16 %v6281
      %v6355 = vunpack.c.l.b16 %v6282
      %v6356 = vunpack.c.l.b16 %v6283
      %v6357 = vunpack.c.l.b16 %v6284
      %v6358 = vunpack.c.l.b16 %v6285
      %v6359 = vunpack.c.l.b16 %v6286
      %v6360 = vunpack.c.l.b16 %v6287
      %v6361 = vpack.c.b16 %v6346, %v6345
      %v6362 = vpack.c.b16 %v6348, %v6347
      %v6363 = vpack.c.b16 %v6350, %v6349
      %v6364 = vpack.c.b16 %v6352, %v6351
      %v6365 = vpack.c.b16 %v6354, %v6353
      %v6366 = vpack.c.b16 %v6356, %v6355
      %v6367 = vpack.c.b16 %v6358, %v6357
      %v6368 = vpack.c.b16 %v6360, %v6359
      %6377 = vmatprep.subr.bf16.mxu0 0
      %6378 = vmatpush1.bf16.msra.mxu0 %v6361
      %6379 = vmatprep.subr.bf16.mxu0 0
      %6380 = vmatpush1.bf16.msra.mxu0 %v6362
      %6381 = vmatprep.subr.bf16.mxu0 0
      %6382 = vmatpush1.bf16.msra.mxu0 %v6363
      %6383 = vmatprep.subr.bf16.mxu0 0
      %6384 = vmatpush1.bf16.msra.mxu0 %v6364
      %6385 = vmatprep.subr.bf16.mxu0 0
      %6386 = vmatpush1.bf16.msra.mxu0 %v6365
      %6387 = vmatprep.subr.bf16.mxu0 0
      %6388 = vmatpush1.bf16.msra.mxu0 %v6366
      %6389 = vmatprep.subr.bf16.mxu0 0
      %6390 = vmatpush1.bf16.msra.mxu0 %v6367
      %6391 = vmatprep.subr.bf16.mxu0 0
      %6392 = vmatpush1.bf16.msra.mxu0 %v6368
      %6393 = vmatprep.subr.bf16.mxu0 0
      %6394 = vmatpush1.bf16.msra.mxu0 0
      %6395 = vmatprep.subr.bf16.mxu0 0
      %6396 = vmatpush1.bf16.msra.mxu0 0
      %6397 = vmatprep.subr.bf16.mxu0 0
      %6398 = vmatpush1.bf16.msra.mxu0 0
      %6399 = vmatprep.subr.bf16.mxu0 0
      %6400 = vmatpush1.bf16.msra.mxu0 0
      %6401 = vmatprep.subr.bf16.mxu0 0
      %6402 = vmatpush1.bf16.msra.mxu0 0
      %6403 = vmatprep.subr.bf16.mxu0 0
      %6404 = vmatpush1.bf16.msra.mxu0 0
      %6405 = vmatprep.subr.bf16.mxu0 0
      %6406 = vmatpush1.bf16.msra.mxu0 0
      %6407 = vmatprep.subr.bf16.mxu0 0
      %6408 = vmatpush1.bf16.msra.mxu0 0
      %6409 = vmatprep.mubr.bf16.mxu0 0
      %6410 = vmatmul.mubr.bf16.gmra.mrb[0].mxu0 %v6293
      %v6411 = vpop.f32.mrb[0].mxu0
      %v6412 = vadd.f32 0.0, %v6411
      %v6413 = vpop.f32.mrb[0].mxu0
      %v6414 = vpop.f32.mrb[0].mxu0
      %v6415 = vadd.f32 0.0, %v6414
      %v6416 = vpop.f32.mrb[0].mxu0
      %6417 = vmatprep.mubr.bf16.mxu0 0
      %6418 = vmatmul.mubr.bf16.gmra.mrb[0].mxu0 %v6295
      %v6419 = vpop.f32.mrb[0].mxu0
      %v6420 = vadd.f32 0.0, %v6419
      %v6421 = vpop.f32.mrb[0].mxu0
      %v6422 = vpop.f32.mrb[0].mxu0
      %v6423 = vadd.f32 0.0, %v6422
      %v6424 = vpop.f32.mrb[0].mxu0
      %6425 = vmatprep.mubr.bf16.mxu0 0
      %6426 = vmatmul.mubr.bf16.gmra.mrb[0].mxu0 %v6297
      %v6427 = vpop.f32.mrb[0].mxu0
      %v6428 = vadd.f32 0.0, %v6427
      %v6429 = vpop.f32.mrb[0].mxu0
      %v6430 = vpop.f32.mrb[0].mxu0
      %v6431 = vadd.f32 0.0, %v6430
      %v6432 = vpop.f32.mrb[0].mxu0
      %6433 = vmatprep.mubr.bf16.mxu0 0
      %6434 = vmatmul.mubr.bf16.gmra.mrb[0].mxu0 %v6299
      %v6435 = vpop.f32.mrb[0].mxu0
      %v6436 = vadd.f32 0.0, %v6435
      %v6437 = vpop.f32.mrb[0].mxu0
      %v6438 = vpop.f32.mrb[0].mxu0
      %v6439 = vadd.f32 0.0, %v6438
      %v6440 = vpop.f32.mrb[0].mxu0
      %6441 = vmatprep.mubr.bf16.mxu0 0
      %6442 = vmatmul.mubr.bf16.gmra.mrb[0].mxu0 %v6301
      %v6443 = vpop.f32.mrb[0].mxu0
      %v6444 = vadd.f32 0.0, %v6443
      %v6445 = vpop.f32.mrb[0].mxu0
      %v6446 = vpop.f32.mrb[0].mxu0
      %v6447 = vadd.f32 0.0, %v6446
      %v6448 = vpop.f32.mrb[0].mxu0
      %6449 = vmatprep.mubr.bf16.mxu0 0
      %6450 = vmatmul.mubr.bf16.gmra.mrb[0].mxu0 %v6303
      %v6451 = vpop.f32.mrb[0].mxu0
      %v6452 = vadd.f32 0.0, %v6451
      %v6453 = vpop.f32.mrb[0].mxu0
      %v6454 = vpop.f32.mrb[0].mxu0
      %v6455 = vadd.f32 0.0, %v6454
      %v6456 = vpop.f32.mrb[0].mxu0
      %6457 = vmatprep.mubr.bf16.mxu0 0
      %6458 = vmatmul.mubr.bf16.gmra.mrb[0].mxu0 %v6305
      %v6459 = vpop.f32.mrb[0].mxu0
      %v6460 = vadd.f32 0.0, %v6459
      %v6461 = vpop.f32.mrb[0].mxu0
      %v6462 = vpop.f32.mrb[0].mxu0
      %v6463 = vadd.f32 0.0, %v6462
      %v6464 = vpop.f32.mrb[0].mxu0
      %6465 = vmatprep.mubr.bf16.mxu0 0
      %6466 = vmatmul.mubr.bf16.gmra.mrb[0].mxu0 %v6307
      %v6467 = vpop.f32.mrb[0].mxu0
      %v6468 = vadd.f32 0.0, %v6467
      %v6469 = vpop.f32.mrb[0].mxu0
      %v6470 = vpop.f32.mrb[0].mxu0
      %v6471 = vadd.f32 0.0, %v6470
      %v6472 = vpop.f32.mrb[0].mxu0
      %6473 = vmatprep.mubr.bf16.mxu0 0
      %6474 = vmatmul.mubr.bf16.gmra.mrb[0].mxu0 %v6309
      %v6475 = vpop.f32.mrb[0].mxu0
      %v6476 = vadd.f32 0.0, %v6475
      %v6477 = vpop.f32.mrb[0].mxu0
      %v6478 = vpop.f32.mrb[0].mxu0
      %v6479 = vadd.f32 0.0, %v6478
      %v6480 = vpop.f32.mrb[0].mxu0
      %6481 = vmatprep.mubr.bf16.mxu0 0
      %6482 = vmatmul.mubr.bf16.gmra.mrb[0].mxu0 %v6311
      %v6483 = vpop.f32.mrb[0].mxu0
      %v6484 = vadd.f32 0.0, %v6483
      %v6485 = vpop.f32.mrb[0].mxu0
      %v6486 = vpop.f32.mrb[0].mxu0
      %v6487 = vadd.f32 0.0, %v6486
      %v6488 = vpop.f32.mrb[0].mxu0
      %6489 = vmatprep.mubr.bf16.mxu0 0
      %6490 = vmatmul.mubr.bf16.gmra.mrb[0].mxu0 %v6313
      %v6491 = vpop.f32.mrb[0].mxu0
      %v6492 = vadd.f32 0.0, %v6491
      %v6493 = vpop.f32.mrb[0].mxu0
      %v6494 = vpop.f32.mrb[0].mxu0
      %v6495 = vadd.f32 0.0, %v6494
      %v6496 = vpop.f32.mrb[0].mxu0
      %6497 = vmatprep.mubr.bf16.mxu0 0
      %6498 = vmatmul.mubr.bf16.gmra.mrb[0].mxu0 %v6315
      %v6499 = vpop.f32.mrb[0].mxu0
      %v6500 = vadd.f32 0.0, %v6499
      %v6501 = vpop.f32.mrb[0].mxu0
      %v6502 = vpop.f32.mrb[0].mxu0
      %v6503 = vadd.f32 0.0, %v6502
      %v6504 = vpop.f32.mrb[0].mxu0
      %6505 = vmatprep.mubr.bf16.mxu0 0
      %6506 = vmatmul.mubr.bf16.gmra.mrb[0].mxu0 %v6314
      %v6507 = vpop.f32.mrb[0].mxu0
      %v6508 = vadd.f32 0.0, %v6507
      %v6509 = vpop.f32.mrb[0].mxu0
      %v6510 = vpop.f32.mrb[0].mxu0
      %v6511 = vpop.f32.mrb[0].mxu0
      %6512 = vdwg.mxu0
      %v6513 = vadd.f32 %v6245, %v6412
      %v6514 = vadd.f32 %v6246, %v6415
      %v6515 = vadd.f32 %v6247, %v6420
      %v6516 = vadd.f32 %v6248, %v6423
      %v6517 = vadd.f32 %v6249, %v6428
      %v6518 = vadd.f32 %v6250, %v6431
      %v6519 = vadd.f32 %v6251, %v6436
      %v6520 = vadd.f32 %v6252, %v6439
      %v6521 = vadd.f32 %v6253, %v6444
      %v6522 = vadd.f32 %v6254, %v6447
      %v6523 = vadd.f32 %v6255, %v6452
      %v6524 = vadd.f32 %v6256, %v6455
      %v6525 = vadd.f32 %v6257, %v6460
      %v6526 = vadd.f32 %v6258, %v6463
      %v6527 = vadd.f32 %v6259, %v6468
      %v6528 = vadd.f32 %v6260, %v6471
      %v6529 = vadd.f32 %v6261, %v6476
      %v6530 = vadd.f32 %v6262, %v6479
      %v6531 = vadd.f32 %v6263, %v6484
      %v6532 = vadd.f32 %v6264, %v6487
      %v6533 = vadd.f32 %v6265, %v6492
      %v6534 = vadd.f32 %v6266, %v6495
      %v6535 = vadd.f32 %v6267, %v6500
      %v6536 = vadd.f32 %v6268, %v6503
      %v6537 = vadd.f32 %v6269, %v6508
      %v6538 = vld [vmem:[%s166 + $0x1c] sm:$0xf]
      %v6539 = vld [vmem:[%s166 + $0x20] sm:$0xf]
      %v6540 = vld [vmem:[%s166 + $0x24] sm:$0xf]
      %v6541 = vld [vmem:[%s166 + $0x28] sm:$0xf]
      %v6542 = vld [vmem:[%s166 + $0x2c] sm:$0xf]
      %v6543 = vld [vmem:[%s166 + $0x30] sm:$0xf]
      %v6544 = vld [vmem:[%s166 + $0x34] sm:$0xf]
      %v6545 = vld [vmem:[%s166 + $0x38] sm:$0xf]
      %v6546 = vld [vmem:[%s166 + $0x3c] sm:$0xf]
      %v6547 = vld [vmem:[%s166 + $0x40] sm:$0xf]
      %v6548 = vld [vmem:[%s166 + $0x44] sm:$0xf]
      %v6549 = vld [vmem:[%s166 + $0x48] sm:$0xf]
      %v6550 = vld [vmem:[%s166 + $0x4c] sm:$0xf]
      %v6551 = vld [vmem:[%s166 + $0x50] sm:$0xf]
      %v6552 = vld [vmem:[%s166 + $0x54] sm:$0xf]
      %v6553 = vld [vmem:[%s166 + $0x58] sm:$0xf]
      %v6554 = vld [vmem:[%s166 + $0x5c] sm:$0xf]
      %v6555 = vld [vmem:[%s166 + $0x60] sm:$0xf]
      %v6556 = vld [vmem:[%s166 + $0x64] sm:$0xf]
      %v6557 = vld [vmem:[%s166 + $0x68] sm:$0xf]
      %v6558 = vld [vmem:[%s166 + $0x6c] sm:$0xf]
      %v6559 = vld [vmem:[%s166 + $0x70] sm:$0xf]
      %v6560 = vld [vmem:[%s166 + $0x74] sm:$0xf]
      %v6561 = vld [vmem:[%s166 + $0x78] sm:$0xf]
      %v6562 = vld [vmem:[%s166 + $0x7c] sm:$0x3]
      %s6563 = scalar_lea.vmem %s1, 1280
      %v6564 = vld [vmem:[%s6563] sm:$0xf]
      %v6565 = vld [vmem:[%s6563 + $0x4] sm:$0xf]
      %v6566 = vld [vmem:[%s6563 + $0x8] sm:$0xf]
      %v6567 = vld [vmem:[%s6563 + $0xc] sm:$0xf]
      %v6568 = vld [vmem:[%s6563 + $0x10] sm:$0xf]
      %v6569 = vld [vmem:[%s6563 + $0x14] sm:$0xf]
      %v6570 = vld [vmem:[%s6563 + $0x18] sm:$0xf]
      %v6571 = vld [vmem:[%s6563 + $0x1c] sm:$0xf]
      %v6572 = vld [vmem:[%s6563 + $0x20] sm:$0xf]
      %v6573 = vld [vmem:[%s6563 + $0x24] sm:$0xf]
      %v6574 = vld [vmem:[%s6563 + $0x28] sm:$0xf]
      %v6575 = vld [vmem:[%s6563 + $0x2c] sm:$0xf]
      %v6576 = vld [vmem:[%s6563 + $0x30] sm:$0xf]
      %v6577 = vld [vmem:[%s6563 + $0x34] sm:$0xf]
      %v6578 = vld [vmem:[%s6563 + $0x38] sm:$0xf]
      %v6579 = vld [vmem:[%s6563 + $0x3c] sm:$0xf]
      %v6605 = vunpack.c.l.b16 %v6538
      %v6606 = vunpack.c.l.b16 %v6539
      %v6607 = vunpack.c.l.b16 %v6540
      %v6608 = vunpack.c.l.b16 %v6541
      %v6609 = vunpack.c.l.b16 %v6542
      %v6610 = vunpack.c.l.b16 %v6543
      %v6611 = vunpack.c.l.b16 %v6544
      %v6612 = vunpack.c.l.b16 %v6545
      %v6613 = vunpack.c.l.b16 %v6546
      %v6614 = vunpack.c.l.b16 %v6547
      %v6615 = vunpack.c.l.b16 %v6548
      %v6616 = vunpack.c.l.b16 %v6549
      %v6617 = vunpack.c.l.b16 %v6550
      %v6618 = vunpack.c.l.b16 %v6551
      %v6619 = vunpack.c.l.b16 %v6552
      %v6620 = vunpack.c.l.b16 %v6553
      %v6621 = vunpack.c.l.b16 %v6554
      %v6622 = vunpack.c.l.b16 %v6555
      %v6623 = vunpack.c.l.b16 %v6556
      %v6624 = vunpack.c.l.b16 %v6557
      %v6625 = vunpack.c.l.b16 %v6558
      %v6626 = vunpack.c.l.b16 %v6559
      %v6627 = vunpack.c.l.b16 %v6560
      %v6628 = vunpack.c.l.b16 %v6561
      %v6629 = vunpack.c.l.b16 %v6562
      %v6630 = vpack.c.b16 %v6606, %v6605
      %v6631 = vpack.c.b16 %v6608, %v6607
      %v6632 = vpack.c.b16 %v6610, %v6609
      %v6633 = vpack.c.b16 %v6612, %v6611
      %v6634 = vpack.c.b16 %v6614, %v6613
      %v6635 = vpack.c.b16 %v6616, %v6615
      %v6636 = vpack.c.b16 %v6618, %v6617
      %v6637 = vpack.c.b16 %v6620, %v6619
      %v6638 = vpack.c.b16 %v6622, %v6621
      %v6639 = vpack.c.b16 %v6624, %v6623
      %v6640 = vpack.c.b16 %v6626, %v6625
      %v6641 = vpack.c.b16 %v6628, %v6627
      %v6642 = vpack.c.b16 %v6629, %v6629
      %v6672 = vunpack.c.l.b16 %v6564
      %v6673 = vunpack.c.l.b16 %v6565
      %v6674 = vunpack.c.l.b16 %v6566
      %v6675 = vunpack.c.l.b16 %v6567
      %v6676 = vunpack.c.l.b16 %v6568
      %v6677 = vunpack.c.l.b16 %v6569
      %v6678 = vunpack.c.l.b16 %v6570
      %v6679 = vunpack.c.l.b16 %v6571
      %v6680 = vunpack.c.l.b16 %v6572
      %v6681 = vunpack.c.l.b16 %v6573
      %v6682 = vunpack.c.l.b16 %v6574
      %v6683 = vunpack.c.l.b16 %v6575
      %v6684 = vunpack.c.l.b16 %v6576
      %v6685 = vunpack.c.l.b16 %v6577
      %v6686 = vunpack.c.l.b16 %v6578
      %v6687 = vunpack.c.l.b16 %v6579
      %v6688 = vpack.c.b16 %v6673, %v6672
      %v6689 = vpack.c.b16 %v6675, %v6674
      %v6690 = vpack.c.b16 %v6677, %v6676
      %v6691 = vpack.c.b16 %v6679, %v6678
      %v6692 = vpack.c.b16 %v6681, %v6680
      %v6693 = vpack.c.b16 %v6683, %v6682
      %v6694 = vpack.c.b16 %v6685, %v6684
      %v6695 = vpack.c.b16 %v6687, %v6686
      %6704 = vmatprep.subr.bf16.mxu0 0
      %6705 = vmatpush1.bf16.msra.mxu0 %v6688
      %6706 = vmatprep.subr.bf16.mxu0 0
      %6707 = vmatpush1.bf16.msra.mxu0 %v6689
      %6708 = vmatprep.subr.bf16.mxu0 0
      %6709 = vmatpush1.bf16.msra.mxu0 %v6690
      %6710 = vmatprep.subr.bf16.mxu0 0
      %6711 = vmatpush1.bf16.msra.mxu0 %v6691
      %6712 = vmatprep.subr.bf16.mxu0 0
      %6713 = vmatpush1.bf16.msra.mxu0 %v6692
      %6714 = vmatprep.subr.bf16.mxu0 0
      %6715 = vmatpush1.bf16.msra.mxu0 %v6693
      %6716 = vmatprep.subr.bf16.mxu0 0
      %6717 = vmatpush1.bf16.msra.mxu0 %v6694
      %6718 = vmatprep.subr.bf16.mxu0 0
      %6719 = vmatpush1.bf16.msra.mxu0 %v6695
      %6720 = vmatprep.subr.bf16.mxu0 0
      %6721 = vmatpush1.bf16.msra.mxu0 0
      %6722 = vmatprep.subr.bf16.mxu0 0
      %6723 = vmatpush1.bf16.msra.mxu0 0
      %6724 = vmatprep.subr.bf16.mxu0 0
      %6725 = vmatpush1.bf16.msra.mxu0 0
      %6726 = vmatprep.subr.bf16.mxu0 0
      %6727 = vmatpush1.bf16.msra.mxu0 0
      %6728 = vmatprep.subr.bf16.mxu0 0
      %6729 = vmatpush1.bf16.msra.mxu0 0
      %6730 = vmatprep.subr.bf16.mxu0 0
      %6731 = vmatpush1.bf16.msra.mxu0 0
      %6732 = vmatprep.subr.bf16.mxu0 0
      %6733 = vmatpush1.bf16.msra.mxu0 0
      %6734 = vmatprep.subr.bf16.mxu0 0
      %6735 = vmatpush1.bf16.msra.mxu0 0
      %6736 = vmatprep.mubr.bf16.mxu0 0
      %6737 = vmatmul.mubr.bf16.gmra.mrb[0].mxu0 %v6630
      %v6738 = vpop.f32.mrb[0].mxu0
      %v6739 = vadd.f32 0.0, %v6738
      %v6740 = vpop.f32.mrb[0].mxu0
      %v6741 = vpop.f32.mrb[0].mxu0
      %v6742 = vadd.f32 0.0, %v6741
      %v6743 = vpop.f32.mrb[0].mxu0
      %6744 = vmatprep.mubr.bf16.mxu0 0
      %6745 = vmatmul.mubr.bf16.gmra.mrb[0].mxu0 %v6631
      %v6746 = vpop.f32.mrb[0].mxu0
      %v6747 = vadd.f32 0.0, %v6746
      %v6748 = vpop.f32.mrb[0].mxu0
      %v6749 = vpop.f32.mrb[0].mxu0
      %v6750 = vadd.f32 0.0, %v6749
      %v6751 = vpop.f32.mrb[0].mxu0
      %6752 = vmatprep.mubr.bf16.mxu0 0
      %6753 = vmatmul.mubr.bf16.gmra.mrb[0].mxu0 %v6632
      %v6754 = vpop.f32.mrb[0].mxu0
      %v6755 = vadd.f32 0.0, %v6754
      %v6756 = vpop.f32.mrb[0].mxu0
      %v6757 = vpop.f32.mrb[0].mxu0
      %v6758 = vadd.f32 0.0, %v6757
      %v6759 = vpop.f32.mrb[0].mxu0
      %6760 = vmatprep.mubr.bf16.mxu0 0
      %6761 = vmatmul.mubr.bf16.gmra.mrb[0].mxu0 %v6633
      %v6762 = vpop.f32.mrb[0].mxu0
      %v6763 = vadd.f32 0.0, %v6762
      %v6764 = vpop.f32.mrb[0].mxu0
      %v6765 = vpop.f32.mrb[0].mxu0
      %v6766 = vadd.f32 0.0, %v6765
      %v6767 = vpop.f32.mrb[0].mxu0
      %6768 = vmatprep.mubr.bf16.mxu0 0
      %6769 = vmatmul.mubr.bf16.gmra.mrb[0].mxu0 %v6634
      %v6770 = vpop.f32.mrb[0].mxu0
      %v6771 = vadd.f32 0.0, %v6770
      %v6772 = vpop.f32.mrb[0].mxu0
      %v6773 = vpop.f32.mrb[0].mxu0
      %v6774 = vadd.f32 0.0, %v6773
      %v6775 = vpop.f32.mrb[0].mxu0
      %6776 = vmatprep.mubr.bf16.mxu0 0
      %6777 = vmatmul.mubr.bf16.gmra.mrb[0].mxu0 %v6635
      %v6778 = vpop.f32.mrb[0].mxu0
      %v6779 = vadd.f32 0.0, %v6778
      %v6780 = vpop.f32.mrb[0].mxu0
      %v6781 = vpop.f32.mrb[0].mxu0
      %v6782 = vadd.f32 0.0, %v6781
      %v6783 = vpop.f32.mrb[0].mxu0
      %6784 = vmatprep.mubr.bf16.mxu0 0
      %6785 = vmatmul.mubr.bf16.gmra.mrb[0].mxu0 %v6636
      %v6786 = vpop.f32.mrb[0].mxu0
      %v6787 = vadd.f32 0.0, %v6786
      %v6788 = vpop.f32.mrb[0].mxu0
      %v6789 = vpop.f32.mrb[0].mxu0
      %v6790 = vadd.f32 0.0, %v6789
      %v6791 = vpop.f32.mrb[0].mxu0
      %6792 = vmatprep.mubr.bf16.mxu0 0
      %6793 = vmatmul.mubr.bf16.gmra.mrb[0].mxu0 %v6637
      %v6794 = vpop.f32.mrb[0].mxu0
      %v6795 = vadd.f32 0.0, %v6794
      %v6796 = vpop.f32.mrb[0].mxu0
      %v6797 = vpop.f32.mrb[0].mxu0
      %v6798 = vadd.f32 0.0, %v6797
      %v6799 = vpop.f32.mrb[0].mxu0
      %6800 = vmatprep.mubr.bf16.mxu0 0
      %6801 = vmatmul.mubr.bf16.gmra.mrb[0].mxu0 %v6638
      %v6802 = vpop.f32.mrb[0].mxu0
      %v6803 = vadd.f32 0.0, %v6802
      %v6804 = vpop.f32.mrb[0].mxu0
      %v6805 = vpop.f32.mrb[0].mxu0
      %v6806 = vadd.f32 0.0, %v6805
      %v6807 = vpop.f32.mrb[0].mxu0
      %6808 = vmatprep.mubr.bf16.mxu0 0
      %6809 = vmatmul.mubr.bf16.gmra.mrb[0].mxu0 %v6639
      %v6810 = vpop.f32.mrb[0].mxu0
      %v6811 = vadd.f32 0.0, %v6810
      %v6812 = vpop.f32.mrb[0].mxu0
      %v6813 = vpop.f32.mrb[0].mxu0
      %v6814 = vadd.f32 0.0, %v6813
      %v6815 = vpop.f32.mrb[0].mxu0
      %6816 = vmatprep.mubr.bf16.mxu0 0
      %6817 = vmatmul.mubr.bf16.gmra.mrb[0].mxu0 %v6640
      %v6818 = vpop.f32.mrb[0].mxu0
      %v6819 = vadd.f32 0.0, %v6818
      %v6820 = vpop.f32.mrb[0].mxu0
      %v6821 = vpop.f32.mrb[0].mxu0
      %v6822 = vadd.f32 0.0, %v6821
      %v6823 = vpop.f32.mrb[0].mxu0
      %6824 = vmatprep.mubr.bf16.mxu0 0
      %6825 = vmatmul.mubr.bf16.gmra.mrb[0].mxu0 %v6641
      %v6826 = vpop.f32.mrb[0].mxu0
      %v6827 = vadd.f32 0.0, %v6826
      %v6828 = vpop.f32.mrb[0].mxu0
      %v6829 = vpop.f32.mrb[0].mxu0
      %v6830 = vadd.f32 0.0, %v6829
      %v6831 = vpop.f32.mrb[0].mxu0
      %6832 = vmatprep.mubr.bf16.mxu0 0
      %6833 = vmatmul.mubr.bf16.gmra.mrb[0].mxu0 %v6642
      %v6834 = vpop.f32.mrb[0].mxu0
      %v6835 = vadd.f32 0.0, %v6834
      %v6836 = vpop.f32.mrb[0].mxu0
      %v6837 = vpop.f32.mrb[0].mxu0
      %v6838 = vpop.f32.mrb[0].mxu0
      %6839 = vdwg.mxu0
      %v6840 = vadd.f32 %v6513, %v6739
      %v6841 = vadd.f32 %v6514, %v6742
      %v6842 = vadd.f32 %v6515, %v6747
      %v6843 = vadd.f32 %v6516, %v6750
      %v6844 = vadd.f32 %v6517, %v6755
      %v6845 = vadd.f32 %v6518, %v6758
      %v6846 = vadd.f32 %v6519, %v6763
      %v6847 = vadd.f32 %v6520, %v6766
      %v6848 = vadd.f32 %v6521, %v6771
      %v6849 = vadd.f32 %v6522, %v6774
      %v6850 = vadd.f32 %v6523, %v6779
      %v6851 = vadd.f32 %v6524, %v6782
      %v6852 = vadd.f32 %v6525, %v6787
      %v6853 = vadd.f32 %v6526, %v6790
      %v6854 = vadd.f32 %v6527, %v6795
      %v6855 = vadd.f32 %v6528, %v6798
      %v6856 = vadd.f32 %v6529, %v6803
      %v6857 = vadd.f32 %v6530, %v6806
      %v6858 = vadd.f32 %v6531, %v6811
      %v6859 = vadd.f32 %v6532, %v6814
      %v6860 = vadd.f32 %v6533, %v6819
      %v6861 = vadd.f32 %v6534, %v6822
      %v6862 = vadd.f32 %v6535, %v6827
      %v6863 = vadd.f32 %v6536, %v6830
      %v6864 = vadd.f32 %v6537, %v6835
      %v6865 = vld [vmem:[%s166 + $0x7c] sm:$0x7]
      %s6866 = scalar_lea.vmem %s1, 1344
      %v6867 = vld [vmem:[%s6866] sm:$0xf]
      %v6868 = vld [vmem:[%s6866 + $0x4] sm:$0xf]
      %v6869 = vld [vmem:[%s6866 + $0x8] sm:$0xf]
      %v6870 = vld [vmem:[%s6866 + $0xc] sm:$0xf]
      %v6871 = vld [vmem:[%s6866 + $0x10] sm:$0xf]
      %v6872 = vld [vmem:[%s6866 + $0x14] sm:$0xf]
      %v6873 = vld [vmem:[%s6866 + $0x18] sm:$0xf]
      %v6874 = vld [vmem:[%s6866 + $0x1c] sm:$0xf]
      %v6875 = vld [vmem:[%s6866 + $0x20] sm:$0xf]
      %v6876 = vld [vmem:[%s6866 + $0x24] sm:$0xf]
      %v6877 = vld [vmem:[%s6866 + $0x28] sm:$0xf]
      %v6878 = vld [vmem:[%s6866 + $0x2c] sm:$0xf]
      %v6879 = vld [vmem:[%s6866 + $0x30] sm:$0xf]
      %v6880 = vld [vmem:[%s6866 + $0x34] sm:$0xf]
      %v6881 = vld [vmem:[%s6866 + $0x38] sm:$0xf]
      %v6882 = vld [vmem:[%s6866 + $0x3c] sm:$0xf]
      %v6884 = vunpack.c.l.b16 %v6865
      %v6885 = vpack.c.b16 %v6884, %v6884
      %v6887 = vshrl.u32 %v6630, 16
      %v6889 = vshll.u32 %v6630, 16
      %v6891 = vrot.slane %v6889, 1
      %v6892 = vor.u32 %v6887, %v6891
      %v6894 = vshll.u32 %v6631, 16
      %v6896 = vrot.slane %v6894, 1
      %v6897 = vsel %vm296, %v6892, %v6896
      %v6898 = vshrl.u32 %v6631, 16
      %v6900 = vor.u32 %v6898, %v6896
      %v6902 = vshll.u32 %v6632, 16
      %v6904 = vrot.slane %v6902, 1
      %v6905 = vsel %vm296, %v6900, %v6904
      %v6906 = vshrl.u32 %v6632, 16
      %v6908 = vor.u32 %v6906, %v6904
      %v6910 = vshll.u32 %v6633, 16
      %v6912 = vrot.slane %v6910, 1
      %v6913 = vsel %vm296, %v6908, %v6912
      %v6914 = vshrl.u32 %v6633, 16
      %v6916 = vor.u32 %v6914, %v6912
      %v6918 = vshll.u32 %v6634, 16
      %v6920 = vrot.slane %v6918, 1
      %v6921 = vsel %vm296, %v6916, %v6920
      %v6922 = vshrl.u32 %v6634, 16
      %v6924 = vor.u32 %v6922, %v6920
      %v6926 = vshll.u32 %v6635, 16
      %v6928 = vrot.slane %v6926, 1
      %v6929 = vsel %vm296, %v6924, %v6928
      %v6930 = vshrl.u32 %v6635, 16
      %v6932 = vor.u32 %v6930, %v6928
      %v6934 = vshll.u32 %v6636, 16
      %v6936 = vrot.slane %v6934, 1
      %v6937 = vsel %vm296, %v6932, %v6936
      %v6938 = vshrl.u32 %v6636, 16
      %v6940 = vor.u32 %v6938, %v6936
      %v6942 = vshll.u32 %v6637, 16
      %v6944 = vrot.slane %v6942, 1
      %v6945 = vsel %vm296, %v6940, %v6944
      %v6946 = vshrl.u32 %v6637, 16
      %v6948 = vor.u32 %v6946, %v6944
      %v6950 = vshll.u32 %v6638, 16
      %v6952 = vrot.slane %v6950, 1
      %v6953 = vsel %vm296, %v6948, %v6952
      %v6954 = vshrl.u32 %v6638, 16
      %v6956 = vor.u32 %v6954, %v6952
      %v6958 = vshll.u32 %v6639, 16
      %v6960 = vrot.slane %v6958, 1
      %v6961 = vsel %vm296, %v6956, %v6960
      %v6962 = vshrl.u32 %v6639, 16
      %v6964 = vor.u32 %v6962, %v6960
      %v6966 = vshll.u32 %v6640, 16
      %v6968 = vrot.slane %v6966, 1
      %v6969 = vsel %vm296, %v6964, %v6968
      %v6970 = vshrl.u32 %v6640, 16
      %v6972 = vor.u32 %v6970, %v6968
      %v6974 = vshll.u32 %v6641, 16
      %v6976 = vrot.slane %v6974, 1
      %v6977 = vsel %vm296, %v6972, %v6976
      %v6978 = vshrl.u32 %v6641, 16
      %v6980 = vor.u32 %v6978, %v6976
      %v6982 = vshll.u32 %v6885, 16
      %v6984 = vrot.slane %v6982, 1
      %v6985 = vsel %vm296, %v6980, %v6984
      %v6986 = vshrl.u32 %v6885, 16
      %v6988 = vor.u32 %v6986, %v6984
      %v7018 = vunpack.c.l.b16 %v6867
      %v7019 = vunpack.c.l.b16 %v6868
      %v7020 = vunpack.c.l.b16 %v6869
      %v7021 = vunpack.c.l.b16 %v6870
      %v7022 = vunpack.c.l.b16 %v6871
      %v7023 = vunpack.c.l.b16 %v6872
      %v7024 = vunpack.c.l.b16 %v6873
      %v7025 = vunpack.c.l.b16 %v6874
      %v7026 = vunpack.c.l.b16 %v6875
      %v7027 = vunpack.c.l.b16 %v6876
      %v7028 = vunpack.c.l.b16 %v6877
      %v7029 = vunpack.c.l.b16 %v6878
      %v7030 = vunpack.c.l.b16 %v6879
      %v7031 = vunpack.c.l.b16 %v6880
      %v7032 = vunpack.c.l.b16 %v6881
      %v7033 = vunpack.c.l.b16 %v6882
      %v7034 = vpack.c.b16 %v7019, %v7018
      %v7035 = vpack.c.b16 %v7021, %v7020
      %v7036 = vpack.c.b16 %v7023, %v7022
      %v7037 = vpack.c.b16 %v7025, %v7024
      %v7038 = vpack.c.b16 %v7027, %v7026
      %v7039 = vpack.c.b16 %v7029, %v7028
      %v7040 = vpack.c.b16 %v7031, %v7030
      %v7041 = vpack.c.b16 %v7033, %v7032
      %7050 = vmatprep.subr.bf16.mxu0 0
      %7051 = vmatpush1.bf16.msra.mxu0 %v7034
      %7052 = vmatprep.subr.bf16.mxu0 0
      %7053 = vmatpush1.bf16.msra.mxu0 %v7035
      %7054 = vmatprep.subr.bf16.mxu0 0
      %7055 = vmatpush1.bf16.msra.mxu0 %v7036
      %7056 = vmatprep.subr.bf16.mxu0 0
      %7057 = vmatpush1.bf16.msra.mxu0 %v7037
      %7058 = vmatprep.subr.bf16.mxu0 0
      %7059 = vmatpush1.bf16.msra.mxu0 %v7038
      %7060 = vmatprep.subr.bf16.mxu0 0
      %7061 = vmatpush1.bf16.msra.mxu0 %v7039
      %7062 = vmatprep.subr.bf16.mxu0 0
      %7063 = vmatpush1.bf16.msra.mxu0 %v7040
      %7064 = vmatprep.subr.bf16.mxu0 0
      %7065 = vmatpush1.bf16.msra.mxu0 %v7041
      %7066 = vmatprep.subr.bf16.mxu0 0
      %7067 = vmatpush1.bf16.msra.mxu0 0
      %7068 = vmatprep.subr.bf16.mxu0 0
      %7069 = vmatpush1.bf16.msra.mxu0 0
      %7070 = vmatprep.subr.bf16.mxu0 0
      %7071 = vmatpush1.bf16.msra.mxu0 0
      %7072 = vmatprep.subr.bf16.mxu0 0
      %7073 = vmatpush1.bf16.msra.mxu0 0
      %7074 = vmatprep.subr.bf16.mxu0 0
      %7075 = vmatpush1.bf16.msra.mxu0 0
      %7076 = vmatprep.subr.bf16.mxu0 0
      %7077 = vmatpush1.bf16.msra.mxu0 0
      %7078 = vmatprep.subr.bf16.mxu0 0
      %7079 = vmatpush1.bf16.msra.mxu0 0
      %7080 = vmatprep.subr.bf16.mxu0 0
      %7081 = vmatpush1.bf16.msra.mxu0 0
      %7082 = vmatprep.mubr.bf16.mxu0 0
      %7083 = vmatmul.mubr.bf16.gmra.mrb[0].mxu0 %v6897
      %v7084 = vpop.f32.mrb[0].mxu0
      %v7085 = vadd.f32 0.0, %v7084
      %v7086 = vpop.f32.mrb[0].mxu0
      %v7087 = vpop.f32.mrb[0].mxu0
      %v7088 = vadd.f32 0.0, %v7087
      %v7089 = vpop.f32.mrb[0].mxu0
      %7090 = vmatprep.mubr.bf16.mxu0 0
      %7091 = vmatmul.mubr.bf16.gmra.mrb[0].mxu0 %v6905
      %v7092 = vpop.f32.mrb[0].mxu0
      %v7093 = vadd.f32 0.0, %v7092
      %v7094 = vpop.f32.mrb[0].mxu0
      %v7095 = vpop.f32.mrb[0].mxu0
      %v7096 = vadd.f32 0.0, %v7095
      %v7097 = vpop.f32.mrb[0].mxu0
      %7098 = vmatprep.mubr.bf16.mxu0 0
      %7099 = vmatmul.mubr.bf16.gmra.mrb[0].mxu0 %v6913
      %v7100 = vpop.f32.mrb[0].mxu0
      %v7101 = vadd.f32 0.0, %v7100
      %v7102 = vpop.f32.mrb[0].mxu0
      %v7103 = vpop.f32.mrb[0].mxu0
      %v7104 = vadd.f32 0.0, %v7103
      %v7105 = vpop.f32.mrb[0].mxu0
      %7106 = vmatprep.mubr.bf16.mxu0 0
      %7107 = vmatmul.mubr.bf16.gmra.mrb[0].mxu0 %v6921
      %v7108 = vpop.f32.mrb[0].mxu0
      %v7109 = vadd.f32 0.0, %v7108
      %v7110 = vpop.f32.mrb[0].mxu0
      %v7111 = vpop.f32.mrb[0].mxu0
      %v7112 = vadd.f32 0.0, %v7111
      %v7113 = vpop.f32.mrb[0].mxu0
      %7114 = vmatprep.mubr.bf16.mxu0 0
      %7115 = vmatmul.mubr.bf16.gmra.mrb[0].mxu0 %v6929
      %v7116 = vpop.f32.mrb[0].mxu0
      %v7117 = vadd.f32 0.0, %v7116
      %v7118 = vpop.f32.mrb[0].mxu0
      %v7119 = vpop.f32.mrb[0].mxu0
      %v7120 = vadd.f32 0.0, %v7119
      %v7121 = vpop.f32.mrb[0].mxu0
      %7122 = vmatprep.mubr.bf16.mxu0 0
      %7123 = vmatmul.mubr.bf16.gmra.mrb[0].mxu0 %v6937
      %v7124 = vpop.f32.mrb[0].mxu0
      %v7125 = vadd.f32 0.0, %v7124
      %v7126 = vpop.f32.mrb[0].mxu0
      %v7127 = vpop.f32.mrb[0].mxu0
      %v7128 = vadd.f32 0.0, %v7127
      %v7129 = vpop.f32.mrb[0].mxu0
      %7130 = vmatprep.mubr.bf16.mxu0 0
      %7131 = vmatmul.mubr.bf16.gmra.mrb[0].mxu0 %v6945
      %v7132 = vpop.f32.mrb[0].mxu0
      %v7133 = vadd.f32 0.0, %v7132
      %v7134 = vpop.f32.mrb[0].mxu0
      %v7135 = vpop.f32.mrb[0].mxu0
      %v7136 = vadd.f32 0.0, %v7135
      %v7137 = vpop.f32.mrb[0].mxu0
      %7138 = vmatprep.mubr.bf16.mxu0 0
      %7139 = vmatmul.mubr.bf16.gmra.mrb[0].mxu0 %v6953
      %v7140 = vpop.f32.mrb[0].mxu0
      %v7141 = vadd.f32 0.0, %v7140
      %v7142 = vpop.f32.mrb[0].mxu0
      %v7143 = vpop.f32.mrb[0].mxu0
      %v7144 = vadd.f32 0.0, %v7143
      %v7145 = vpop.f32.mrb[0].mxu0
      %7146 = vmatprep.mubr.bf16.mxu0 0
      %7147 = vmatmul.mubr.bf16.gmra.mrb[0].mxu0 %v6961
      %v7148 = vpop.f32.mrb[0].mxu0
      %v7149 = vadd.f32 0.0, %v7148
      %v7150 = vpop.f32.mrb[0].mxu0
      %v7151 = vpop.f32.mrb[0].mxu0
      %v7152 = vadd.f32 0.0, %v7151
      %v7153 = vpop.f32.mrb[0].mxu0
      %7154 = vmatprep.mubr.bf16.mxu0 0
      %7155 = vmatmul.mubr.bf16.gmra.mrb[0].mxu0 %v6969
      %v7156 = vpop.f32.mrb[0].mxu0
      %v7157 = vadd.f32 0.0, %v7156
      %v7158 = vpop.f32.mrb[0].mxu0
      %v7159 = vpop.f32.mrb[0].mxu0
      %v7160 = vadd.f32 0.0, %v7159
      %v7161 = vpop.f32.mrb[0].mxu0
      %7162 = vmatprep.mubr.bf16.mxu0 0
      %7163 = vmatmul.mubr.bf16.gmra.mrb[0].mxu0 %v6977
      %v7164 = vpop.f32.mrb[0].mxu0
      %v7165 = vadd.f32 0.0, %v7164
      %v7166 = vpop.f32.mrb[0].mxu0
      %v7167 = vpop.f32.mrb[0].mxu0
      %v7168 = vadd.f32 0.0, %v7167
      %v7169 = vpop.f32.mrb[0].mxu0
      %7170 = vmatprep.mubr.bf16.mxu0 0
      %7171 = vmatmul.mubr.bf16.gmra.mrb[0].mxu0 %v6985
      %v7172 = vpop.f32.mrb[0].mxu0
      %v7173 = vadd.f32 0.0, %v7172
      %v7174 = vpop.f32.mrb[0].mxu0
      %v7175 = vpop.f32.mrb[0].mxu0
      %v7176 = vadd.f32 0.0, %v7175
      %v7177 = vpop.f32.mrb[0].mxu0
      %7178 = vmatprep.mubr.bf16.mxu0 0
      %7179 = vmatmul.mubr.bf16.gmra.mrb[0].mxu0 %v6988
      %v7180 = vpop.f32.mrb[0].mxu0
      %v7181 = vadd.f32 0.0, %v7180
      %v7182 = vpop.f32.mrb[0].mxu0
      %v7183 = vpop.f32.mrb[0].mxu0
      %v7184 = vpop.f32.mrb[0].mxu0
      %7185 = vdwg.mxu0
      %v7186 = vadd.f32 %v6840, %v7085
      %v7187 = vadd.f32 %v6841, %v7088
      %v7188 = vadd.f32 %v6842, %v7093
      %v7189 = vadd.f32 %v6843, %v7096
      %v7190 = vadd.f32 %v6844, %v7101
      %v7191 = vadd.f32 %v6845, %v7104
      %v7192 = vadd.f32 %v6846, %v7109
      %v7193 = vadd.f32 %v6847, %v7112
      %v7194 = vadd.f32 %v6848, %v7117
      %v7195 = vadd.f32 %v6849, %v7120
      %v7196 = vadd.f32 %v6850, %v7125
      %v7197 = vadd.f32 %v6851, %v7128
      %v7198 = vadd.f32 %v6852, %v7133
      %v7199 = vadd.f32 %v6853, %v7136
      %v7200 = vadd.f32 %v6854, %v7141
      %v7201 = vadd.f32 %v6855, %v7144
      %v7202 = vadd.f32 %v6856, %v7149
      %v7203 = vadd.f32 %v6857, %v7152
      %v7204 = vadd.f32 %v6858, %v7157
      %v7205 = vadd.f32 %v6859, %v7160
      %v7206 = vadd.f32 %v6860, %v7165
      %v7207 = vadd.f32 %v6861, %v7168
      %v7208 = vadd.f32 %v6862, %v7173
      %v7209 = vadd.f32 %v6863, %v7176
      %v7210 = vadd.f32 %v6864, %v7181
      %v7211 = vld [vmem:[%s166 + $0x1c] sm:$0xe]
      %s7212 = scalar_lea.vmem %s1, 1408
      %v7213 = vld [vmem:[%s7212] sm:$0xf]
      %v7214 = vld [vmem:[%s7212 + $0x4] sm:$0xf]
      %v7215 = vld [vmem:[%s7212 + $0x8] sm:$0xf]
      %v7216 = vld [vmem:[%s7212 + $0xc] sm:$0xf]
      %v7217 = vld [vmem:[%s7212 + $0x10] sm:$0xf]
      %v7218 = vld [vmem:[%s7212 + $0x14] sm:$0xf]
      %v7219 = vld [vmem:[%s7212 + $0x18] sm:$0xf]
      %v7220 = vld [vmem:[%s7212 + $0x1c] sm:$0xf]
      %v7221 = vld [vmem:[%s7212 + $0x20] sm:$0xf]
      %v7222 = vld [vmem:[%s7212 + $0x24] sm:$0xf]
      %v7223 = vld [vmem:[%s7212 + $0x28] sm:$0xf]
      %v7224 = vld [vmem:[%s7212 + $0x2c] sm:$0xf]
      %v7225 = vld [vmem:[%s7212 + $0x30] sm:$0xf]
      %v7226 = vld [vmem:[%s7212 + $0x34] sm:$0xf]
      %v7227 = vld [vmem:[%s7212 + $0x38] sm:$0xf]
      %v7228 = vld [vmem:[%s7212 + $0x3c] sm:$0xf]
      %v7230 = vunpack.c.l.b16 %v7211
      %v7231 = vpack.c.b16 %v6606, %v7230
      %v7232 = vrot.slane %v7231, 1
      %v7233 = vrot.slane %v6631, 1
      %v7234 = vsel %vm818, %v7232, %v7233
      %v7235 = vrot.slane %v6632, 1
      %v7236 = vsel %vm818, %v7233, %v7235
      %v7237 = vrot.slane %v6633, 1
      %v7238 = vsel %vm818, %v7235, %v7237
      %v7239 = vrot.slane %v6634, 1
      %v7240 = vsel %vm818, %v7237, %v7239
      %v7241 = vrot.slane %v6635, 1
      %v7242 = vsel %vm818, %v7239, %v7241
      %v7243 = vrot.slane %v6636, 1
      %v7244 = vsel %vm818, %v7241, %v7243
      %v7245 = vrot.slane %v6637, 1
      %v7246 = vsel %vm818, %v7243, %v7245
      %v7247 = vrot.slane %v6638, 1
      %v7248 = vsel %vm818, %v7245, %v7247
      %v7249 = vrot.slane %v6639, 1
      %v7250 = vsel %vm818, %v7247, %v7249
      %v7251 = vrot.slane %v6640, 1
      %v7252 = vsel %vm818, %v7249, %v7251
      %v7253 = vrot.slane %v6641, 1
      %v7254 = vsel %vm818, %v7251, %v7253
      %v7255 = vrot.slane %v6885, 1
      %v7256 = vsel %vm818, %v7253, %v7255
      %v7286 = vunpack.c.l.b16 %v7213
      %v7287 = vunpack.c.l.b16 %v7214
      %v7288 = vunpack.c.l.b16 %v7215
      %v7289 = vunpack.c.l.b16 %v7216
      %v7290 = vunpack.c.l.b16 %v7217
      %v7291 = vunpack.c.l.b16 %v7218
      %v7292 = vunpack.c.l.b16 %v7219
      %v7293 = vunpack.c.l.b16 %v7220
      %v7294 = vunpack.c.l.b16 %v7221
      %v7295 = vunpack.c.l.b16 %v7222
      %v7296 = vunpack.c.l.b16 %v7223
      %v7297 = vunpack.c.l.b16 %v7224
      %v7298 = vunpack.c.l.b16 %v7225
      %v7299 = vunpack.c.l.b16 %v7226
      %v7300 = vunpack.c.l.b16 %v7227
      %v7301 = vunpack.c.l.b16 %v7228
      %v7302 = vpack.c.b16 %v7287, %v7286
      %v7303 = vpack.c.b16 %v7289, %v7288
      %v7304 = vpack.c.b16 %v7291, %v7290
      %v7305 = vpack.c.b16 %v7293, %v7292
      %v7306 = vpack.c.b16 %v7295, %v7294
      %v7307 = vpack.c.b16 %v7297, %v7296
      %v7308 = vpack.c.b16 %v7299, %v7298
      %v7309 = vpack.c.b16 %v7301, %v7300
      %7318 = vmatprep.subr.bf16.mxu0 0
      %7319 = vmatpush1.bf16.msra.mxu0 %v7302
      %7320 = vmatprep.subr.bf16.mxu0 0
      %7321 = vmatpush1.bf16.msra.mxu0 %v7303
      %7322 = vmatprep.subr.bf16.mxu0 0
      %7323 = vmatpush1.bf16.msra.mxu0 %v7304
      %7324 = vmatprep.subr.bf16.mxu0 0
      %7325 = vmatpush1.bf16.msra.mxu0 %v7305
      %7326 = vmatprep.subr.bf16.mxu0 0
      %7327 = vmatpush1.bf16.msra.mxu0 %v7306
      %7328 = vmatprep.subr.bf16.mxu0 0
      %7329 = vmatpush1.bf16.msra.mxu0 %v7307
      %7330 = vmatprep.subr.bf16.mxu0 0
      %7331 = vmatpush1.bf16.msra.mxu0 %v7308
      %7332 = vmatprep.subr.bf16.mxu0 0
      %7333 = vmatpush1.bf16.msra.mxu0 %v7309
      %7334 = vmatprep.subr.bf16.mxu0 0
      %7335 = vmatpush1.bf16.msra.mxu0 0
      %7336 = vmatprep.subr.bf16.mxu0 0
      %7337 = vmatpush1.bf16.msra.mxu0 0
      %7338 = vmatprep.subr.bf16.mxu0 0
      %7339 = vmatpush1.bf16.msra.mxu0 0
      %7340 = vmatprep.subr.bf16.mxu0 0
      %7341 = vmatpush1.bf16.msra.mxu0 0
      %7342 = vmatprep.subr.bf16.mxu0 0
      %7343 = vmatpush1.bf16.msra.mxu0 0
      %7344 = vmatprep.subr.bf16.mxu0 0
      %7345 = vmatpush1.bf16.msra.mxu0 0
      %7346 = vmatprep.subr.bf16.mxu0 0
      %7347 = vmatpush1.bf16.msra.mxu0 0
      %7348 = vmatprep.subr.bf16.mxu0 0
      %7349 = vmatpush1.bf16.msra.mxu0 0
      %7350 = vmatprep.mubr.bf16.mxu0 0
      %7351 = vmatmul.mubr.bf16.gmra.mrb[0].mxu0 %v7234
      %v7352 = vpop.f32.mrb[0].mxu0
      %v7353 = vadd.f32 0.0, %v7352
      %v7354 = vpop.f32.mrb[0].mxu0
      %v7355 = vpop.f32.mrb[0].mxu0
      %v7356 = vadd.f32 0.0, %v7355
      %v7357 = vpop.f32.mrb[0].mxu0
      %7358 = vmatprep.mubr.bf16.mxu0 0
      %7359 = vmatmul.mubr.bf16.gmra.mrb[0].mxu0 %v7236
      %v7360 = vpop.f32.mrb[0].mxu0
      %v7361 = vadd.f32 0.0, %v7360
      %v7362 = vpop.f32.mrb[0].mxu0
      %v7363 = vpop.f32.mrb[0].mxu0
      %v7364 = vadd.f32 0.0, %v7363
      %v7365 = vpop.f32.mrb[0].mxu0
      %7366 = vmatprep.mubr.bf16.mxu0 0
      %7367 = vmatmul.mubr.bf16.gmra.mrb[0].mxu0 %v7238
      %v7368 = vpop.f32.mrb[0].mxu0
      %v7369 = vadd.f32 0.0, %v7368
      %v7370 = vpop.f32.mrb[0].mxu0
      %v7371 = vpop.f32.mrb[0].mxu0
      %v7372 = vadd.f32 0.0, %v7371
      %v7373 = vpop.f32.mrb[0].mxu0
      %7374 = vmatprep.mubr.bf16.mxu0 0
      %7375 = vmatmul.mubr.bf16.gmra.mrb[0].mxu0 %v7240
      %v7376 = vpop.f32.mrb[0].mxu0
      %v7377 = vadd.f32 0.0, %v7376
      %v7378 = vpop.f32.mrb[0].mxu0
      %v7379 = vpop.f32.mrb[0].mxu0
      %v7380 = vadd.f32 0.0, %v7379
      %v7381 = vpop.f32.mrb[0].mxu0
      %7382 = vmatprep.mubr.bf16.mxu0 0
      %7383 = vmatmul.mubr.bf16.gmra.mrb[0].mxu0 %v7242
      %v7384 = vpop.f32.mrb[0].mxu0
      %v7385 = vadd.f32 0.0, %v7384
      %v7386 = vpop.f32.mrb[0].mxu0
      %v7387 = vpop.f32.mrb[0].mxu0
      %v7388 = vadd.f32 0.0, %v7387
      %v7389 = vpop.f32.mrb[0].mxu0
      %7390 = vmatprep.mubr.bf16.mxu0 0
      %7391 = vmatmul.mubr.bf16.gmra.mrb[0].mxu0 %v7244
      %v7392 = vpop.f32.mrb[0].mxu0
      %v7393 = vadd.f32 0.0, %v7392
      %v7394 = vpop.f32.mrb[0].mxu0
      %v7395 = vpop.f32.mrb[0].mxu0
      %v7396 = vadd.f32 0.0, %v7395
      %v7397 = vpop.f32.mrb[0].mxu0
      %7398 = vmatprep.mubr.bf16.mxu0 0
      %7399 = vmatmul.mubr.bf16.gmra.mrb[0].mxu0 %v7246
      %v7400 = vpop.f32.mrb[0].mxu0
      %v7401 = vadd.f32 0.0, %v7400
      %v7402 = vpop.f32.mrb[0].mxu0
      %v7403 = vpop.f32.mrb[0].mxu0
      %v7404 = vadd.f32 0.0, %v7403
      %v7405 = vpop.f32.mrb[0].mxu0
      %7406 = vmatprep.mubr.bf16.mxu0 0
      %7407 = vmatmul.mubr.bf16.gmra.mrb[0].mxu0 %v7248
      %v7408 = vpop.f32.mrb[0].mxu0
      %v7409 = vadd.f32 0.0, %v7408
      %v7410 = vpop.f32.mrb[0].mxu0
      %v7411 = vpop.f32.mrb[0].mxu0
      %v7412 = vadd.f32 0.0, %v7411
      %v7413 = vpop.f32.mrb[0].mxu0
      %7414 = vmatprep.mubr.bf16.mxu0 0
      %7415 = vmatmul.mubr.bf16.gmra.mrb[0].mxu0 %v7250
      %v7416 = vpop.f32.mrb[0].mxu0
      %v7417 = vadd.f32 0.0, %v7416
      %v7418 = vpop.f32.mrb[0].mxu0
      %v7419 = vpop.f32.mrb[0].mxu0
      %v7420 = vadd.f32 0.0, %v7419
      %v7421 = vpop.f32.mrb[0].mxu0
      %7422 = vmatprep.mubr.bf16.mxu0 0
      %7423 = vmatmul.mubr.bf16.gmra.mrb[0].mxu0 %v7252
      %v7424 = vpop.f32.mrb[0].mxu0
      %v7425 = vadd.f32 0.0, %v7424
      %v7426 = vpop.f32.mrb[0].mxu0
      %v7427 = vpop.f32.mrb[0].mxu0
      %v7428 = vadd.f32 0.0, %v7427
      %v7429 = vpop.f32.mrb[0].mxu0
      %7430 = vmatprep.mubr.bf16.mxu0 0
      %7431 = vmatmul.mubr.bf16.gmra.mrb[0].mxu0 %v7254
      %v7432 = vpop.f32.mrb[0].mxu0
      %v7433 = vadd.f32 0.0, %v7432
      %v7434 = vpop.f32.mrb[0].mxu0
      %v7435 = vpop.f32.mrb[0].mxu0
      %v7436 = vadd.f32 0.0, %v7435
      %v7437 = vpop.f32.mrb[0].mxu0
      %7438 = vmatprep.mubr.bf16.mxu0 0
      %7439 = vmatmul.mubr.bf16.gmra.mrb[0].mxu0 %v7256
      %v7440 = vpop.f32.mrb[0].mxu0
      %v7441 = vadd.f32 0.0, %v7440
      %v7442 = vpop.f32.mrb[0].mxu0
      %v7443 = vpop.f32.mrb[0].mxu0
      %v7444 = vadd.f32 0.0, %v7443
      %v7445 = vpop.f32.mrb[0].mxu0
      %7446 = vmatprep.mubr.bf16.mxu0 0
      %7447 = vmatmul.mubr.bf16.gmra.mrb[0].mxu0 %v7255
      %v7448 = vpop.f32.mrb[0].mxu0
      %v7449 = vadd.f32 0.0, %v7448
      %v7450 = vpop.f32.mrb[0].mxu0
      %v7451 = vpop.f32.mrb[0].mxu0
      %v7452 = vpop.f32.mrb[0].mxu0
      %7453 = vdwg.mxu0
      %v7454 = vadd.f32 %v7186, %v7353
      %v7455 = vadd.f32 %v7187, %v7356
      %v7456 = vadd.f32 %v7188, %v7361
      %v7457 = vadd.f32 %v7189, %v7364
      %v7458 = vadd.f32 %v7190, %v7369
      %v7459 = vadd.f32 %v7191, %v7372
      %v7460 = vadd.f32 %v7192, %v7377
      %v7461 = vadd.f32 %v7193, %v7380
      %v7462 = vadd.f32 %v7194, %v7385
      %v7463 = vadd.f32 %v7195, %v7388
      %v7464 = vadd.f32 %v7196, %v7393
      %v7465 = vadd.f32 %v7197, %v7396
      %v7466 = vadd.f32 %v7198, %v7401
      %v7467 = vadd.f32 %v7199, %v7404
      %v7468 = vadd.f32 %v7200, %v7409
      %v7469 = vadd.f32 %v7201, %v7412
      %v7470 = vadd.f32 %v7202, %v7417
      %v7471 = vadd.f32 %v7203, %v7420
      %v7472 = vadd.f32 %v7204, %v7425
      %v7473 = vadd.f32 %v7205, %v7428
      %v7474 = vadd.f32 %v7206, %v7433
      %v7475 = vadd.f32 %v7207, %v7436
      %v7476 = vadd.f32 %v7208, %v7441
      %v7477 = vadd.f32 %v7209, %v7444
      %v7478 = vadd.f32 %v7210, %v7449
      %v7479 = vld [vmem:[%s166 + $0x7c] sm:$0xf]
      %s7480 = scalar_lea.vmem %s1, 1472
      %v7481 = vld [vmem:[%s7480] sm:$0xf]
      %v7482 = vld [vmem:[%s7480 + $0x4] sm:$0xf]
      %v7483 = vld [vmem:[%s7480 + $0x8] sm:$0xf]
      %v7484 = vld [vmem:[%s7480 + $0xc] sm:$0xf]
      %v7485 = vld [vmem:[%s7480 + $0x10] sm:$0xf]
      %v7486 = vld [vmem:[%s7480 + $0x14] sm:$0xf]
      %v7487 = vld [vmem:[%s7480 + $0x18] sm:$0xf]
      %v7488 = vld [vmem:[%s7480 + $0x1c] sm:$0xf]
      %v7489 = vld [vmem:[%s7480 + $0x20] sm:$0xf]
      %v7490 = vld [vmem:[%s7480 + $0x24] sm:$0xf]
      %v7491 = vld [vmem:[%s7480 + $0x28] sm:$0xf]
      %v7492 = vld [vmem:[%s7480 + $0x2c] sm:$0xf]
      %v7493 = vld [vmem:[%s7480 + $0x30] sm:$0xf]
      %v7494 = vld [vmem:[%s7480 + $0x34] sm:$0xf]
      %v7495 = vld [vmem:[%s7480 + $0x38] sm:$0xf]
      %v7496 = vld [vmem:[%s7480 + $0x3c] sm:$0xf]
      %v7498 = vunpack.c.l.b16 %v7479
      %v7499 = vpack.c.b16 %v7498, %v7498
      %v7501 = vshrl.u32 %v7231, 16
      %v7503 = vrot.slane %v7501, 1
      %v7504 = vshll.u32 %v7231, 16
      %v7506 = vrot.slane %v7504, 2
      %v7507 = vor.u32 %v7503, %v7506
      %v7508 = vrot.slane %v6898, 1
      %v7509 = vrot.slane %v6894, 2
      %v7510 = vor.u32 %v7508, %v7509
      %v7511 = vsel %vm1087, %v7507, %v7510
      %v7512 = vrot.slane %v6906, 1
      %v7513 = vrot.slane %v6902, 2
      %v7514 = vor.u32 %v7512, %v7513
      %v7515 = vsel %vm1087, %v7510, %v7514
      %v7516 = vrot.slane %v6914, 1
      %v7517 = vrot.slane %v6910, 2
      %v7518 = vor.u32 %v7516, %v7517
      %v7519 = vsel %vm1087, %v7514, %v7518
      %v7520 = vrot.slane %v6922, 1
      %v7521 = vrot.slane %v6918, 2
      %v7522 = vor.u32 %v7520, %v7521
      %v7523 = vsel %vm1087, %v7518, %v7522
      %v7524 = vrot.slane %v6930, 1
      %v7525 = vrot.slane %v6926, 2
      %v7526 = vor.u32 %v7524, %v7525
      %v7527 = vsel %vm1087, %v7522, %v7526
      %v7528 = vrot.slane %v6938, 1
      %v7529 = vrot.slane %v6934, 2
      %v7530 = vor.u32 %v7528, %v7529
      %v7531 = vsel %vm1087, %v7526, %v7530
      %v7532 = vrot.slane %v6946, 1
      %v7533 = vrot.slane %v6942, 2
      %v7534 = vor.u32 %v7532, %v7533
      %v7535 = vsel %vm1087, %v7530, %v7534
      %v7536 = vrot.slane %v6954, 1
      %v7537 = vrot.slane %v6950, 2
      %v7538 = vor.u32 %v7536, %v7537
      %v7539 = vsel %vm1087, %v7534, %v7538
      %v7540 = vrot.slane %v6962, 1
      %v7541 = vrot.slane %v6958, 2
      %v7542 = vor.u32 %v7540, %v7541
      %v7543 = vsel %vm1087, %v7538, %v7542
      %v7544 = vrot.slane %v6970, 1
      %v7545 = vrot.slane %v6966, 2
      %v7546 = vor.u32 %v7544, %v7545
      %v7547 = vsel %vm1087, %v7542, %v7546
      %v7548 = vrot.slane %v6978, 1
      %v7549 = vrot.slane %v6974, 2
      %v7550 = vor.u32 %v7548, %v7549
      %v7551 = vsel %vm1087, %v7546, %v7550
      %v7553 = vshrl.u32 %v7499, 16
      %v7555 = vrot.slane %v7553, 1
      %v7556 = vshll.u32 %v7499, 16
      %v7558 = vrot.slane %v7556, 2
      %v7559 = vor.u32 %v7555, %v7558
      %v7560 = vsel %vm1087, %v7550, %v7559
      %v7590 = vunpack.c.l.b16 %v7481
      %v7591 = vunpack.c.l.b16 %v7482
      %v7592 = vunpack.c.l.b16 %v7483
      %v7593 = vunpack.c.l.b16 %v7484
      %v7594 = vunpack.c.l.b16 %v7485
      %v7595 = vunpack.c.l.b16 %v7486
      %v7596 = vunpack.c.l.b16 %v7487
      %v7597 = vunpack.c.l.b16 %v7488
      %v7598 = vunpack.c.l.b16 %v7489
      %v7599 = vunpack.c.l.b16 %v7490
      %v7600 = vunpack.c.l.b16 %v7491
      %v7601 = vunpack.c.l.b16 %v7492
      %v7602 = vunpack.c.l.b16 %v7493
      %v7603 = vunpack.c.l.b16 %v7494
      %v7604 = vunpack.c.l.b16 %v7495
      %v7605 = vunpack.c.l.b16 %v7496
      %v7606 = vpack.c.b16 %v7591, %v7590
      %v7607 = vpack.c.b16 %v7593, %v7592
      %v7608 = vpack.c.b16 %v7595, %v7594
      %v7609 = vpack.c.b16 %v7597, %v7596
      %v7610 = vpack.c.b16 %v7599, %v7598
      %v7611 = vpack.c.b16 %v7601, %v7600
      %v7612 = vpack.c.b16 %v7603, %v7602
      %v7613 = vpack.c.b16 %v7605, %v7604
      %7622 = vmatprep.subr.bf16.mxu0 0
      %7623 = vmatpush1.bf16.msra.mxu0 %v7606
      %7624 = vmatprep.subr.bf16.mxu0 0
      %7625 = vmatpush1.bf16.msra.mxu0 %v7607
      %7626 = vmatprep.subr.bf16.mxu0 0
      %7627 = vmatpush1.bf16.msra.mxu0 %v7608
      %7628 = vmatprep.subr.bf16.mxu0 0
      %7629 = vmatpush1.bf16.msra.mxu0 %v7609
      %7630 = vmatprep.subr.bf16.mxu0 0
      %7631 = vmatpush1.bf16.msra.mxu0 %v7610
      %7632 = vmatprep.subr.bf16.mxu0 0
      %7633 = vmatpush1.bf16.msra.mxu0 %v7611
      %7634 = vmatprep.subr.bf16.mxu0 0
      %7635 = vmatpush1.bf16.msra.mxu0 %v7612
      %7636 = vmatprep.subr.bf16.mxu0 0
      %7637 = vmatpush1.bf16.msra.mxu0 %v7613
      %7638 = vmatprep.subr.bf16.mxu0 0
      %7639 = vmatpush1.bf16.msra.mxu0 0
      %7640 = vmatprep.subr.bf16.mxu0 0
      %7641 = vmatpush1.bf16.msra.mxu0 0
      %7642 = vmatprep.subr.bf16.mxu0 0
      %7643 = vmatpush1.bf16.msra.mxu0 0
      %7644 = vmatprep.subr.bf16.mxu0 0
      %7645 = vmatpush1.bf16.msra.mxu0 0
      %7646 = vmatprep.subr.bf16.mxu0 0
      %7647 = vmatpush1.bf16.msra.mxu0 0
      %7648 = vmatprep.subr.bf16.mxu0 0
      %7649 = vmatpush1.bf16.msra.mxu0 0
      %7650 = vmatprep.subr.bf16.mxu0 0
      %7651 = vmatpush1.bf16.msra.mxu0 0
      %7652 = vmatprep.subr.bf16.mxu0 0
      %7653 = vmatpush1.bf16.msra.mxu0 0
      %7654 = vmatprep.mubr.bf16.mxu0 0
      %7655 = vmatmul.mubr.bf16.gmra.mrb[0].mxu0 %v7511
      %v7656 = vpop.f32.mrb[0].mxu0
      %v7657 = vadd.f32 0.0, %v7656
      %v7658 = vpop.f32.mrb[0].mxu0
      %v7659 = vpop.f32.mrb[0].mxu0
      %v7660 = vadd.f32 0.0, %v7659
      %v7661 = vpop.f32.mrb[0].mxu0
      %7662 = vmatprep.mubr.bf16.mxu0 0
      %7663 = vmatmul.mubr.bf16.gmra.mrb[0].mxu0 %v7515
      %v7664 = vpop.f32.mrb[0].mxu0
      %v7665 = vadd.f32 0.0, %v7664
      %v7666 = vpop.f32.mrb[0].mxu0
      %v7667 = vpop.f32.mrb[0].mxu0
      %v7668 = vadd.f32 0.0, %v7667
      %v7669 = vpop.f32.mrb[0].mxu0
      %7670 = vmatprep.mubr.bf16.mxu0 0
      %7671 = vmatmul.mubr.bf16.gmra.mrb[0].mxu0 %v7519
      %v7672 = vpop.f32.mrb[0].mxu0
      %v7673 = vadd.f32 0.0, %v7672
      %v7674 = vpop.f32.mrb[0].mxu0
      %v7675 = vpop.f32.mrb[0].mxu0
      %v7676 = vadd.f32 0.0, %v7675
      %v7677 = vpop.f32.mrb[0].mxu0
      %7678 = vmatprep.mubr.bf16.mxu0 0
      %7679 = vmatmul.mubr.bf16.gmra.mrb[0].mxu0 %v7523
      %v7680 = vpop.f32.mrb[0].mxu0
      %v7681 = vadd.f32 0.0, %v7680
      %v7682 = vpop.f32.mrb[0].mxu0
      %v7683 = vpop.f32.mrb[0].mxu0
      %v7684 = vadd.f32 0.0, %v7683
      %v7685 = vpop.f32.mrb[0].mxu0
      %7686 = vmatprep.mubr.bf16.mxu0 0
      %7687 = vmatmul.mubr.bf16.gmra.mrb[0].mxu0 %v7527
      %v7688 = vpop.f32.mrb[0].mxu0
      %v7689 = vadd.f32 0.0, %v7688
      %v7690 = vpop.f32.mrb[0].mxu0
      %v7691 = vpop.f32.mrb[0].mxu0
      %v7692 = vadd.f32 0.0, %v7691
      %v7693 = vpop.f32.mrb[0].mxu0
      %7694 = vmatprep.mubr.bf16.mxu0 0
      %7695 = vmatmul.mubr.bf16.gmra.mrb[0].mxu0 %v7531
      %v7696 = vpop.f32.mrb[0].mxu0
      %v7697 = vadd.f32 0.0, %v7696
      %v7698 = vpop.f32.mrb[0].mxu0
      %v7699 = vpop.f32.mrb[0].mxu0
      %v7700 = vadd.f32 0.0, %v7699
      %v7701 = vpop.f32.mrb[0].mxu0
      %7702 = vmatprep.mubr.bf16.mxu0 0
      %7703 = vmatmul.mubr.bf16.gmra.mrb[0].mxu0 %v7535
      %v7704 = vpop.f32.mrb[0].mxu0
      %v7705 = vadd.f32 0.0, %v7704
      %v7706 = vpop.f32.mrb[0].mxu0
      %v7707 = vpop.f32.mrb[0].mxu0
      %v7708 = vadd.f32 0.0, %v7707
      %v7709 = vpop.f32.mrb[0].mxu0
      %7710 = vmatprep.mubr.bf16.mxu0 0
      %7711 = vmatmul.mubr.bf16.gmra.mrb[0].mxu0 %v7539
      %v7712 = vpop.f32.mrb[0].mxu0
      %v7713 = vadd.f32 0.0, %v7712
      %v7714 = vpop.f32.mrb[0].mxu0
      %v7715 = vpop.f32.mrb[0].mxu0
      %v7716 = vadd.f32 0.0, %v7715
      %v7717 = vpop.f32.mrb[0].mxu0
      %7718 = vmatprep.mubr.bf16.mxu0 0
      %7719 = vmatmul.mubr.bf16.gmra.mrb[0].mxu0 %v7543
      %v7720 = vpop.f32.mrb[0].mxu0
      %v7721 = vadd.f32 0.0, %v7720
      %v7722 = vpop.f32.mrb[0].mxu0
      %v7723 = vpop.f32.mrb[0].mxu0
      %v7724 = vadd.f32 0.0, %v7723
      %v7725 = vpop.f32.mrb[0].mxu0
      %7726 = vmatprep.mubr.bf16.mxu0 0
      %7727 = vmatmul.mubr.bf16.gmra.mrb[0].mxu0 %v7547
      %v7728 = vpop.f32.mrb[0].mxu0
      %v7729 = vadd.f32 0.0, %v7728
      %v7730 = vpop.f32.mrb[0].mxu0
      %v7731 = vpop.f32.mrb[0].mxu0
      %v7732 = vadd.f32 0.0, %v7731
      %v7733 = vpop.f32.mrb[0].mxu0
      %7734 = vmatprep.mubr.bf16.mxu0 0
      %7735 = vmatmul.mubr.bf16.gmra.mrb[0].mxu0 %v7551
      %v7736 = vpop.f32.mrb[0].mxu0
      %v7737 = vadd.f32 0.0, %v7736
      %v7738 = vpop.f32.mrb[0].mxu0
      %v7739 = vpop.f32.mrb[0].mxu0
      %v7740 = vadd.f32 0.0, %v7739
      %v7741 = vpop.f32.mrb[0].mxu0
      %7742 = vmatprep.mubr.bf16.mxu0 0
      %7743 = vmatmul.mubr.bf16.gmra.mrb[0].mxu0 %v7560
      %v7744 = vpop.f32.mrb[0].mxu0
      %v7745 = vadd.f32 0.0, %v7744
      %v7746 = vpop.f32.mrb[0].mxu0
      %v7747 = vpop.f32.mrb[0].mxu0
      %v7748 = vadd.f32 0.0, %v7747
      %v7749 = vpop.f32.mrb[0].mxu0
      %7750 = vmatprep.mubr.bf16.mxu0 0
      %7751 = vmatmul.mubr.bf16.gmra.mrb[0].mxu0 %v7559
      %v7752 = vpop.f32.mrb[0].mxu0
      %v7753 = vadd.f32 0.0, %v7752
      %v7754 = vpop.f32.mrb[0].mxu0
      %v7755 = vpop.f32.mrb[0].mxu0
      %v7756 = vpop.f32.mrb[0].mxu0
      %7757 = vdwg.mxu0
      %v7758 = vadd.f32 %v7454, %v7657
      %v7759 = vadd.f32 %v7455, %v7660
      %v7760 = vadd.f32 %v7456, %v7665
      %v7761 = vadd.f32 %v7457, %v7668
      %v7762 = vadd.f32 %v7458, %v7673
      %v7763 = vadd.f32 %v7459, %v7676
      %v7764 = vadd.f32 %v7460, %v7681
      %v7765 = vadd.f32 %v7461, %v7684
      %v7766 = vadd.f32 %v7462, %v7689
      %v7767 = vadd.f32 %v7463, %v7692
      %v7768 = vadd.f32 %v7464, %v7697
      %v7769 = vadd.f32 %v7465, %v7700
      %v7770 = vadd.f32 %v7466, %v7705
      %v7771 = vadd.f32 %v7467, %v7708
      %v7772 = vadd.f32 %v7468, %v7713
      %v7773 = vadd.f32 %v7469, %v7716
      %v7774 = vadd.f32 %v7470, %v7721
      %v7775 = vadd.f32 %v7471, %v7724
      %v7776 = vadd.f32 %v7472, %v7729
      %v7777 = vadd.f32 %v7473, %v7732
      %v7778 = vadd.f32 %v7474, %v7737
      %v7779 = vadd.f32 %v7475, %v7740
      %v7780 = vadd.f32 %v7476, %v7745
      %v7781 = vadd.f32 %v7477, %v7748
      %v7782 = vadd.f32 %v7478, %v7753
      %v7783 = vld [vmem:[%s166 + $0x1c] sm:$0xc]
      %s7784 = scalar_lea.vmem %s1, 1536
      %v7785 = vld [vmem:[%s7784] sm:$0xf]
      %v7786 = vld [vmem:[%s7784 + $0x4] sm:$0xf]
      %v7787 = vld [vmem:[%s7784 + $0x8] sm:$0xf]
      %v7788 = vld [vmem:[%s7784 + $0xc] sm:$0xf]
      %v7789 = vld [vmem:[%s7784 + $0x10] sm:$0xf]
      %v7790 = vld [vmem:[%s7784 + $0x14] sm:$0xf]
      %v7791 = vld [vmem:[%s7784 + $0x18] sm:$0xf]
      %v7792 = vld [vmem:[%s7784 + $0x1c] sm:$0xf]
      %v7793 = vld [vmem:[%s7784 + $0x20] sm:$0xf]
      %v7794 = vld [vmem:[%s7784 + $0x24] sm:$0xf]
      %v7795 = vld [vmem:[%s7784 + $0x28] sm:$0xf]
      %v7796 = vld [vmem:[%s7784 + $0x2c] sm:$0xf]
      %v7797 = vld [vmem:[%s7784 + $0x30] sm:$0xf]
      %v7798 = vld [vmem:[%s7784 + $0x34] sm:$0xf]
      %v7799 = vld [vmem:[%s7784 + $0x38] sm:$0xf]
      %v7800 = vld [vmem:[%s7784 + $0x3c] sm:$0xf]
      %v7802 = vunpack.c.l.b16 %v7783
      %v7803 = vpack.c.b16 %v6606, %v7802
      %v7804 = vrot.slane %v7803, 2
      %v7805 = vrot.slane %v6631, 2
      %v7806 = vsel %vm1392, %v7804, %v7805
      %v7807 = vrot.slane %v6632, 2
      %v7808 = vsel %vm1392, %v7805, %v7807
      %v7809 = vrot.slane %v6633, 2
      %v7810 = vsel %vm1392, %v7807, %v7809
      %v7811 = vrot.slane %v6634, 2
      %v7812 = vsel %vm1392, %v7809, %v7811
      %v7813 = vrot.slane %v6635, 2
      %v7814 = vsel %vm1392, %v7811, %v7813
      %v7815 = vrot.slane %v6636, 2
      %v7816 = vsel %vm1392, %v7813, %v7815
      %v7817 = vrot.slane %v6637, 2
      %v7818 = vsel %vm1392, %v7815, %v7817
      %v7819 = vrot.slane %v6638, 2
      %v7820 = vsel %vm1392, %v7817, %v7819
      %v7821 = vrot.slane %v6639, 2
      %v7822 = vsel %vm1392, %v7819, %v7821
      %v7823 = vrot.slane %v6640, 2
      %v7824 = vsel %vm1392, %v7821, %v7823
      %v7825 = vrot.slane %v6641, 2
      %v7826 = vsel %vm1392, %v7823, %v7825
      %v7827 = vrot.slane %v7499, 2
      %v7828 = vsel %vm1392, %v7825, %v7827
      %v7858 = vunpack.c.l.b16 %v7785
      %v7859 = vunpack.c.l.b16 %v7786
      %v7860 = vunpack.c.l.b16 %v7787
      %v7861 = vunpack.c.l.b16 %v7788
      %v7862 = vunpack.c.l.b16 %v7789
      %v7863 = vunpack.c.l.b16 %v7790
      %v7864 = vunpack.c.l.b16 %v7791
      %v7865 = vunpack.c.l.b16 %v7792
      %v7866 = vunpack.c.l.b16 %v7793
      %v7867 = vunpack.c.l.b16 %v7794
      %v7868 = vunpack.c.l.b16 %v7795
      %v7869 = vunpack.c.l.b16 %v7796
      %v7870 = vunpack.c.l.b16 %v7797
      %v7871 = vunpack.c.l.b16 %v7798
      %v7872 = vunpack.c.l.b16 %v7799
      %v7873 = vunpack.c.l.b16 %v7800
      %v7874 = vpack.c.b16 %v7859, %v7858
      %v7875 = vpack.c.b16 %v7861, %v7860
      %v7876 = vpack.c.b16 %v7863, %v7862
      %v7877 = vpack.c.b16 %v7865, %v7864
      %v7878 = vpack.c.b16 %v7867, %v7866
      %v7879 = vpack.c.b16 %v7869, %v7868
      %v7880 = vpack.c.b16 %v7871, %v7870
      %v7881 = vpack.c.b16 %v7873, %v7872
      %7890 = vmatprep.subr.bf16.mxu0 0
      %7891 = vmatpush1.bf16.msra.mxu0 %v7874
      %7892 = vmatprep.subr.bf16.mxu0 0
      %7893 = vmatpush1.bf16.msra.mxu0 %v7875
      %7894 = vmatprep.subr.bf16.mxu0 0
      %7895 = vmatpush1.bf16.msra.mxu0 %v7876
      %7896 = vmatprep.subr.bf16.mxu0 0
      %7897 = vmatpush1.bf16.msra.mxu0 %v7877
      %7898 = vmatprep.subr.bf16.mxu0 0
      %7899 = vmatpush1.bf16.msra.mxu0 %v7878
      %7900 = vmatprep.subr.bf16.mxu0 0
      %7901 = vmatpush1.bf16.msra.mxu0 %v7879
      %7902 = vmatprep.subr.bf16.mxu0 0
      %7903 = vmatpush1.bf16.msra.mxu0 %v7880
      %7904 = vmatprep.subr.bf16.mxu0 0
      %7905 = vmatpush1.bf16.msra.mxu0 %v7881
      %7906 = vmatprep.subr.bf16.mxu0 0
      %7907 = vmatpush1.bf16.msra.mxu0 0
      %7908 = vmatprep.subr.bf16.mxu0 0
      %7909 = vmatpush1.bf16.msra.mxu0 0
      %7910 = vmatprep.subr.bf16.mxu0 0
      %7911 = vmatpush1.bf16.msra.mxu0 0
      %7912 = vmatprep.subr.bf16.mxu0 0
      %7913 = vmatpush1.bf16.msra.mxu0 0
      %7914 = vmatprep.subr.bf16.mxu0 0
      %7915 = vmatpush1.bf16.msra.mxu0 0
      %7916 = vmatprep.subr.bf16.mxu0 0
      %7917 = vmatpush1.bf16.msra.mxu0 0
      %7918 = vmatprep.subr.bf16.mxu0 0
      %7919 = vmatpush1.bf16.msra.mxu0 0
      %7920 = vmatprep.subr.bf16.mxu0 0
      %7921 = vmatpush1.bf16.msra.mxu0 0
      %7922 = vmatprep.mubr.bf16.mxu0 0
      %7923 = vmatmul.mubr.bf16.gmra.mrb[0].mxu0 %v7806
      %v7924 = vpop.f32.mrb[0].mxu0
      %v7925 = vadd.f32 0.0, %v7924
      %v7926 = vpop.f32.mrb[0].mxu0
      %v7927 = vpop.f32.mrb[0].mxu0
      %v7928 = vadd.f32 0.0, %v7927
      %v7929 = vpop.f32.mrb[0].mxu0
      %7930 = vmatprep.mubr.bf16.mxu0 0
      %7931 = vmatmul.mubr.bf16.gmra.mrb[0].mxu0 %v7808
      %v7932 = vpop.f32.mrb[0].mxu0
      %v7933 = vadd.f32 0.0, %v7932
      %v7934 = vpop.f32.mrb[0].mxu0
      %v7935 = vpop.f32.mrb[0].mxu0
      %v7936 = vadd.f32 0.0, %v7935
      %v7937 = vpop.f32.mrb[0].mxu0
      %7938 = vmatprep.mubr.bf16.mxu0 0
      %7939 = vmatmul.mubr.bf16.gmra.mrb[0].mxu0 %v7810
      %v7940 = vpop.f32.mrb[0].mxu0
      %v7941 = vadd.f32 0.0, %v7940
      %v7942 = vpop.f32.mrb[0].mxu0
      %v7943 = vpop.f32.mrb[0].mxu0
      %v7944 = vadd.f32 0.0, %v7943
      %v7945 = vpop.f32.mrb[0].mxu0
      %7946 = vmatprep.mubr.bf16.mxu0 0
      %7947 = vmatmul.mubr.bf16.gmra.mrb[0].mxu0 %v7812
      %v7948 = vpop.f32.mrb[0].mxu0
      %v7949 = vadd.f32 0.0, %v7948
      %v7950 = vpop.f32.mrb[0].mxu0
      %v7951 = vpop.f32.mrb[0].mxu0
      %v7952 = vadd.f32 0.0, %v7951
      %v7953 = vpop.f32.mrb[0].mxu0
      %7954 = vmatprep.mubr.bf16.mxu0 0
      %7955 = vmatmul.mubr.bf16.gmra.mrb[0].mxu0 %v7814
      %v7956 = vpop.f32.mrb[0].mxu0
      %v7957 = vadd.f32 0.0, %v7956
      %v7958 = vpop.f32.mrb[0].mxu0
      %v7959 = vpop.f32.mrb[0].mxu0
      %v7960 = vadd.f32 0.0, %v7959
      %v7961 = vpop.f32.mrb[0].mxu0
      %7962 = vmatprep.mubr.bf16.mxu0 0
      %7963 = vmatmul.mubr.bf16.gmra.mrb[0].mxu0 %v7816
      %v7964 = vpop.f32.mrb[0].mxu0
      %v7965 = vadd.f32 0.0, %v7964
      %v7966 = vpop.f32.mrb[0].mxu0
      %v7967 = vpop.f32.mrb[0].mxu0
      %v7968 = vadd.f32 0.0, %v7967
      %v7969 = vpop.f32.mrb[0].mxu0
      %7970 = vmatprep.mubr.bf16.mxu0 0
      %7971 = vmatmul.mubr.bf16.gmra.mrb[0].mxu0 %v7818
      %v7972 = vpop.f32.mrb[0].mxu0
      %v7973 = vadd.f32 0.0, %v7972
      %v7974 = vpop.f32.mrb[0].mxu0
      %v7975 = vpop.f32.mrb[0].mxu0
      %v7976 = vadd.f32 0.0, %v7975
      %v7977 = vpop.f32.mrb[0].mxu0
      %7978 = vmatprep.mubr.bf16.mxu0 0
      %7979 = vmatmul.mubr.bf16.gmra.mrb[0].mxu0 %v7820
      %v7980 = vpop.f32.mrb[0].mxu0
      %v7981 = vadd.f32 0.0, %v7980
      %v7982 = vpop.f32.mrb[0].mxu0
      %v7983 = vpop.f32.mrb[0].mxu0
      %v7984 = vadd.f32 0.0, %v7983
      %v7985 = vpop.f32.mrb[0].mxu0
      %7986 = vmatprep.mubr.bf16.mxu0 0
      %7987 = vmatmul.mubr.bf16.gmra.mrb[0].mxu0 %v7822
      %v7988 = vpop.f32.mrb[0].mxu0
      %v7989 = vadd.f32 0.0, %v7988
      %v7990 = vpop.f32.mrb[0].mxu0
      %v7991 = vpop.f32.mrb[0].mxu0
      %v7992 = vadd.f32 0.0, %v7991
      %v7993 = vpop.f32.mrb[0].mxu0
      %7994 = vmatprep.mubr.bf16.mxu0 0
      %7995 = vmatmul.mubr.bf16.gmra.mrb[0].mxu0 %v7824
      %v7996 = vpop.f32.mrb[0].mxu0
      %v7997 = vadd.f32 0.0, %v7996
      %v7998 = vpop.f32.mrb[0].mxu0
      %v7999 = vpop.f32.mrb[0].mxu0
      %v8000 = vadd.f32 0.0, %v7999
      %v8001 = vpop.f32.mrb[0].mxu0
      %8002 = vmatprep.mubr.bf16.mxu0 0
      %8003 = vmatmul.mubr.bf16.gmra.mrb[0].mxu0 %v7826
      %v8004 = vpop.f32.mrb[0].mxu0
      %v8005 = vadd.f32 0.0, %v8004
      %v8006 = vpop.f32.mrb[0].mxu0
      %v8007 = vpop.f32.mrb[0].mxu0
      %v8008 = vadd.f32 0.0, %v8007
      %v8009 = vpop.f32.mrb[0].mxu0
      %8010 = vmatprep.mubr.bf16.mxu0 0
      %8011 = vmatmul.mubr.bf16.gmra.mrb[0].mxu0 %v7828
      %v8012 = vpop.f32.mrb[0].mxu0
      %v8013 = vadd.f32 0.0, %v8012
      %v8014 = vpop.f32.mrb[0].mxu0
      %v8015 = vpop.f32.mrb[0].mxu0
      %v8016 = vadd.f32 0.0, %v8015
      %v8017 = vpop.f32.mrb[0].mxu0
      %8018 = vmatprep.mubr.bf16.mxu0 0
      %8019 = vmatmul.mubr.bf16.gmra.mrb[0].mxu0 %v7827
      %v8020 = vpop.f32.mrb[0].mxu0
      %v8021 = vadd.f32 0.0, %v8020
      %v8022 = vpop.f32.mrb[0].mxu0
      %v8023 = vpop.f32.mrb[0].mxu0
      %v8024 = vpop.f32.mrb[0].mxu0
      %8025 = vdwg.mxu0
      %v8026 = vadd.f32 %v7758, %v7925
      %v8027 = vadd.f32 %v7759, %v7928
      %v8028 = vadd.f32 %v7760, %v7933
      %v8029 = vadd.f32 %v7761, %v7936
      %v8030 = vadd.f32 %v7762, %v7941
      %v8031 = vadd.f32 %v7763, %v7944
      %v8032 = vadd.f32 %v7764, %v7949
      %v8033 = vadd.f32 %v7765, %v7952
      %v8034 = vadd.f32 %v7766, %v7957
      %v8035 = vadd.f32 %v7767, %v7960
      %v8036 = vadd.f32 %v7768, %v7965
      %v8037 = vadd.f32 %v7769, %v7968
      %v8038 = vadd.f32 %v7770, %v7973
      %v8039 = vadd.f32 %v7771, %v7976
      %v8040 = vadd.f32 %v7772, %v7981
      %v8041 = vadd.f32 %v7773, %v7984
      %v8042 = vadd.f32 %v7774, %v7989
      %v8043 = vadd.f32 %v7775, %v7992
      %v8044 = vadd.f32 %v7776, %v7997
      %v8045 = vadd.f32 %v7777, %v8000
      %v8046 = vadd.f32 %v7778, %v8005
      %v8047 = vadd.f32 %v7779, %v8008
      %v8048 = vadd.f32 %v7780, %v8013
      %v8049 = vadd.f32 %v7781, %v8016
      %v8050 = vadd.f32 %v7782, %v8021
      %v8051 = vld [vmem:[%s2] sm:$0x1]
      %v8053 = vlaneseq
      %v8054 = vshrl.u32 %v8053, 7
      %v8055 = vsub.s32 0, %v8054
      %v8056 = vrot.slane %v8051, %v8055
      %v8058 = vadd.f32 %v8026, %v8056
      %v8059 = vadd.f32 %v8027, %v8056
      %v8060 = vadd.f32 %v8028, %v8056
      %v8061 = vadd.f32 %v8029, %v8056
      %v8062 = vadd.f32 %v8030, %v8056
      %v8063 = vadd.f32 %v8031, %v8056
      %v8064 = vadd.f32 %v8032, %v8056
      %v8065 = vadd.f32 %v8033, %v8056
      %v8066 = vadd.f32 %v8034, %v8056
      %v8067 = vadd.f32 %v8035, %v8056
      %v8068 = vadd.f32 %v8036, %v8056
      %v8069 = vadd.f32 %v8037, %v8056
      %v8070 = vadd.f32 %v8038, %v8056
      %v8071 = vadd.f32 %v8039, %v8056
      %v8072 = vadd.f32 %v8040, %v8056
      %v8073 = vadd.f32 %v8041, %v8056
      %v8074 = vadd.f32 %v8042, %v8056
      %v8075 = vadd.f32 %v8043, %v8056
      %v8076 = vadd.f32 %v8044, %v8056
      %v8077 = vadd.f32 %v8045, %v8056
      %v8078 = vadd.f32 %v8046, %v8056
      %v8079 = vadd.f32 %v8047, %v8056
      %v8080 = vadd.f32 %v8048, %v8056
      %v8081 = vadd.f32 %v8049, %v8056
      %v8082 = vadd.f32 %v8050, %v8056
      %v8083 = vmax.f32 %v8058, 0.0
      %v8084 = vmax.f32 %v8059, 0.0
      %v8085 = vmax.f32 %v8060, 0.0
      %v8086 = vmax.f32 %v8061, 0.0
      %v8087 = vmax.f32 %v8062, 0.0
      %v8088 = vmax.f32 %v8063, 0.0
      %v8089 = vmax.f32 %v8064, 0.0
      %v8090 = vmax.f32 %v8065, 0.0
      %v8091 = vmax.f32 %v8066, 0.0
      %v8092 = vmax.f32 %v8067, 0.0
      %v8093 = vmax.f32 %v8068, 0.0
      %v8094 = vmax.f32 %v8069, 0.0
      %v8095 = vmax.f32 %v8070, 0.0
      %v8096 = vmax.f32 %v8071, 0.0
      %v8097 = vmax.f32 %v8072, 0.0
      %v8098 = vmax.f32 %v8073, 0.0
      %v8099 = vmax.f32 %v8074, 0.0
      %v8100 = vmax.f32 %v8075, 0.0
      %v8101 = vmax.f32 %v8076, 0.0
      %v8102 = vmax.f32 %v8077, 0.0
      %v8103 = vmax.f32 %v8078, 0.0
      %v8104 = vmax.f32 %v8079, 0.0
      %v8105 = vmax.f32 %v8080, 0.0
      %v8106 = vmax.f32 %v8081, 0.0
      %v8107 = vmax.f32 %v8082, 0.0
      %8108 = vst [vmem:[#allocation2] sm:$0xff] %v8083
      %8109 = vst [vmem:[#allocation2 + $0x8] sm:$0xff] %v8084
      %8110 = vst [vmem:[#allocation2 + $0x10] sm:$0xff] %v8085
      %8111 = vst [vmem:[#allocation2 + $0x18] sm:$0xff] %v8086
      %8112 = vst [vmem:[#allocation2 + $0x20] sm:$0xff] %v8087
      %8113 = vst [vmem:[#allocation2 + $0x28] sm:$0xff] %v8088
      %8114 = vst [vmem:[#allocation2 + $0x30] sm:$0xff] %v8089
      %8115 = vst [vmem:[#allocation2 + $0x38] sm:$0xff] %v8090
      %8116 = vst [vmem:[#allocation2 + $0x40] sm:$0xff] %v8091
      %8117 = vst [vmem:[#allocation2 + $0x48] sm:$0xff] %v8092
      %8118 = vst [vmem:[#allocation2 + $0x50] sm:$0xff] %v8093
      %8119 = vst [vmem:[#allocation2 + $0x58] sm:$0xff] %v8094
      %8120 = vst [vmem:[#allocation2 + $0x60] sm:$0xff] %v8095
      %8121 = vst [vmem:[#allocation2 + $0x68] sm:$0xff] %v8096
      %8122 = vst [vmem:[#allocation2 + $0x70] sm:$0xff] %v8097
      %8123 = vst [vmem:[#allocation2 + $0x78] sm:$0xff] %v8098
      %8124 = vst [vmem:[#allocation2 + $0x80] sm:$0xff] %v8099
      %8125 = vst [vmem:[#allocation2 + $0x88] sm:$0xff] %v8100
      %8126 = vst [vmem:[#allocation2 + $0x90] sm:$0xff] %v8101
      %8127 = vst [vmem:[#allocation2 + $0x98] sm:$0xff] %v8102
      %8128 = vst [vmem:[#allocation2 + $0xa0] sm:$0xff] %v8103
      %8129 = vst [vmem:[#allocation2 + $0xa8] sm:$0xff] %v8104
      %8130 = vst [vmem:[#allocation2 + $0xb0] sm:$0xff] %v8105
      %8131 = vst [vmem:[#allocation2 + $0xb8] sm:$0xff] %v8106
      %8132 = vst [vmem:[#allocation2 + $0xc0] sm:$0xf] %v8107
      %v8133 = vld [vmem:[#allocation2] ss:$2 sm:$0xff]
      %s8134 = scalar_lea.vmem [#allocation2], 16
      %v8135 = vld [vmem:[%s8134] ss:$2 sm:$0xff]
      %s8136 = scalar_lea.vmem [#allocation2], 32
      %v8137 = vld [vmem:[%s8136] ss:$2 sm:$0xff]
      %s8138 = scalar_lea.vmem [#allocation2], 48
      %v8139 = vld [vmem:[%s8138] ss:$2 sm:$0xff]
      %s8140 = scalar_lea.vmem [#allocation2], 64
      %v8141 = vld [vmem:[%s8140] ss:$2 sm:$0xff]
      %s8142 = scalar_lea.vmem [#allocation2], 80
      %v8143 = vld [vmem:[%s8142] ss:$2 sm:$0xff]
      %s8144 = scalar_lea.vmem [#allocation2], 96
      %v8145 = vld [vmem:[%s8144] ss:$2 sm:$0xff]
      %s8146 = scalar_lea.vmem [#allocation2], 112
      %v8147 = vld [vmem:[%s8146] ss:$2 sm:$0xff]
      %s8148 = scalar_lea.vmem [#allocation2], 128
      %v8149 = vld [vmem:[%s8148] ss:$2 sm:$0xff]
      %s8150 = scalar_lea.vmem [#allocation2], 144
      %v8151 = vld [vmem:[%s8150] ss:$2 sm:$0xff]
      %s8152 = scalar_lea.vmem [#allocation2], 160
      %v8153 = vld [vmem:[%s8152] ss:$2 sm:$0xff]
      %s8154 = scalar_lea.vmem [#allocation2], 176
      %v8155 = vld [vmem:[%s8154] ss:$2 sm:$0xff]
      %s8156 = scalar_lea.vmem [#allocation2], 192
      %v8157 = vld [vmem:[%s8156] ss:$2 sm:$0x3]
      %s8158 = scalar_lea.vmem [#allocation2], 1
      %v8159 = vld [vmem:[%s8158] ss:$2 sm:$0xff]
      %s8160 = scalar_lea.vmem [#allocation2], 17
      %v8161 = vld [vmem:[%s8160] ss:$2 sm:$0xff]
      %s8162 = scalar_lea.vmem [#allocation2], 33
      %v8163 = vld [vmem:[%s8162] ss:$2 sm:$0xff]
      %s8164 = scalar_lea.vmem [#allocation2], 49
      %v8165 = vld [vmem:[%s8164] ss:$2 sm:$0xff]
      %s8166 = scalar_lea.vmem [#allocation2], 65
      %v8167 = vld [vmem:[%s8166] ss:$2 sm:$0xff]
      %s8168 = scalar_lea.vmem [#allocation2], 81
      %v8169 = vld [vmem:[%s8168] ss:$2 sm:$0xff]
      %s8170 = scalar_lea.vmem [#allocation2], 97
      %v8171 = vld [vmem:[%s8170] ss:$2 sm:$0xff]
      %s8172 = scalar_lea.vmem [#allocation2], 113
      %v8173 = vld [vmem:[%s8172] ss:$2 sm:$0xff]
      %s8174 = scalar_lea.vmem [#allocation2], 129
      %v8175 = vld [vmem:[%s8174] ss:$2 sm:$0xff]
      %s8176 = scalar_lea.vmem [#allocation2], 145
      %v8177 = vld [vmem:[%s8176] ss:$2 sm:$0xff]
      %s8178 = scalar_lea.vmem [#allocation2], 161
      %v8179 = vld [vmem:[%s8178] ss:$2 sm:$0xff]
      %s8180 = scalar_lea.vmem [#allocation2], 177
      %v8181 = vld [vmem:[%s8180] ss:$2 sm:$0xff]
      %s8182 = scalar_lea.vmem [#allocation2], 193
      %v8183 = vld [vmem:[%s8182] ss:$2 sm:$0x3]
      %v8184 = vmax.f32 %v8133, %v8159
      %v8185 = vmax.f32 %v8135, %v8161
      %v8186 = vmax.f32 %v8137, %v8163
      %v8187 = vmax.f32 %v8139, %v8165
      %v8188 = vmax.f32 %v8141, %v8167
      %v8189 = vmax.f32 %v8143, %v8169
      %v8190 = vmax.f32 %v8145, %v8171
      %v8191 = vmax.f32 %v8147, %v8173
      %v8192 = vmax.f32 %v8149, %v8175
      %v8193 = vmax.f32 %v8151, %v8177
      %v8194 = vmax.f32 %v8153, %v8179
      %v8195 = vmax.f32 %v8155, %v8181
      %v8196 = vmax.f32 %v8157, %v8183
      %8197 = vst [vmem:[#allocation3] sm:$0xff] %v8184
      %8198 = vst [vmem:[#allocation3 + $0x8] sm:$0xff] %v8185
      %8199 = vst [vmem:[#allocation3 + $0x10] sm:$0xff] %v8186
      %8200 = vst [vmem:[#allocation3 + $0x18] sm:$0xff] %v8187
      %8201 = vst [vmem:[#allocation3 + $0x20] sm:$0xff] %v8188
      %8202 = vst [vmem:[#allocation3 + $0x28] sm:$0xff] %v8189
      %8203 = vst [vmem:[#allocation3 + $0x30] sm:$0xff] %v8190
      %8204 = vst [vmem:[#allocation3 + $0x38] sm:$0xff] %v8191
      %8205 = vst [vmem:[#allocation3 + $0x40] sm:$0xff] %v8192
      %8206 = vst [vmem:[#allocation3 + $0x48] sm:$0xff] %v8193
      %8207 = vst [vmem:[#allocation3 + $0x50] sm:$0xff] %v8194
      %8208 = vst [vmem:[#allocation3 + $0x58] sm:$0xff] %v8195
      %8209 = vst [vmem:[#allocation3 + $0x60] sm:$0x3] %v8196
      %v8210 = vld [vmem:[#allocation3] sm:$0x1f]
      %v8211 = vld [vmem:[#allocation3 + $0x7] sm:$0x1f]
      %v8212 = vmax.f32 %v8210, %v8211
      %v8213 = vpack.c.bf16 %v8212, %v8212
      %vm8214 = vcmask 1042432
      %vm8215 = vsmask.f32 2304
      %vm8216 = vmand %vm8214, %vm8215
      %v8217 = vld [vmem:[%s172] sm:$0x7]
      %v8218 = vsel %vm8216, %v8213, %v8217
      %8219 = vst [vmem:[%s172] sm:$0x7] %v8218
      %v8220 = vld [vmem:[#allocation3 + $0xe] sm:$0x1f]
      %v8221 = vld [vmem:[#allocation3 + $0x15] sm:$0x1f]
      %v8222 = vmax.f32 %v8220, %v8221
      %v8223 = vpack.c.bf16 %v8222, %v8222
      %v8225 = vunpack.c.l.b16 %v8223
      %v8226 = vpack.c.b16 %v8225, %v8225
      %v8228 = vshrl.u32 %v8226, 16
      %v8230 = vrot.slane %v8228, 5
      %v8231 = vshll.u32 %v8226, 16
      %v8233 = vrot.slane %v8231, 6
      %v8234 = vor.u32 %v8230, %v8233
      %v8235 = vrot.slane %v8234, 4
      %vm8238 = vcmask 1043458
      %vm8239 = vsmask.f32 7946
      %vm8240 = vmand %vm8238, %vm8239
      %v8241 = vld [vmem:[%s172] sm:$0xc]
      %v8242 = vsel %vm8240, %v8234, %v8241
      %8243 = vst [vmem:[%s172] sm:$0xc] %v8242
      %8244 = vst [vmem:[%s172 + $0x4] sm:$0x1] %v8235
      %v8245 = vld [vmem:[#allocation3 + $0x1c] sm:$0x1f]
      %v8246 = vld [vmem:[#allocation3 + $0x23] sm:$0x1f]
      %v8247 = vmax.f32 %v8245, %v8246
      %v8248 = vpack.c.bf16 %v8247, %v8247
      %v8250 = vunpack.c.l.b16 %v8248
      %v8251 = vpack.c.b16 %v8250, %v8250
      %v8252 = vrot.slane %v8251, 7
      %vm8254 = vcmask 1043457
      %vm8255 = vsmask.f32 3328
      %vm8256 = vmand %vm8254, %vm8255
      %v8257 = vld [vmem:[%s172 + $0x4] sm:$0xe]
      %v8258 = vsel %vm8256, %v8252, %v8257
      %8259 = vst [vmem:[%s172 + $0x4] sm:$0xe] %v8258
      %v8260 = vld [vmem:[#allocation3 + $0x2a] sm:$0x1f]
      %v8261 = vld [vmem:[#allocation3 + $0x31] sm:$0x1f]
      %v8262 = vmax.f32 %v8260, %v8261
      %v8263 = vpack.c.bf16 %v8262, %v8262
      %v8265 = vunpack.c.l.b16 %v8263
      %v8266 = vpack.c.b16 %v8265, %v8265
      %v8268 = vshll.u32 %v8266, 16
      %v8270 = vrot.slane %v8268, 5
      %v8271 = vshrl.u32 %v8266, 16
      %v8273 = vrot.slane %v8271, 4
      %v8274 = vor.u32 %v8273, %v8270
      %v8275 = vrot.slane %v8274, 4
      %vm8278 = vcmask 1043459
      %vm8279 = vsmask.f32 7950
      %vm8280 = vmand %vm8278, %vm8279
      %v8281 = vld [vmem:[%s172 + $0x4] sm:$0x8]
      %v8282 = vsel %vm8280, %v8270, %v8281
      %8283 = vst [vmem:[%s172 + $0x4] sm:$0x8] %v8282
      %8284 = vst [vmem:[%s172 + $0x8] sm:$0x3] %v8275
      %v8285 = vld [vmem:[#allocation3 + $0x38] sm:$0x1f]
      %v8286 = vld [vmem:[#allocation3 + $0x3f] sm:$0x1f]
      %v8287 = vmax.f32 %v8285, %v8286
      %v8288 = vpack.c.bf16 %v8287, %v8287
      %v8290 = vunpack.c.l.b16 %v8288
      %v8291 = vpack.c.b16 %v8290, %v8290
      %v8292 = vrot.slane %v8291, 6
      %v8293 = vrot.slane %v8292, 4
      %8296 = vst [vmem:[%s172 + $0x8] sm:$0xc] %v8292
      %vm8297 = vcmask 1040384
      %vm8298 = vsmask.f32 256
      %vm8299 = vmand %vm8297, %vm8298
      %v8300 = vld [vmem:[%s172 + $0xc] sm:$0x1]
      %v8301 = vsel %vm8299, %v8293, %v8300
      %8302 = vst [vmem:[%s172 + $0xc] sm:$0x1] %v8301
      %p8303 = scmp.lt.s32.totalorder %s14, 3
      %s8304 = scalar_select %p8303, %s14, 3
      %s8305 = smul.addr %s8304, 4
      %s8306 = smul.addr %s8305, 4
      %s8307 = scalar_lea.vmem %s3, %s8306
      // Predicated region
      $region33: #{net_forward.4} parent=31 // pred_check
        %p8308 = pneg %p100
      $region34: #{net_forward.4} parent=31 // pred_check_branch
        %8310 = sbr.rel (%p8308) target = $region36
      $region35: #{net_forward.4} parent=31 // pred_region
        _
      $region36: #{net_forward.4} parent=31 // pred_fallthru
        _
    $region32: #{net_forward.4} parent=5 // pred_fallthru
      _
    %p8311 = scmp.le.s32.totalorder 2, %s9
    // Predicated region
    $region37: #{net_forward.4} parent=5 // pred_check
      %p8312 = pneg %p8311
    $region38: #{net_forward.4} parent=5 // pred_check_branch
      %8314 = sbr.rel (%p8312) target = $region40
    $region39: #{net_forward.4} parent=5 // pred_region
      %s8315 = ssub.s32 %s9, 2
      // Predicated region
      $region41: #{net_forward.4} parent=39 // pred_check
        %p8316 = pneg %p106
      $region42: #{net_forward.4} parent=39 // pred_check_branch
        %8318 = sbr.rel (%p8316) target = $region44
      $region43: #{net_forward.4} parent=39 // pred_region
        %p8319 = scmp.lt.s32.totalorder %s15, 3
        %s8320 = scalar_select %p8319, %s15, 3
        %s8321 = smul.addr %s8320, 4
        %s8322 = smul.addr %s8321, 4
        %s8323 = scalar_lea.vmem %s3, %s8322
      $region44: #{net_forward.4} parent=39 // pred_fallthru
        _
    $region40: #{net_forward.4} parent=5 // pred_fallthru
      _
  $region6: #{net_forward.4} parent=0 // loop_footer
    %s13 = sadd.s32 1, %s9
  $region7: #{net_forward.4} parent=0 // loop_footer_branch
    %8 = sbr.rel target = $region3
  $region8: #{net_forward.4} parent=0 // loop_exit
    _

</llo_original>
